<compile_context>
chip_gen: v7x
topology: tpu7x:2x2x1
jax: 0.10.0
libtpu: 0.0.40
codegen_flags: <defaults>
</compile_context>

<pallas_src>
import jax
import jax.numpy as jnp
import numpy as np
from jax.experimental import pallas as pl
from jax.experimental.pallas import tpu as pltpu


# ----------------------------------------------------------------------------
# Fused UnetUp kernel (one grid step == one batch element).
# ----------------------------------------------------------------------------
def _unet_up_kernel(x1_ref, x2_ref, upw_ref, upb_ref, w1_ref, b1_ref,
                    w2_ref, b2_ref, o_ref, cat_ref, h1_ref):
    # x1_ref : (1, H1, W1, Cskip)            skip connection (NHWC)
    # x2_ref : (1, 2*H2*W2, 2*Cin)           kj-expanded lower-layer input
    # upw_ref: (2*Cin, 2*Cout)               rows (kj, c), cols (ki, o)
    # upb_ref: (1, 2*Cout)
    # w1_ref : (3, 3, Ccat, Cout)            HWIO, input chans = [skip ++ up]
    # w2_ref : (3, 3, Cout, Cout)            HWIO
    # o_ref  : (1, Cout, H*W)                lane-dense, NCHW-flat
    # cat_ref: (H+2, W+2, Ccat) VMEM scratch (padded implicit concat plane)
    # h1_ref : (H+2, W+2, Cout) VMEM scratch (padded conv1 output)
    Hp, Wp, Ccat = cat_ref.shape
    H, W = Hp - 2, Wp - 2
    H2 = H // 2
    Cout = o_ref.shape[1]
    _, H1, W1, Cskip = x1_ref.shape

    # ---- zero halos (scratch persists across grid steps, so re-init) --------
    cat_ref[...] = jnp.zeros_like(cat_ref)
    h1_ref[...] = jnp.zeros_like(h1_ref)

    # ---- skip branch: F.pad(inputs1) into channels [0, Cskip) ---------------
    p = (H - H1) // 2
    cat_ref[1 + p:1 + p + H1, 1 + p:1 + p + W1, 0:Cskip] = (
        x1_ref[0].astype(cat_ref.dtype))

    # ---- up branch: ConvTranspose2d(k=2, s=2) as a single matmul ------------
    # rows of y are ordered (i, j, kj), columns (ki, o); bias added once.
    y = jnp.dot(x2_ref[0], upw_ref[...], preferred_element_type=jnp.float32)
    y = y + upb_ref[...]                                  # (2*H2*W2, 2*Cout)

    # pixel shuffle with layout-free reshapes only:
    #   lane slice per ki  ->  (i, w=2j+kj) rows  ->  ki interleave via
    #   major-dim concat + major-dim merge.
    slabs = []
    for ki in range(2):
        s = y[:, ki * Cout:(ki + 1) * Cout]               # (2*H2*W2, Cout)
        slabs.append(s.reshape(H2, 1, W, Cout))           # rows (i, 2j+kj)
    up_full = jnp.concatenate(slabs, axis=1).reshape(H, W, Cout)
    cat_ref[1:1 + H, 1:1 + W, Cskip:Ccat] = up_full.astype(cat_ref.dtype)

    # ---- 3x3 conv (padding=1) + ReLU as 9 shifted matmuls -------------------
    def conv3x3_relu(src_ref, w_ref, b_ref):
        ci = src_ref.shape[2]
        acc = None
        for dx in range(3):
            # hoist the dx window: one sublane-shifted load per dx (not 9)
            window = src_ref[:, dx:dx + W, :]             # (H+2, W, ci)
            flat = window.reshape((H + 2) * W, ci)        # free: W % 8 == 0
            for dy in range(3):
                tap = flat[dy * W:(dy + H) * W, :]        # aligned slice
                prod = jnp.dot(tap, w_ref[dy, dx],
                               preferred_element_type=jnp.float32)
                if acc is None:
                    acc = prod + b_ref[...]               # init = tap0 + bias
                else:
                    acc = acc + prod
        return jnp.maximum(acc, 0.0)                      # (H*W, Cout)

    # conv1 over the implicit concat; result stays in VMEM (padded for conv2)
    h1 = conv3x3_relu(cat_ref, w1_ref, b1_ref)
    h1_ref[1:1 + H, 1:1 + W, :] = h1.reshape(H, W, Cout)

    # conv2 over h1 (never leaves VMEM)
    h2 = conv3x3_relu(h1_ref, w2_ref, b2_ref)             # (H*W, Cout)

    # lane-dense NCHW store: (H*W, Cout) -> (Cout, H*W)
    o_ref[0] = jnp.transpose(h2).astype(o_ref.dtype)


# ----------------------------------------------------------------------------
# Wrapper: stages inputs/weights once, runs the single fused kernel.
# ----------------------------------------------------------------------------
def unet_up_forward(params, inputs1_nchw, inputs2_nchw, is_deconv=True):
    if not is_deconv:
        # TODO(synk): bilinear (align_corners=True) upsample branch not implemented in Pallas.
        raise NotImplementedError("only the is_deconv=True path is implemented")

    up_w, up_b = params["up_w"], params["up_b"]
    w1, b1 = params["conv1_w"], params["conv1_b"]
    w2, b2 = params["conv2_w"], params["conv2_b"]

    N, Cskip, H1, W1 = inputs1_nchw.shape
    _, Cin, H2, W2 = inputs2_nchw.shape
    Cout = up_w.shape[1]
    Ccat = Cskip + Cout
    H, W = 2 * H2, 2 * W2

    assert w1.shape[1] == Ccat, "conv1 in_channels must equal skip+up channels"
    offset = H - H1
    assert offset >= 0 and offset % 2 == 0, (
        "spatial offset between up(inputs2) and inputs1 must be even and >= 0")
    assert W % 8 == 0, "output width must be a multiple of 8 (TPU sublane tile)"

    # -- input staging (cheap one-time XLA ops; everything heavy is fused) ----
    x1_nhwc = jnp.transpose(inputs1_nchw, (0, 2, 3, 1))      # (N, H1, W1, Cskip)
    x2_nhwc = jnp.transpose(inputs2_nchw, (0, 2, 3, 1))      # (N, H2, W2, Cin)
    # kj-expanded LHS: L[n, (i*W2+j)*2+kj, kj'*Cin+c] = x2[n,i,j,c] * (kj==kj')
    # so the deconv matmul output rows are already ordered (i, j, kj) and the
    # in-kernel pixel shuffle needs no lane<->sublane relayout.
    eye2 = jnp.eye(2, dtype=x2_nhwc.dtype)
    x2_exp = jnp.einsum("nijc,kl->nijklc", x2_nhwc, eye2)
    x2_exp = x2_exp.reshape(N, H2 * W2 * 2, 2 * Cin)

    # -- weight staging (trace-time reshapes) ---------------------------------
    # ConvTranspose2d weight (Cin, Cout, ki, kj) -> rows (kj, c), cols (ki, o)
    upw = jnp.transpose(up_w, (3, 0, 2, 1)).reshape(2 * Cin, 2 * Cout)
    upb = jnp.tile(up_b, 2).reshape(1, 2 * Cout)
    w1_hwio = jnp.transpose(w1, (2, 3, 1, 0))                # (3,3,Ccat,Cout)
    w2_hwio = jnp.transpose(w2, (2, 3, 1, 0))                # (3,3,Cout,Cout)
    b1r = b1.reshape(1, Cout)
    b2r = b2.reshape(1, Cout)

    out_flat = pl.pallas_call(
        _unet_up_kernel,
        out_shape=jax.ShapeDtypeStruct((N, Cout, H * W), inputs1_nchw.dtype),
        grid=(N,),
        in_specs=[
            pl.BlockSpec((1, H1, W1, Cskip), lambda n: (n, 0, 0, 0)),
            pl.BlockSpec((1, 2 * H2 * W2, 2 * Cin), lambda n: (n, 0, 0)),
            pl.BlockSpec((2 * Cin, 2 * Cout), lambda n: (0, 0)),
            pl.BlockSpec((1, 2 * Cout), lambda n: (0, 0)),
            pl.BlockSpec((3, 3, Ccat, Cout), lambda n: (0, 0, 0, 0)),
            pl.BlockSpec((1, Cout), lambda n: (0, 0)),
            pl.BlockSpec((3, 3, Cout, Cout), lambda n: (0, 0, 0, 0)),
            pl.BlockSpec((1, Cout), lambda n: (0, 0)),
        ],
        out_specs=pl.BlockSpec((1, Cout, H * W), lambda n: (n, 0, 0)),
        scratch_shapes=[
            pltpu.VMEM((H + 2, W + 2, Ccat), jnp.float32),   # padded concat
            pltpu.VMEM((H + 2, W + 2, Cout), jnp.float32),   # padded conv1 out
        ],
        compiler_params=pltpu.CompilerParams(
            dimension_semantics=("parallel",)),
    )(x1_nhwc, x2_exp, upw, upb, w1_hwio, b1r, w2_hwio, b2r)

    return out_flat.reshape(N, Cout, H, W)                   # free reshape, NCHW


# ----------------------------------------------------------------------------
# Pure-JAX reference (same math, XLA convs) for validation.
# ----------------------------------------------------------------------------
def _reference(params, inputs1_nchw, inputs2_nchw):
    x1 = jnp.transpose(inputs1_nchw, (0, 2, 3, 1))
    x2 = jnp.transpose(inputs2_nchw, (0, 2, 3, 1))
    wu, bu = params["up_w"], params["up_b"]
    y = jnp.einsum("nijc,cokl->nikjlo", x2, wu)
    N, H2, _, W2, _, Cout = y.shape
    out2 = y.reshape(N, 2 * H2, 2 * W2, Cout) + bu

    offset = out2.shape[1] - x1.shape[1]
    p = offset // 2
    out1 = jnp.pad(x1, ((0, 0), (p, p), (p, p), (0, 0)))
    h = jnp.concatenate([out1, out2], axis=-1)

    def conv(x, w, b):
        w_hwio = jnp.transpose(w, (2, 3, 1, 0))
        y = jax.lax.conv_general_dilated(
            x, w_hwio, window_strides=(1, 1), padding="SAME",
            dimension_numbers=("NHWC", "HWIO", "NHWC"))
        return jax.nn.relu(y + b)

    h = conv(h, params["conv1_w"], params["conv1_b"])
    h = conv(h, params["conv2_w"], params["conv2_b"])
    return jnp.transpose(h, (0, 3, 1, 2))


if __name__ == "__main__":
    # Small shapes: in_channels=8, out_channels=4, batch=2.
    in_ch, out_ch = 8, 4
    N, H1, W1 = 2, 16, 16          # inputs1 (skip connection, out_ch channels)
    H2, W2 = 8, 8                  # inputs2 (lower layer, in_ch channels)

    key = jax.random.PRNGKey(0)
    k = jax.random.split(key, 8)
    params = {
        # ConvTranspose2d(in_ch, out_ch, 2, 2): weight (in_ch, out_ch, 2, 2)
        "up_w": 0.1 * jax.random.normal(k[0], (in_ch, out_ch, 2, 2), jnp.float32),
        "up_b": 0.1 * jax.random.normal(k[1], (out_ch,), jnp.float32),
        # Conv2d(in_ch, out_ch, 3): weight (out_ch, in_ch, 3, 3)
        "conv1_w": 0.1 * jax.random.normal(k[2], (out_ch, in_ch, 3, 3), jnp.float32),
        "conv1_b": 0.1 * jax.random.normal(k[3], (out_ch,), jnp.float32),
        "conv2_w": 0.1 * jax.random.normal(k[4], (out_ch, out_ch, 3, 3), jnp.float32),
        "conv2_b": 0.1 * jax.random.normal(k[5], (out_ch,), jnp.float32),
    }

    inputs1 = jax.random.normal(k[6], (N, out_ch, H1, W1), jnp.float32)  # NCHW
    inputs2 = jax.random.normal(k[7], (N, in_ch, H2, W2), jnp.float32)   # NCHW

    fwd = jax.jit(lambda p, a, b: unet_up_forward(p, a, b))
    out = jax.block_until_ready(fwd(params, inputs1, inputs2))

    ref = jax.block_until_ready(_reference(params, inputs1, inputs2))
    assert out.shape == ref.shape == (N, out_ch, H1, W1), out.shape
    if not np.allclose(np.asarray(out), np.asarray(ref), rtol=5e-2, atol=5e-2):
        raise AssertionError(
            f"mismatch vs reference; max abs err = "
            f"{float(jnp.max(jnp.abs(out - ref)))}")

    print("KERNEL_OK")
</pallas_src>

<mosaic_0001>
module attributes {stable_mosaic.version = 11 : i64} {
  func.func @_unet_up_kernel(%arg0: i32, %arg1: memref<1x16x16x4xf32, #tpu.memory_space<vmem>>, %arg2: memref<1x128x16xf32, #tpu.memory_space<vmem>>, %arg3: memref<16x8xf32, #tpu.memory_space<vmem>>, %arg4: memref<1x8xf32, #tpu.memory_space<vmem>>, %arg5: memref<3x3x8x4xf32, #tpu.memory_space<vmem>>, %arg6: memref<1x4xf32, #tpu.memory_space<vmem>>, %arg7: memref<3x3x4x4xf32, #tpu.memory_space<vmem>>, %arg8: memref<1x4xf32, #tpu.memory_space<vmem>>, %arg9: memref<1x4x256xf32, #tpu.memory_space<vmem>>, %arg10: memref<18x18x8xf32, #tpu.memory_space<vmem>>, %arg11: memref<18x18x4xf32, #tpu.memory_space<vmem>>) attributes {dimension_semantics = [#tpu.dimension_semantics<parallel>], iteration_bounds = array<i64: 2>, scalar_prefetch = 0 : i64, scratch_operands = 2 : i64, tpu.core_type = #tpu.core_type<tc>, window_params = [{transform_indices = @transform_0, window_bounds = array<i64: 1, 16, 16, 4>}, {transform_indices = @transform_1, window_bounds = array<i64: 1, 128, 16>}, {pipeline_mode = #tpu.pipeline_mode<synchronous>, transform_indices = @transform_2, window_bounds = array<i64: 16, 8>}, {pipeline_mode = #tpu.pipeline_mode<synchronous>, transform_indices = @transform_3, window_bounds = array<i64: 1, 8>}, {pipeline_mode = #tpu.pipeline_mode<synchronous>, transform_indices = @transform_4, window_bounds = array<i64: 3, 3, 8, 4>}, {pipeline_mode = #tpu.pipeline_mode<synchronous>, transform_indices = @transform_5, window_bounds = array<i64: 1, 4>}, {pipeline_mode = #tpu.pipeline_mode<synchronous>, transform_indices = @transform_6, window_bounds = array<i64: 3, 3, 4, 4>}, {pipeline_mode = #tpu.pipeline_mode<synchronous>, transform_indices = @transform_7, window_bounds = array<i64: 1, 4>}, {transform_indices = @transform_8, window_bounds = array<i64: 1, 4, 256>}]} {
    %cst = arith.constant 0.000000e+00 : f32
    %0 = vector.broadcast %cst : f32 to vector<18x18x8xf32>
    %c0 = arith.constant 0 : index
    %c0_0 = arith.constant 0 : index
    %c0_1 = arith.constant 0 : index
    %1 = vector.load %arg10[%c0, %c0_0, %c0_1] : memref<18x18x8xf32, #tpu.memory_space<vmem>>, vector<18x18x8xf32>
    tpu.vector_store %arg10[%c0, %c0_0, %c0_1], %0 {strides = array<i32>} : memref<18x18x8xf32, #tpu.memory_space<vmem>>, vector<18x18x8xf32>,
    %cst_2 = arith.constant 0.000000e+00 : f32
    %2 = vector.broadcast %cst_2 : f32 to vector<18x18x4xf32>
    %c0_3 = arith.constant 0 : index
    %c0_4 = arith.constant 0 : index
    %c0_5 = arith.constant 0 : index
    %3 = vector.load %arg11[%c0_3, %c0_4, %c0_5] : memref<18x18x4xf32, #tpu.memory_space<vmem>>, vector<18x18x4xf32>
    tpu.vector_store %arg11[%c0_3, %c0_4, %c0_5], %2 {strides = array<i32>} : memref<18x18x4xf32, #tpu.memory_space<vmem>>, vector<18x18x4xf32>,
    %c0_6 = arith.constant 0 : index
    %c0_7 = arith.constant 0 : index
    %c0_8 = arith.constant 0 : index
    %c0_9 = arith.constant 0 : index
    %4 = vector.load %arg1[%c0_6, %c0_7, %c0_8, %c0_9] : memref<1x16x16x4xf32, #tpu.memory_space<vmem>>, vector<1x16x16x4xf32>
    %5 = vector.shape_cast %4 : vector<1x16x16x4xf32> to vector<16x16x4xf32>
    %c1 = arith.constant 1 : index
    %c1_10 = arith.constant 1 : index
    %c0_11 = arith.constant 0 : index
    %6 = vector.load %arg10[%c1, %c1_10, %c0_11] : memref<18x18x8xf32, #tpu.memory_space<vmem>>, vector<16x16x4xf32>
    tpu.vector_store %arg10[%c1, %c1_10, %c0_11], %5 {strides = array<i32>} : memref<18x18x8xf32, #tpu.memory_space<vmem>>, vector<16x16x4xf32>,
    %c0_12 = arith.constant 0 : index
    %c0_13 = arith.constant 0 : index
    %c0_14 = arith.constant 0 : index
    %7 = vector.load %arg2[%c0_12, %c0_13, %c0_14] : memref<1x128x16xf32, #tpu.memory_space<vmem>>, vector<1x128x16xf32>
    %8 = vector.shape_cast %7 : vector<1x128x16xf32> to vector<128x16xf32>
    %c0_15 = arith.constant 0 : index
    %c0_16 = arith.constant 0 : index
    %9 = vector.load %arg3[%c0_15, %c0_16] : memref<16x8xf32, #tpu.memory_space<vmem>>, vector<16x8xf32>
    %cst_17 = arith.constant dense<0.000000e+00> : vector<128x8xf32>
    %10 = tpu.matmul %8, %9, %cst_17 {dimension_numbers = #tpu.dot_dimension_numbers<[1], [0], [0], [1], [0, 0, 1, 1], [], []>} : vector<128x16xf32>, vector<16x8xf32>, vector<128x8xf32> -> vector<128x8xf32>
    %c0_18 = arith.constant 0 : index
    %c0_19 = arith.constant 0 : index
    %11 = vector.load %arg4[%c0_18, %c0_19] : memref<1x8xf32, #tpu.memory_space<vmem>>, vector<1x8xf32>
    %12 = vector.broadcast %11 : vector<1x8xf32> to vector<128x8xf32>
    %13 = arith.addf %10, %12 : vector<128x8xf32>
    %14 = vector.extract_strided_slice %13 {offsets = [0, 0], sizes = [128, 4], strides = [1, 1]} : vector<128x8xf32> to vector<128x4xf32>
    %15 = vector.shape_cast %14 : vector<128x4xf32> to vector<8x1x16x4xf32>
    %16 = vector.extract_strided_slice %13 {offsets = [0, 4], sizes = [128, 4], strides = [1, 1]} : vector<128x8xf32> to vector<128x4xf32>
    %17 = vector.shape_cast %16 : vector<128x4xf32> to vector<8x1x16x4xf32>
    %18 = tpu.concatenate %15, %17 in 1 : vector<8x1x16x4xf32>, vector<8x1x16x4xf32> -> vector<8x2x16x4xf32>
    %19 = vector.shape_cast %18 : vector<8x2x16x4xf32> to vector<16x16x4xf32>
    %c1_20 = arith.constant 1 : index
    %c1_21 = arith.constant 1 : index
    %c4 = arith.constant 4 : index
    %20 = vector.load %arg10[%c1_20, %c1_21, %c4] : memref<18x18x8xf32, #tpu.memory_space<vmem>>, vector<16x16x4xf32>
    tpu.vector_store %arg10[%c1_20, %c1_21, %c4], %19 {strides = array<i32>} : memref<18x18x8xf32, #tpu.memory_space<vmem>>, vector<16x16x4xf32>,
    %c0_22 = arith.constant 0 : index
    %c0_23 = arith.constant 0 : index
    %c0_24 = arith.constant 0 : index
    %21 = vector.load %arg10[%c0_22, %c0_23, %c0_24] : memref<18x18x8xf32, #tpu.memory_space<vmem>>, vector<18x16x8xf32>
    %22 = vector.shape_cast %21 : vector<18x16x8xf32> to vector<288x8xf32>
    %23 = vector.extract_strided_slice %22 {offsets = [0, 0], sizes = [256, 8], strides = [1, 1]} : vector<288x8xf32> to vector<256x8xf32>
    %c0_25 = arith.constant 0 : index
    %c0_26 = arith.constant 0 : index
    %c0_27 = arith.constant 0 : index
    %c0_28 = arith.constant 0 : index
    %24 = vector.load %arg5[%c0_25, %c0_26, %c0_27, %c0_28] : memref<3x3x8x4xf32, #tpu.memory_space<vmem>>, vector<1x1x8x4xf32>
    %25 = vector.shape_cast %24 : vector<1x1x8x4xf32> to vector<8x4xf32>
    %cst_29 = arith.constant dense<0.000000e+00> : vector<256x4xf32>
    %26 = tpu.matmul %23, %25, %cst_29 {dimension_numbers = #tpu.dot_dimension_numbers<[1], [0], [0], [1], [0, 0, 1, 1], [], []>} : vector<256x8xf32>, vector<8x4xf32>, vector<256x4xf32> -> vector<256x4xf32>
    %c0_30 = arith.constant 0 : index
    %c0_31 = arith.constant 0 : index
    %27 = vector.load %arg6[%c0_30, %c0_31] : memref<1x4xf32, #tpu.memory_space<vmem>>, vector<1x4xf32>
    %28 = vector.broadcast %27 : vector<1x4xf32> to vector<256x4xf32>
    %29 = arith.addf %26, %28 : vector<256x4xf32>
    %30 = vector.extract_strided_slice %22 {offsets = [16, 0], sizes = [256, 8], strides = [1, 1]} : vector<288x8xf32> to vector<256x8xf32>
    %c1_32 = arith.constant 1 : index
    %c0_33 = arith.constant 0 : index
    %c0_34 = arith.constant 0 : index
    %c0_35 = arith.constant 0 : index
    %31 = vector.load %arg5[%c1_32, %c0_33, %c0_34, %c0_35] : memref<3x3x8x4xf32, #tpu.memory_space<vmem>>, vector<1x1x8x4xf32>
    %32 = vector.shape_cast %31 : vector<1x1x8x4xf32> to vector<8x4xf32>
    %cst_36 = arith.constant dense<0.000000e+00> : vector<256x4xf32>
    %33 = tpu.matmul %30, %32, %cst_36 {dimension_numbers = #tpu.dot_dimension_numbers<[1], [0], [0], [1], [0, 0, 1, 1], [], []>} : vector<256x8xf32>, vector<8x4xf32>, vector<256x4xf32> -> vector<256x4xf32>
    %34 = arith.addf %29, %33 : vector<256x4xf32>
    %35 = vector.extract_strided_slice %22 {offsets = [32, 0], sizes = [256, 8], strides = [1, 1]} : vector<288x8xf32> to vector<256x8xf32>
    %c2 = arith.constant 2 : index
    %c0_37 = arith.constant 0 : index
    %c0_38 = arith.constant 0 : index
    %c0_39 = arith.constant 0 : index
    %36 = vector.load %arg5[%c2, %c0_37, %c0_38, %c0_39] : memref<3x3x8x4xf32, #tpu.memory_space<vmem>>, vector<1x1x8x4xf32>
    %37 = vector.shape_cast %36 : vector<1x1x8x4xf32> to vector<8x4xf32>
    %cst_40 = arith.constant dense<0.000000e+00> : vector<256x4xf32>
    %38 = tpu.matmul %35, %37, %cst_40 {dimension_numbers = #tpu.dot_dimension_numbers<[1], [0], [0], [1], [0, 0, 1, 1], [], []>} : vector<256x8xf32>, vector<8x4xf32>, vector<256x4xf32> -> vector<256x4xf32>
    %39 = arith.addf %34, %38 : vector<256x4xf32>
    %c0_41 = arith.constant 0 : index
    %c1_42 = arith.constant 1 : index
    %c0_43 = arith.constant 0 : index
    %40 = vector.load %arg10[%c0_41, %c1_42, %c0_43] : memref<18x18x8xf32, #tpu.memory_space<vmem>>, vector<18x16x8xf32>
    %41 = vector.shape_cast %40 : vector<18x16x8xf32> to vector<288x8xf32>
    %42 = vector.extract_strided_slice %41 {offsets = [0, 0], sizes = [256, 8], strides = [1, 1]} : vector<288x8xf32> to vector<256x8xf32>
    %c0_44 = arith.constant 0 : index
    %c1_45 = arith.constant 1 : index
    %c0_46 = arith.constant 0 : index
    %c0_47 = arith.constant 0 : index
    %43 = vector.load %arg5[%c0_44, %c1_45, %c0_46, %c0_47] : memref<3x3x8x4xf32, #tpu.memory_space<vmem>>, vector<1x1x8x4xf32>
    %44 = vector.shape_cast %43 : vector<1x1x8x4xf32> to vector<8x4xf32>
    %cst_48 = arith.constant dense<0.000000e+00> : vector<256x4xf32>
    %45 = tpu.matmul %42, %44, %cst_48 {dimension_numbers = #tpu.dot_dimension_numbers<[1], [0], [0], [1], [0, 0, 1, 1], [], []>} : vector<256x8xf32>, vector<8x4xf32>, vector<256x4xf32> -> vector<256x4xf32>
    %46 = arith.addf %39, %45 : vector<256x4xf32>
    %47 = vector.extract_strided_slice %41 {offsets = [16, 0], sizes = [256, 8], strides = [1, 1]} : vector<288x8xf32> to vector<256x8xf32>
    %c1_49 = arith.constant 1 : index
    %c1_50 = arith.constant 1 : index
    %c0_51 = arith.constant 0 : index
    %c0_52 = arith.constant 0 : index
    %48 = vector.load %arg5[%c1_49, %c1_50, %c0_51, %c0_52] : memref<3x3x8x4xf32, #tpu.memory_space<vmem>>, vector<1x1x8x4xf32>
    %49 = vector.shape_cast %48 : vector<1x1x8x4xf32> to vector<8x4xf32>
    %cst_53 = arith.constant dense<0.000000e+00> : vector<256x4xf32>
    %50 = tpu.matmul %47, %49, %cst_53 {dimension_numbers = #tpu.dot_dimension_numbers<[1], [0], [0], [1], [0, 0, 1, 1], [], []>} : vector<256x8xf32>, vector<8x4xf32>, vector<256x4xf32> -> vector<256x4xf32>
    %51 = arith.addf %46, %50 : vector<256x4xf32>
    %52 = vector.extract_strided_slice %41 {offsets = [32, 0], sizes = [256, 8], strides = [1, 1]} : vector<288x8xf32> to vector<256x8xf32>
    %c2_54 = arith.constant 2 : index
    %c1_55 = arith.constant 1 : index
    %c0_56 = arith.constant 0 : index
    %c0_57 = arith.constant 0 : index
    %53 = vector.load %arg5[%c2_54, %c1_55, %c0_56, %c0_57] : memref<3x3x8x4xf32, #tpu.memory_space<vmem>>, vector<1x1x8x4xf32>
    %54 = vector.shape_cast %53 : vector<1x1x8x4xf32> to vector<8x4xf32>
    %cst_58 = arith.constant dense<0.000000e+00> : vector<256x4xf32>
    %55 = tpu.matmul %52, %54, %cst_58 {dimension_numbers = #tpu.dot_dimension_numbers<[1], [0], [0], [1], [0, 0, 1, 1], [], []>} : vector<256x8xf32>, vector<8x4xf32>, vector<256x4xf32> -> vector<256x4xf32>
    %56 = arith.addf %51, %55 : vector<256x4xf32>
    %c0_59 = arith.constant 0 : index
    %c2_60 = arith.constant 2 : index
    %c0_61 = arith.constant 0 : index
    %57 = vector.load %arg10[%c0_59, %c2_60, %c0_61] : memref<18x18x8xf32, #tpu.memory_space<vmem>>, vector<18x16x8xf32>
    %58 = vector.shape_cast %57 : vector<18x16x8xf32> to vector<288x8xf32>
    %59 = vector.extract_strided_slice %58 {offsets = [0, 0], sizes = [256, 8], strides = [1, 1]} : vector<288x8xf32> to vector<256x8xf32>
    %c0_62 = arith.constant 0 : index
    %c2_63 = arith.constant 2 : index
    %c0_64 = arith.constant 0 : index
    %c0_65 = arith.constant 0 : index
    %60 = vector.load %arg5[%c0_62, %c2_63, %c0_64, %c0_65] : memref<3x3x8x4xf32, #tpu.memory_space<vmem>>, vector<1x1x8x4xf32>
    %61 = vector.shape_cast %60 : vector<1x1x8x4xf32> to vector<8x4xf32>
    %cst_66 = arith.constant dense<0.000000e+00> : vector<256x4xf32>
    %62 = tpu.matmul %59, %61, %cst_66 {dimension_numbers = #tpu.dot_dimension_numbers<[1], [0], [0], [1], [0, 0, 1, 1], [], []>} : vector<256x8xf32>, vector<8x4xf32>, vector<256x4xf32> -> vector<256x4xf32>
    %63 = arith.addf %56, %62 : vector<256x4xf32>
    %64 = vector.extract_strided_slice %58 {offsets = [16, 0], sizes = [256, 8], strides = [1, 1]} : vector<288x8xf32> to vector<256x8xf32>
    %c1_67 = arith.constant 1 : index
    %c2_68 = arith.constant 2 : index
    %c0_69 = arith.constant 0 : index
    %c0_70 = arith.constant 0 : index
    %65 = vector.load %arg5[%c1_67, %c2_68, %c0_69, %c0_70] : memref<3x3x8x4xf32, #tpu.memory_space<vmem>>, vector<1x1x8x4xf32>
    %66 = vector.shape_cast %65 : vector<1x1x8x4xf32> to vector<8x4xf32>
    %cst_71 = arith.constant dense<0.000000e+00> : vector<256x4xf32>
    %67 = tpu.matmul %64, %66, %cst_71 {dimension_numbers = #tpu.dot_dimension_numbers<[1], [0], [0], [1], [0, 0, 1, 1], [], []>} : vector<256x8xf32>, vector<8x4xf32>, vector<256x4xf32> -> vector<256x4xf32>
    %68 = arith.addf %63, %67 : vector<256x4xf32>
    %69 = vector.extract_strided_slice %58 {offsets = [32, 0], sizes = [256, 8], strides = [1, 1]} : vector<288x8xf32> to vector<256x8xf32>
    %c2_72 = arith.constant 2 : index
    %c2_73 = arith.constant 2 : index
    %c0_74 = arith.constant 0 : index
    %c0_75 = arith.constant 0 : index
    %70 = vector.load %arg5[%c2_72, %c2_73, %c0_74, %c0_75] : memref<3x3x8x4xf32, #tpu.memory_space<vmem>>, vector<1x1x8x4xf32>
    %71 = vector.shape_cast %70 : vector<1x1x8x4xf32> to vector<8x4xf32>
    %cst_76 = arith.constant dense<0.000000e+00> : vector<256x4xf32>
    %72 = tpu.matmul %69, %71, %cst_76 {dimension_numbers = #tpu.dot_dimension_numbers<[1], [0], [0], [1], [0, 0, 1, 1], [], []>} : vector<256x8xf32>, vector<8x4xf32>, vector<256x4xf32> -> vector<256x4xf32>
    %73 = arith.addf %68, %72 : vector<256x4xf32>
    %cst_77 = arith.constant 0.000000e+00 : f32
    %74 = vector.broadcast %cst_77 : f32 to vector<256x4xf32>
    %75 = arith.maximumf %73, %74 : vector<256x4xf32>
    %76 = vector.shape_cast %75 : vector<256x4xf32> to vector<16x16x4xf32>
    %c1_78 = arith.constant 1 : index
    %c1_79 = arith.constant 1 : index
    %c0_80 = arith.constant 0 : index
    %77 = vector.load %arg11[%c1_78, %c1_79, %c0_80] : memref<18x18x4xf32, #tpu.memory_space<vmem>>, vector<16x16x4xf32>
    tpu.vector_store %arg11[%c1_78, %c1_79, %c0_80], %76 {strides = array<i32>} : memref<18x18x4xf32, #tpu.memory_space<vmem>>, vector<16x16x4xf32>,
    %c0_81 = arith.constant 0 : index
    %c0_82 = arith.constant 0 : index
    %c0_83 = arith.constant 0 : index
    %78 = vector.load %arg11[%c0_81, %c0_82, %c0_83] : memref<18x18x4xf32, #tpu.memory_space<vmem>>, vector<18x16x4xf32>
    %79 = vector.shape_cast %78 : vector<18x16x4xf32> to vector<288x4xf32>
    %80 = vector.extract_strided_slice %79 {offsets = [0, 0], sizes = [256, 4], strides = [1, 1]} : vector<288x4xf32> to vector<256x4xf32>
    %c0_84 = arith.constant 0 : index
    %c0_85 = arith.constant 0 : index
    %c0_86 = arith.constant 0 : index
    %c0_87 = arith.constant 0 : index
    %81 = vector.load %arg7[%c0_84, %c0_85, %c0_86, %c0_87] : memref<3x3x4x4xf32, #tpu.memory_space<vmem>>, vector<1x1x4x4xf32>
    %82 = vector.shape_cast %81 : vector<1x1x4x4xf32> to vector<4x4xf32>
    %cst_88 = arith.constant dense<0.000000e+00> : vector<256x4xf32>
    %83 = tpu.matmul %80, %82, %cst_88 {dimension_numbers = #tpu.dot_dimension_numbers<[1], [0], [0], [1], [0, 0, 1, 1], [], []>} : vector<256x4xf32>, vector<4x4xf32>, vector<256x4xf32> -> vector<256x4xf32>
    %c0_89 = arith.constant 0 : index
    %c0_90 = arith.constant 0 : index
    %84 = vector.load %arg8[%c0_89, %c0_90] : memref<1x4xf32, #tpu.memory_space<vmem>>, vector<1x4xf32>
    %85 = vector.broadcast %84 : vector<1x4xf32> to vector<256x4xf32>
    %86 = arith.addf %83, %85 : vector<256x4xf32>
    %87 = vector.extract_strided_slice %79 {offsets = [16, 0], sizes = [256, 4], strides = [1, 1]} : vector<288x4xf32> to vector<256x4xf32>
    %c1_91 = arith.constant 1 : index
    %c0_92 = arith.constant 0 : index
    %c0_93 = arith.constant 0 : index
    %c0_94 = arith.constant 0 : index
    %88 = vector.load %arg7[%c1_91, %c0_92, %c0_93, %c0_94] : memref<3x3x4x4xf32, #tpu.memory_space<vmem>>, vector<1x1x4x4xf32>
    %89 = vector.shape_cast %88 : vector<1x1x4x4xf32> to vector<4x4xf32>
    %cst_95 = arith.constant dense<0.000000e+00> : vector<256x4xf32>
    %90 = tpu.matmul %87, %89, %cst_95 {dimension_numbers = #tpu.dot_dimension_numbers<[1], [0], [0], [1], [0, 0, 1, 1], [], []>} : vector<256x4xf32>, vector<4x4xf32>, vector<256x4xf32> -> vector<256x4xf32>
    %91 = arith.addf %86, %90 : vector<256x4xf32>
    %92 = vector.extract_strided_slice %79 {offsets = [32, 0], sizes = [256, 4], strides = [1, 1]} : vector<288x4xf32> to vector<256x4xf32>
    %c2_96 = arith.constant 2 : index
    %c0_97 = arith.constant 0 : index
    %c0_98 = arith.constant 0 : index
    %c0_99 = arith.constant 0 : index
    %93 = vector.load %arg7[%c2_96, %c0_97, %c0_98, %c0_99] : memref<3x3x4x4xf32, #tpu.memory_space<vmem>>, vector<1x1x4x4xf32>
    %94 = vector.shape_cast %93 : vector<1x1x4x4xf32> to vector<4x4xf32>
    %cst_100 = arith.constant dense<0.000000e+00> : vector<256x4xf32>
    %95 = tpu.matmul %92, %94, %cst_100 {dimension_numbers = #tpu.dot_dimension_numbers<[1], [0], [0], [1], [0, 0, 1, 1], [], []>} : vector<256x4xf32>, vector<4x4xf32>, vector<256x4xf32> -> vector<256x4xf32>
    %96 = arith.addf %91, %95 : vector<256x4xf32>
    %c0_101 = arith.constant 0 : index
    %c1_102 = arith.constant 1 : index
    %c0_103 = arith.constant 0 : index
    %97 = vector.load %arg11[%c0_101, %c1_102, %c0_103] : memref<18x18x4xf32, #tpu.memory_space<vmem>>, vector<18x16x4xf32>
    %98 = vector.shape_cast %97 : vector<18x16x4xf32> to vector<288x4xf32>
    %99 = vector.extract_strided_slice %98 {offsets = [0, 0], sizes = [256, 4], strides = [1, 1]} : vector<288x4xf32> to vector<256x4xf32>
    %c0_104 = arith.constant 0 : index
    %c1_105 = arith.constant 1 : index
    %c0_106 = arith.constant 0 : index
    %c0_107 = arith.constant 0 : index
    %100 = vector.load %arg7[%c0_104, %c1_105, %c0_106, %c0_107] : memref<3x3x4x4xf32, #tpu.memory_space<vmem>>, vector<1x1x4x4xf32>
    %101 = vector.shape_cast %100 : vector<1x1x4x4xf32> to vector<4x4xf32>
    %cst_108 = arith.constant dense<0.000000e+00> : vector<256x4xf32>
    %102 = tpu.matmul %99, %101, %cst_108 {dimension_numbers = #tpu.dot_dimension_numbers<[1], [0], [0], [1], [0, 0, 1, 1], [], []>} : vector<256x4xf32>, vector<4x4xf32>, vector<256x4xf32> -> vector<256x4xf32>
    %103 = arith.addf %96, %102 : vector<256x4xf32>
    %104 = vector.extract_strided_slice %98 {offsets = [16, 0], sizes = [256, 4], strides = [1, 1]} : vector<288x4xf32> to vector<256x4xf32>
    %c1_109 = arith.constant 1 : index
    %c1_110 = arith.constant 1 : index
    %c0_111 = arith.constant 0 : index
    %c0_112 = arith.constant 0 : index
    %105 = vector.load %arg7[%c1_109, %c1_110, %c0_111, %c0_112] : memref<3x3x4x4xf32, #tpu.memory_space<vmem>>, vector<1x1x4x4xf32>
    %106 = vector.shape_cast %105 : vector<1x1x4x4xf32> to vector<4x4xf32>
    %cst_113 = arith.constant dense<0.000000e+00> : vector<256x4xf32>
    %107 = tpu.matmul %104, %106, %cst_113 {dimension_numbers = #tpu.dot_dimension_numbers<[1], [0], [0], [1], [0, 0, 1, 1], [], []>} : vector<256x4xf32>, vector<4x4xf32>, vector<256x4xf32> -> vector<256x4xf32>
    %108 = arith.addf %103, %107 : vector<256x4xf32>
    %109 = vector.extract_strided_slice %98 {offsets = [32, 0], sizes = [256, 4], strides = [1, 1]} : vector<288x4xf32> to vector<256x4xf32>
    %c2_114 = arith.constant 2 : index
    %c1_115 = arith.constant 1 : index
    %c0_116 = arith.constant 0 : index
    %c0_117 = arith.constant 0 : index
    %110 = vector.load %arg7[%c2_114, %c1_115, %c0_116, %c0_117] : memref<3x3x4x4xf32, #tpu.memory_space<vmem>>, vector<1x1x4x4xf32>
    %111 = vector.shape_cast %110 : vector<1x1x4x4xf32> to vector<4x4xf32>
    %cst_118 = arith.constant dense<0.000000e+00> : vector<256x4xf32>
    %112 = tpu.matmul %109, %111, %cst_118 {dimension_numbers = #tpu.dot_dimension_numbers<[1], [0], [0], [1], [0, 0, 1, 1], [], []>} : vector<256x4xf32>, vector<4x4xf32>, vector<256x4xf32> -> vector<256x4xf32>
    %113 = arith.addf %108, %112 : vector<256x4xf32>
    %c0_119 = arith.constant 0 : index
    %c2_120 = arith.constant 2 : index
    %c0_121 = arith.constant 0 : index
    %114 = vector.load %arg11[%c0_119, %c2_120, %c0_121] : memref<18x18x4xf32, #tpu.memory_space<vmem>>, vector<18x16x4xf32>
    %115 = vector.shape_cast %114 : vector<18x16x4xf32> to vector<288x4xf32>
    %116 = vector.extract_strided_slice %115 {offsets = [0, 0], sizes = [256, 4], strides = [1, 1]} : vector<288x4xf32> to vector<256x4xf32>
    %c0_122 = arith.constant 0 : index
    %c2_123 = arith.constant 2 : index
    %c0_124 = arith.constant 0 : index
    %c0_125 = arith.constant 0 : index
    %117 = vector.load %arg7[%c0_122, %c2_123, %c0_124, %c0_125] : memref<3x3x4x4xf32, #tpu.memory_space<vmem>>, vector<1x1x4x4xf32>
    %118 = vector.shape_cast %117 : vector<1x1x4x4xf32> to vector<4x4xf32>
    %cst_126 = arith.constant dense<0.000000e+00> : vector<256x4xf32>
    %119 = tpu.matmul %116, %118, %cst_126 {dimension_numbers = #tpu.dot_dimension_numbers<[1], [0], [0], [1], [0, 0, 1, 1], [], []>} : vector<256x4xf32>, vector<4x4xf32>, vector<256x4xf32> -> vector<256x4xf32>
    %120 = arith.addf %113, %119 : vector<256x4xf32>
    %121 = vector.extract_strided_slice %115 {offsets = [16, 0], sizes = [256, 4], strides = [1, 1]} : vector<288x4xf32> to vector<256x4xf32>
    %c1_127 = arith.constant 1 : index
    %c2_128 = arith.constant 2 : index
    %c0_129 = arith.constant 0 : index
    %c0_130 = arith.constant 0 : index
    %122 = vector.load %arg7[%c1_127, %c2_128, %c0_129, %c0_130] : memref<3x3x4x4xf32, #tpu.memory_space<vmem>>, vector<1x1x4x4xf32>
    %123 = vector.shape_cast %122 : vector<1x1x4x4xf32> to vector<4x4xf32>
    %cst_131 = arith.constant dense<0.000000e+00> : vector<256x4xf32>
    %124 = tpu.matmul %121, %123, %cst_131 {dimension_numbers = #tpu.dot_dimension_numbers<[1], [0], [0], [1], [0, 0, 1, 1], [], []>} : vector<256x4xf32>, vector<4x4xf32>, vector<256x4xf32> -> vector<256x4xf32>
    %125 = arith.addf %120, %124 : vector<256x4xf32>
    %126 = vector.extract_strided_slice %115 {offsets = [32, 0], sizes = [256, 4], strides = [1, 1]} : vector<288x4xf32> to vector<256x4xf32>
    %c2_132 = arith.constant 2 : index
    %c2_133 = arith.constant 2 : index
    %c0_134 = arith.constant 0 : index
    %c0_135 = arith.constant 0 : index
    %127 = vector.load %arg7[%c2_132, %c2_133, %c0_134, %c0_135] : memref<3x3x4x4xf32, #tpu.memory_space<vmem>>, vector<1x1x4x4xf32>
    %128 = vector.shape_cast %127 : vector<1x1x4x4xf32> to vector<4x4xf32>
    %cst_136 = arith.constant dense<0.000000e+00> : vector<256x4xf32>
    %129 = tpu.matmul %126, %128, %cst_136 {dimension_numbers = #tpu.dot_dimension_numbers<[1], [0], [0], [1], [0, 0, 1, 1], [], []>} : vector<256x4xf32>, vector<4x4xf32>, vector<256x4xf32> -> vector<256x4xf32>
    %130 = arith.addf %125, %129 : vector<256x4xf32>
    %cst_137 = arith.constant 0.000000e+00 : f32
    %131 = vector.broadcast %cst_137 : f32 to vector<256x4xf32>
    %132 = arith.maximumf %130, %131 : vector<256x4xf32>
    %133 = tpu.transpose %132, [1, 0] : vector<256x4xf32> -> vector<4x256xf32>
    %c0_138 = arith.constant 0 : index
    %c0_139 = arith.constant 0 : index
    %c0_140 = arith.constant 0 : index
    %134 = vector.load %arg9[%c0_138, %c0_139, %c0_140] : memref<1x4x256xf32, #tpu.memory_space<vmem>>, vector<1x4x256xf32>
    %135 = vector.shape_cast %134 : vector<1x4x256xf32> to vector<4x256xf32>
    %136 = vector.shape_cast %133 : vector<4x256xf32> to vector<1x4x256xf32>
    tpu.vector_store %arg9[%c0_138, %c0_139, %c0_140], %136 {strides = array<i32>} : memref<1x4x256xf32, #tpu.memory_space<vmem>>, vector<1x4x256xf32>,
    return
  }
  func.func @transform_0(%arg0: i32) -> (i32, i32, i32, i32) {
    %c0_i32 = arith.constant 0 : i32
    %c0_i32_0 = arith.constant 0 : i32
    %c0_i32_1 = arith.constant 0 : i32
    %c0_i32_2 = arith.constant 0 : i32
    return %arg0, %c0_i32, %c0_i32_0, %c0_i32_1 : i32, i32, i32, i32
  }
  func.func @transform_1(%arg0: i32) -> (i32, i32, i32) {
    %c0_i32 = arith.constant 0 : i32
    %c0_i32_0 = arith.constant 0 : i32
    %c0_i32_1 = arith.constant 0 : i32
    return %arg0, %c0_i32, %c0_i32_0 : i32, i32, i32
  }
  func.func @transform_2(%arg0: i32) -> (i32, i32) {
    %c0_i32 = arith.constant 0 : i32
    %c0_i32_0 = arith.constant 0 : i32
    %c0_i32_1 = arith.constant 0 : i32
    return %c0_i32, %c0_i32_0 : i32, i32
  }
  func.func @transform_3(%arg0: i32) -> (i32, i32) {
    %c0_i32 = arith.constant 0 : i32
    %c0_i32_0 = arith.constant 0 : i32
    %c0_i32_1 = arith.constant 0 : i32
    return %c0_i32, %c0_i32_0 : i32, i32
  }
  func.func @transform_4(%arg0: i32) -> (i32, i32, i32, i32) {
    %c0_i32 = arith.constant 0 : i32
    %c0_i32_0 = arith.constant 0 : i32
    %c0_i32_1 = arith.constant 0 : i32
    %c0_i32_2 = arith.constant 0 : i32
    %c0_i32_3 = arith.constant 0 : i32
    return %c0_i32, %c0_i32_0, %c0_i32_1, %c0_i32_2 : i32, i32, i32, i32
  }
  func.func @transform_5(%arg0: i32) -> (i32, i32) {
    %c0_i32 = arith.constant 0 : i32
    %c0_i32_0 = arith.constant 0 : i32
    %c0_i32_1 = arith.constant 0 : i32
    return %c0_i32, %c0_i32_0 : i32, i32
  }
  func.func @transform_6(%arg0: i32) -> (i32, i32, i32, i32) {
    %c0_i32 = arith.constant 0 : i32
    %c0_i32_0 = arith.constant 0 : i32
    %c0_i32_1 = arith.constant 0 : i32
    %c0_i32_2 = arith.constant 0 : i32
    %c0_i32_3 = arith.constant 0 : i32
    return %c0_i32, %c0_i32_0, %c0_i32_1, %c0_i32_2 : i32, i32, i32, i32
  }
  func.func @transform_7(%arg0: i32) -> (i32, i32) {
    %c0_i32 = arith.constant 0 : i32
    %c0_i32_0 = arith.constant 0 : i32
    %c0_i32_1 = arith.constant 0 : i32
    return %c0_i32, %c0_i32_0 : i32, i32
  }
  func.func @transform_8(%arg0: i32) -> (i32, i32, i32) {
    %c0_i32 = arith.constant 0 : i32
    %c0_i32_0 = arith.constant 0 : i32
    %c0_i32_1 = arith.constant 0 : i32
    return %arg0, %c0_i32, %c0_i32_0 : i32, i32, i32
  }
}

</mosaic_0001>

<llo_original>
// kernel: tile.9
$region0: #{tile.9}
  %s0 = inlined_call_operand.vmem [shape: f32[2,4], index: 0, kind: input, shape index: {}]
  %s1 = inlined_call_operand.vmem [shape: f32[1,8], index: 1, kind: output, shape index: {}]
  $region1: #{tile.9} parent=0
    #allocation0 [shape = 'u8[4096]{0}', space=vmem, size = 0x1000, scoped, tag = 'scoped mem for output reshape']
    #allocation1 [shape = 'u8[4096]{0}', space=vmem, size = 0x1000, scoped, tag = 'scoped mem for input reshape']
    %s3 = sshllo.u32 0, 2
    %v4 = vld [vmem:[%s0] sm:%s3]
    %5 = vst [vmem:[#allocation1] sm:%s3] %v4
    %v6 = vld [vmem:[#allocation1] sm:$0x1]
    %vm7 = vcmask 31744
    %8 = vst.msk [vmem:[#allocation0] sm:$0x1] %vm7, %v6
    %s9 = scalar_lea.vmem [#allocation1], 1
    %v10 = vld [vmem:[%s9] sm:$0x1]
    %11 = vrot.lane.b32.xlu0 %v10, 4
    %v12 = vpop.permute.xlu0 %11
    %vm13 = vcmask 64544
    %14 = vst.msk [vmem:[#allocation0] sm:$0x1] %vm13, %v12
    %s16 = sshllo.u32 0, 1
    %v18 = vld [vmem:[#allocation0] sm:%s16]
    %s19 = sshllo.u32 0, 1
    %20 = vst [vmem:[%s1] sm:%s19] %v18

// kernel: tile.8
$region0: #{tile.8}
  #allocation0 [shape = 's32[1]{0}', space=sflag, size = 0x4, scoped, tag = 'scoped memory for tile.8']
  %s0 = inlined_call_operand.vmem [shape: f32[4], index: 0, kind: input, shape index: {}]
  %s1 = inlined_call_operand.vmem [shape: f32[2,4], index: 1, kind: output, shape index: {}]
  // Predicated region
  $region2: #{tile.8} parent=0 // pred_check
    _
  $region3: #{tile.8} parent=0 // pred_check_branch
    %3 = sbr.rel (0) target = $region5
  $region4: #{tile.8} parent=0 // pred_region
    _
  $region5: #{tile.8} parent=0 // pred_fallthru
    _
  %v4 = vld [vmem:[%s0] ss:$0 sm:$0xff]
  %5 = vst [vmem:[%s1] sm:$0x3] %v4

// kernel: _lambda_.1
$region0: #{_lambda_.1}
  #allocation0 [shape = 'u32[]', space=smem, size = 0x4, offset = 0x4, fixed_abs, tag = 'smem constant byte address 0x4 - core index']
  #allocation1 [shape = 'u32[144,128]{1,0:T(1,128)}', space=vmem, size = 0x12000, scoped, tag = 'internal scratch']
  #allocation2 [shape = 'f32[18,18,8]{2,1,0:T(8,128)}', space=vmem, size = 0x36000, scoped, tag = 'scratch operand']
  #allocation3 [shape = 'f32[18,18,4]{2,1,0:T(8,128)}', space=vmem, size = 0x36000, scoped, tag = 'scratch operand']
  %s0 = inlined_call_operand.vmem [shape: f32[2,16,16,4], index: 0, kind: input, shape index: {}]
  %s1 = inlined_call_operand.vmem [shape: f32[2,128,16], index: 1, kind: input, shape index: {}]
  %s2 = inlined_call_operand.vmem [shape: f32[16,8], index: 2, kind: input, shape index: {}]
  %s3 = inlined_call_operand.vmem [shape: f32[1,8], index: 3, kind: input, shape index: {}]
  %s4 = inlined_call_operand.vmem [shape: f32[3,3,8,4], index: 4, kind: input, shape index: {}]
  %s5 = inlined_call_operand.vmem [shape: f32[1,4], index: 5, kind: input, shape index: {}]
  %s6 = inlined_call_operand.vmem [shape: f32[3,3,4,4], index: 6, kind: input, shape index: {}]
  %s7 = inlined_call_operand.vmem [shape: f32[1,4], index: 7, kind: input, shape index: {}]
  %s8 = inlined_call_operand.vmem [shape: f32[2,4,256], index: 8, kind: output, shape index: {}]
  %s9 = sld [smem:[#allocation0]]
  $region65: #{_lambda_.1} parent=0
    _
  %s11 = ssub.s32 1, %s9
  %s12 = scalar_select 0, %s11, %s9
  loop: start=0, step=1, limit=4
  $region2: #{_lambda_.1} parent=0 // loop_pre_header
    _
  $region3: #{_lambda_.1} parent=0 // loop_header
    %s14 = sphi 0, %s18
    %p15 = scmp.ge.s32.totalorder %s14, 4
    %s24 = sphi 0, %s26
    %s27 = sphi 0, %s24
    %s28 = sphi 0, %s27
    %s44 = sphi 0, %s28
    %s50 = sphi 0, %s52
    %s53 = sphi 0, %s50
    %s54 = sphi 0, %s53
    %s70 = sphi 0, %s54
    %s74 = sphi 0, %s74
    %s76 = sphi 0, %s74
    %s77 = sphi 0, %s76
    %s91 = sphi 0, %s77
    %s95 = sphi 0, %s95
    %s97 = sphi 0, %s95
    %s98 = sphi 0, %s97
    %s112 = sphi 0, %s98
    %s116 = sphi 0, %s116
    %s118 = sphi 0, %s116
    %s119 = sphi 0, %s118
    %s133 = sphi 0, %s119
    %s137 = sphi 0, %s137
    %s139 = sphi 0, %s137
    %s140 = sphi 0, %s139
    %s154 = sphi 0, %s140
    %s158 = sphi 0, %s158
    %s160 = sphi 0, %s158
    %s161 = sphi 0, %s160
    %s175 = sphi 0, %s161
    %s179 = sphi 0, %s179
    %s181 = sphi 0, %s179
    %s182 = sphi 0, %s181
    %s196 = sphi 0, %s182
    %s202 = sphi 0, %s204
    %s205 = sphi 0, %s202
    %s206 = sphi 0, %s205
    %s222 = sphi 0, %s206
  $region4: #{_lambda_.1} parent=0 // loop_header_branch
    %17 = sbr.rel (%p15) target = $region8
  $region5: #{_lambda_.1} parent=0 // loop_body
    %s19 = ssub.s32 %s14, 1
    %s20 = ssub.s32 %s14, 2
    %s21 = sadd.s32 %s14, 1
    %s22 = ssub.s32 %s14, %s21
    %p23 = scmp.eq.s32.totalorder %s22, 0
    %s25 = sadd.s32 %s24, 1
    %s26 = scalar_select %p23, %s24, %s25
    %p29 = pneg %p23
    %p30 = scmp.eq.s32.totalorder %s14, 1
    %p31 = por %p29, %p30
    %p32 = scmp.ne.s32.totalorder %s24, %s27
    %p33 = scmp.eq.s32.totalorder %s14, 0
    %p34 = por %p32, %p33
    %p35 = scmp.ne.s32.totalorder %s24, %s27
    %p36 = scmp.eq.s32.totalorder %s19, 1
    %p37 = por %p35, %p36
    %p38 = scmp.ne.s32.totalorder %s27, %s28
    %p39 = scmp.eq.s32.totalorder %s19, 0
    %p40 = por %p38, %p39
    %p41 = scmp.ne.s32.totalorder %s27, %s28
    %p42 = scmp.eq.s32.totalorder %s20, 1
    %p43 = por %p41, %p42
    %p45 = scmp.ne.s32.totalorder %s28, %s44
    %p46 = scmp.eq.s32.totalorder %s20, 0
    %p47 = por %p45, %p46
    %s48 = ssub.s32 %s14, %s21
    %p49 = scmp.eq.s32.totalorder %s48, 0
    %s51 = sadd.s32 %s50, 1
    %s52 = scalar_select %p49, %s50, %s51
    %p55 = pneg %p49
    %p56 = scmp.eq.s32.totalorder %s14, 1
    %p57 = por %p55, %p56
    %p58 = scmp.ne.s32.totalorder %s50, %s53
    %p59 = scmp.eq.s32.totalorder %s14, 0
    %p60 = por %p58, %p59
    %p61 = scmp.ne.s32.totalorder %s50, %s53
    %p62 = scmp.eq.s32.totalorder %s19, 1
    %p63 = por %p61, %p62
    %p64 = scmp.ne.s32.totalorder %s53, %s54
    %p65 = scmp.eq.s32.totalorder %s19, 0
    %p66 = por %p64, %p65
    %p67 = scmp.ne.s32.totalorder %s53, %s54
    %p68 = scmp.eq.s32.totalorder %s20, 1
    %p69 = por %p67, %p68
    %p71 = scmp.ne.s32.totalorder %s54, %s70
    %p72 = scmp.eq.s32.totalorder %s20, 0
    %p73 = por %p71, %p72
    %s75 = sadd.s32 %s74, 1
    %p78 = scmp.eq.s32.totalorder %s14, 1
    %p79 = scmp.ne.s32.totalorder %s74, %s76
    %p80 = scmp.eq.s32.totalorder %s14, 0
    %p81 = por %p79, %p80
    %p82 = scmp.ne.s32.totalorder %s74, %s76
    %p83 = scmp.eq.s32.totalorder %s19, 1
    %p84 = por %p82, %p83
    %p85 = scmp.ne.s32.totalorder %s76, %s77
    %p86 = scmp.eq.s32.totalorder %s19, 0
    %p87 = por %p85, %p86
    %p88 = scmp.ne.s32.totalorder %s76, %s77
    %p89 = scmp.eq.s32.totalorder %s20, 1
    %p90 = por %p88, %p89
    %p92 = scmp.ne.s32.totalorder %s77, %s91
    %p93 = scmp.eq.s32.totalorder %s20, 0
    %p94 = por %p92, %p93
    %s96 = sadd.s32 %s95, 1
    %p99 = scmp.eq.s32.totalorder %s14, 1
    %p100 = scmp.ne.s32.totalorder %s95, %s97
    %p101 = scmp.eq.s32.totalorder %s14, 0
    %p102 = por %p100, %p101
    %p103 = scmp.ne.s32.totalorder %s95, %s97
    %p104 = scmp.eq.s32.totalorder %s19, 1
    %p105 = por %p103, %p104
    %p106 = scmp.ne.s32.totalorder %s97, %s98
    %p107 = scmp.eq.s32.totalorder %s19, 0
    %p108 = por %p106, %p107
    %p109 = scmp.ne.s32.totalorder %s97, %s98
    %p110 = scmp.eq.s32.totalorder %s20, 1
    %p111 = por %p109, %p110
    %p113 = scmp.ne.s32.totalorder %s98, %s112
    %p114 = scmp.eq.s32.totalorder %s20, 0
    %p115 = por %p113, %p114
    %s117 = sadd.s32 %s116, 1
    %p120 = scmp.eq.s32.totalorder %s14, 1
    %p121 = scmp.ne.s32.totalorder %s116, %s118
    %p122 = scmp.eq.s32.totalorder %s14, 0
    %p123 = por %p121, %p122
    %p124 = scmp.ne.s32.totalorder %s116, %s118
    %p125 = scmp.eq.s32.totalorder %s19, 1
    %p126 = por %p124, %p125
    %p127 = scmp.ne.s32.totalorder %s118, %s119
    %p128 = scmp.eq.s32.totalorder %s19, 0
    %p129 = por %p127, %p128
    %p130 = scmp.ne.s32.totalorder %s118, %s119
    %p131 = scmp.eq.s32.totalorder %s20, 1
    %p132 = por %p130, %p131
    %p134 = scmp.ne.s32.totalorder %s119, %s133
    %p135 = scmp.eq.s32.totalorder %s20, 0
    %p136 = por %p134, %p135
    %s138 = sadd.s32 %s137, 1
    %p141 = scmp.eq.s32.totalorder %s14, 1
    %p142 = scmp.ne.s32.totalorder %s137, %s139
    %p143 = scmp.eq.s32.totalorder %s14, 0
    %p144 = por %p142, %p143
    %p145 = scmp.ne.s32.totalorder %s137, %s139
    %p146 = scmp.eq.s32.totalorder %s19, 1
    %p147 = por %p145, %p146
    %p148 = scmp.ne.s32.totalorder %s139, %s140
    %p149 = scmp.eq.s32.totalorder %s19, 0
    %p150 = por %p148, %p149
    %p151 = scmp.ne.s32.totalorder %s139, %s140
    %p152 = scmp.eq.s32.totalorder %s20, 1
    %p153 = por %p151, %p152
    %p155 = scmp.ne.s32.totalorder %s140, %s154
    %p156 = scmp.eq.s32.totalorder %s20, 0
    %p157 = por %p155, %p156
    %s159 = sadd.s32 %s158, 1
    %p162 = scmp.eq.s32.totalorder %s14, 1
    %p163 = scmp.ne.s32.totalorder %s158, %s160
    %p164 = scmp.eq.s32.totalorder %s14, 0
    %p165 = por %p163, %p164
    %p166 = scmp.ne.s32.totalorder %s158, %s160
    %p167 = scmp.eq.s32.totalorder %s19, 1
    %p168 = por %p166, %p167
    %p169 = scmp.ne.s32.totalorder %s160, %s161
    %p170 = scmp.eq.s32.totalorder %s19, 0
    %p171 = por %p169, %p170
    %p172 = scmp.ne.s32.totalorder %s160, %s161
    %p173 = scmp.eq.s32.totalorder %s20, 1
    %p174 = por %p172, %p173
    %p176 = scmp.ne.s32.totalorder %s161, %s175
    %p177 = scmp.eq.s32.totalorder %s20, 0
    %p178 = por %p176, %p177
    %s180 = sadd.s32 %s179, 1
    %p183 = scmp.eq.s32.totalorder %s14, 1
    %p184 = scmp.ne.s32.totalorder %s179, %s181
    %p185 = scmp.eq.s32.totalorder %s14, 0
    %p186 = por %p184, %p185
    %p187 = scmp.ne.s32.totalorder %s179, %s181
    %p188 = scmp.eq.s32.totalorder %s19, 1
    %p189 = por %p187, %p188
    %p190 = scmp.ne.s32.totalorder %s181, %s182
    %p191 = scmp.eq.s32.totalorder %s19, 0
    %p192 = por %p190, %p191
    %p193 = scmp.ne.s32.totalorder %s181, %s182
    %p194 = scmp.eq.s32.totalorder %s20, 1
    %p195 = por %p193, %p194
    %p197 = scmp.ne.s32.totalorder %s182, %s196
    %p198 = scmp.eq.s32.totalorder %s20, 0
    %p199 = por %p197, %p198
    %s200 = ssub.s32 %s14, %s21
    %p201 = scmp.eq.s32.totalorder %s200, 0
    %s203 = sadd.s32 %s202, 1
    %s204 = scalar_select %p201, %s202, %s203
    %p207 = pneg %p201
    %p208 = scmp.eq.s32.totalorder %s14, 1
    %p209 = por %p207, %p208
    %p210 = scmp.ne.s32.totalorder %s202, %s205
    %p211 = scmp.eq.s32.totalorder %s14, 0
    %p212 = por %p210, %p211
    %p213 = scmp.ne.s32.totalorder %s202, %s205
    %p214 = scmp.eq.s32.totalorder %s19, 1
    %p215 = por %p213, %p214
    %p216 = scmp.ne.s32.totalorder %s205, %s206
    %p217 = scmp.eq.s32.totalorder %s19, 0
    %p218 = por %p216, %p217
    %p219 = scmp.ne.s32.totalorder %s205, %s206
    %p220 = scmp.eq.s32.totalorder %s20, 1
    %p221 = por %p219, %p220
    %p223 = scmp.ne.s32.totalorder %s206, %s222
    %p224 = scmp.eq.s32.totalorder %s20, 0
    %p225 = por %p223, %p224
    %p226 = scmp.le.s32.totalorder 1, %s14
    %p227 = scmp.lt.s32.totalorder %s14, 3
    %p228 = pnand %p226, %p227
    %p229 = pneg %p228
    // Predicated region
    $region9: #{_lambda_.1} parent=5 // pred_check
      _
    $region10: #{_lambda_.1} parent=5 // pred_check_branch
      %231 = sbr.rel (%p228) target = $region12
    $region11: #{_lambda_.1} parent=5 // pred_region
      %s232 = ssub.s32 %s14, 1
      // Predicated region
      $region13: #{_lambda_.1} parent=11 // pred_check
        %p233 = pneg %p87
      $region14: #{_lambda_.1} parent=11 // pred_check_branch
        %235 = sbr.rel (%p233) target = $region16
      $region15: #{_lambda_.1} parent=11 // pred_region
        _
      $region16: #{_lambda_.1} parent=11 // pred_fallthru
        _
      // Predicated region
      $region17: #{_lambda_.1} parent=11 // pred_check
        %p236 = pneg %p108
      $region18: #{_lambda_.1} parent=11 // pred_check_branch
        %238 = sbr.rel (%p236) target = $region20
      $region19: #{_lambda_.1} parent=11 // pred_region
        _
      $region20: #{_lambda_.1} parent=11 // pred_fallthru
        _
      // Predicated region
      $region21: #{_lambda_.1} parent=11 // pred_check
        %p239 = pneg %p129
      $region22: #{_lambda_.1} parent=11 // pred_check_branch
        %241 = sbr.rel (%p239) target = $region24
      $region23: #{_lambda_.1} parent=11 // pred_region
        _
      $region24: #{_lambda_.1} parent=11 // pred_fallthru
        _
      // Predicated region
      $region25: #{_lambda_.1} parent=11 // pred_check
        %p242 = pneg %p150
      $region26: #{_lambda_.1} parent=11 // pred_check_branch
        %244 = sbr.rel (%p242) target = $region28
      $region27: #{_lambda_.1} parent=11 // pred_region
        _
      $region28: #{_lambda_.1} parent=11 // pred_fallthru
        _
      // Predicated region
      $region29: #{_lambda_.1} parent=11 // pred_check
        %p245 = pneg %p171
      $region30: #{_lambda_.1} parent=11 // pred_check_branch
        %247 = sbr.rel (%p245) target = $region32
      $region31: #{_lambda_.1} parent=11 // pred_region
        _
      $region32: #{_lambda_.1} parent=11 // pred_fallthru
        _
      // Predicated region
      $region33: #{_lambda_.1} parent=11 // pred_check
        %p248 = pneg %p192
      $region34: #{_lambda_.1} parent=11 // pred_check_branch
        %250 = sbr.rel (%p248) target = $region36
      $region35: #{_lambda_.1} parent=11 // pred_region
        _
      $region36: #{_lambda_.1} parent=11 // pred_fallthru
        _
    $region12: #{_lambda_.1} parent=5 // pred_fallthru
      _
    %p251 = scmp.lt.s32.totalorder %s14, 2
    // Predicated region
    $region37: #{_lambda_.1} parent=5 // pred_check
      %p252 = pneg %p251
    $region38: #{_lambda_.1} parent=5 // pred_check_branch
      %254 = sbr.rel (%p252) target = $region40
    $region39: #{_lambda_.1} parent=5 // pred_region
      // Predicated region
      $region41: #{_lambda_.1} parent=39 // pred_check
        %p255 = pneg %p34
      $region42: #{_lambda_.1} parent=39 // pred_check_branch
        %257 = sbr.rel (%p255) target = $region44
      $region43: #{_lambda_.1} parent=39 // pred_region
        %p258 = scmp.lt.s32.totalorder %s14, 1
        %s259 = scalar_select %p258, %s14, 1
        %s260 = smul.addr %s259, 32
        %s261 = smul.addr %s260, 8
        %s262 = scalar_lea.vmem %s0, %s261
      $region44: #{_lambda_.1} parent=39 // pred_fallthru
        _
      // Predicated region
      $region45: #{_lambda_.1} parent=39 // pred_check
        %p263 = pneg %p60
      $region46: #{_lambda_.1} parent=39 // pred_check_branch
        %265 = sbr.rel (%p263) target = $region48
      $region47: #{_lambda_.1} parent=39 // pred_region
        %p266 = scmp.lt.s32.totalorder %s14, 1
        %s267 = scalar_select %p266, %s14, 1
        %s268 = smul.addr %s267, 16
        %s269 = smul.addr %s268, 8
        %s270 = scalar_lea.vmem %s1, %s269
      $region48: #{_lambda_.1} parent=39 // pred_fallthru
        _
    $region40: #{_lambda_.1} parent=5 // pred_fallthru
      _
    %p271 = scmp.le.s32.totalorder 1, %s14
    %p272 = scmp.lt.s32.totalorder %s14, 3
    %p273 = pnand %p271, %p272
    %p274 = pneg %p273
    // Predicated region
    $region49: #{_lambda_.1} parent=5 // pred_check
      _
    $region50: #{_lambda_.1} parent=5 // pred_check_branch
      %276 = sbr.rel (%p273) target = $region52
    $region51: #{_lambda_.1} parent=5 // pred_region
      %s277 = ssub.s32 %s14, 1
      %p278 = scmp.lt.s32.totalorder %s19, 1
      %s279 = scalar_select %p278, %s19, 1
      %s280 = smul.addr %s279, 32
      %s281 = smul.addr %s280, 8
      %s282 = scalar_lea.vmem %s0, %s281
      %p283 = pneg %p40
      %p284 = pneg %p37
      %p285 = scmp.lt.s32.totalorder %s19, 1
      %s286 = scalar_select %p285, %s19, 1
      %s287 = smul.addr %s286, 16
      %s288 = smul.addr %s287, 8
      %s289 = scalar_lea.vmem %s1, %s288
      %p290 = pneg %p66
      %p291 = pneg %p63
      %p292 = pneg %p87
      %p293 = pneg %p84
      %p294 = pneg %p108
      %p295 = pneg %p105
      %p296 = pneg %p129
      %p297 = pneg %p126
      %p298 = pneg %p150
      %p299 = pneg %p147
      %p300 = pneg %p171
      %p301 = pneg %p168
      %p302 = pneg %p192
      %p303 = pneg %p189
      %p304 = pneg %p218
      %p305 = pneg %p215
      %p306 = scmp.lt.s32.totalorder %s19, 1
      %s307 = scalar_select %p306, %s19, 1
      %s308 = smul.addr %s307, 2
      %s309 = smul.addr %s308, 4
      %s310 = scalar_lea.vmem %s8, %s309
      %p311 = scmp.lt.s32.totalorder %s19, 1
      %s312 = scalar_select %p311, %s19, 1
      %s313 = smul.addr %s312, 32
      %s314 = smul.addr %s313, 8
      %s315 = scalar_lea.vmem %s0, %s314
      %p316 = scmp.lt.s32.totalorder %s19, 1
      %s317 = scalar_select %p316, %s19, 1
      %s318 = smul.addr %s317, 16
      %s319 = smul.addr %s318, 8
      %s320 = scalar_lea.vmem %s1, %s319
      %p321 = scmp.lt.s32.totalorder %s19, 1
      %s322 = scalar_select %p321, %s19, 1
      %s323 = smul.addr %s322, 2
      %s324 = smul.addr %s323, 4
      %s325 = scalar_lea.vmem %s8, %s324
      %vm326 = vcmask 64512
      %327 = vst.msk [vmem:[#allocation2] sm:$0xff] %vm326, 0.0
      %328 = vst.msk [vmem:[#allocation2 + $0x8] sm:$0xff] %vm326, 0.0
      %vm329 = vcmask 58368
      %330 = vst.msk [vmem:[#allocation2 + $0x10] sm:$0x3] %vm329, 0.0
      %331 = vst.msk [vmem:[#allocation2 + $0x18] sm:$0xff] %vm326, 0.0
      %332 = vst.msk [vmem:[#allocation2 + $0x20] sm:$0xff] %vm326, 0.0
      %333 = vst.msk [vmem:[#allocation2 + $0x28] sm:$0x3] %vm329, 0.0
      %334 = vst.msk [vmem:[#allocation2 + $0x30] sm:$0xff] %vm326, 0.0
      %335 = vst.msk [vmem:[#allocation2 + $0x38] sm:$0xff] %vm326, 0.0
      %336 = vst.msk [vmem:[#allocation2 + $0x40] sm:$0x3] %vm329, 0.0
      %337 = vst.msk [vmem:[#allocation2 + $0x48] sm:$0xff] %vm326, 0.0
      %338 = vst.msk [vmem:[#allocation2 + $0x50] sm:$0xff] %vm326, 0.0
      %339 = vst.msk [vmem:[#allocation2 + $0x58] sm:$0x3] %vm329, 0.0
      %340 = vst.msk [vmem:[#allocation2 + $0x60] sm:$0xff] %vm326, 0.0
      %341 = vst.msk [vmem:[#allocation2 + $0x68] sm:$0xff] %vm326, 0.0
      %342 = vst.msk [vmem:[#allocation2 + $0x70] sm:$0x3] %vm329, 0.0
      %343 = vst.msk [vmem:[#allocation2 + $0x78] sm:$0xff] %vm326, 0.0
      %344 = vst.msk [vmem:[#allocation2 + $0x80] sm:$0xff] %vm326, 0.0
      %345 = vst.msk [vmem:[#allocation2 + $0x88] sm:$0x3] %vm329, 0.0
      %346 = vst.msk [vmem:[#allocation2 + $0x90] sm:$0xff] %vm326, 0.0
      %347 = vst.msk [vmem:[#allocation2 + $0x98] sm:$0xff] %vm326, 0.0
      %348 = vst.msk [vmem:[#allocation2 + $0xa0] sm:$0x3] %vm329, 0.0
      %349 = vst.msk [vmem:[#allocation2 + $0xa8] sm:$0xff] %vm326, 0.0
      %350 = vst.msk [vmem:[#allocation2 + $0xb0] sm:$0xff] %vm326, 0.0
      %351 = vst.msk [vmem:[#allocation2 + $0xb8] sm:$0x3] %vm329, 0.0
      %352 = vst.msk [vmem:[#allocation2 + $0xc0] sm:$0xff] %vm326, 0.0
      %353 = vst.msk [vmem:[#allocation2 + $0xc8] sm:$0xff] %vm326, 0.0
      %354 = vst.msk [vmem:[#allocation2 + $0xd0] sm:$0x3] %vm329, 0.0
      %355 = vst.msk [vmem:[#allocation2 + $0xd8] sm:$0xff] %vm326, 0.0
      %356 = vst.msk [vmem:[#allocation2 + $0xe0] sm:$0xff] %vm326, 0.0
      %357 = vst.msk [vmem:[#allocation2 + $0xe8] sm:$0x3] %vm329, 0.0
      %358 = vst.msk [vmem:[#allocation2 + $0xf0] sm:$0xff] %vm326, 0.0
      %359 = vst.msk [vmem:[#allocation2 + $0xf8] sm:$0xff] %vm326, 0.0
      %360 = vst.msk [vmem:[#allocation2 + $0x100] sm:$0x3] %vm329, 0.0
      %361 = vst.msk [vmem:[#allocation2 + $0x108] sm:$0xff] %vm326, 0.0
      %362 = vst.msk [vmem:[#allocation2 + $0x110] sm:$0xff] %vm326, 0.0
      %363 = vst.msk [vmem:[#allocation2 + $0x118] sm:$0x3] %vm329, 0.0
      %364 = vst.msk [vmem:[#allocation2 + $0x120] sm:$0xff] %vm326, 0.0
      %365 = vst.msk [vmem:[#allocation2 + $0x128] sm:$0xff] %vm326, 0.0
      %366 = vst.msk [vmem:[#allocation2 + $0x130] sm:$0x3] %vm329, 0.0
      %367 = vst.msk [vmem:[#allocation2 + $0x138] sm:$0xff] %vm326, 0.0
      %368 = vst.msk [vmem:[#allocation2 + $0x140] sm:$0xff] %vm326, 0.0
      %369 = vst.msk [vmem:[#allocation2 + $0x148] sm:$0x3] %vm329, 0.0
      %370 = vst.msk [vmem:[#allocation2 + $0x150] sm:$0xff] %vm326, 0.0
      %371 = vst.msk [vmem:[#allocation2 + $0x158] sm:$0xff] %vm326, 0.0
      %372 = vst.msk [vmem:[#allocation2 + $0x160] sm:$0x3] %vm329, 0.0
      %373 = vst.msk [vmem:[#allocation2 + $0x168] sm:$0xff] %vm326, 0.0
      %374 = vst.msk [vmem:[#allocation2 + $0x170] sm:$0xff] %vm326, 0.0
      %375 = vst.msk [vmem:[#allocation2 + $0x178] sm:$0x3] %vm329, 0.0
      %376 = vst.msk [vmem:[#allocation2 + $0x180] sm:$0xff] %vm326, 0.0
      %377 = vst.msk [vmem:[#allocation2 + $0x188] sm:$0xff] %vm326, 0.0
      %378 = vst.msk [vmem:[#allocation2 + $0x190] sm:$0x3] %vm329, 0.0
      %379 = vst.msk [vmem:[#allocation2 + $0x198] sm:$0xff] %vm326, 0.0
      %380 = vst.msk [vmem:[#allocation2 + $0x1a0] sm:$0xff] %vm326, 0.0
      %381 = vst.msk [vmem:[#allocation2 + $0x1a8] sm:$0x3] %vm329, 0.0
      %vm382 = vcmask 31744
      %383 = vst.msk [vmem:[#allocation3] sm:$0xff] %vm382, 0.0
      %384 = vst.msk [vmem:[#allocation3 + $0x8] sm:$0xff] %vm382, 0.0
      %vm385 = vcmask 25600
      %386 = vst.msk [vmem:[#allocation3 + $0x10] sm:$0x3] %vm385, 0.0
      %387 = vst.msk [vmem:[#allocation3 + $0x18] sm:$0xff] %vm382, 0.0
      %388 = vst.msk [vmem:[#allocation3 + $0x20] sm:$0xff] %vm382, 0.0
      %389 = vst.msk [vmem:[#allocation3 + $0x28] sm:$0x3] %vm385, 0.0
      %390 = vst.msk [vmem:[#allocation3 + $0x30] sm:$0xff] %vm382, 0.0
      %391 = vst.msk [vmem:[#allocation3 + $0x38] sm:$0xff] %vm382, 0.0
      %392 = vst.msk [vmem:[#allocation3 + $0x40] sm:$0x3] %vm385, 0.0
      %393 = vst.msk [vmem:[#allocation3 + $0x48] sm:$0xff] %vm382, 0.0
      %394 = vst.msk [vmem:[#allocation3 + $0x50] sm:$0xff] %vm382, 0.0
      %395 = vst.msk [vmem:[#allocation3 + $0x58] sm:$0x3] %vm385, 0.0
      %396 = vst.msk [vmem:[#allocation3 + $0x60] sm:$0xff] %vm382, 0.0
      %397 = vst.msk [vmem:[#allocation3 + $0x68] sm:$0xff] %vm382, 0.0
      %398 = vst.msk [vmem:[#allocation3 + $0x70] sm:$0x3] %vm385, 0.0
      %399 = vst.msk [vmem:[#allocation3 + $0x78] sm:$0xff] %vm382, 0.0
      %400 = vst.msk [vmem:[#allocation3 + $0x80] sm:$0xff] %vm382, 0.0
      %401 = vst.msk [vmem:[#allocation3 + $0x88] sm:$0x3] %vm385, 0.0
      %402 = vst.msk [vmem:[#allocation3 + $0x90] sm:$0xff] %vm382, 0.0
      %403 = vst.msk [vmem:[#allocation3 + $0x98] sm:$0xff] %vm382, 0.0
      %404 = vst.msk [vmem:[#allocation3 + $0xa0] sm:$0x3] %vm385, 0.0
      %405 = vst.msk [vmem:[#allocation3 + $0xa8] sm:$0xff] %vm382, 0.0
      %406 = vst.msk [vmem:[#allocation3 + $0xb0] sm:$0xff] %vm382, 0.0
      %407 = vst.msk [vmem:[#allocation3 + $0xb8] sm:$0x3] %vm385, 0.0
      %408 = vst.msk [vmem:[#allocation3 + $0xc0] sm:$0xff] %vm382, 0.0
      %409 = vst.msk [vmem:[#allocation3 + $0xc8] sm:$0xff] %vm382, 0.0
      %410 = vst.msk [vmem:[#allocation3 + $0xd0] sm:$0x3] %vm385, 0.0
      %411 = vst.msk [vmem:[#allocation3 + $0xd8] sm:$0xff] %vm382, 0.0
      %412 = vst.msk [vmem:[#allocation3 + $0xe0] sm:$0xff] %vm382, 0.0
      %413 = vst.msk [vmem:[#allocation3 + $0xe8] sm:$0x3] %vm385, 0.0
      %414 = vst.msk [vmem:[#allocation3 + $0xf0] sm:$0xff] %vm382, 0.0
      %415 = vst.msk [vmem:[#allocation3 + $0xf8] sm:$0xff] %vm382, 0.0
      %416 = vst.msk [vmem:[#allocation3 + $0x100] sm:$0x3] %vm385, 0.0
      %417 = vst.msk [vmem:[#allocation3 + $0x108] sm:$0xff] %vm382, 0.0
      %418 = vst.msk [vmem:[#allocation3 + $0x110] sm:$0xff] %vm382, 0.0
      %419 = vst.msk [vmem:[#allocation3 + $0x118] sm:$0x3] %vm385, 0.0
      %420 = vst.msk [vmem:[#allocation3 + $0x120] sm:$0xff] %vm382, 0.0
      %421 = vst.msk [vmem:[#allocation3 + $0x128] sm:$0xff] %vm382, 0.0
      %422 = vst.msk [vmem:[#allocation3 + $0x130] sm:$0x3] %vm385, 0.0
      %423 = vst.msk [vmem:[#allocation3 + $0x138] sm:$0xff] %vm382, 0.0
      %424 = vst.msk [vmem:[#allocation3 + $0x140] sm:$0xff] %vm382, 0.0
      %425 = vst.msk [vmem:[#allocation3 + $0x148] sm:$0x3] %vm385, 0.0
      %426 = vst.msk [vmem:[#allocation3 + $0x150] sm:$0xff] %vm382, 0.0
      %427 = vst.msk [vmem:[#allocation3 + $0x158] sm:$0xff] %vm382, 0.0
      %428 = vst.msk [vmem:[#allocation3 + $0x160] sm:$0x3] %vm385, 0.0
      %429 = vst.msk [vmem:[#allocation3 + $0x168] sm:$0xff] %vm382, 0.0
      %430 = vst.msk [vmem:[#allocation3 + $0x170] sm:$0xff] %vm382, 0.0
      %431 = vst.msk [vmem:[#allocation3 + $0x178] sm:$0x3] %vm385, 0.0
      %432 = vst.msk [vmem:[#allocation3 + $0x180] sm:$0xff] %vm382, 0.0
      %433 = vst.msk [vmem:[#allocation3 + $0x188] sm:$0xff] %vm382, 0.0
      %434 = vst.msk [vmem:[#allocation3 + $0x190] sm:$0x3] %vm385, 0.0
      %435 = vst.msk [vmem:[#allocation3 + $0x198] sm:$0xff] %vm382, 0.0
      %436 = vst.msk [vmem:[#allocation3 + $0x1a0] sm:$0xff] %vm382, 0.0
      %437 = vst.msk [vmem:[#allocation3 + $0x1a8] sm:$0x3] %vm385, 0.0
      %v438 = vld [vmem:[%s315] sm:$0xff]
      %v439 = vld [vmem:[%s315 + $0x8] sm:$0xff]
      %v440 = vld [vmem:[%s315 + $0x10] sm:$0xff]
      %v441 = vld [vmem:[%s315 + $0x18] sm:$0xff]
      %v442 = vld [vmem:[%s315 + $0x20] sm:$0xff]
      %v443 = vld [vmem:[%s315 + $0x28] sm:$0xff]
      %v444 = vld [vmem:[%s315 + $0x30] sm:$0xff]
      %v445 = vld [vmem:[%s315 + $0x38] sm:$0xff]
      %v446 = vld [vmem:[%s315 + $0x40] sm:$0xff]
      %v447 = vld [vmem:[%s315 + $0x48] sm:$0xff]
      %v448 = vld [vmem:[%s315 + $0x50] sm:$0xff]
      %v449 = vld [vmem:[%s315 + $0x58] sm:$0xff]
      %v450 = vld [vmem:[%s315 + $0x60] sm:$0xff]
      %v451 = vld [vmem:[%s315 + $0x68] sm:$0xff]
      %v452 = vld [vmem:[%s315 + $0x70] sm:$0xff]
      %v453 = vld [vmem:[%s315 + $0x78] sm:$0xff]
      %v454 = vld [vmem:[%s315 + $0x80] sm:$0xff]
      %v455 = vld [vmem:[%s315 + $0x88] sm:$0xff]
      %v456 = vld [vmem:[%s315 + $0x90] sm:$0xff]
      %v457 = vld [vmem:[%s315 + $0x98] sm:$0xff]
      %v458 = vld [vmem:[%s315 + $0xa0] sm:$0xff]
      %v459 = vld [vmem:[%s315 + $0xa8] sm:$0xff]
      %v460 = vld [vmem:[%s315 + $0xb0] sm:$0xff]
      %v461 = vld [vmem:[%s315 + $0xb8] sm:$0xff]
      %v462 = vld [vmem:[%s315 + $0xc0] sm:$0xff]
      %v463 = vld [vmem:[%s315 + $0xc8] sm:$0xff]
      %v464 = vld [vmem:[%s315 + $0xd0] sm:$0xff]
      %v465 = vld [vmem:[%s315 + $0xd8] sm:$0xff]
      %v466 = vld [vmem:[%s315 + $0xe0] sm:$0xff]
      %v467 = vld [vmem:[%s315 + $0xe8] sm:$0xff]
      %v468 = vld [vmem:[%s315 + $0xf0] sm:$0xff]
      %v469 = vld [vmem:[%s315 + $0xf8] sm:$0xff]
      %s470 = scalar_lea.vmem [#allocation2], 24
      %471 = vst.msk [vmem:[%s470 + $0x1] sm:$0xff] %vm382, %v438
      %472 = vst.msk [vmem:[%s470 + $0x9] sm:$0xff] %vm382, %v439
      %473 = vst.msk [vmem:[%s470 + $0x19] sm:$0xff] %vm382, %v440
      %474 = vst.msk [vmem:[%s470 + $0x21] sm:$0xff] %vm382, %v441
      %475 = vst.msk [vmem:[%s470 + $0x31] sm:$0xff] %vm382, %v442
      %476 = vst.msk [vmem:[%s470 + $0x39] sm:$0xff] %vm382, %v443
      %477 = vst.msk [vmem:[%s470 + $0x49] sm:$0xff] %vm382, %v444
      %478 = vst.msk [vmem:[%s470 + $0x51] sm:$0xff] %vm382, %v445
      %479 = vst.msk [vmem:[%s470 + $0x61] sm:$0xff] %vm382, %v446
      %480 = vst.msk [vmem:[%s470 + $0x69] sm:$0xff] %vm382, %v447
      %481 = vst.msk [vmem:[%s470 + $0x79] sm:$0xff] %vm382, %v448
      %482 = vst.msk [vmem:[%s470 + $0x81] sm:$0xff] %vm382, %v449
      %483 = vst.msk [vmem:[%s470 + $0x91] sm:$0xff] %vm382, %v450
      %484 = vst.msk [vmem:[%s470 + $0x99] sm:$0xff] %vm382, %v451
      %485 = vst.msk [vmem:[%s470 + $0xa9] sm:$0xff] %vm382, %v452
      %486 = vst.msk [vmem:[%s470 + $0xb1] sm:$0xff] %vm382, %v453
      %487 = vst.msk [vmem:[%s470 + $0xc1] sm:$0xff] %vm382, %v454
      %488 = vst.msk [vmem:[%s470 + $0xc9] sm:$0xff] %vm382, %v455
      %489 = vst.msk [vmem:[%s470 + $0xd9] sm:$0xff] %vm382, %v456
      %490 = vst.msk [vmem:[%s470 + $0xe1] sm:$0xff] %vm382, %v457
      %491 = vst.msk [vmem:[%s470 + $0xf1] sm:$0xff] %vm382, %v458
      %492 = vst.msk [vmem:[%s470 + $0xf9] sm:$0xff] %vm382, %v459
      %493 = vst.msk [vmem:[%s470 + $0x109] sm:$0xff] %vm382, %v460
      %494 = vst.msk [vmem:[%s470 + $0x111] sm:$0xff] %vm382, %v461
      %495 = vst.msk [vmem:[%s470 + $0x121] sm:$0xff] %vm382, %v462
      %496 = vst.msk [vmem:[%s470 + $0x129] sm:$0xff] %vm382, %v463
      %497 = vst.msk [vmem:[%s470 + $0x139] sm:$0xff] %vm382, %v464
      %498 = vst.msk [vmem:[%s470 + $0x141] sm:$0xff] %vm382, %v465
      %499 = vst.msk [vmem:[%s470 + $0x151] sm:$0xff] %vm382, %v466
      %500 = vst.msk [vmem:[%s470 + $0x159] sm:$0xff] %vm382, %v467
      %501 = vst.msk [vmem:[%s470 + $0x169] sm:$0xff] %vm382, %v468
      %502 = vst.msk [vmem:[%s470 + $0x171] sm:$0xff] %vm382, %v469
      %v503 = vld [vmem:[%s320] sm:$0xff]
      %v504 = vld [vmem:[%s320 + $0x8] sm:$0xff]
      %v505 = vld [vmem:[%s320 + $0x10] sm:$0xff]
      %v506 = vld [vmem:[%s320 + $0x18] sm:$0xff]
      %v507 = vld [vmem:[%s320 + $0x20] sm:$0xff]
      %v508 = vld [vmem:[%s320 + $0x28] sm:$0xff]
      %v509 = vld [vmem:[%s320 + $0x30] sm:$0xff]
      %v510 = vld [vmem:[%s320 + $0x38] sm:$0xff]
      %v511 = vld [vmem:[%s320 + $0x40] sm:$0xff]
      %v512 = vld [vmem:[%s320 + $0x48] sm:$0xff]
      %v513 = vld [vmem:[%s320 + $0x50] sm:$0xff]
      %v514 = vld [vmem:[%s320 + $0x58] sm:$0xff]
      %v515 = vld [vmem:[%s320 + $0x60] sm:$0xff]
      %v516 = vld [vmem:[%s320 + $0x68] sm:$0xff]
      %v517 = vld [vmem:[%s320 + $0x70] sm:$0xff]
      %v518 = vld [vmem:[%s320 + $0x78] sm:$0xff]
      %v519 = vld [vmem:[%s2] sm:$0xff]
      %v520 = vld [vmem:[%s2 + $0x8] sm:$0xff]
      %v521 = vld [vmem:[%s3] sm:$0x1]
      %v523 = vlaneseq
      %v524 = vshrl.u32 %v523, 7
      %v525 = vsub.s32 0, %v524
      %v526 = vrot.slane %v521, %v525
      %vm528 = vcmask 130048
      %v530 = vsel %vm528, %v503, 0
      %v533 = vsel %vm528, %v504, 0
      %v536 = vsel %vm528, %v505, 0
      %v539 = vsel %vm528, %v506, 0
      %v542 = vsel %vm528, %v507, 0
      %v545 = vsel %vm528, %v508, 0
      %v548 = vsel %vm528, %v509, 0
      %v551 = vsel %vm528, %v510, 0
      %v554 = vsel %vm528, %v511, 0
      %v557 = vsel %vm528, %v512, 0
      %v560 = vsel %vm528, %v513, 0
      %v563 = vsel %vm528, %v514, 0
      %v566 = vsel %vm528, %v515, 0
      %v569 = vsel %vm528, %v516, 0
      %v572 = vsel %vm528, %v517, 0
      %v575 = vsel %vm528, %v518, 0
      %577 = vmatprep.subr.mxu0 0.0
      %578 = vmatpush1.msra.mxu0 %v519
      %579 = vmatprep.subr.mxu0 0.0
      %580 = vmatpush1.msra.mxu0 %v520
      %581 = vmatprep.subr.mxu0 0.0
      %582 = vmatpush1.msra.mxu0 0.0
      %583 = vmatprep.subr.mxu0 0.0
      %584 = vmatpush1.msra.mxu0 0.0
      %585 = vmatprep.subr.mxu0 0.0
      %586 = vmatpush1.msra.mxu0 0.0
      %587 = vmatprep.subr.mxu0 0.0
      %588 = vmatpush1.msra.mxu0 0.0
      %589 = vmatprep.subr.mxu0 0.0
      %590 = vmatpush1.msra.mxu0 0.0
      %591 = vmatprep.subr.mxu0 0.0
      %592 = vmatpush1.msra.mxu0 0.0
      %593 = vmatprep.subr.mxu0 0.0
      %594 = vmatpush1.msra.mxu0 0.0
      %595 = vmatprep.subr.mxu0 0.0
      %596 = vmatpush1.msra.mxu0 0.0
      %597 = vmatprep.subr.mxu0 0.0
      %598 = vmatpush1.msra.mxu0 0.0
      %599 = vmatprep.subr.mxu0 0.0
      %600 = vmatpush1.msra.mxu0 0.0
      %601 = vmatprep.subr.mxu0 0.0
      %602 = vmatpush1.msra.mxu0 0.0
      %603 = vmatprep.subr.mxu0 0.0
      %604 = vmatpush1.msra.mxu0 0.0
      %605 = vmatprep.subr.mxu0 0.0
      %606 = vmatpush1.msra.mxu0 0.0
      %607 = vmatprep.subr.mxu0 0.0
      %608 = vmatpush1.msra.mxu0 0.0
      %609 = vmatprep.subr.mxu0 0.0
      %610 = vmatpush1.msra.mxu0 0.0
      %611 = vmatprep.subr.mxu0 0.0
      %612 = vmatpush1.msra.mxu0 0.0
      %613 = vmatprep.subr.mxu0 0.0
      %614 = vmatpush1.msra.mxu0 0.0
      %615 = vmatprep.subr.mxu0 0.0
      %616 = vmatpush1.msra.mxu0 0.0
      %617 = vmatprep.subr.mxu0 0.0
      %618 = vmatpush1.msra.mxu0 0.0
      %619 = vmatprep.subr.mxu0 0.0
      %620 = vmatpush1.msra.mxu0 0.0
      %621 = vmatprep.subr.mxu0 0.0
      %622 = vmatpush1.msra.mxu0 0.0
      %623 = vmatprep.subr.mxu0 0.0
      %624 = vmatpush1.msra.mxu0 0.0
      %625 = vmatprep.subr.mxu0 0.0
      %626 = vmatpush1.msra.mxu0 0.0
      %627 = vmatprep.subr.mxu0 0.0
      %628 = vmatpush1.msra.mxu0 0.0
      %629 = vmatprep.subr.mxu0 0.0
      %630 = vmatpush1.msra.mxu0 0.0
      %631 = vmatprep.subr.mxu0 0.0
      %632 = vmatpush1.msra.mxu0 0.0
      %633 = vmatprep.subr.mxu0 0.0
      %634 = vmatpush1.msra.mxu0 0.0
      %635 = vmatprep.subr.mxu0 0.0
      %636 = vmatpush1.msra.mxu0 0.0
      %637 = vmatprep.subr.mxu0 0.0
      %638 = vmatpush1.msra.mxu0 0.0
      %639 = vmatprep.subr.mxu0 0.0
      %640 = vmatpush1.msra.mxu0 0.0
      %641 = vmatprep.mubr.f32.mxu0 0.0
      %642 = vmatmul.mubr.f32.gmra.mrb[0].mxu0 %v530
      %v643 = vpop.f32.mrb[0].mxu0
      %v644 = vadd.f32 %v526, %v643
      %v645 = vpop.f32.mrb[0].mxu0
      %646 = vmatprep.mubr.f32.mxu0 0.0
      %647 = vmatmul.mubr.f32.gmra.mrb[0].mxu0 %v533
      %v648 = vpop.f32.mrb[0].mxu0
      %v649 = vadd.f32 %v526, %v648
      %v650 = vpop.f32.mrb[0].mxu0
      %651 = vmatprep.mubr.f32.mxu0 0.0
      %652 = vmatmul.mubr.f32.gmra.mrb[0].mxu0 %v536
      %v653 = vpop.f32.mrb[0].mxu0
      %v654 = vadd.f32 %v526, %v653
      %v655 = vpop.f32.mrb[0].mxu0
      %656 = vmatprep.mubr.f32.mxu0 0.0
      %657 = vmatmul.mubr.f32.gmra.mrb[0].mxu0 %v539
      %v658 = vpop.f32.mrb[0].mxu0
      %v659 = vadd.f32 %v526, %v658
      %v660 = vpop.f32.mrb[0].mxu0
      %661 = vmatprep.mubr.f32.mxu0 0.0
      %662 = vmatmul.mubr.f32.gmra.mrb[0].mxu0 %v542
      %v663 = vpop.f32.mrb[0].mxu0
      %v664 = vadd.f32 %v526, %v663
      %v665 = vpop.f32.mrb[0].mxu0
      %666 = vmatprep.mubr.f32.mxu0 0.0
      %667 = vmatmul.mubr.f32.gmra.mrb[0].mxu0 %v545
      %v668 = vpop.f32.mrb[0].mxu0
      %v669 = vadd.f32 %v526, %v668
      %v670 = vpop.f32.mrb[0].mxu0
      %671 = vmatprep.mubr.f32.mxu0 0.0
      %672 = vmatmul.mubr.f32.gmra.mrb[0].mxu0 %v548
      %v673 = vpop.f32.mrb[0].mxu0
      %v674 = vadd.f32 %v526, %v673
      %v675 = vpop.f32.mrb[0].mxu0
      %676 = vmatprep.mubr.f32.mxu0 0.0
      %677 = vmatmul.mubr.f32.gmra.mrb[0].mxu0 %v551
      %v678 = vpop.f32.mrb[0].mxu0
      %v679 = vadd.f32 %v526, %v678
      %v680 = vpop.f32.mrb[0].mxu0
      %681 = vmatprep.mubr.f32.mxu0 0.0
      %682 = vmatmul.mubr.f32.gmra.mrb[0].mxu0 %v554
      %v683 = vpop.f32.mrb[0].mxu0
      %v684 = vadd.f32 %v526, %v683
      %v685 = vpop.f32.mrb[0].mxu0
      %686 = vmatprep.mubr.f32.mxu0 0.0
      %687 = vmatmul.mubr.f32.gmra.mrb[0].mxu0 %v557
      %v688 = vpop.f32.mrb[0].mxu0
      %v689 = vadd.f32 %v526, %v688
      %v690 = vpop.f32.mrb[0].mxu0
      %691 = vmatprep.mubr.f32.mxu0 0.0
      %692 = vmatmul.mubr.f32.gmra.mrb[0].mxu0 %v560
      %v693 = vpop.f32.mrb[0].mxu0
      %v694 = vadd.f32 %v526, %v693
      %v695 = vpop.f32.mrb[0].mxu0
      %696 = vmatprep.mubr.f32.mxu0 0.0
      %697 = vmatmul.mubr.f32.gmra.mrb[0].mxu0 %v563
      %v698 = vpop.f32.mrb[0].mxu0
      %v699 = vadd.f32 %v526, %v698
      %v700 = vpop.f32.mrb[0].mxu0
      %701 = vmatprep.mubr.f32.mxu0 0.0
      %702 = vmatmul.mubr.f32.gmra.mrb[0].mxu0 %v566
      %v703 = vpop.f32.mrb[0].mxu0
      %v704 = vadd.f32 %v526, %v703
      %v705 = vpop.f32.mrb[0].mxu0
      %706 = vmatprep.mubr.f32.mxu0 0.0
      %707 = vmatmul.mubr.f32.gmra.mrb[0].mxu0 %v569
      %v708 = vpop.f32.mrb[0].mxu0
      %v709 = vadd.f32 %v526, %v708
      %v710 = vpop.f32.mrb[0].mxu0
      %711 = vmatprep.mubr.f32.mxu0 0.0
      %712 = vmatmul.mubr.f32.gmra.mrb[0].mxu0 %v572
      %v713 = vpop.f32.mrb[0].mxu0
      %v714 = vadd.f32 %v526, %v713
      %v715 = vpop.f32.mrb[0].mxu0
      %716 = vmatprep.mubr.f32.mxu0 0.0
      %717 = vmatmul.mubr.f32.gmra.mrb[0].mxu0 %v575
      %v718 = vpop.f32.mrb[0].mxu0
      %v719 = vadd.f32 %v526, %v718
      %v720 = vpop.f32.mrb[0].mxu0
      %721 = vdwg.mxu0
      %738 = vrot.lane.b32.xlu0 %v644, 124
      %v739 = vpop.permute.xlu0 %738
      %740 = vrot.lane.b32.xlu0 %v649, 124
      %v741 = vpop.permute.xlu0 %740
      %742 = vrot.lane.b32.xlu0 %v654, 124
      %v743 = vpop.permute.xlu0 %742
      %744 = vrot.lane.b32.xlu0 %v659, 124
      %v745 = vpop.permute.xlu0 %744
      %746 = vrot.lane.b32.xlu0 %v664, 124
      %v747 = vpop.permute.xlu0 %746
      %748 = vrot.lane.b32.xlu0 %v669, 124
      %v749 = vpop.permute.xlu0 %748
      %750 = vrot.lane.b32.xlu0 %v674, 124
      %v751 = vpop.permute.xlu0 %750
      %752 = vrot.lane.b32.xlu0 %v679, 124
      %v753 = vpop.permute.xlu0 %752
      %754 = vrot.lane.b32.xlu0 %v684, 124
      %v755 = vpop.permute.xlu0 %754
      %756 = vrot.lane.b32.xlu0 %v689, 124
      %v757 = vpop.permute.xlu0 %756
      %758 = vrot.lane.b32.xlu0 %v694, 124
      %v759 = vpop.permute.xlu0 %758
      %760 = vrot.lane.b32.xlu0 %v699, 124
      %v761 = vpop.permute.xlu0 %760
      %762 = vrot.lane.b32.xlu0 %v704, 124
      %v763 = vpop.permute.xlu0 %762
      %764 = vrot.lane.b32.xlu0 %v709, 124
      %v765 = vpop.permute.xlu0 %764
      %766 = vrot.lane.b32.xlu0 %v714, 124
      %v767 = vpop.permute.xlu0 %766
      %768 = vrot.lane.b32.xlu0 %v719, 124
      %v769 = vpop.permute.xlu0 %768
      %770 = vrot.lane.b32.xlu0 %v644, 4
      %v771 = vpop.permute.xlu0 %770
      %772 = vrot.lane.b32.xlu0 %v649, 4
      %v773 = vpop.permute.xlu0 %772
      %774 = vrot.lane.b32.xlu0 %v739, 4
      %v775 = vpop.permute.xlu0 %774
      %776 = vrot.lane.b32.xlu0 %v741, 4
      %v777 = vpop.permute.xlu0 %776
      %778 = vrot.lane.b32.xlu0 %v654, 4
      %v779 = vpop.permute.xlu0 %778
      %780 = vrot.lane.b32.xlu0 %v659, 4
      %v781 = vpop.permute.xlu0 %780
      %782 = vrot.lane.b32.xlu0 %v743, 4
      %v783 = vpop.permute.xlu0 %782
      %784 = vrot.lane.b32.xlu0 %v745, 4
      %v785 = vpop.permute.xlu0 %784
      %786 = vrot.lane.b32.xlu0 %v664, 4
      %v787 = vpop.permute.xlu0 %786
      %788 = vrot.lane.b32.xlu0 %v669, 4
      %v789 = vpop.permute.xlu0 %788
      %790 = vrot.lane.b32.xlu0 %v747, 4
      %v791 = vpop.permute.xlu0 %790
      %792 = vrot.lane.b32.xlu0 %v749, 4
      %v793 = vpop.permute.xlu0 %792
      %794 = vrot.lane.b32.xlu0 %v674, 4
      %v795 = vpop.permute.xlu0 %794
      %796 = vrot.lane.b32.xlu0 %v679, 4
      %v797 = vpop.permute.xlu0 %796
      %798 = vrot.lane.b32.xlu0 %v751, 4
      %v799 = vpop.permute.xlu0 %798
      %800 = vrot.lane.b32.xlu0 %v753, 4
      %v801 = vpop.permute.xlu0 %800
      %802 = vrot.lane.b32.xlu0 %v684, 4
      %v803 = vpop.permute.xlu0 %802
      %804 = vrot.lane.b32.xlu0 %v689, 4
      %v805 = vpop.permute.xlu0 %804
      %806 = vrot.lane.b32.xlu0 %v755, 4
      %v807 = vpop.permute.xlu0 %806
      %808 = vrot.lane.b32.xlu0 %v757, 4
      %v809 = vpop.permute.xlu0 %808
      %810 = vrot.lane.b32.xlu0 %v694, 4
      %v811 = vpop.permute.xlu0 %810
      %812 = vrot.lane.b32.xlu0 %v699, 4
      %v813 = vpop.permute.xlu0 %812
      %814 = vrot.lane.b32.xlu0 %v759, 4
      %v815 = vpop.permute.xlu0 %814
      %816 = vrot.lane.b32.xlu0 %v761, 4
      %v817 = vpop.permute.xlu0 %816
      %818 = vrot.lane.b32.xlu0 %v704, 4
      %v819 = vpop.permute.xlu0 %818
      %820 = vrot.lane.b32.xlu0 %v709, 4
      %v821 = vpop.permute.xlu0 %820
      %822 = vrot.lane.b32.xlu0 %v763, 4
      %v823 = vpop.permute.xlu0 %822
      %824 = vrot.lane.b32.xlu0 %v765, 4
      %v825 = vpop.permute.xlu0 %824
      %826 = vrot.lane.b32.xlu0 %v714, 4
      %v827 = vpop.permute.xlu0 %826
      %828 = vrot.lane.b32.xlu0 %v719, 4
      %v829 = vpop.permute.xlu0 %828
      %830 = vrot.lane.b32.xlu0 %v767, 4
      %v831 = vpop.permute.xlu0 %830
      %832 = vrot.lane.b32.xlu0 %v769, 4
      %v833 = vpop.permute.xlu0 %832
      %vm866 = vcmask 64544
      %867 = vst.msk [vmem:[%s470 + $0x1] sm:$0xff] %vm866, %v771
      %868 = vst.msk [vmem:[%s470 + $0x9] sm:$0xff] %vm866, %v773
      %869 = vst.msk [vmem:[%s470 + $0x19] sm:$0xff] %vm866, %v775
      %870 = vst.msk [vmem:[%s470 + $0x21] sm:$0xff] %vm866, %v777
      %871 = vst.msk [vmem:[%s470 + $0x31] sm:$0xff] %vm866, %v779
      %872 = vst.msk [vmem:[%s470 + $0x39] sm:$0xff] %vm866, %v781
      %873 = vst.msk [vmem:[%s470 + $0x49] sm:$0xff] %vm866, %v783
      %874 = vst.msk [vmem:[%s470 + $0x51] sm:$0xff] %vm866, %v785
      %875 = vst.msk [vmem:[%s470 + $0x61] sm:$0xff] %vm866, %v787
      %876 = vst.msk [vmem:[%s470 + $0x69] sm:$0xff] %vm866, %v789
      %877 = vst.msk [vmem:[%s470 + $0x79] sm:$0xff] %vm866, %v791
      %878 = vst.msk [vmem:[%s470 + $0x81] sm:$0xff] %vm866, %v793
      %879 = vst.msk [vmem:[%s470 + $0x91] sm:$0xff] %vm866, %v795
      %880 = vst.msk [vmem:[%s470 + $0x99] sm:$0xff] %vm866, %v797
      %881 = vst.msk [vmem:[%s470 + $0xa9] sm:$0xff] %vm866, %v799
      %882 = vst.msk [vmem:[%s470 + $0xb1] sm:$0xff] %vm866, %v801
      %883 = vst.msk [vmem:[%s470 + $0xc1] sm:$0xff] %vm866, %v803
      %884 = vst.msk [vmem:[%s470 + $0xc9] sm:$0xff] %vm866, %v805
      %885 = vst.msk [vmem:[%s470 + $0xd9] sm:$0xff] %vm866, %v807
      %886 = vst.msk [vmem:[%s470 + $0xe1] sm:$0xff] %vm866, %v809
      %887 = vst.msk [vmem:[%s470 + $0xf1] sm:$0xff] %vm866, %v811
      %888 = vst.msk [vmem:[%s470 + $0xf9] sm:$0xff] %vm866, %v813
      %889 = vst.msk [vmem:[%s470 + $0x109] sm:$0xff] %vm866, %v815
      %890 = vst.msk [vmem:[%s470 + $0x111] sm:$0xff] %vm866, %v817
      %891 = vst.msk [vmem:[%s470 + $0x121] sm:$0xff] %vm866, %v819
      %892 = vst.msk [vmem:[%s470 + $0x129] sm:$0xff] %vm866, %v821
      %893 = vst.msk [vmem:[%s470 + $0x139] sm:$0xff] %vm866, %v823
      %894 = vst.msk [vmem:[%s470 + $0x141] sm:$0xff] %vm866, %v825
      %895 = vst.msk [vmem:[%s470 + $0x151] sm:$0xff] %vm866, %v827
      %896 = vst.msk [vmem:[%s470 + $0x159] sm:$0xff] %vm866, %v829
      %897 = vst.msk [vmem:[%s470 + $0x169] sm:$0xff] %vm866, %v831
      %898 = vst.msk [vmem:[%s470 + $0x171] sm:$0xff] %vm866, %v833
      %v899 = vld [vmem:[#allocation2] sm:$0xff]
      %v900 = vld [vmem:[#allocation2 + $0x8] sm:$0xff]
      %v901 = vld [vmem:[#allocation2 + $0x18] sm:$0xff]
      %v902 = vld [vmem:[#allocation2 + $0x20] sm:$0xff]
      %v903 = vld [vmem:[#allocation2 + $0x30] sm:$0xff]
      %v904 = vld [vmem:[#allocation2 + $0x38] sm:$0xff]
      %v905 = vld [vmem:[#allocation2 + $0x48] sm:$0xff]
      %v906 = vld [vmem:[#allocation2 + $0x50] sm:$0xff]
      %v907 = vld [vmem:[#allocation2 + $0x60] sm:$0xff]
      %v908 = vld [vmem:[#allocation2 + $0x68] sm:$0xff]
      %v909 = vld [vmem:[#allocation2 + $0x78] sm:$0xff]
      %v910 = vld [vmem:[#allocation2 + $0x80] sm:$0xff]
      %v911 = vld [vmem:[#allocation2 + $0x90] sm:$0xff]
      %v912 = vld [vmem:[#allocation2 + $0x98] sm:$0xff]
      %v913 = vld [vmem:[#allocation2 + $0xa8] sm:$0xff]
      %v914 = vld [vmem:[#allocation2 + $0xb0] sm:$0xff]
      %v915 = vld [vmem:[#allocation2 + $0xc0] sm:$0xff]
      %v916 = vld [vmem:[#allocation2 + $0xc8] sm:$0xff]
      %v917 = vld [vmem:[#allocation2 + $0xd8] sm:$0xff]
      %v918 = vld [vmem:[#allocation2 + $0xe0] sm:$0xff]
      %v919 = vld [vmem:[#allocation2 + $0xf0] sm:$0xff]
      %v920 = vld [vmem:[#allocation2 + $0xf8] sm:$0xff]
      %v921 = vld [vmem:[#allocation2 + $0x108] sm:$0xff]
      %v922 = vld [vmem:[#allocation2 + $0x110] sm:$0xff]
      %v923 = vld [vmem:[#allocation2 + $0x120] sm:$0xff]
      %v924 = vld [vmem:[#allocation2 + $0x128] sm:$0xff]
      %v925 = vld [vmem:[#allocation2 + $0x138] sm:$0xff]
      %v926 = vld [vmem:[#allocation2 + $0x140] sm:$0xff]
      %v927 = vld [vmem:[#allocation2 + $0x150] sm:$0xff]
      %v928 = vld [vmem:[#allocation2 + $0x158] sm:$0xff]
      %v929 = vld [vmem:[#allocation2 + $0x168] sm:$0xff]
      %v930 = vld [vmem:[#allocation2 + $0x170] sm:$0xff]
      %v931 = vld [vmem:[#allocation2 + $0x180] sm:$0xff]
      %v932 = vld [vmem:[#allocation2 + $0x188] sm:$0xff]
      %v933 = vld [vmem:[#allocation2 + $0x198] sm:$0xff]
      %v934 = vld [vmem:[#allocation2 + $0x1a0] sm:$0xff]
      %v935 = vld [vmem:[%s4] sm:$0xff]
      %v936 = vld [vmem:[%s5] sm:$0x1]
      %v938 = vlaneseq
      %v939 = vshrl.u32 %v938, 7
      %v940 = vsub.s32 0, %v939
      %v941 = vrot.slane %v936, %v940
      %v944 = vsel %vm326, %v899, 0
      %v947 = vsel %vm326, %v900, 0
      %v950 = vsel %vm326, %v901, 0
      %v953 = vsel %vm326, %v902, 0
      %v956 = vsel %vm326, %v903, 0
      %v959 = vsel %vm326, %v904, 0
      %v962 = vsel %vm326, %v905, 0
      %v965 = vsel %vm326, %v906, 0
      %v968 = vsel %vm326, %v907, 0
      %v971 = vsel %vm326, %v908, 0
      %v974 = vsel %vm326, %v909, 0
      %v977 = vsel %vm326, %v910, 0
      %v980 = vsel %vm326, %v911, 0
      %v983 = vsel %vm326, %v912, 0
      %v986 = vsel %vm326, %v913, 0
      %v989 = vsel %vm326, %v914, 0
      %v992 = vsel %vm326, %v915, 0
      %v995 = vsel %vm326, %v916, 0
      %v998 = vsel %vm326, %v917, 0
      %v1001 = vsel %vm326, %v918, 0
      %v1004 = vsel %vm326, %v919, 0
      %v1007 = vsel %vm326, %v920, 0
      %v1010 = vsel %vm326, %v921, 0
      %v1013 = vsel %vm326, %v922, 0
      %v1016 = vsel %vm326, %v923, 0
      %v1019 = vsel %vm326, %v924, 0
      %v1022 = vsel %vm326, %v925, 0
      %v1025 = vsel %vm326, %v926, 0
      %v1028 = vsel %vm326, %v927, 0
      %v1031 = vsel %vm326, %v928, 0
      %v1034 = vsel %vm326, %v929, 0
      %v1037 = vsel %vm326, %v930, 0
      %1039 = vmatprep.subr.mxu0 0.0
      %1040 = vmatpush1.msra.mxu0 %v935
      %1041 = vmatprep.subr.mxu0 0.0
      %1042 = vmatpush1.msra.mxu0 0.0
      %1043 = vmatprep.subr.mxu0 0.0
      %1044 = vmatpush1.msra.mxu0 0.0
      %1045 = vmatprep.subr.mxu0 0.0
      %1046 = vmatpush1.msra.mxu0 0.0
      %1047 = vmatprep.subr.mxu0 0.0
      %1048 = vmatpush1.msra.mxu0 0.0
      %1049 = vmatprep.subr.mxu0 0.0
      %1050 = vmatpush1.msra.mxu0 0.0
      %1051 = vmatprep.subr.mxu0 0.0
      %1052 = vmatpush1.msra.mxu0 0.0
      %1053 = vmatprep.subr.mxu0 0.0
      %1054 = vmatpush1.msra.mxu0 0.0
      %1055 = vmatprep.subr.mxu0 0.0
      %1056 = vmatpush1.msra.mxu0 0.0
      %1057 = vmatprep.subr.mxu0 0.0
      %1058 = vmatpush1.msra.mxu0 0.0
      %1059 = vmatprep.subr.mxu0 0.0
      %1060 = vmatpush1.msra.mxu0 0.0
      %1061 = vmatprep.subr.mxu0 0.0
      %1062 = vmatpush1.msra.mxu0 0.0
      %1063 = vmatprep.subr.mxu0 0.0
      %1064 = vmatpush1.msra.mxu0 0.0
      %1065 = vmatprep.subr.mxu0 0.0
      %1066 = vmatpush1.msra.mxu0 0.0
      %1067 = vmatprep.subr.mxu0 0.0
      %1068 = vmatpush1.msra.mxu0 0.0
      %1069 = vmatprep.subr.mxu0 0.0
      %1070 = vmatpush1.msra.mxu0 0.0
      %1071 = vmatprep.subr.mxu0 0.0
      %1072 = vmatpush1.msra.mxu0 0.0
      %1073 = vmatprep.subr.mxu0 0.0
      %1074 = vmatpush1.msra.mxu0 0.0
      %1075 = vmatprep.subr.mxu0 0.0
      %1076 = vmatpush1.msra.mxu0 0.0
      %1077 = vmatprep.subr.mxu0 0.0
      %1078 = vmatpush1.msra.mxu0 0.0
      %1079 = vmatprep.subr.mxu0 0.0
      %1080 = vmatpush1.msra.mxu0 0.0
      %1081 = vmatprep.subr.mxu0 0.0
      %1082 = vmatpush1.msra.mxu0 0.0
      %1083 = vmatprep.subr.mxu0 0.0
      %1084 = vmatpush1.msra.mxu0 0.0
      %1085 = vmatprep.subr.mxu0 0.0
      %1086 = vmatpush1.msra.mxu0 0.0
      %1087 = vmatprep.subr.mxu0 0.0
      %1088 = vmatpush1.msra.mxu0 0.0
      %1089 = vmatprep.subr.mxu0 0.0
      %1090 = vmatpush1.msra.mxu0 0.0
      %1091 = vmatprep.subr.mxu0 0.0
      %1092 = vmatpush1.msra.mxu0 0.0
      %1093 = vmatprep.subr.mxu0 0.0
      %1094 = vmatpush1.msra.mxu0 0.0
      %1095 = vmatprep.subr.mxu0 0.0
      %1096 = vmatpush1.msra.mxu0 0.0
      %1097 = vmatprep.subr.mxu0 0.0
      %1098 = vmatpush1.msra.mxu0 0.0
      %1099 = vmatprep.subr.mxu0 0.0
      %1100 = vmatpush1.msra.mxu0 0.0
      %1101 = vmatprep.subr.mxu0 0.0
      %1102 = vmatpush1.msra.mxu0 0.0
      %1103 = vmatprep.mubr.f32.mxu0 0.0
      %1104 = vmatmul.mubr.f32.gmra.mrb[0].mxu0 %v944
      %v1105 = vpop.f32.mrb[0].mxu0
      %v1106 = vadd.f32 %v941, %v1105
      %v1107 = vpop.f32.mrb[0].mxu0
      %1108 = vmatprep.mubr.f32.mxu0 0.0
      %1109 = vmatmul.mubr.f32.gmra.mrb[0].mxu0 %v947
      %v1110 = vpop.f32.mrb[0].mxu0
      %v1111 = vadd.f32 %v941, %v1110
      %v1112 = vpop.f32.mrb[0].mxu0
      %1113 = vmatprep.mubr.f32.mxu0 0.0
      %1114 = vmatmul.mubr.f32.gmra.mrb[0].mxu0 %v950
      %v1115 = vpop.f32.mrb[0].mxu0
      %v1116 = vadd.f32 %v941, %v1115
      %v1117 = vpop.f32.mrb[0].mxu0
      %1118 = vmatprep.mubr.f32.mxu0 0.0
      %1119 = vmatmul.mubr.f32.gmra.mrb[0].mxu0 %v953
      %v1120 = vpop.f32.mrb[0].mxu0
      %v1121 = vadd.f32 %v941, %v1120
      %v1122 = vpop.f32.mrb[0].mxu0
      %1123 = vmatprep.mubr.f32.mxu0 0.0
      %1124 = vmatmul.mubr.f32.gmra.mrb[0].mxu0 %v956
      %v1125 = vpop.f32.mrb[0].mxu0
      %v1126 = vadd.f32 %v941, %v1125
      %v1127 = vpop.f32.mrb[0].mxu0
      %1128 = vmatprep.mubr.f32.mxu0 0.0
      %1129 = vmatmul.mubr.f32.gmra.mrb[0].mxu0 %v959
      %v1130 = vpop.f32.mrb[0].mxu0
      %v1131 = vadd.f32 %v941, %v1130
      %v1132 = vpop.f32.mrb[0].mxu0
      %1133 = vmatprep.mubr.f32.mxu0 0.0
      %1134 = vmatmul.mubr.f32.gmra.mrb[0].mxu0 %v962
      %v1135 = vpop.f32.mrb[0].mxu0
      %v1136 = vadd.f32 %v941, %v1135
      %v1137 = vpop.f32.mrb[0].mxu0
      %1138 = vmatprep.mubr.f32.mxu0 0.0
      %1139 = vmatmul.mubr.f32.gmra.mrb[0].mxu0 %v965
      %v1140 = vpop.f32.mrb[0].mxu0
      %v1141 = vadd.f32 %v941, %v1140
      %v1142 = vpop.f32.mrb[0].mxu0
      %1143 = vmatprep.mubr.f32.mxu0 0.0
      %1144 = vmatmul.mubr.f32.gmra.mrb[0].mxu0 %v968
      %v1145 = vpop.f32.mrb[0].mxu0
      %v1146 = vadd.f32 %v941, %v1145
      %v1147 = vpop.f32.mrb[0].mxu0
      %1148 = vmatprep.mubr.f32.mxu0 0.0
      %1149 = vmatmul.mubr.f32.gmra.mrb[0].mxu0 %v971
      %v1150 = vpop.f32.mrb[0].mxu0
      %v1151 = vadd.f32 %v941, %v1150
      %v1152 = vpop.f32.mrb[0].mxu0
      %1153 = vmatprep.mubr.f32.mxu0 0.0
      %1154 = vmatmul.mubr.f32.gmra.mrb[0].mxu0 %v974
      %v1155 = vpop.f32.mrb[0].mxu0
      %v1156 = vadd.f32 %v941, %v1155
      %v1157 = vpop.f32.mrb[0].mxu0
      %1158 = vmatprep.mubr.f32.mxu0 0.0
      %1159 = vmatmul.mubr.f32.gmra.mrb[0].mxu0 %v977
      %v1160 = vpop.f32.mrb[0].mxu0
      %v1161 = vadd.f32 %v941, %v1160
      %v1162 = vpop.f32.mrb[0].mxu0
      %1163 = vmatprep.mubr.f32.mxu0 0.0
      %1164 = vmatmul.mubr.f32.gmra.mrb[0].mxu0 %v980
      %v1165 = vpop.f32.mrb[0].mxu0
      %v1166 = vadd.f32 %v941, %v1165
      %v1167 = vpop.f32.mrb[0].mxu0
      %1168 = vmatprep.mubr.f32.mxu0 0.0
      %1169 = vmatmul.mubr.f32.gmra.mrb[0].mxu0 %v983
      %v1170 = vpop.f32.mrb[0].mxu0
      %v1171 = vadd.f32 %v941, %v1170
      %v1172 = vpop.f32.mrb[0].mxu0
      %1173 = vmatprep.mubr.f32.mxu0 0.0
      %1174 = vmatmul.mubr.f32.gmra.mrb[0].mxu0 %v986
      %v1175 = vpop.f32.mrb[0].mxu0
      %v1176 = vadd.f32 %v941, %v1175
      %v1177 = vpop.f32.mrb[0].mxu0
      %1178 = vmatprep.mubr.f32.mxu0 0.0
      %1179 = vmatmul.mubr.f32.gmra.mrb[0].mxu0 %v989
      %v1180 = vpop.f32.mrb[0].mxu0
      %v1181 = vadd.f32 %v941, %v1180
      %v1182 = vpop.f32.mrb[0].mxu0
      %1183 = vmatprep.mubr.f32.mxu0 0.0
      %1184 = vmatmul.mubr.f32.gmra.mrb[0].mxu0 %v992
      %v1185 = vpop.f32.mrb[0].mxu0
      %v1186 = vadd.f32 %v941, %v1185
      %v1187 = vpop.f32.mrb[0].mxu0
      %1188 = vmatprep.mubr.f32.mxu0 0.0
      %1189 = vmatmul.mubr.f32.gmra.mrb[0].mxu0 %v995
      %v1190 = vpop.f32.mrb[0].mxu0
      %v1191 = vadd.f32 %v941, %v1190
      %v1192 = vpop.f32.mrb[0].mxu0
      %1193 = vmatprep.mubr.f32.mxu0 0.0
      %1194 = vmatmul.mubr.f32.gmra.mrb[0].mxu0 %v998
      %v1195 = vpop.f32.mrb[0].mxu0
      %v1196 = vadd.f32 %v941, %v1195
      %v1197 = vpop.f32.mrb[0].mxu0
      %1198 = vmatprep.mubr.f32.mxu0 0.0
      %1199 = vmatmul.mubr.f32.gmra.mrb[0].mxu0 %v1001
      %v1200 = vpop.f32.mrb[0].mxu0
      %v1201 = vadd.f32 %v941, %v1200
      %v1202 = vpop.f32.mrb[0].mxu0
      %1203 = vmatprep.mubr.f32.mxu0 0.0
      %1204 = vmatmul.mubr.f32.gmra.mrb[0].mxu0 %v1004
      %v1205 = vpop.f32.mrb[0].mxu0
      %v1206 = vadd.f32 %v941, %v1205
      %v1207 = vpop.f32.mrb[0].mxu0
      %1208 = vmatprep.mubr.f32.mxu0 0.0
      %1209 = vmatmul.mubr.f32.gmra.mrb[0].mxu0 %v1007
      %v1210 = vpop.f32.mrb[0].mxu0
      %v1211 = vadd.f32 %v941, %v1210
      %v1212 = vpop.f32.mrb[0].mxu0
      %1213 = vmatprep.mubr.f32.mxu0 0.0
      %1214 = vmatmul.mubr.f32.gmra.mrb[0].mxu0 %v1010
      %v1215 = vpop.f32.mrb[0].mxu0
      %v1216 = vadd.f32 %v941, %v1215
      %v1217 = vpop.f32.mrb[0].mxu0
      %1218 = vmatprep.mubr.f32.mxu0 0.0
      %1219 = vmatmul.mubr.f32.gmra.mrb[0].mxu0 %v1013
      %v1220 = vpop.f32.mrb[0].mxu0
      %v1221 = vadd.f32 %v941, %v1220
      %v1222 = vpop.f32.mrb[0].mxu0
      %1223 = vmatprep.mubr.f32.mxu0 0.0
      %1224 = vmatmul.mubr.f32.gmra.mrb[0].mxu0 %v1016
      %v1225 = vpop.f32.mrb[0].mxu0
      %v1226 = vadd.f32 %v941, %v1225
      %v1227 = vpop.f32.mrb[0].mxu0
      %1228 = vmatprep.mubr.f32.mxu0 0.0
      %1229 = vmatmul.mubr.f32.gmra.mrb[0].mxu0 %v1019
      %v1230 = vpop.f32.mrb[0].mxu0
      %v1231 = vadd.f32 %v941, %v1230
      %v1232 = vpop.f32.mrb[0].mxu0
      %1233 = vmatprep.mubr.f32.mxu0 0.0
      %1234 = vmatmul.mubr.f32.gmra.mrb[0].mxu0 %v1022
      %v1235 = vpop.f32.mrb[0].mxu0
      %v1236 = vadd.f32 %v941, %v1235
      %v1237 = vpop.f32.mrb[0].mxu0
      %1238 = vmatprep.mubr.f32.mxu0 0.0
      %1239 = vmatmul.mubr.f32.gmra.mrb[0].mxu0 %v1025
      %v1240 = vpop.f32.mrb[0].mxu0
      %v1241 = vadd.f32 %v941, %v1240
      %v1242 = vpop.f32.mrb[0].mxu0
      %1243 = vmatprep.mubr.f32.mxu0 0.0
      %1244 = vmatmul.mubr.f32.gmra.mrb[0].mxu0 %v1028
      %v1245 = vpop.f32.mrb[0].mxu0
      %v1246 = vadd.f32 %v941, %v1245
      %v1247 = vpop.f32.mrb[0].mxu0
      %1248 = vmatprep.mubr.f32.mxu0 0.0
      %1249 = vmatmul.mubr.f32.gmra.mrb[0].mxu0 %v1031
      %v1250 = vpop.f32.mrb[0].mxu0
      %v1251 = vadd.f32 %v941, %v1250
      %v1252 = vpop.f32.mrb[0].mxu0
      %1253 = vmatprep.mubr.f32.mxu0 0.0
      %1254 = vmatmul.mubr.f32.gmra.mrb[0].mxu0 %v1034
      %v1255 = vpop.f32.mrb[0].mxu0
      %v1256 = vadd.f32 %v941, %v1255
      %v1257 = vpop.f32.mrb[0].mxu0
      %1258 = vmatprep.mubr.f32.mxu0 0.0
      %1259 = vmatmul.mubr.f32.gmra.mrb[0].mxu0 %v1037
      %v1260 = vpop.f32.mrb[0].mxu0
      %v1261 = vadd.f32 %v941, %v1260
      %v1262 = vpop.f32.mrb[0].mxu0
      %1263 = vdwg.mxu0
      %s1264 = scalar_lea.vmem %s4, 24
      %v1265 = vld [vmem:[%s1264] sm:$0xff]
      %v1267 = vsel %vm326, %v931, 0
      %v1270 = vsel %vm326, %v932, 0
      %1272 = vmatprep.subr.mxu0 0.0
      %1273 = vmatpush1.msra.mxu0 %v1265
      %1274 = vmatprep.subr.mxu0 0.0
      %1275 = vmatpush1.msra.mxu0 0.0
      %1276 = vmatprep.subr.mxu0 0.0
      %1277 = vmatpush1.msra.mxu0 0.0
      %1278 = vmatprep.subr.mxu0 0.0
      %1279 = vmatpush1.msra.mxu0 0.0
      %1280 = vmatprep.subr.mxu0 0.0
      %1281 = vmatpush1.msra.mxu0 0.0
      %1282 = vmatprep.subr.mxu0 0.0
      %1283 = vmatpush1.msra.mxu0 0.0
      %1284 = vmatprep.subr.mxu0 0.0
      %1285 = vmatpush1.msra.mxu0 0.0
      %1286 = vmatprep.subr.mxu0 0.0
      %1287 = vmatpush1.msra.mxu0 0.0
      %1288 = vmatprep.subr.mxu0 0.0
      %1289 = vmatpush1.msra.mxu0 0.0
      %1290 = vmatprep.subr.mxu0 0.0
      %1291 = vmatpush1.msra.mxu0 0.0
      %1292 = vmatprep.subr.mxu0 0.0
      %1293 = vmatpush1.msra.mxu0 0.0
      %1294 = vmatprep.subr.mxu0 0.0
      %1295 = vmatpush1.msra.mxu0 0.0
      %1296 = vmatprep.subr.mxu0 0.0
      %1297 = vmatpush1.msra.mxu0 0.0
      %1298 = vmatprep.subr.mxu0 0.0
      %1299 = vmatpush1.msra.mxu0 0.0
      %1300 = vmatprep.subr.mxu0 0.0
      %1301 = vmatpush1.msra.mxu0 0.0
      %1302 = vmatprep.subr.mxu0 0.0
      %1303 = vmatpush1.msra.mxu0 0.0
      %1304 = vmatprep.subr.mxu0 0.0
      %1305 = vmatpush1.msra.mxu0 0.0
      %1306 = vmatprep.subr.mxu0 0.0
      %1307 = vmatpush1.msra.mxu0 0.0
      %1308 = vmatprep.subr.mxu0 0.0
      %1309 = vmatpush1.msra.mxu0 0.0
      %1310 = vmatprep.subr.mxu0 0.0
      %1311 = vmatpush1.msra.mxu0 0.0
      %1312 = vmatprep.subr.mxu0 0.0
      %1313 = vmatpush1.msra.mxu0 0.0
      %1314 = vmatprep.subr.mxu0 0.0
      %1315 = vmatpush1.msra.mxu0 0.0
      %1316 = vmatprep.subr.mxu0 0.0
      %1317 = vmatpush1.msra.mxu0 0.0
      %1318 = vmatprep.subr.mxu0 0.0
      %1319 = vmatpush1.msra.mxu0 0.0
      %1320 = vmatprep.subr.mxu0 0.0
      %1321 = vmatpush1.msra.mxu0 0.0
      %1322 = vmatprep.subr.mxu0 0.0
      %1323 = vmatpush1.msra.mxu0 0.0
      %1324 = vmatprep.subr.mxu0 0.0
      %1325 = vmatpush1.msra.mxu0 0.0
      %1326 = vmatprep.subr.mxu0 0.0
      %1327 = vmatpush1.msra.mxu0 0.0
      %1328 = vmatprep.subr.mxu0 0.0
      %1329 = vmatpush1.msra.mxu0 0.0
      %1330 = vmatprep.subr.mxu0 0.0
      %1331 = vmatpush1.msra.mxu0 0.0
      %1332 = vmatprep.subr.mxu0 0.0
      %1333 = vmatpush1.msra.mxu0 0.0
      %1334 = vmatprep.subr.mxu0 0.0
      %1335 = vmatpush1.msra.mxu0 0.0
      %1336 = vmatprep.mubr.f32.mxu0 0.0
      %1337 = vmatmul.mubr.f32.gmra.mrb[0].mxu0 %v950
      %v1338 = vpop.f32.mrb[0].mxu0
      %v1339 = vadd.f32 0.0, %v1338
      %v1340 = vpop.f32.mrb[0].mxu0
      %1341 = vmatprep.mubr.f32.mxu0 0.0
      %1342 = vmatmul.mubr.f32.gmra.mrb[0].mxu0 %v953
      %v1343 = vpop.f32.mrb[0].mxu0
      %v1344 = vadd.f32 0.0, %v1343
      %v1345 = vpop.f32.mrb[0].mxu0
      %1346 = vmatprep.mubr.f32.mxu0 0.0
      %1347 = vmatmul.mubr.f32.gmra.mrb[0].mxu0 %v956
      %v1348 = vpop.f32.mrb[0].mxu0
      %v1349 = vadd.f32 0.0, %v1348
      %v1350 = vpop.f32.mrb[0].mxu0
      %1351 = vmatprep.mubr.f32.mxu0 0.0
      %1352 = vmatmul.mubr.f32.gmra.mrb[0].mxu0 %v959
      %v1353 = vpop.f32.mrb[0].mxu0
      %v1354 = vadd.f32 0.0, %v1353
      %v1355 = vpop.f32.mrb[0].mxu0
      %1356 = vmatprep.mubr.f32.mxu0 0.0
      %1357 = vmatmul.mubr.f32.gmra.mrb[0].mxu0 %v962
      %v1358 = vpop.f32.mrb[0].mxu0
      %v1359 = vadd.f32 0.0, %v1358
      %v1360 = vpop.f32.mrb[0].mxu0
      %1361 = vmatprep.mubr.f32.mxu0 0.0
      %1362 = vmatmul.mubr.f32.gmra.mrb[0].mxu0 %v965
      %v1363 = vpop.f32.mrb[0].mxu0
      %v1364 = vadd.f32 0.0, %v1363
      %v1365 = vpop.f32.mrb[0].mxu0
      %1366 = vmatprep.mubr.f32.mxu0 0.0
      %1367 = vmatmul.mubr.f32.gmra.mrb[0].mxu0 %v968
      %v1368 = vpop.f32.mrb[0].mxu0
      %v1369 = vadd.f32 0.0, %v1368
      %v1370 = vpop.f32.mrb[0].mxu0
      %1371 = vmatprep.mubr.f32.mxu0 0.0
      %1372 = vmatmul.mubr.f32.gmra.mrb[0].mxu0 %v971
      %v1373 = vpop.f32.mrb[0].mxu0
      %v1374 = vadd.f32 0.0, %v1373
      %v1375 = vpop.f32.mrb[0].mxu0
      %1376 = vmatprep.mubr.f32.mxu0 0.0
      %1377 = vmatmul.mubr.f32.gmra.mrb[0].mxu0 %v974
      %v1378 = vpop.f32.mrb[0].mxu0
      %v1379 = vadd.f32 0.0, %v1378
      %v1380 = vpop.f32.mrb[0].mxu0
      %1381 = vmatprep.mubr.f32.mxu0 0.0
      %1382 = vmatmul.mubr.f32.gmra.mrb[0].mxu0 %v977
      %v1383 = vpop.f32.mrb[0].mxu0
      %v1384 = vadd.f32 0.0, %v1383
      %v1385 = vpop.f32.mrb[0].mxu0
      %1386 = vmatprep.mubr.f32.mxu0 0.0
      %1387 = vmatmul.mubr.f32.gmra.mrb[0].mxu0 %v980
      %v1388 = vpop.f32.mrb[0].mxu0
      %v1389 = vadd.f32 0.0, %v1388
      %v1390 = vpop.f32.mrb[0].mxu0
      %1391 = vmatprep.mubr.f32.mxu0 0.0
      %1392 = vmatmul.mubr.f32.gmra.mrb[0].mxu0 %v983
      %v1393 = vpop.f32.mrb[0].mxu0
      %v1394 = vadd.f32 0.0, %v1393
      %v1395 = vpop.f32.mrb[0].mxu0
      %1396 = vmatprep.mubr.f32.mxu0 0.0
      %1397 = vmatmul.mubr.f32.gmra.mrb[0].mxu0 %v986
      %v1398 = vpop.f32.mrb[0].mxu0
      %v1399 = vadd.f32 0.0, %v1398
      %v1400 = vpop.f32.mrb[0].mxu0
      %1401 = vmatprep.mubr.f32.mxu0 0.0
      %1402 = vmatmul.mubr.f32.gmra.mrb[0].mxu0 %v989
      %v1403 = vpop.f32.mrb[0].mxu0
      %v1404 = vadd.f32 0.0, %v1403
      %v1405 = vpop.f32.mrb[0].mxu0
      %1406 = vmatprep.mubr.f32.mxu0 0.0
      %1407 = vmatmul.mubr.f32.gmra.mrb[0].mxu0 %v992
      %v1408 = vpop.f32.mrb[0].mxu0
      %v1409 = vadd.f32 0.0, %v1408
      %v1410 = vpop.f32.mrb[0].mxu0
      %1411 = vmatprep.mubr.f32.mxu0 0.0
      %1412 = vmatmul.mubr.f32.gmra.mrb[0].mxu0 %v995
      %v1413 = vpop.f32.mrb[0].mxu0
      %v1414 = vadd.f32 0.0, %v1413
      %v1415 = vpop.f32.mrb[0].mxu0
      %1416 = vmatprep.mubr.f32.mxu0 0.0
      %1417 = vmatmul.mubr.f32.gmra.mrb[0].mxu0 %v998
      %v1418 = vpop.f32.mrb[0].mxu0
      %v1419 = vadd.f32 0.0, %v1418
      %v1420 = vpop.f32.mrb[0].mxu0
      %1421 = vmatprep.mubr.f32.mxu0 0.0
      %1422 = vmatmul.mubr.f32.gmra.mrb[0].mxu0 %v1001
      %v1423 = vpop.f32.mrb[0].mxu0
      %v1424 = vadd.f32 0.0, %v1423
      %v1425 = vpop.f32.mrb[0].mxu0
      %1426 = vmatprep.mubr.f32.mxu0 0.0
      %1427 = vmatmul.mubr.f32.gmra.mrb[0].mxu0 %v1004
      %v1428 = vpop.f32.mrb[0].mxu0
      %v1429 = vadd.f32 0.0, %v1428
      %v1430 = vpop.f32.mrb[0].mxu0
      %1431 = vmatprep.mubr.f32.mxu0 0.0
      %1432 = vmatmul.mubr.f32.gmra.mrb[0].mxu0 %v1007
      %v1433 = vpop.f32.mrb[0].mxu0
      %v1434 = vadd.f32 0.0, %v1433
      %v1435 = vpop.f32.mrb[0].mxu0
      %1436 = vmatprep.mubr.f32.mxu0 0.0
      %1437 = vmatmul.mubr.f32.gmra.mrb[0].mxu0 %v1010
      %v1438 = vpop.f32.mrb[0].mxu0
      %v1439 = vadd.f32 0.0, %v1438
      %v1440 = vpop.f32.mrb[0].mxu0
      %1441 = vmatprep.mubr.f32.mxu0 0.0
      %1442 = vmatmul.mubr.f32.gmra.mrb[0].mxu0 %v1013
      %v1443 = vpop.f32.mrb[0].mxu0
      %v1444 = vadd.f32 0.0, %v1443
      %v1445 = vpop.f32.mrb[0].mxu0
      %1446 = vmatprep.mubr.f32.mxu0 0.0
      %1447 = vmatmul.mubr.f32.gmra.mrb[0].mxu0 %v1016
      %v1448 = vpop.f32.mrb[0].mxu0
      %v1449 = vadd.f32 0.0, %v1448
      %v1450 = vpop.f32.mrb[0].mxu0
      %1451 = vmatprep.mubr.f32.mxu0 0.0
      %1452 = vmatmul.mubr.f32.gmra.mrb[0].mxu0 %v1019
      %v1453 = vpop.f32.mrb[0].mxu0
      %v1454 = vadd.f32 0.0, %v1453
      %v1455 = vpop.f32.mrb[0].mxu0
      %1456 = vmatprep.mubr.f32.mxu0 0.0
      %1457 = vmatmul.mubr.f32.gmra.mrb[0].mxu0 %v1022
      %v1458 = vpop.f32.mrb[0].mxu0
      %v1459 = vadd.f32 0.0, %v1458
      %v1460 = vpop.f32.mrb[0].mxu0
      %1461 = vmatprep.mubr.f32.mxu0 0.0
      %1462 = vmatmul.mubr.f32.gmra.mrb[0].mxu0 %v1025
      %v1463 = vpop.f32.mrb[0].mxu0
      %v1464 = vadd.f32 0.0, %v1463
      %v1465 = vpop.f32.mrb[0].mxu0
      %1466 = vmatprep.mubr.f32.mxu0 0.0
      %1467 = vmatmul.mubr.f32.gmra.mrb[0].mxu0 %v1028
      %v1468 = vpop.f32.mrb[0].mxu0
      %v1469 = vadd.f32 0.0, %v1468
      %v1470 = vpop.f32.mrb[0].mxu0
      %1471 = vmatprep.mubr.f32.mxu0 0.0
      %1472 = vmatmul.mubr.f32.gmra.mrb[0].mxu0 %v1031
      %v1473 = vpop.f32.mrb[0].mxu0
      %v1474 = vadd.f32 0.0, %v1473
      %v1475 = vpop.f32.mrb[0].mxu0
      %1476 = vmatprep.mubr.f32.mxu0 0.0
      %1477 = vmatmul.mubr.f32.gmra.mrb[0].mxu0 %v1034
      %v1478 = vpop.f32.mrb[0].mxu0
      %v1479 = vadd.f32 0.0, %v1478
      %v1480 = vpop.f32.mrb[0].mxu0
      %1481 = vmatprep.mubr.f32.mxu0 0.0
      %1482 = vmatmul.mubr.f32.gmra.mrb[0].mxu0 %v1037
      %v1483 = vpop.f32.mrb[0].mxu0
      %v1484 = vadd.f32 0.0, %v1483
      %v1485 = vpop.f32.mrb[0].mxu0
      %1486 = vmatprep.mubr.f32.mxu0 0.0
      %1487 = vmatmul.mubr.f32.gmra.mrb[0].mxu0 %v1267
      %v1488 = vpop.f32.mrb[0].mxu0
      %v1489 = vadd.f32 0.0, %v1488
      %v1490 = vpop.f32.mrb[0].mxu0
      %1491 = vmatprep.mubr.f32.mxu0 0.0
      %1492 = vmatmul.mubr.f32.gmra.mrb[0].mxu0 %v1270
      %v1493 = vpop.f32.mrb[0].mxu0
      %v1494 = vadd.f32 0.0, %v1493
      %v1495 = vpop.f32.mrb[0].mxu0
      %1496 = vdwg.mxu0
      %v1497 = vadd.f32 %v1106, %v1339
      %v1498 = vadd.f32 %v1111, %v1344
      %v1499 = vadd.f32 %v1116, %v1349
      %v1500 = vadd.f32 %v1121, %v1354
      %v1501 = vadd.f32 %v1126, %v1359
      %v1502 = vadd.f32 %v1131, %v1364
      %v1503 = vadd.f32 %v1136, %v1369
      %v1504 = vadd.f32 %v1141, %v1374
      %v1505 = vadd.f32 %v1146, %v1379
      %v1506 = vadd.f32 %v1151, %v1384
      %v1507 = vadd.f32 %v1156, %v1389
      %v1508 = vadd.f32 %v1161, %v1394
      %v1509 = vadd.f32 %v1166, %v1399
      %v1510 = vadd.f32 %v1171, %v1404
      %v1511 = vadd.f32 %v1176, %v1409
      %v1512 = vadd.f32 %v1181, %v1414
      %v1513 = vadd.f32 %v1186, %v1419
      %v1514 = vadd.f32 %v1191, %v1424
      %v1515 = vadd.f32 %v1196, %v1429
      %v1516 = vadd.f32 %v1201, %v1434
      %v1517 = vadd.f32 %v1206, %v1439
      %v1518 = vadd.f32 %v1211, %v1444
      %v1519 = vadd.f32 %v1216, %v1449
      %v1520 = vadd.f32 %v1221, %v1454
      %v1521 = vadd.f32 %v1226, %v1459
      %v1522 = vadd.f32 %v1231, %v1464
      %v1523 = vadd.f32 %v1236, %v1469
      %v1524 = vadd.f32 %v1241, %v1474
      %v1525 = vadd.f32 %v1246, %v1479
      %v1526 = vadd.f32 %v1251, %v1484
      %v1527 = vadd.f32 %v1256, %v1489
      %v1528 = vadd.f32 %v1261, %v1494
      %s1529 = scalar_lea.vmem %s4, 48
      %v1530 = vld [vmem:[%s1529] sm:$0xff]
      %v1532 = vsel %vm326, %v933, 0
      %v1535 = vsel %vm326, %v934, 0
      %1537 = vmatprep.subr.mxu0 0.0
      %1538 = vmatpush1.msra.mxu0 %v1530
      %1539 = vmatprep.subr.mxu0 0.0
      %1540 = vmatpush1.msra.mxu0 0.0
      %1541 = vmatprep.subr.mxu0 0.0
      %1542 = vmatpush1.msra.mxu0 0.0
      %1543 = vmatprep.subr.mxu0 0.0
      %1544 = vmatpush1.msra.mxu0 0.0
      %1545 = vmatprep.subr.mxu0 0.0
      %1546 = vmatpush1.msra.mxu0 0.0
      %1547 = vmatprep.subr.mxu0 0.0
      %1548 = vmatpush1.msra.mxu0 0.0
      %1549 = vmatprep.subr.mxu0 0.0
      %1550 = vmatpush1.msra.mxu0 0.0
      %1551 = vmatprep.subr.mxu0 0.0
      %1552 = vmatpush1.msra.mxu0 0.0
      %1553 = vmatprep.subr.mxu0 0.0
      %1554 = vmatpush1.msra.mxu0 0.0
      %1555 = vmatprep.subr.mxu0 0.0
      %1556 = vmatpush1.msra.mxu0 0.0
      %1557 = vmatprep.subr.mxu0 0.0
      %1558 = vmatpush1.msra.mxu0 0.0
      %1559 = vmatprep.subr.mxu0 0.0
      %1560 = vmatpush1.msra.mxu0 0.0
      %1561 = vmatprep.subr.mxu0 0.0
      %1562 = vmatpush1.msra.mxu0 0.0
      %1563 = vmatprep.subr.mxu0 0.0
      %1564 = vmatpush1.msra.mxu0 0.0
      %1565 = vmatprep.subr.mxu0 0.0
      %1566 = vmatpush1.msra.mxu0 0.0
      %1567 = vmatprep.subr.mxu0 0.0
      %1568 = vmatpush1.msra.mxu0 0.0
      %1569 = vmatprep.subr.mxu0 0.0
      %1570 = vmatpush1.msra.mxu0 0.0
      %1571 = vmatprep.subr.mxu0 0.0
      %1572 = vmatpush1.msra.mxu0 0.0
      %1573 = vmatprep.subr.mxu0 0.0
      %1574 = vmatpush1.msra.mxu0 0.0
      %1575 = vmatprep.subr.mxu0 0.0
      %1576 = vmatpush1.msra.mxu0 0.0
      %1577 = vmatprep.subr.mxu0 0.0
      %1578 = vmatpush1.msra.mxu0 0.0
      %1579 = vmatprep.subr.mxu0 0.0
      %1580 = vmatpush1.msra.mxu0 0.0
      %1581 = vmatprep.subr.mxu0 0.0
      %1582 = vmatpush1.msra.mxu0 0.0
      %1583 = vmatprep.subr.mxu0 0.0
      %1584 = vmatpush1.msra.mxu0 0.0
      %1585 = vmatprep.subr.mxu0 0.0
      %1586 = vmatpush1.msra.mxu0 0.0
      %1587 = vmatprep.subr.mxu0 0.0
      %1588 = vmatpush1.msra.mxu0 0.0
      %1589 = vmatprep.subr.mxu0 0.0
      %1590 = vmatpush1.msra.mxu0 0.0
      %1591 = vmatprep.subr.mxu0 0.0
      %1592 = vmatpush1.msra.mxu0 0.0
      %1593 = vmatprep.subr.mxu0 0.0
      %1594 = vmatpush1.msra.mxu0 0.0
      %1595 = vmatprep.subr.mxu0 0.0
      %1596 = vmatpush1.msra.mxu0 0.0
      %1597 = vmatprep.subr.mxu0 0.0
      %1598 = vmatpush1.msra.mxu0 0.0
      %1599 = vmatprep.subr.mxu0 0.0
      %1600 = vmatpush1.msra.mxu0 0.0
      %1601 = vmatprep.mubr.f32.mxu0 0.0
      %1602 = vmatmul.mubr.f32.gmra.mrb[0].mxu0 %v956
      %v1603 = vpop.f32.mrb[0].mxu0
      %v1604 = vadd.f32 0.0, %v1603
      %v1605 = vpop.f32.mrb[0].mxu0
      %1606 = vmatprep.mubr.f32.mxu0 0.0
      %1607 = vmatmul.mubr.f32.gmra.mrb[0].mxu0 %v959
      %v1608 = vpop.f32.mrb[0].mxu0
      %v1609 = vadd.f32 0.0, %v1608
      %v1610 = vpop.f32.mrb[0].mxu0
      %1611 = vmatprep.mubr.f32.mxu0 0.0
      %1612 = vmatmul.mubr.f32.gmra.mrb[0].mxu0 %v962
      %v1613 = vpop.f32.mrb[0].mxu0
      %v1614 = vadd.f32 0.0, %v1613
      %v1615 = vpop.f32.mrb[0].mxu0
      %1616 = vmatprep.mubr.f32.mxu0 0.0
      %1617 = vmatmul.mubr.f32.gmra.mrb[0].mxu0 %v965
      %v1618 = vpop.f32.mrb[0].mxu0
      %v1619 = vadd.f32 0.0, %v1618
      %v1620 = vpop.f32.mrb[0].mxu0
      %1621 = vmatprep.mubr.f32.mxu0 0.0
      %1622 = vmatmul.mubr.f32.gmra.mrb[0].mxu0 %v968
      %v1623 = vpop.f32.mrb[0].mxu0
      %v1624 = vadd.f32 0.0, %v1623
      %v1625 = vpop.f32.mrb[0].mxu0
      %1626 = vmatprep.mubr.f32.mxu0 0.0
      %1627 = vmatmul.mubr.f32.gmra.mrb[0].mxu0 %v971
      %v1628 = vpop.f32.mrb[0].mxu0
      %v1629 = vadd.f32 0.0, %v1628
      %v1630 = vpop.f32.mrb[0].mxu0
      %1631 = vmatprep.mubr.f32.mxu0 0.0
      %1632 = vmatmul.mubr.f32.gmra.mrb[0].mxu0 %v974
      %v1633 = vpop.f32.mrb[0].mxu0
      %v1634 = vadd.f32 0.0, %v1633
      %v1635 = vpop.f32.mrb[0].mxu0
      %1636 = vmatprep.mubr.f32.mxu0 0.0
      %1637 = vmatmul.mubr.f32.gmra.mrb[0].mxu0 %v977
      %v1638 = vpop.f32.mrb[0].mxu0
      %v1639 = vadd.f32 0.0, %v1638
      %v1640 = vpop.f32.mrb[0].mxu0
      %1641 = vmatprep.mubr.f32.mxu0 0.0
      %1642 = vmatmul.mubr.f32.gmra.mrb[0].mxu0 %v980
      %v1643 = vpop.f32.mrb[0].mxu0
      %v1644 = vadd.f32 0.0, %v1643
      %v1645 = vpop.f32.mrb[0].mxu0
      %1646 = vmatprep.mubr.f32.mxu0 0.0
      %1647 = vmatmul.mubr.f32.gmra.mrb[0].mxu0 %v983
      %v1648 = vpop.f32.mrb[0].mxu0
      %v1649 = vadd.f32 0.0, %v1648
      %v1650 = vpop.f32.mrb[0].mxu0
      %1651 = vmatprep.mubr.f32.mxu0 0.0
      %1652 = vmatmul.mubr.f32.gmra.mrb[0].mxu0 %v986
      %v1653 = vpop.f32.mrb[0].mxu0
      %v1654 = vadd.f32 0.0, %v1653
      %v1655 = vpop.f32.mrb[0].mxu0
      %1656 = vmatprep.mubr.f32.mxu0 0.0
      %1657 = vmatmul.mubr.f32.gmra.mrb[0].mxu0 %v989
      %v1658 = vpop.f32.mrb[0].mxu0
      %v1659 = vadd.f32 0.0, %v1658
      %v1660 = vpop.f32.mrb[0].mxu0
      %1661 = vmatprep.mubr.f32.mxu0 0.0
      %1662 = vmatmul.mubr.f32.gmra.mrb[0].mxu0 %v992
      %v1663 = vpop.f32.mrb[0].mxu0
      %v1664 = vadd.f32 0.0, %v1663
      %v1665 = vpop.f32.mrb[0].mxu0
      %1666 = vmatprep.mubr.f32.mxu0 0.0
      %1667 = vmatmul.mubr.f32.gmra.mrb[0].mxu0 %v995
      %v1668 = vpop.f32.mrb[0].mxu0
      %v1669 = vadd.f32 0.0, %v1668
      %v1670 = vpop.f32.mrb[0].mxu0
      %1671 = vmatprep.mubr.f32.mxu0 0.0
      %1672 = vmatmul.mubr.f32.gmra.mrb[0].mxu0 %v998
      %v1673 = vpop.f32.mrb[0].mxu0
      %v1674 = vadd.f32 0.0, %v1673
      %v1675 = vpop.f32.mrb[0].mxu0
      %1676 = vmatprep.mubr.f32.mxu0 0.0
      %1677 = vmatmul.mubr.f32.gmra.mrb[0].mxu0 %v1001
      %v1678 = vpop.f32.mrb[0].mxu0
      %v1679 = vadd.f32 0.0, %v1678
      %v1680 = vpop.f32.mrb[0].mxu0
      %1681 = vmatprep.mubr.f32.mxu0 0.0
      %1682 = vmatmul.mubr.f32.gmra.mrb[0].mxu0 %v1004
      %v1683 = vpop.f32.mrb[0].mxu0
      %v1684 = vadd.f32 0.0, %v1683
      %v1685 = vpop.f32.mrb[0].mxu0
      %1686 = vmatprep.mubr.f32.mxu0 0.0
      %1687 = vmatmul.mubr.f32.gmra.mrb[0].mxu0 %v1007
      %v1688 = vpop.f32.mrb[0].mxu0
      %v1689 = vadd.f32 0.0, %v1688
      %v1690 = vpop.f32.mrb[0].mxu0
      %1691 = vmatprep.mubr.f32.mxu0 0.0
      %1692 = vmatmul.mubr.f32.gmra.mrb[0].mxu0 %v1010
      %v1693 = vpop.f32.mrb[0].mxu0
      %v1694 = vadd.f32 0.0, %v1693
      %v1695 = vpop.f32.mrb[0].mxu0
      %1696 = vmatprep.mubr.f32.mxu0 0.0
      %1697 = vmatmul.mubr.f32.gmra.mrb[0].mxu0 %v1013
      %v1698 = vpop.f32.mrb[0].mxu0
      %v1699 = vadd.f32 0.0, %v1698
      %v1700 = vpop.f32.mrb[0].mxu0
      %1701 = vmatprep.mubr.f32.mxu0 0.0
      %1702 = vmatmul.mubr.f32.gmra.mrb[0].mxu0 %v1016
      %v1703 = vpop.f32.mrb[0].mxu0
      %v1704 = vadd.f32 0.0, %v1703
      %v1705 = vpop.f32.mrb[0].mxu0
      %1706 = vmatprep.mubr.f32.mxu0 0.0
      %1707 = vmatmul.mubr.f32.gmra.mrb[0].mxu0 %v1019
      %v1708 = vpop.f32.mrb[0].mxu0
      %v1709 = vadd.f32 0.0, %v1708
      %v1710 = vpop.f32.mrb[0].mxu0
      %1711 = vmatprep.mubr.f32.mxu0 0.0
      %1712 = vmatmul.mubr.f32.gmra.mrb[0].mxu0 %v1022
      %v1713 = vpop.f32.mrb[0].mxu0
      %v1714 = vadd.f32 0.0, %v1713
      %v1715 = vpop.f32.mrb[0].mxu0
      %1716 = vmatprep.mubr.f32.mxu0 0.0
      %1717 = vmatmul.mubr.f32.gmra.mrb[0].mxu0 %v1025
      %v1718 = vpop.f32.mrb[0].mxu0
      %v1719 = vadd.f32 0.0, %v1718
      %v1720 = vpop.f32.mrb[0].mxu0
      %1721 = vmatprep.mubr.f32.mxu0 0.0
      %1722 = vmatmul.mubr.f32.gmra.mrb[0].mxu0 %v1028
      %v1723 = vpop.f32.mrb[0].mxu0
      %v1724 = vadd.f32 0.0, %v1723
      %v1725 = vpop.f32.mrb[0].mxu0
      %1726 = vmatprep.mubr.f32.mxu0 0.0
      %1727 = vmatmul.mubr.f32.gmra.mrb[0].mxu0 %v1031
      %v1728 = vpop.f32.mrb[0].mxu0
      %v1729 = vadd.f32 0.0, %v1728
      %v1730 = vpop.f32.mrb[0].mxu0
      %1731 = vmatprep.mubr.f32.mxu0 0.0
      %1732 = vmatmul.mubr.f32.gmra.mrb[0].mxu0 %v1034
      %v1733 = vpop.f32.mrb[0].mxu0
      %v1734 = vadd.f32 0.0, %v1733
      %v1735 = vpop.f32.mrb[0].mxu0
      %1736 = vmatprep.mubr.f32.mxu0 0.0
      %1737 = vmatmul.mubr.f32.gmra.mrb[0].mxu0 %v1037
      %v1738 = vpop.f32.mrb[0].mxu0
      %v1739 = vadd.f32 0.0, %v1738
      %v1740 = vpop.f32.mrb[0].mxu0
      %1741 = vmatprep.mubr.f32.mxu0 0.0
      %1742 = vmatmul.mubr.f32.gmra.mrb[0].mxu0 %v1267
      %v1743 = vpop.f32.mrb[0].mxu0
      %v1744 = vadd.f32 0.0, %v1743
      %v1745 = vpop.f32.mrb[0].mxu0
      %1746 = vmatprep.mubr.f32.mxu0 0.0
      %1747 = vmatmul.mubr.f32.gmra.mrb[0].mxu0 %v1270
      %v1748 = vpop.f32.mrb[0].mxu0
      %v1749 = vadd.f32 0.0, %v1748
      %v1750 = vpop.f32.mrb[0].mxu0
      %1751 = vmatprep.mubr.f32.mxu0 0.0
      %1752 = vmatmul.mubr.f32.gmra.mrb[0].mxu0 %v1532
      %v1753 = vpop.f32.mrb[0].mxu0
      %v1754 = vadd.f32 0.0, %v1753
      %v1755 = vpop.f32.mrb[0].mxu0
      %1756 = vmatprep.mubr.f32.mxu0 0.0
      %1757 = vmatmul.mubr.f32.gmra.mrb[0].mxu0 %v1535
      %v1758 = vpop.f32.mrb[0].mxu0
      %v1759 = vadd.f32 0.0, %v1758
      %v1760 = vpop.f32.mrb[0].mxu0
      %1761 = vdwg.mxu0
      %v1762 = vadd.f32 %v1497, %v1604
      %v1763 = vadd.f32 %v1498, %v1609
      %v1764 = vadd.f32 %v1499, %v1614
      %v1765 = vadd.f32 %v1500, %v1619
      %v1766 = vadd.f32 %v1501, %v1624
      %v1767 = vadd.f32 %v1502, %v1629
      %v1768 = vadd.f32 %v1503, %v1634
      %v1769 = vadd.f32 %v1504, %v1639
      %v1770 = vadd.f32 %v1505, %v1644
      %v1771 = vadd.f32 %v1506, %v1649
      %v1772 = vadd.f32 %v1507, %v1654
      %v1773 = vadd.f32 %v1508, %v1659
      %v1774 = vadd.f32 %v1509, %v1664
      %v1775 = vadd.f32 %v1510, %v1669
      %v1776 = vadd.f32 %v1511, %v1674
      %v1777 = vadd.f32 %v1512, %v1679
      %v1778 = vadd.f32 %v1513, %v1684
      %v1779 = vadd.f32 %v1514, %v1689
      %v1780 = vadd.f32 %v1515, %v1694
      %v1781 = vadd.f32 %v1516, %v1699
      %v1782 = vadd.f32 %v1517, %v1704
      %v1783 = vadd.f32 %v1518, %v1709
      %v1784 = vadd.f32 %v1519, %v1714
      %v1785 = vadd.f32 %v1520, %v1719
      %v1786 = vadd.f32 %v1521, %v1724
      %v1787 = vadd.f32 %v1522, %v1729
      %v1788 = vadd.f32 %v1523, %v1734
      %v1789 = vadd.f32 %v1524, %v1739
      %v1790 = vadd.f32 %v1525, %v1744
      %v1791 = vadd.f32 %v1526, %v1749
      %v1792 = vadd.f32 %v1527, %v1754
      %v1793 = vadd.f32 %v1528, %v1759
      %v1794 = vld [vmem:[#allocation2 + $0x1] sm:$0xff]
      %v1795 = vld [vmem:[#allocation2 + $0x9] sm:$0xff]
      %v1796 = vld [vmem:[#allocation2 + $0x19] sm:$0xff]
      %v1797 = vld [vmem:[#allocation2 + $0x21] sm:$0xff]
      %v1798 = vld [vmem:[#allocation2 + $0x31] sm:$0xff]
      %v1799 = vld [vmem:[#allocation2 + $0x39] sm:$0xff]
      %v1800 = vld [vmem:[#allocation2 + $0x49] sm:$0xff]
      %v1801 = vld [vmem:[#allocation2 + $0x51] sm:$0xff]
      %v1802 = vld [vmem:[#allocation2 + $0x61] sm:$0xff]
      %v1803 = vld [vmem:[#allocation2 + $0x69] sm:$0xff]
      %v1804 = vld [vmem:[#allocation2 + $0x79] sm:$0xff]
      %v1805 = vld [vmem:[#allocation2 + $0x81] sm:$0xff]
      %v1806 = vld [vmem:[#allocation2 + $0x91] sm:$0xff]
      %v1807 = vld [vmem:[#allocation2 + $0x99] sm:$0xff]
      %v1808 = vld [vmem:[#allocation2 + $0xa9] sm:$0xff]
      %v1809 = vld [vmem:[#allocation2 + $0xb1] sm:$0xff]
      %v1810 = vld [vmem:[#allocation2 + $0xc1] sm:$0xff]
      %v1811 = vld [vmem:[#allocation2 + $0xc9] sm:$0xff]
      %v1812 = vld [vmem:[#allocation2 + $0xd9] sm:$0xff]
      %v1813 = vld [vmem:[#allocation2 + $0xe1] sm:$0xff]
      %v1814 = vld [vmem:[#allocation2 + $0xf1] sm:$0xff]
      %v1815 = vld [vmem:[#allocation2 + $0xf9] sm:$0xff]
      %v1816 = vld [vmem:[#allocation2 + $0x109] sm:$0xff]
      %v1817 = vld [vmem:[#allocation2 + $0x111] sm:$0xff]
      %v1818 = vld [vmem:[#allocation2 + $0x121] sm:$0xff]
      %v1819 = vld [vmem:[#allocation2 + $0x129] sm:$0xff]
      %v1820 = vld [vmem:[#allocation2 + $0x139] sm:$0xff]
      %v1821 = vld [vmem:[#allocation2 + $0x141] sm:$0xff]
      %v1822 = vld [vmem:[#allocation2 + $0x151] sm:$0xff]
      %v1823 = vld [vmem:[#allocation2 + $0x159] sm:$0xff]
      %v1824 = vld [vmem:[#allocation2 + $0x169] sm:$0xff]
      %v1825 = vld [vmem:[#allocation2 + $0x171] sm:$0xff]
      %v1826 = vld [vmem:[#allocation2 + $0x181] sm:$0xff]
      %v1827 = vld [vmem:[#allocation2 + $0x189] sm:$0xff]
      %v1828 = vld [vmem:[#allocation2 + $0x199] sm:$0xff]
      %v1829 = vld [vmem:[#allocation2 + $0x1a1] sm:$0xff]
      %s1830 = scalar_lea.vmem %s4, 8
      %v1831 = vld [vmem:[%s1830] sm:$0xff]
      %v1833 = vsel %vm326, %v1794, 0
      %v1836 = vsel %vm326, %v1795, 0
      %v1839 = vsel %vm326, %v1796, 0
      %v1842 = vsel %vm326, %v1797, 0
      %v1845 = vsel %vm326, %v1798, 0
      %v1848 = vsel %vm326, %v1799, 0
      %v1851 = vsel %vm326, %v1800, 0
      %v1854 = vsel %vm326, %v1801, 0
      %v1857 = vsel %vm326, %v1802, 0
      %v1860 = vsel %vm326, %v1803, 0
      %v1863 = vsel %vm326, %v1804, 0
      %v1866 = vsel %vm326, %v1805, 0
      %v1869 = vsel %vm326, %v1806, 0
      %v1872 = vsel %vm326, %v1807, 0
      %v1875 = vsel %vm326, %v1808, 0
      %v1878 = vsel %vm326, %v1809, 0
      %v1881 = vsel %vm326, %v1810, 0
      %v1884 = vsel %vm326, %v1811, 0
      %v1887 = vsel %vm326, %v1812, 0
      %v1890 = vsel %vm326, %v1813, 0
      %v1893 = vsel %vm326, %v1814, 0
      %v1896 = vsel %vm326, %v1815, 0
      %v1899 = vsel %vm326, %v1816, 0
      %v1902 = vsel %vm326, %v1817, 0
      %v1905 = vsel %vm326, %v1818, 0
      %v1908 = vsel %vm326, %v1819, 0
      %v1911 = vsel %vm326, %v1820, 0
      %v1914 = vsel %vm326, %v1821, 0
      %v1917 = vsel %vm326, %v1822, 0
      %v1920 = vsel %vm326, %v1823, 0
      %v1923 = vsel %vm326, %v1824, 0
      %v1926 = vsel %vm326, %v1825, 0
      %1928 = vmatprep.subr.mxu0 0.0
      %1929 = vmatpush1.msra.mxu0 %v1831
      %1930 = vmatprep.subr.mxu0 0.0
      %1931 = vmatpush1.msra.mxu0 0.0
      %1932 = vmatprep.subr.mxu0 0.0
      %1933 = vmatpush1.msra.mxu0 0.0
      %1934 = vmatprep.subr.mxu0 0.0
      %1935 = vmatpush1.msra.mxu0 0.0
      %1936 = vmatprep.subr.mxu0 0.0
      %1937 = vmatpush1.msra.mxu0 0.0
      %1938 = vmatprep.subr.mxu0 0.0
      %1939 = vmatpush1.msra.mxu0 0.0
      %1940 = vmatprep.subr.mxu0 0.0
      %1941 = vmatpush1.msra.mxu0 0.0
      %1942 = vmatprep.subr.mxu0 0.0
      %1943 = vmatpush1.msra.mxu0 0.0
      %1944 = vmatprep.subr.mxu0 0.0
      %1945 = vmatpush1.msra.mxu0 0.0
      %1946 = vmatprep.subr.mxu0 0.0
      %1947 = vmatpush1.msra.mxu0 0.0
      %1948 = vmatprep.subr.mxu0 0.0
      %1949 = vmatpush1.msra.mxu0 0.0
      %1950 = vmatprep.subr.mxu0 0.0
      %1951 = vmatpush1.msra.mxu0 0.0
      %1952 = vmatprep.subr.mxu0 0.0
      %1953 = vmatpush1.msra.mxu0 0.0
      %1954 = vmatprep.subr.mxu0 0.0
      %1955 = vmatpush1.msra.mxu0 0.0
      %1956 = vmatprep.subr.mxu0 0.0
      %1957 = vmatpush1.msra.mxu0 0.0
      %1958 = vmatprep.subr.mxu0 0.0
      %1959 = vmatpush1.msra.mxu0 0.0
      %1960 = vmatprep.subr.mxu0 0.0
      %1961 = vmatpush1.msra.mxu0 0.0
      %1962 = vmatprep.subr.mxu0 0.0
      %1963 = vmatpush1.msra.mxu0 0.0
      %1964 = vmatprep.subr.mxu0 0.0
      %1965 = vmatpush1.msra.mxu0 0.0
      %1966 = vmatprep.subr.mxu0 0.0
      %1967 = vmatpush1.msra.mxu0 0.0
      %1968 = vmatprep.subr.mxu0 0.0
      %1969 = vmatpush1.msra.mxu0 0.0
      %1970 = vmatprep.subr.mxu0 0.0
      %1971 = vmatpush1.msra.mxu0 0.0
      %1972 = vmatprep.subr.mxu0 0.0
      %1973 = vmatpush1.msra.mxu0 0.0
      %1974 = vmatprep.subr.mxu0 0.0
      %1975 = vmatpush1.msra.mxu0 0.0
      %1976 = vmatprep.subr.mxu0 0.0
      %1977 = vmatpush1.msra.mxu0 0.0
      %1978 = vmatprep.subr.mxu0 0.0
      %1979 = vmatpush1.msra.mxu0 0.0
      %1980 = vmatprep.subr.mxu0 0.0
      %1981 = vmatpush1.msra.mxu0 0.0
      %1982 = vmatprep.subr.mxu0 0.0
      %1983 = vmatpush1.msra.mxu0 0.0
      %1984 = vmatprep.subr.mxu0 0.0
      %1985 = vmatpush1.msra.mxu0 0.0
      %1986 = vmatprep.subr.mxu0 0.0
      %1987 = vmatpush1.msra.mxu0 0.0
      %1988 = vmatprep.subr.mxu0 0.0
      %1989 = vmatpush1.msra.mxu0 0.0
      %1990 = vmatprep.subr.mxu0 0.0
      %1991 = vmatpush1.msra.mxu0 0.0
      %1992 = vmatprep.mubr.f32.mxu0 0.0
      %1993 = vmatmul.mubr.f32.gmra.mrb[0].mxu0 %v1833
      %v1994 = vpop.f32.mrb[0].mxu0
      %v1995 = vadd.f32 0.0, %v1994
      %v1996 = vpop.f32.mrb[0].mxu0
      %1997 = vmatprep.mubr.f32.mxu0 0.0
      %1998 = vmatmul.mubr.f32.gmra.mrb[0].mxu0 %v1836
      %v1999 = vpop.f32.mrb[0].mxu0
      %v2000 = vadd.f32 0.0, %v1999
      %v2001 = vpop.f32.mrb[0].mxu0
      %2002 = vmatprep.mubr.f32.mxu0 0.0
      %2003 = vmatmul.mubr.f32.gmra.mrb[0].mxu0 %v1839
      %v2004 = vpop.f32.mrb[0].mxu0
      %v2005 = vadd.f32 0.0, %v2004
      %v2006 = vpop.f32.mrb[0].mxu0
      %2007 = vmatprep.mubr.f32.mxu0 0.0
      %2008 = vmatmul.mubr.f32.gmra.mrb[0].mxu0 %v1842
      %v2009 = vpop.f32.mrb[0].mxu0
      %v2010 = vadd.f32 0.0, %v2009
      %v2011 = vpop.f32.mrb[0].mxu0
      %2012 = vmatprep.mubr.f32.mxu0 0.0
      %2013 = vmatmul.mubr.f32.gmra.mrb[0].mxu0 %v1845
      %v2014 = vpop.f32.mrb[0].mxu0
      %v2015 = vadd.f32 0.0, %v2014
      %v2016 = vpop.f32.mrb[0].mxu0
      %2017 = vmatprep.mubr.f32.mxu0 0.0
      %2018 = vmatmul.mubr.f32.gmra.mrb[0].mxu0 %v1848
      %v2019 = vpop.f32.mrb[0].mxu0
      %v2020 = vadd.f32 0.0, %v2019
      %v2021 = vpop.f32.mrb[0].mxu0
      %2022 = vmatprep.mubr.f32.mxu0 0.0
      %2023 = vmatmul.mubr.f32.gmra.mrb[0].mxu0 %v1851
      %v2024 = vpop.f32.mrb[0].mxu0
      %v2025 = vadd.f32 0.0, %v2024
      %v2026 = vpop.f32.mrb[0].mxu0
      %2027 = vmatprep.mubr.f32.mxu0 0.0
      %2028 = vmatmul.mubr.f32.gmra.mrb[0].mxu0 %v1854
      %v2029 = vpop.f32.mrb[0].mxu0
      %v2030 = vadd.f32 0.0, %v2029
      %v2031 = vpop.f32.mrb[0].mxu0
      %2032 = vmatprep.mubr.f32.mxu0 0.0
      %2033 = vmatmul.mubr.f32.gmra.mrb[0].mxu0 %v1857
      %v2034 = vpop.f32.mrb[0].mxu0
      %v2035 = vadd.f32 0.0, %v2034
      %v2036 = vpop.f32.mrb[0].mxu0
      %2037 = vmatprep.mubr.f32.mxu0 0.0
      %2038 = vmatmul.mubr.f32.gmra.mrb[0].mxu0 %v1860
      %v2039 = vpop.f32.mrb[0].mxu0
      %v2040 = vadd.f32 0.0, %v2039
      %v2041 = vpop.f32.mrb[0].mxu0
      %2042 = vmatprep.mubr.f32.mxu0 0.0
      %2043 = vmatmul.mubr.f32.gmra.mrb[0].mxu0 %v1863
      %v2044 = vpop.f32.mrb[0].mxu0
      %v2045 = vadd.f32 0.0, %v2044
      %v2046 = vpop.f32.mrb[0].mxu0
      %2047 = vmatprep.mubr.f32.mxu0 0.0
      %2048 = vmatmul.mubr.f32.gmra.mrb[0].mxu0 %v1866
      %v2049 = vpop.f32.mrb[0].mxu0
      %v2050 = vadd.f32 0.0, %v2049
      %v2051 = vpop.f32.mrb[0].mxu0
      %2052 = vmatprep.mubr.f32.mxu0 0.0
      %2053 = vmatmul.mubr.f32.gmra.mrb[0].mxu0 %v1869
      %v2054 = vpop.f32.mrb[0].mxu0
      %v2055 = vadd.f32 0.0, %v2054
      %v2056 = vpop.f32.mrb[0].mxu0
      %2057 = vmatprep.mubr.f32.mxu0 0.0
      %2058 = vmatmul.mubr.f32.gmra.mrb[0].mxu0 %v1872
      %v2059 = vpop.f32.mrb[0].mxu0
      %v2060 = vadd.f32 0.0, %v2059
      %v2061 = vpop.f32.mrb[0].mxu0
      %2062 = vmatprep.mubr.f32.mxu0 0.0
      %2063 = vmatmul.mubr.f32.gmra.mrb[0].mxu0 %v1875
      %v2064 = vpop.f32.mrb[0].mxu0
      %v2065 = vadd.f32 0.0, %v2064
      %v2066 = vpop.f32.mrb[0].mxu0
      %2067 = vmatprep.mubr.f32.mxu0 0.0
      %2068 = vmatmul.mubr.f32.gmra.mrb[0].mxu0 %v1878
      %v2069 = vpop.f32.mrb[0].mxu0
      %v2070 = vadd.f32 0.0, %v2069
      %v2071 = vpop.f32.mrb[0].mxu0
      %2072 = vmatprep.mubr.f32.mxu0 0.0
      %2073 = vmatmul.mubr.f32.gmra.mrb[0].mxu0 %v1881
      %v2074 = vpop.f32.mrb[0].mxu0
      %v2075 = vadd.f32 0.0, %v2074
      %v2076 = vpop.f32.mrb[0].mxu0
      %2077 = vmatprep.mubr.f32.mxu0 0.0
      %2078 = vmatmul.mubr.f32.gmra.mrb[0].mxu0 %v1884
      %v2079 = vpop.f32.mrb[0].mxu0
      %v2080 = vadd.f32 0.0, %v2079
      %v2081 = vpop.f32.mrb[0].mxu0
      %2082 = vmatprep.mubr.f32.mxu0 0.0
      %2083 = vmatmul.mubr.f32.gmra.mrb[0].mxu0 %v1887
      %v2084 = vpop.f32.mrb[0].mxu0
      %v2085 = vadd.f32 0.0, %v2084
      %v2086 = vpop.f32.mrb[0].mxu0
      %2087 = vmatprep.mubr.f32.mxu0 0.0
      %2088 = vmatmul.mubr.f32.gmra.mrb[0].mxu0 %v1890
      %v2089 = vpop.f32.mrb[0].mxu0
      %v2090 = vadd.f32 0.0, %v2089
      %v2091 = vpop.f32.mrb[0].mxu0
      %2092 = vmatprep.mubr.f32.mxu0 0.0
      %2093 = vmatmul.mubr.f32.gmra.mrb[0].mxu0 %v1893
      %v2094 = vpop.f32.mrb[0].mxu0
      %v2095 = vadd.f32 0.0, %v2094
      %v2096 = vpop.f32.mrb[0].mxu0
      %2097 = vmatprep.mubr.f32.mxu0 0.0
      %2098 = vmatmul.mubr.f32.gmra.mrb[0].mxu0 %v1896
      %v2099 = vpop.f32.mrb[0].mxu0
      %v2100 = vadd.f32 0.0, %v2099
      %v2101 = vpop.f32.mrb[0].mxu0
      %2102 = vmatprep.mubr.f32.mxu0 0.0
      %2103 = vmatmul.mubr.f32.gmra.mrb[0].mxu0 %v1899
      %v2104 = vpop.f32.mrb[0].mxu0
      %v2105 = vadd.f32 0.0, %v2104
      %v2106 = vpop.f32.mrb[0].mxu0
      %2107 = vmatprep.mubr.f32.mxu0 0.0
      %2108 = vmatmul.mubr.f32.gmra.mrb[0].mxu0 %v1902
      %v2109 = vpop.f32.mrb[0].mxu0
      %v2110 = vadd.f32 0.0, %v2109
      %v2111 = vpop.f32.mrb[0].mxu0
      %2112 = vmatprep.mubr.f32.mxu0 0.0
      %2113 = vmatmul.mubr.f32.gmra.mrb[0].mxu0 %v1905
      %v2114 = vpop.f32.mrb[0].mxu0
      %v2115 = vadd.f32 0.0, %v2114
      %v2116 = vpop.f32.mrb[0].mxu0
      %2117 = vmatprep.mubr.f32.mxu0 0.0
      %2118 = vmatmul.mubr.f32.gmra.mrb[0].mxu0 %v1908
      %v2119 = vpop.f32.mrb[0].mxu0
      %v2120 = vadd.f32 0.0, %v2119
      %v2121 = vpop.f32.mrb[0].mxu0
      %2122 = vmatprep.mubr.f32.mxu0 0.0
      %2123 = vmatmul.mubr.f32.gmra.mrb[0].mxu0 %v1911
      %v2124 = vpop.f32.mrb[0].mxu0
      %v2125 = vadd.f32 0.0, %v2124
      %v2126 = vpop.f32.mrb[0].mxu0
      %2127 = vmatprep.mubr.f32.mxu0 0.0
      %2128 = vmatmul.mubr.f32.gmra.mrb[0].mxu0 %v1914
      %v2129 = vpop.f32.mrb[0].mxu0
      %v2130 = vadd.f32 0.0, %v2129
      %v2131 = vpop.f32.mrb[0].mxu0
      %2132 = vmatprep.mubr.f32.mxu0 0.0
      %2133 = vmatmul.mubr.f32.gmra.mrb[0].mxu0 %v1917
      %v2134 = vpop.f32.mrb[0].mxu0
      %v2135 = vadd.f32 0.0, %v2134
      %v2136 = vpop.f32.mrb[0].mxu0
      %2137 = vmatprep.mubr.f32.mxu0 0.0
      %2138 = vmatmul.mubr.f32.gmra.mrb[0].mxu0 %v1920
      %v2139 = vpop.f32.mrb[0].mxu0
      %v2140 = vadd.f32 0.0, %v2139
      %v2141 = vpop.f32.mrb[0].mxu0
      %2142 = vmatprep.mubr.f32.mxu0 0.0
      %2143 = vmatmul.mubr.f32.gmra.mrb[0].mxu0 %v1923
      %v2144 = vpop.f32.mrb[0].mxu0
      %v2145 = vadd.f32 0.0, %v2144
      %v2146 = vpop.f32.mrb[0].mxu0
      %2147 = vmatprep.mubr.f32.mxu0 0.0
      %2148 = vmatmul.mubr.f32.gmra.mrb[0].mxu0 %v1926
      %v2149 = vpop.f32.mrb[0].mxu0
      %v2150 = vadd.f32 0.0, %v2149
      %v2151 = vpop.f32.mrb[0].mxu0
      %2152 = vdwg.mxu0
      %v2153 = vadd.f32 %v1762, %v1995
      %v2154 = vadd.f32 %v1763, %v2000
      %v2155 = vadd.f32 %v1764, %v2005
      %v2156 = vadd.f32 %v1765, %v2010
      %v2157 = vadd.f32 %v1766, %v2015
      %v2158 = vadd.f32 %v1767, %v2020
      %v2159 = vadd.f32 %v1768, %v2025
      %v2160 = vadd.f32 %v1769, %v2030
      %v2161 = vadd.f32 %v1770, %v2035
      %v2162 = vadd.f32 %v1771, %v2040
      %v2163 = vadd.f32 %v1772, %v2045
      %v2164 = vadd.f32 %v1773, %v2050
      %v2165 = vadd.f32 %v1774, %v2055
      %v2166 = vadd.f32 %v1775, %v2060
      %v2167 = vadd.f32 %v1776, %v2065
      %v2168 = vadd.f32 %v1777, %v2070
      %v2169 = vadd.f32 %v1778, %v2075
      %v2170 = vadd.f32 %v1779, %v2080
      %v2171 = vadd.f32 %v1780, %v2085
      %v2172 = vadd.f32 %v1781, %v2090
      %v2173 = vadd.f32 %v1782, %v2095
      %v2174 = vadd.f32 %v1783, %v2100
      %v2175 = vadd.f32 %v1784, %v2105
      %v2176 = vadd.f32 %v1785, %v2110
      %v2177 = vadd.f32 %v1786, %v2115
      %v2178 = vadd.f32 %v1787, %v2120
      %v2179 = vadd.f32 %v1788, %v2125
      %v2180 = vadd.f32 %v1789, %v2130
      %v2181 = vadd.f32 %v1790, %v2135
      %v2182 = vadd.f32 %v1791, %v2140
      %v2183 = vadd.f32 %v1792, %v2145
      %v2184 = vadd.f32 %v1793, %v2150
      %s2185 = scalar_lea.vmem %s4, 32
      %v2186 = vld [vmem:[%s2185] sm:$0xff]
      %v2188 = vsel %vm326, %v1826, 0
      %v2191 = vsel %vm326, %v1827, 0
      %2193 = vmatprep.subr.mxu0 0.0
      %2194 = vmatpush1.msra.mxu0 %v2186
      %2195 = vmatprep.subr.mxu0 0.0
      %2196 = vmatpush1.msra.mxu0 0.0
      %2197 = vmatprep.subr.mxu0 0.0
      %2198 = vmatpush1.msra.mxu0 0.0
      %2199 = vmatprep.subr.mxu0 0.0
      %2200 = vmatpush1.msra.mxu0 0.0
      %2201 = vmatprep.subr.mxu0 0.0
      %2202 = vmatpush1.msra.mxu0 0.0
      %2203 = vmatprep.subr.mxu0 0.0
      %2204 = vmatpush1.msra.mxu0 0.0
      %2205 = vmatprep.subr.mxu0 0.0
      %2206 = vmatpush1.msra.mxu0 0.0
      %2207 = vmatprep.subr.mxu0 0.0
      %2208 = vmatpush1.msra.mxu0 0.0
      %2209 = vmatprep.subr.mxu0 0.0
      %2210 = vmatpush1.msra.mxu0 0.0
      %2211 = vmatprep.subr.mxu0 0.0
      %2212 = vmatpush1.msra.mxu0 0.0
      %2213 = vmatprep.subr.mxu0 0.0
      %2214 = vmatpush1.msra.mxu0 0.0
      %2215 = vmatprep.subr.mxu0 0.0
      %2216 = vmatpush1.msra.mxu0 0.0
      %2217 = vmatprep.subr.mxu0 0.0
      %2218 = vmatpush1.msra.mxu0 0.0
      %2219 = vmatprep.subr.mxu0 0.0
      %2220 = vmatpush1.msra.mxu0 0.0
      %2221 = vmatprep.subr.mxu0 0.0
      %2222 = vmatpush1.msra.mxu0 0.0
      %2223 = vmatprep.subr.mxu0 0.0
      %2224 = vmatpush1.msra.mxu0 0.0
      %2225 = vmatprep.subr.mxu0 0.0
      %2226 = vmatpush1.msra.mxu0 0.0
      %2227 = vmatprep.subr.mxu0 0.0
      %2228 = vmatpush1.msra.mxu0 0.0
      %2229 = vmatprep.subr.mxu0 0.0
      %2230 = vmatpush1.msra.mxu0 0.0
      %2231 = vmatprep.subr.mxu0 0.0
      %2232 = vmatpush1.msra.mxu0 0.0
      %2233 = vmatprep.subr.mxu0 0.0
      %2234 = vmatpush1.msra.mxu0 0.0
      %2235 = vmatprep.subr.mxu0 0.0
      %2236 = vmatpush1.msra.mxu0 0.0
      %2237 = vmatprep.subr.mxu0 0.0
      %2238 = vmatpush1.msra.mxu0 0.0
      %2239 = vmatprep.subr.mxu0 0.0
      %2240 = vmatpush1.msra.mxu0 0.0
      %2241 = vmatprep.subr.mxu0 0.0
      %2242 = vmatpush1.msra.mxu0 0.0
      %2243 = vmatprep.subr.mxu0 0.0
      %2244 = vmatpush1.msra.mxu0 0.0
      %2245 = vmatprep.subr.mxu0 0.0
      %2246 = vmatpush1.msra.mxu0 0.0
      %2247 = vmatprep.subr.mxu0 0.0
      %2248 = vmatpush1.msra.mxu0 0.0
      %2249 = vmatprep.subr.mxu0 0.0
      %2250 = vmatpush1.msra.mxu0 0.0
      %2251 = vmatprep.subr.mxu0 0.0
      %2252 = vmatpush1.msra.mxu0 0.0
      %2253 = vmatprep.subr.mxu0 0.0
      %2254 = vmatpush1.msra.mxu0 0.0
      %2255 = vmatprep.subr.mxu0 0.0
      %2256 = vmatpush1.msra.mxu0 0.0
      %2257 = vmatprep.mubr.f32.mxu0 0.0
      %2258 = vmatmul.mubr.f32.gmra.mrb[0].mxu0 %v1839
      %v2259 = vpop.f32.mrb[0].mxu0
      %v2260 = vadd.f32 0.0, %v2259
      %v2261 = vpop.f32.mrb[0].mxu0
      %2262 = vmatprep.mubr.f32.mxu0 0.0
      %2263 = vmatmul.mubr.f32.gmra.mrb[0].mxu0 %v1842
      %v2264 = vpop.f32.mrb[0].mxu0
      %v2265 = vadd.f32 0.0, %v2264
      %v2266 = vpop.f32.mrb[0].mxu0
      %2267 = vmatprep.mubr.f32.mxu0 0.0
      %2268 = vmatmul.mubr.f32.gmra.mrb[0].mxu0 %v1845
      %v2269 = vpop.f32.mrb[0].mxu0
      %v2270 = vadd.f32 0.0, %v2269
      %v2271 = vpop.f32.mrb[0].mxu0
      %2272 = vmatprep.mubr.f32.mxu0 0.0
      %2273 = vmatmul.mubr.f32.gmra.mrb[0].mxu0 %v1848
      %v2274 = vpop.f32.mrb[0].mxu0
      %v2275 = vadd.f32 0.0, %v2274
      %v2276 = vpop.f32.mrb[0].mxu0
      %2277 = vmatprep.mubr.f32.mxu0 0.0
      %2278 = vmatmul.mubr.f32.gmra.mrb[0].mxu0 %v1851
      %v2279 = vpop.f32.mrb[0].mxu0
      %v2280 = vadd.f32 0.0, %v2279
      %v2281 = vpop.f32.mrb[0].mxu0
      %2282 = vmatprep.mubr.f32.mxu0 0.0
      %2283 = vmatmul.mubr.f32.gmra.mrb[0].mxu0 %v1854
      %v2284 = vpop.f32.mrb[0].mxu0
      %v2285 = vadd.f32 0.0, %v2284
      %v2286 = vpop.f32.mrb[0].mxu0
      %2287 = vmatprep.mubr.f32.mxu0 0.0
      %2288 = vmatmul.mubr.f32.gmra.mrb[0].mxu0 %v1857
      %v2289 = vpop.f32.mrb[0].mxu0
      %v2290 = vadd.f32 0.0, %v2289
      %v2291 = vpop.f32.mrb[0].mxu0
      %2292 = vmatprep.mubr.f32.mxu0 0.0
      %2293 = vmatmul.mubr.f32.gmra.mrb[0].mxu0 %v1860
      %v2294 = vpop.f32.mrb[0].mxu0
      %v2295 = vadd.f32 0.0, %v2294
      %v2296 = vpop.f32.mrb[0].mxu0
      %2297 = vmatprep.mubr.f32.mxu0 0.0
      %2298 = vmatmul.mubr.f32.gmra.mrb[0].mxu0 %v1863
      %v2299 = vpop.f32.mrb[0].mxu0
      %v2300 = vadd.f32 0.0, %v2299
      %v2301 = vpop.f32.mrb[0].mxu0
      %2302 = vmatprep.mubr.f32.mxu0 0.0
      %2303 = vmatmul.mubr.f32.gmra.mrb[0].mxu0 %v1866
      %v2304 = vpop.f32.mrb[0].mxu0
      %v2305 = vadd.f32 0.0, %v2304
      %v2306 = vpop.f32.mrb[0].mxu0
      %2307 = vmatprep.mubr.f32.mxu0 0.0
      %2308 = vmatmul.mubr.f32.gmra.mrb[0].mxu0 %v1869
      %v2309 = vpop.f32.mrb[0].mxu0
      %v2310 = vadd.f32 0.0, %v2309
      %v2311 = vpop.f32.mrb[0].mxu0
      %2312 = vmatprep.mubr.f32.mxu0 0.0
      %2313 = vmatmul.mubr.f32.gmra.mrb[0].mxu0 %v1872
      %v2314 = vpop.f32.mrb[0].mxu0
      %v2315 = vadd.f32 0.0, %v2314
      %v2316 = vpop.f32.mrb[0].mxu0
      %2317 = vmatprep.mubr.f32.mxu0 0.0
      %2318 = vmatmul.mubr.f32.gmra.mrb[0].mxu0 %v1875
      %v2319 = vpop.f32.mrb[0].mxu0
      %v2320 = vadd.f32 0.0, %v2319
      %v2321 = vpop.f32.mrb[0].mxu0
      %2322 = vmatprep.mubr.f32.mxu0 0.0
      %2323 = vmatmul.mubr.f32.gmra.mrb[0].mxu0 %v1878
      %v2324 = vpop.f32.mrb[0].mxu0
      %v2325 = vadd.f32 0.0, %v2324
      %v2326 = vpop.f32.mrb[0].mxu0
      %2327 = vmatprep.mubr.f32.mxu0 0.0
      %2328 = vmatmul.mubr.f32.gmra.mrb[0].mxu0 %v1881
      %v2329 = vpop.f32.mrb[0].mxu0
      %v2330 = vadd.f32 0.0, %v2329
      %v2331 = vpop.f32.mrb[0].mxu0
      %2332 = vmatprep.mubr.f32.mxu0 0.0
      %2333 = vmatmul.mubr.f32.gmra.mrb[0].mxu0 %v1884
      %v2334 = vpop.f32.mrb[0].mxu0
      %v2335 = vadd.f32 0.0, %v2334
      %v2336 = vpop.f32.mrb[0].mxu0
      %2337 = vmatprep.mubr.f32.mxu0 0.0
      %2338 = vmatmul.mubr.f32.gmra.mrb[0].mxu0 %v1887
      %v2339 = vpop.f32.mrb[0].mxu0
      %v2340 = vadd.f32 0.0, %v2339
      %v2341 = vpop.f32.mrb[0].mxu0
      %2342 = vmatprep.mubr.f32.mxu0 0.0
      %2343 = vmatmul.mubr.f32.gmra.mrb[0].mxu0 %v1890
      %v2344 = vpop.f32.mrb[0].mxu0
      %v2345 = vadd.f32 0.0, %v2344
      %v2346 = vpop.f32.mrb[0].mxu0
      %2347 = vmatprep.mubr.f32.mxu0 0.0
      %2348 = vmatmul.mubr.f32.gmra.mrb[0].mxu0 %v1893
      %v2349 = vpop.f32.mrb[0].mxu0
      %v2350 = vadd.f32 0.0, %v2349
      %v2351 = vpop.f32.mrb[0].mxu0
      %2352 = vmatprep.mubr.f32.mxu0 0.0
      %2353 = vmatmul.mubr.f32.gmra.mrb[0].mxu0 %v1896
      %v2354 = vpop.f32.mrb[0].mxu0
      %v2355 = vadd.f32 0.0, %v2354
      %v2356 = vpop.f32.mrb[0].mxu0
      %2357 = vmatprep.mubr.f32.mxu0 0.0
      %2358 = vmatmul.mubr.f32.gmra.mrb[0].mxu0 %v1899
      %v2359 = vpop.f32.mrb[0].mxu0
      %v2360 = vadd.f32 0.0, %v2359
      %v2361 = vpop.f32.mrb[0].mxu0
      %2362 = vmatprep.mubr.f32.mxu0 0.0
      %2363 = vmatmul.mubr.f32.gmra.mrb[0].mxu0 %v1902
      %v2364 = vpop.f32.mrb[0].mxu0
      %v2365 = vadd.f32 0.0, %v2364
      %v2366 = vpop.f32.mrb[0].mxu0
      %2367 = vmatprep.mubr.f32.mxu0 0.0
      %2368 = vmatmul.mubr.f32.gmra.mrb[0].mxu0 %v1905
      %v2369 = vpop.f32.mrb[0].mxu0
      %v2370 = vadd.f32 0.0, %v2369
      %v2371 = vpop.f32.mrb[0].mxu0
      %2372 = vmatprep.mubr.f32.mxu0 0.0
      %2373 = vmatmul.mubr.f32.gmra.mrb[0].mxu0 %v1908
      %v2374 = vpop.f32.mrb[0].mxu0
      %v2375 = vadd.f32 0.0, %v2374
      %v2376 = vpop.f32.mrb[0].mxu0
      %2377 = vmatprep.mubr.f32.mxu0 0.0
      %2378 = vmatmul.mubr.f32.gmra.mrb[0].mxu0 %v1911
      %v2379 = vpop.f32.mrb[0].mxu0
      %v2380 = vadd.f32 0.0, %v2379
      %v2381 = vpop.f32.mrb[0].mxu0
      %2382 = vmatprep.mubr.f32.mxu0 0.0
      %2383 = vmatmul.mubr.f32.gmra.mrb[0].mxu0 %v1914
      %v2384 = vpop.f32.mrb[0].mxu0
      %v2385 = vadd.f32 0.0, %v2384
      %v2386 = vpop.f32.mrb[0].mxu0
      %2387 = vmatprep.mubr.f32.mxu0 0.0
      %2388 = vmatmul.mubr.f32.gmra.mrb[0].mxu0 %v1917
      %v2389 = vpop.f32.mrb[0].mxu0
      %v2390 = vadd.f32 0.0, %v2389
      %v2391 = vpop.f32.mrb[0].mxu0
      %2392 = vmatprep.mubr.f32.mxu0 0.0
      %2393 = vmatmul.mubr.f32.gmra.mrb[0].mxu0 %v1920
      %v2394 = vpop.f32.mrb[0].mxu0
      %v2395 = vadd.f32 0.0, %v2394
      %v2396 = vpop.f32.mrb[0].mxu0
      %2397 = vmatprep.mubr.f32.mxu0 0.0
      %2398 = vmatmul.mubr.f32.gmra.mrb[0].mxu0 %v1923
      %v2399 = vpop.f32.mrb[0].mxu0
      %v2400 = vadd.f32 0.0, %v2399
      %v2401 = vpop.f32.mrb[0].mxu0
      %2402 = vmatprep.mubr.f32.mxu0 0.0
      %2403 = vmatmul.mubr.f32.gmra.mrb[0].mxu0 %v1926
      %v2404 = vpop.f32.mrb[0].mxu0
      %v2405 = vadd.f32 0.0, %v2404
      %v2406 = vpop.f32.mrb[0].mxu0
      %2407 = vmatprep.mubr.f32.mxu0 0.0
      %2408 = vmatmul.mubr.f32.gmra.mrb[0].mxu0 %v2188
      %v2409 = vpop.f32.mrb[0].mxu0
      %v2410 = vadd.f32 0.0, %v2409
      %v2411 = vpop.f32.mrb[0].mxu0
      %2412 = vmatprep.mubr.f32.mxu0 0.0
      %2413 = vmatmul.mubr.f32.gmra.mrb[0].mxu0 %v2191
      %v2414 = vpop.f32.mrb[0].mxu0
      %v2415 = vadd.f32 0.0, %v2414
      %v2416 = vpop.f32.mrb[0].mxu0
      %2417 = vdwg.mxu0
      %v2418 = vadd.f32 %v2153, %v2260
      %v2419 = vadd.f32 %v2154, %v2265
      %v2420 = vadd.f32 %v2155, %v2270
      %v2421 = vadd.f32 %v2156, %v2275
      %v2422 = vadd.f32 %v2157, %v2280
      %v2423 = vadd.f32 %v2158, %v2285
      %v2424 = vadd.f32 %v2159, %v2290
      %v2425 = vadd.f32 %v2160, %v2295
      %v2426 = vadd.f32 %v2161, %v2300
      %v2427 = vadd.f32 %v2162, %v2305
      %v2428 = vadd.f32 %v2163, %v2310
      %v2429 = vadd.f32 %v2164, %v2315
      %v2430 = vadd.f32 %v2165, %v2320
      %v2431 = vadd.f32 %v2166, %v2325
      %v2432 = vadd.f32 %v2167, %v2330
      %v2433 = vadd.f32 %v2168, %v2335
      %v2434 = vadd.f32 %v2169, %v2340
      %v2435 = vadd.f32 %v2170, %v2345
      %v2436 = vadd.f32 %v2171, %v2350
      %v2437 = vadd.f32 %v2172, %v2355
      %v2438 = vadd.f32 %v2173, %v2360
      %v2439 = vadd.f32 %v2174, %v2365
      %v2440 = vadd.f32 %v2175, %v2370
      %v2441 = vadd.f32 %v2176, %v2375
      %v2442 = vadd.f32 %v2177, %v2380
      %v2443 = vadd.f32 %v2178, %v2385
      %v2444 = vadd.f32 %v2179, %v2390
      %v2445 = vadd.f32 %v2180, %v2395
      %v2446 = vadd.f32 %v2181, %v2400
      %v2447 = vadd.f32 %v2182, %v2405
      %v2448 = vadd.f32 %v2183, %v2410
      %v2449 = vadd.f32 %v2184, %v2415
      %s2450 = scalar_lea.vmem %s4, 56
      %v2451 = vld [vmem:[%s2450] sm:$0xff]
      %v2453 = vsel %vm326, %v1828, 0
      %v2456 = vsel %vm326, %v1829, 0
      %2458 = vmatprep.subr.mxu0 0.0
      %2459 = vmatpush1.msra.mxu0 %v2451
      %2460 = vmatprep.subr.mxu0 0.0
      %2461 = vmatpush1.msra.mxu0 0.0
      %2462 = vmatprep.subr.mxu0 0.0
      %2463 = vmatpush1.msra.mxu0 0.0
      %2464 = vmatprep.subr.mxu0 0.0
      %2465 = vmatpush1.msra.mxu0 0.0
      %2466 = vmatprep.subr.mxu0 0.0
      %2467 = vmatpush1.msra.mxu0 0.0
      %2468 = vmatprep.subr.mxu0 0.0
      %2469 = vmatpush1.msra.mxu0 0.0
      %2470 = vmatprep.subr.mxu0 0.0
      %2471 = vmatpush1.msra.mxu0 0.0
      %2472 = vmatprep.subr.mxu0 0.0
      %2473 = vmatpush1.msra.mxu0 0.0
      %2474 = vmatprep.subr.mxu0 0.0
      %2475 = vmatpush1.msra.mxu0 0.0
      %2476 = vmatprep.subr.mxu0 0.0
      %2477 = vmatpush1.msra.mxu0 0.0
      %2478 = vmatprep.subr.mxu0 0.0
      %2479 = vmatpush1.msra.mxu0 0.0
      %2480 = vmatprep.subr.mxu0 0.0
      %2481 = vmatpush1.msra.mxu0 0.0
      %2482 = vmatprep.subr.mxu0 0.0
      %2483 = vmatpush1.msra.mxu0 0.0
      %2484 = vmatprep.subr.mxu0 0.0
      %2485 = vmatpush1.msra.mxu0 0.0
      %2486 = vmatprep.subr.mxu0 0.0
      %2487 = vmatpush1.msra.mxu0 0.0
      %2488 = vmatprep.subr.mxu0 0.0
      %2489 = vmatpush1.msra.mxu0 0.0
      %2490 = vmatprep.subr.mxu0 0.0
      %2491 = vmatpush1.msra.mxu0 0.0
      %2492 = vmatprep.subr.mxu0 0.0
      %2493 = vmatpush1.msra.mxu0 0.0
      %2494 = vmatprep.subr.mxu0 0.0
      %2495 = vmatpush1.msra.mxu0 0.0
      %2496 = vmatprep.subr.mxu0 0.0
      %2497 = vmatpush1.msra.mxu0 0.0
      %2498 = vmatprep.subr.mxu0 0.0
      %2499 = vmatpush1.msra.mxu0 0.0
      %2500 = vmatprep.subr.mxu0 0.0
      %2501 = vmatpush1.msra.mxu0 0.0
      %2502 = vmatprep.subr.mxu0 0.0
      %2503 = vmatpush1.msra.mxu0 0.0
      %2504 = vmatprep.subr.mxu0 0.0
      %2505 = vmatpush1.msra.mxu0 0.0
      %2506 = vmatprep.subr.mxu0 0.0
      %2507 = vmatpush1.msra.mxu0 0.0
      %2508 = vmatprep.subr.mxu0 0.0
      %2509 = vmatpush1.msra.mxu0 0.0
      %2510 = vmatprep.subr.mxu0 0.0
      %2511 = vmatpush1.msra.mxu0 0.0
      %2512 = vmatprep.subr.mxu0 0.0
      %2513 = vmatpush1.msra.mxu0 0.0
      %2514 = vmatprep.subr.mxu0 0.0
      %2515 = vmatpush1.msra.mxu0 0.0
      %2516 = vmatprep.subr.mxu0 0.0
      %2517 = vmatpush1.msra.mxu0 0.0
      %2518 = vmatprep.subr.mxu0 0.0
      %2519 = vmatpush1.msra.mxu0 0.0
      %2520 = vmatprep.subr.mxu0 0.0
      %2521 = vmatpush1.msra.mxu0 0.0
      %2522 = vmatprep.mubr.f32.mxu0 0.0
      %2523 = vmatmul.mubr.f32.gmra.mrb[0].mxu0 %v1845
      %v2524 = vpop.f32.mrb[0].mxu0
      %v2525 = vadd.f32 0.0, %v2524
      %v2526 = vpop.f32.mrb[0].mxu0
      %2527 = vmatprep.mubr.f32.mxu0 0.0
      %2528 = vmatmul.mubr.f32.gmra.mrb[0].mxu0 %v1848
      %v2529 = vpop.f32.mrb[0].mxu0
      %v2530 = vadd.f32 0.0, %v2529
      %v2531 = vpop.f32.mrb[0].mxu0
      %2532 = vmatprep.mubr.f32.mxu0 0.0
      %2533 = vmatmul.mubr.f32.gmra.mrb[0].mxu0 %v1851
      %v2534 = vpop.f32.mrb[0].mxu0
      %v2535 = vadd.f32 0.0, %v2534
      %v2536 = vpop.f32.mrb[0].mxu0
      %2537 = vmatprep.mubr.f32.mxu0 0.0
      %2538 = vmatmul.mubr.f32.gmra.mrb[0].mxu0 %v1854
      %v2539 = vpop.f32.mrb[0].mxu0
      %v2540 = vadd.f32 0.0, %v2539
      %v2541 = vpop.f32.mrb[0].mxu0
      %2542 = vmatprep.mubr.f32.mxu0 0.0
      %2543 = vmatmul.mubr.f32.gmra.mrb[0].mxu0 %v1857
      %v2544 = vpop.f32.mrb[0].mxu0
      %v2545 = vadd.f32 0.0, %v2544
      %v2546 = vpop.f32.mrb[0].mxu0
      %2547 = vmatprep.mubr.f32.mxu0 0.0
      %2548 = vmatmul.mubr.f32.gmra.mrb[0].mxu0 %v1860
      %v2549 = vpop.f32.mrb[0].mxu0
      %v2550 = vadd.f32 0.0, %v2549
      %v2551 = vpop.f32.mrb[0].mxu0
      %2552 = vmatprep.mubr.f32.mxu0 0.0
      %2553 = vmatmul.mubr.f32.gmra.mrb[0].mxu0 %v1863
      %v2554 = vpop.f32.mrb[0].mxu0
      %v2555 = vadd.f32 0.0, %v2554
      %v2556 = vpop.f32.mrb[0].mxu0
      %2557 = vmatprep.mubr.f32.mxu0 0.0
      %2558 = vmatmul.mubr.f32.gmra.mrb[0].mxu0 %v1866
      %v2559 = vpop.f32.mrb[0].mxu0
      %v2560 = vadd.f32 0.0, %v2559
      %v2561 = vpop.f32.mrb[0].mxu0
      %2562 = vmatprep.mubr.f32.mxu0 0.0
      %2563 = vmatmul.mubr.f32.gmra.mrb[0].mxu0 %v1869
      %v2564 = vpop.f32.mrb[0].mxu0
      %v2565 = vadd.f32 0.0, %v2564
      %v2566 = vpop.f32.mrb[0].mxu0
      %2567 = vmatprep.mubr.f32.mxu0 0.0
      %2568 = vmatmul.mubr.f32.gmra.mrb[0].mxu0 %v1872
      %v2569 = vpop.f32.mrb[0].mxu0
      %v2570 = vadd.f32 0.0, %v2569
      %v2571 = vpop.f32.mrb[0].mxu0
      %2572 = vmatprep.mubr.f32.mxu0 0.0
      %2573 = vmatmul.mubr.f32.gmra.mrb[0].mxu0 %v1875
      %v2574 = vpop.f32.mrb[0].mxu0
      %v2575 = vadd.f32 0.0, %v2574
      %v2576 = vpop.f32.mrb[0].mxu0
      %2577 = vmatprep.mubr.f32.mxu0 0.0
      %2578 = vmatmul.mubr.f32.gmra.mrb[0].mxu0 %v1878
      %v2579 = vpop.f32.mrb[0].mxu0
      %v2580 = vadd.f32 0.0, %v2579
      %v2581 = vpop.f32.mrb[0].mxu0
      %2582 = vmatprep.mubr.f32.mxu0 0.0
      %2583 = vmatmul.mubr.f32.gmra.mrb[0].mxu0 %v1881
      %v2584 = vpop.f32.mrb[0].mxu0
      %v2585 = vadd.f32 0.0, %v2584
      %v2586 = vpop.f32.mrb[0].mxu0
      %2587 = vmatprep.mubr.f32.mxu0 0.0
      %2588 = vmatmul.mubr.f32.gmra.mrb[0].mxu0 %v1884
      %v2589 = vpop.f32.mrb[0].mxu0
      %v2590 = vadd.f32 0.0, %v2589
      %v2591 = vpop.f32.mrb[0].mxu0
      %2592 = vmatprep.mubr.f32.mxu0 0.0
      %2593 = vmatmul.mubr.f32.gmra.mrb[0].mxu0 %v1887
      %v2594 = vpop.f32.mrb[0].mxu0
      %v2595 = vadd.f32 0.0, %v2594
      %v2596 = vpop.f32.mrb[0].mxu0
      %2597 = vmatprep.mubr.f32.mxu0 0.0
      %2598 = vmatmul.mubr.f32.gmra.mrb[0].mxu0 %v1890
      %v2599 = vpop.f32.mrb[0].mxu0
      %v2600 = vadd.f32 0.0, %v2599
      %v2601 = vpop.f32.mrb[0].mxu0
      %2602 = vmatprep.mubr.f32.mxu0 0.0
      %2603 = vmatmul.mubr.f32.gmra.mrb[0].mxu0 %v1893
      %v2604 = vpop.f32.mrb[0].mxu0
      %v2605 = vadd.f32 0.0, %v2604
      %v2606 = vpop.f32.mrb[0].mxu0
      %2607 = vmatprep.mubr.f32.mxu0 0.0
      %2608 = vmatmul.mubr.f32.gmra.mrb[0].mxu0 %v1896
      %v2609 = vpop.f32.mrb[0].mxu0
      %v2610 = vadd.f32 0.0, %v2609
      %v2611 = vpop.f32.mrb[0].mxu0
      %2612 = vmatprep.mubr.f32.mxu0 0.0
      %2613 = vmatmul.mubr.f32.gmra.mrb[0].mxu0 %v1899
      %v2614 = vpop.f32.mrb[0].mxu0
      %v2615 = vadd.f32 0.0, %v2614
      %v2616 = vpop.f32.mrb[0].mxu0
      %2617 = vmatprep.mubr.f32.mxu0 0.0
      %2618 = vmatmul.mubr.f32.gmra.mrb[0].mxu0 %v1902
      %v2619 = vpop.f32.mrb[0].mxu0
      %v2620 = vadd.f32 0.0, %v2619
      %v2621 = vpop.f32.mrb[0].mxu0
      %2622 = vmatprep.mubr.f32.mxu0 0.0
      %2623 = vmatmul.mubr.f32.gmra.mrb[0].mxu0 %v1905
      %v2624 = vpop.f32.mrb[0].mxu0
      %v2625 = vadd.f32 0.0, %v2624
      %v2626 = vpop.f32.mrb[0].mxu0
      %2627 = vmatprep.mubr.f32.mxu0 0.0
      %2628 = vmatmul.mubr.f32.gmra.mrb[0].mxu0 %v1908
      %v2629 = vpop.f32.mrb[0].mxu0
      %v2630 = vadd.f32 0.0, %v2629
      %v2631 = vpop.f32.mrb[0].mxu0
      %2632 = vmatprep.mubr.f32.mxu0 0.0
      %2633 = vmatmul.mubr.f32.gmra.mrb[0].mxu0 %v1911
      %v2634 = vpop.f32.mrb[0].mxu0
      %v2635 = vadd.f32 0.0, %v2634
      %v2636 = vpop.f32.mrb[0].mxu0
      %2637 = vmatprep.mubr.f32.mxu0 0.0
      %2638 = vmatmul.mubr.f32.gmra.mrb[0].mxu0 %v1914
      %v2639 = vpop.f32.mrb[0].mxu0
      %v2640 = vadd.f32 0.0, %v2639
      %v2641 = vpop.f32.mrb[0].mxu0
      %2642 = vmatprep.mubr.f32.mxu0 0.0
      %2643 = vmatmul.mubr.f32.gmra.mrb[0].mxu0 %v1917
      %v2644 = vpop.f32.mrb[0].mxu0
      %v2645 = vadd.f32 0.0, %v2644
      %v2646 = vpop.f32.mrb[0].mxu0
      %2647 = vmatprep.mubr.f32.mxu0 0.0
      %2648 = vmatmul.mubr.f32.gmra.mrb[0].mxu0 %v1920
      %v2649 = vpop.f32.mrb[0].mxu0
      %v2650 = vadd.f32 0.0, %v2649
      %v2651 = vpop.f32.mrb[0].mxu0
      %2652 = vmatprep.mubr.f32.mxu0 0.0
      %2653 = vmatmul.mubr.f32.gmra.mrb[0].mxu0 %v1923
      %v2654 = vpop.f32.mrb[0].mxu0
      %v2655 = vadd.f32 0.0, %v2654
      %v2656 = vpop.f32.mrb[0].mxu0
      %2657 = vmatprep.mubr.f32.mxu0 0.0
      %2658 = vmatmul.mubr.f32.gmra.mrb[0].mxu0 %v1926
      %v2659 = vpop.f32.mrb[0].mxu0
      %v2660 = vadd.f32 0.0, %v2659
      %v2661 = vpop.f32.mrb[0].mxu0
      %2662 = vmatprep.mubr.f32.mxu0 0.0
      %2663 = vmatmul.mubr.f32.gmra.mrb[0].mxu0 %v2188
      %v2664 = vpop.f32.mrb[0].mxu0
      %v2665 = vadd.f32 0.0, %v2664
      %v2666 = vpop.f32.mrb[0].mxu0
      %2667 = vmatprep.mubr.f32.mxu0 0.0
      %2668 = vmatmul.mubr.f32.gmra.mrb[0].mxu0 %v2191
      %v2669 = vpop.f32.mrb[0].mxu0
      %v2670 = vadd.f32 0.0, %v2669
      %v2671 = vpop.f32.mrb[0].mxu0
      %2672 = vmatprep.mubr.f32.mxu0 0.0
      %2673 = vmatmul.mubr.f32.gmra.mrb[0].mxu0 %v2453
      %v2674 = vpop.f32.mrb[0].mxu0
      %v2675 = vadd.f32 0.0, %v2674
      %v2676 = vpop.f32.mrb[0].mxu0
      %2677 = vmatprep.mubr.f32.mxu0 0.0
      %2678 = vmatmul.mubr.f32.gmra.mrb[0].mxu0 %v2456
      %v2679 = vpop.f32.mrb[0].mxu0
      %v2680 = vadd.f32 0.0, %v2679
      %v2681 = vpop.f32.mrb[0].mxu0
      %2682 = vdwg.mxu0
      %v2683 = vadd.f32 %v2418, %v2525
      %v2684 = vadd.f32 %v2419, %v2530
      %v2685 = vadd.f32 %v2420, %v2535
      %v2686 = vadd.f32 %v2421, %v2540
      %v2687 = vadd.f32 %v2422, %v2545
      %v2688 = vadd.f32 %v2423, %v2550
      %v2689 = vadd.f32 %v2424, %v2555
      %v2690 = vadd.f32 %v2425, %v2560
      %v2691 = vadd.f32 %v2426, %v2565
      %v2692 = vadd.f32 %v2427, %v2570
      %v2693 = vadd.f32 %v2428, %v2575
      %v2694 = vadd.f32 %v2429, %v2580
      %v2695 = vadd.f32 %v2430, %v2585
      %v2696 = vadd.f32 %v2431, %v2590
      %v2697 = vadd.f32 %v2432, %v2595
      %v2698 = vadd.f32 %v2433, %v2600
      %v2699 = vadd.f32 %v2434, %v2605
      %v2700 = vadd.f32 %v2435, %v2610
      %v2701 = vadd.f32 %v2436, %v2615
      %v2702 = vadd.f32 %v2437, %v2620
      %v2703 = vadd.f32 %v2438, %v2625
      %v2704 = vadd.f32 %v2439, %v2630
      %v2705 = vadd.f32 %v2440, %v2635
      %v2706 = vadd.f32 %v2441, %v2640
      %v2707 = vadd.f32 %v2442, %v2645
      %v2708 = vadd.f32 %v2443, %v2650
      %v2709 = vadd.f32 %v2444, %v2655
      %v2710 = vadd.f32 %v2445, %v2660
      %v2711 = vadd.f32 %v2446, %v2665
      %v2712 = vadd.f32 %v2447, %v2670
      %v2713 = vadd.f32 %v2448, %v2675
      %v2714 = vadd.f32 %v2449, %v2680
      %v2715 = vld [vmem:[#allocation2 + $0x2] sm:$0xff]
      %v2716 = vld [vmem:[#allocation2 + $0xa] sm:$0xff]
      %v2717 = vld [vmem:[#allocation2 + $0x1a] sm:$0xff]
      %v2718 = vld [vmem:[#allocation2 + $0x22] sm:$0xff]
      %v2719 = vld [vmem:[#allocation2 + $0x32] sm:$0xff]
      %v2720 = vld [vmem:[#allocation2 + $0x3a] sm:$0xff]
      %v2721 = vld [vmem:[#allocation2 + $0x4a] sm:$0xff]
      %v2722 = vld [vmem:[#allocation2 + $0x52] sm:$0xff]
      %v2723 = vld [vmem:[#allocation2 + $0x62] sm:$0xff]
      %v2724 = vld [vmem:[#allocation2 + $0x6a] sm:$0xff]
      %v2725 = vld [vmem:[#allocation2 + $0x7a] sm:$0xff]
      %v2726 = vld [vmem:[#allocation2 + $0x82] sm:$0xff]
      %v2727 = vld [vmem:[#allocation2 + $0x92] sm:$0xff]
      %v2728 = vld [vmem:[#allocation2 + $0x9a] sm:$0xff]
      %v2729 = vld [vmem:[#allocation2 + $0xaa] sm:$0xff]
      %v2730 = vld [vmem:[#allocation2 + $0xb2] sm:$0xff]
      %v2731 = vld [vmem:[#allocation2 + $0xc2] sm:$0xff]
      %v2732 = vld [vmem:[#allocation2 + $0xca] sm:$0xff]
      %v2733 = vld [vmem:[#allocation2 + $0xda] sm:$0xff]
      %v2734 = vld [vmem:[#allocation2 + $0xe2] sm:$0xff]
      %v2735 = vld [vmem:[#allocation2 + $0xf2] sm:$0xff]
      %v2736 = vld [vmem:[#allocation2 + $0xfa] sm:$0xff]
      %v2737 = vld [vmem:[#allocation2 + $0x10a] sm:$0xff]
      %v2738 = vld [vmem:[#allocation2 + $0x112] sm:$0xff]
      %v2739 = vld [vmem:[#allocation2 + $0x122] sm:$0xff]
      %v2740 = vld [vmem:[#allocation2 + $0x12a] sm:$0xff]
      %v2741 = vld [vmem:[#allocation2 + $0x13a] sm:$0xff]
      %v2742 = vld [vmem:[#allocation2 + $0x142] sm:$0xff]
      %v2743 = vld [vmem:[#allocation2 + $0x152] sm:$0xff]
      %v2744 = vld [vmem:[#allocation2 + $0x15a] sm:$0xff]
      %v2745 = vld [vmem:[#allocation2 + $0x16a] sm:$0xff]
      %v2746 = vld [vmem:[#allocation2 + $0x172] sm:$0xff]
      %v2747 = vld [vmem:[#allocation2 + $0x182] sm:$0xff]
      %v2748 = vld [vmem:[#allocation2 + $0x18a] sm:$0xff]
      %v2749 = vld [vmem:[#allocation2 + $0x19a] sm:$0xff]
      %v2750 = vld [vmem:[#allocation2 + $0x1a2] sm:$0xff]
      %s2751 = scalar_lea.vmem %s4, 16
      %v2752 = vld [vmem:[%s2751] sm:$0xff]
      %v2754 = vsel %vm326, %v2715, 0
      %v2757 = vsel %vm326, %v2716, 0
      %v2760 = vsel %vm326, %v2717, 0
      %v2763 = vsel %vm326, %v2718, 0
      %v2766 = vsel %vm326, %v2719, 0
      %v2769 = vsel %vm326, %v2720, 0
      %v2772 = vsel %vm326, %v2721, 0
      %v2775 = vsel %vm326, %v2722, 0
      %v2778 = vsel %vm326, %v2723, 0
      %v2781 = vsel %vm326, %v2724, 0
      %v2784 = vsel %vm326, %v2725, 0
      %v2787 = vsel %vm326, %v2726, 0
      %v2790 = vsel %vm326, %v2727, 0
      %v2793 = vsel %vm326, %v2728, 0
      %v2796 = vsel %vm326, %v2729, 0
      %v2799 = vsel %vm326, %v2730, 0
      %v2802 = vsel %vm326, %v2731, 0
      %v2805 = vsel %vm326, %v2732, 0
      %v2808 = vsel %vm326, %v2733, 0
      %v2811 = vsel %vm326, %v2734, 0
      %v2814 = vsel %vm326, %v2735, 0
      %v2817 = vsel %vm326, %v2736, 0
      %v2820 = vsel %vm326, %v2737, 0
      %v2823 = vsel %vm326, %v2738, 0
      %v2826 = vsel %vm326, %v2739, 0
      %v2829 = vsel %vm326, %v2740, 0
      %v2832 = vsel %vm326, %v2741, 0
      %v2835 = vsel %vm326, %v2742, 0
      %v2838 = vsel %vm326, %v2743, 0
      %v2841 = vsel %vm326, %v2744, 0
      %v2844 = vsel %vm326, %v2745, 0
      %v2847 = vsel %vm326, %v2746, 0
      %2849 = vmatprep.subr.mxu0 0.0
      %2850 = vmatpush1.msra.mxu0 %v2752
      %2851 = vmatprep.subr.mxu0 0.0
      %2852 = vmatpush1.msra.mxu0 0.0
      %2853 = vmatprep.subr.mxu0 0.0
      %2854 = vmatpush1.msra.mxu0 0.0
      %2855 = vmatprep.subr.mxu0 0.0
      %2856 = vmatpush1.msra.mxu0 0.0
      %2857 = vmatprep.subr.mxu0 0.0
      %2858 = vmatpush1.msra.mxu0 0.0
      %2859 = vmatprep.subr.mxu0 0.0
      %2860 = vmatpush1.msra.mxu0 0.0
      %2861 = vmatprep.subr.mxu0 0.0
      %2862 = vmatpush1.msra.mxu0 0.0
      %2863 = vmatprep.subr.mxu0 0.0
      %2864 = vmatpush1.msra.mxu0 0.0
      %2865 = vmatprep.subr.mxu0 0.0
      %2866 = vmatpush1.msra.mxu0 0.0
      %2867 = vmatprep.subr.mxu0 0.0
      %2868 = vmatpush1.msra.mxu0 0.0
      %2869 = vmatprep.subr.mxu0 0.0
      %2870 = vmatpush1.msra.mxu0 0.0
      %2871 = vmatprep.subr.mxu0 0.0
      %2872 = vmatpush1.msra.mxu0 0.0
      %2873 = vmatprep.subr.mxu0 0.0
      %2874 = vmatpush1.msra.mxu0 0.0
      %2875 = vmatprep.subr.mxu0 0.0
      %2876 = vmatpush1.msra.mxu0 0.0
      %2877 = vmatprep.subr.mxu0 0.0
      %2878 = vmatpush1.msra.mxu0 0.0
      %2879 = vmatprep.subr.mxu0 0.0
      %2880 = vmatpush1.msra.mxu0 0.0
      %2881 = vmatprep.subr.mxu0 0.0
      %2882 = vmatpush1.msra.mxu0 0.0
      %2883 = vmatprep.subr.mxu0 0.0
      %2884 = vmatpush1.msra.mxu0 0.0
      %2885 = vmatprep.subr.mxu0 0.0
      %2886 = vmatpush1.msra.mxu0 0.0
      %2887 = vmatprep.subr.mxu0 0.0
      %2888 = vmatpush1.msra.mxu0 0.0
      %2889 = vmatprep.subr.mxu0 0.0
      %2890 = vmatpush1.msra.mxu0 0.0
      %2891 = vmatprep.subr.mxu0 0.0
      %2892 = vmatpush1.msra.mxu0 0.0
      %2893 = vmatprep.subr.mxu0 0.0
      %2894 = vmatpush1.msra.mxu0 0.0
      %2895 = vmatprep.subr.mxu0 0.0
      %2896 = vmatpush1.msra.mxu0 0.0
      %2897 = vmatprep.subr.mxu0 0.0
      %2898 = vmatpush1.msra.mxu0 0.0
      %2899 = vmatprep.subr.mxu0 0.0
      %2900 = vmatpush1.msra.mxu0 0.0
      %2901 = vmatprep.subr.mxu0 0.0
      %2902 = vmatpush1.msra.mxu0 0.0
      %2903 = vmatprep.subr.mxu0 0.0
      %2904 = vmatpush1.msra.mxu0 0.0
      %2905 = vmatprep.subr.mxu0 0.0
      %2906 = vmatpush1.msra.mxu0 0.0
      %2907 = vmatprep.subr.mxu0 0.0
      %2908 = vmatpush1.msra.mxu0 0.0
      %2909 = vmatprep.subr.mxu0 0.0
      %2910 = vmatpush1.msra.mxu0 0.0
      %2911 = vmatprep.subr.mxu0 0.0
      %2912 = vmatpush1.msra.mxu0 0.0
      %2913 = vmatprep.mubr.f32.mxu0 0.0
      %2914 = vmatmul.mubr.f32.gmra.mrb[0].mxu0 %v2754
      %v2915 = vpop.f32.mrb[0].mxu0
      %v2916 = vadd.f32 0.0, %v2915
      %v2917 = vpop.f32.mrb[0].mxu0
      %2918 = vmatprep.mubr.f32.mxu0 0.0
      %2919 = vmatmul.mubr.f32.gmra.mrb[0].mxu0 %v2757
      %v2920 = vpop.f32.mrb[0].mxu0
      %v2921 = vadd.f32 0.0, %v2920
      %v2922 = vpop.f32.mrb[0].mxu0
      %2923 = vmatprep.mubr.f32.mxu0 0.0
      %2924 = vmatmul.mubr.f32.gmra.mrb[0].mxu0 %v2760
      %v2925 = vpop.f32.mrb[0].mxu0
      %v2926 = vadd.f32 0.0, %v2925
      %v2927 = vpop.f32.mrb[0].mxu0
      %2928 = vmatprep.mubr.f32.mxu0 0.0
      %2929 = vmatmul.mubr.f32.gmra.mrb[0].mxu0 %v2763
      %v2930 = vpop.f32.mrb[0].mxu0
      %v2931 = vadd.f32 0.0, %v2930
      %v2932 = vpop.f32.mrb[0].mxu0
      %2933 = vmatprep.mubr.f32.mxu0 0.0
      %2934 = vmatmul.mubr.f32.gmra.mrb[0].mxu0 %v2766
      %v2935 = vpop.f32.mrb[0].mxu0
      %v2936 = vadd.f32 0.0, %v2935
      %v2937 = vpop.f32.mrb[0].mxu0
      %2938 = vmatprep.mubr.f32.mxu0 0.0
      %2939 = vmatmul.mubr.f32.gmra.mrb[0].mxu0 %v2769
      %v2940 = vpop.f32.mrb[0].mxu0
      %v2941 = vadd.f32 0.0, %v2940
      %v2942 = vpop.f32.mrb[0].mxu0
      %2943 = vmatprep.mubr.f32.mxu0 0.0
      %2944 = vmatmul.mubr.f32.gmra.mrb[0].mxu0 %v2772
      %v2945 = vpop.f32.mrb[0].mxu0
      %v2946 = vadd.f32 0.0, %v2945
      %v2947 = vpop.f32.mrb[0].mxu0
      %2948 = vmatprep.mubr.f32.mxu0 0.0
      %2949 = vmatmul.mubr.f32.gmra.mrb[0].mxu0 %v2775
      %v2950 = vpop.f32.mrb[0].mxu0
      %v2951 = vadd.f32 0.0, %v2950
      %v2952 = vpop.f32.mrb[0].mxu0
      %2953 = vmatprep.mubr.f32.mxu0 0.0
      %2954 = vmatmul.mubr.f32.gmra.mrb[0].mxu0 %v2778
      %v2955 = vpop.f32.mrb[0].mxu0
      %v2956 = vadd.f32 0.0, %v2955
      %v2957 = vpop.f32.mrb[0].mxu0
      %2958 = vmatprep.mubr.f32.mxu0 0.0
      %2959 = vmatmul.mubr.f32.gmra.mrb[0].mxu0 %v2781
      %v2960 = vpop.f32.mrb[0].mxu0
      %v2961 = vadd.f32 0.0, %v2960
      %v2962 = vpop.f32.mrb[0].mxu0
      %2963 = vmatprep.mubr.f32.mxu0 0.0
      %2964 = vmatmul.mubr.f32.gmra.mrb[0].mxu0 %v2784
      %v2965 = vpop.f32.mrb[0].mxu0
      %v2966 = vadd.f32 0.0, %v2965
      %v2967 = vpop.f32.mrb[0].mxu0
      %2968 = vmatprep.mubr.f32.mxu0 0.0
      %2969 = vmatmul.mubr.f32.gmra.mrb[0].mxu0 %v2787
      %v2970 = vpop.f32.mrb[0].mxu0
      %v2971 = vadd.f32 0.0, %v2970
      %v2972 = vpop.f32.mrb[0].mxu0
      %2973 = vmatprep.mubr.f32.mxu0 0.0
      %2974 = vmatmul.mubr.f32.gmra.mrb[0].mxu0 %v2790
      %v2975 = vpop.f32.mrb[0].mxu0
      %v2976 = vadd.f32 0.0, %v2975
      %v2977 = vpop.f32.mrb[0].mxu0
      %2978 = vmatprep.mubr.f32.mxu0 0.0
      %2979 = vmatmul.mubr.f32.gmra.mrb[0].mxu0 %v2793
      %v2980 = vpop.f32.mrb[0].mxu0
      %v2981 = vadd.f32 0.0, %v2980
      %v2982 = vpop.f32.mrb[0].mxu0
      %2983 = vmatprep.mubr.f32.mxu0 0.0
      %2984 = vmatmul.mubr.f32.gmra.mrb[0].mxu0 %v2796
      %v2985 = vpop.f32.mrb[0].mxu0
      %v2986 = vadd.f32 0.0, %v2985
      %v2987 = vpop.f32.mrb[0].mxu0
      %2988 = vmatprep.mubr.f32.mxu0 0.0
      %2989 = vmatmul.mubr.f32.gmra.mrb[0].mxu0 %v2799
      %v2990 = vpop.f32.mrb[0].mxu0
      %v2991 = vadd.f32 0.0, %v2990
      %v2992 = vpop.f32.mrb[0].mxu0
      %2993 = vmatprep.mubr.f32.mxu0 0.0
      %2994 = vmatmul.mubr.f32.gmra.mrb[0].mxu0 %v2802
      %v2995 = vpop.f32.mrb[0].mxu0
      %v2996 = vadd.f32 0.0, %v2995
      %v2997 = vpop.f32.mrb[0].mxu0
      %2998 = vmatprep.mubr.f32.mxu0 0.0
      %2999 = vmatmul.mubr.f32.gmra.mrb[0].mxu0 %v2805
      %v3000 = vpop.f32.mrb[0].mxu0
      %v3001 = vadd.f32 0.0, %v3000
      %v3002 = vpop.f32.mrb[0].mxu0
      %3003 = vmatprep.mubr.f32.mxu0 0.0
      %3004 = vmatmul.mubr.f32.gmra.mrb[0].mxu0 %v2808
      %v3005 = vpop.f32.mrb[0].mxu0
      %v3006 = vadd.f32 0.0, %v3005
      %v3007 = vpop.f32.mrb[0].mxu0
      %3008 = vmatprep.mubr.f32.mxu0 0.0
      %3009 = vmatmul.mubr.f32.gmra.mrb[0].mxu0 %v2811
      %v3010 = vpop.f32.mrb[0].mxu0
      %v3011 = vadd.f32 0.0, %v3010
      %v3012 = vpop.f32.mrb[0].mxu0
      %3013 = vmatprep.mubr.f32.mxu0 0.0
      %3014 = vmatmul.mubr.f32.gmra.mrb[0].mxu0 %v2814
      %v3015 = vpop.f32.mrb[0].mxu0
      %v3016 = vadd.f32 0.0, %v3015
      %v3017 = vpop.f32.mrb[0].mxu0
      %3018 = vmatprep.mubr.f32.mxu0 0.0
      %3019 = vmatmul.mubr.f32.gmra.mrb[0].mxu0 %v2817
      %v3020 = vpop.f32.mrb[0].mxu0
      %v3021 = vadd.f32 0.0, %v3020
      %v3022 = vpop.f32.mrb[0].mxu0
      %3023 = vmatprep.mubr.f32.mxu0 0.0
      %3024 = vmatmul.mubr.f32.gmra.mrb[0].mxu0 %v2820
      %v3025 = vpop.f32.mrb[0].mxu0
      %v3026 = vadd.f32 0.0, %v3025
      %v3027 = vpop.f32.mrb[0].mxu0
      %3028 = vmatprep.mubr.f32.mxu0 0.0
      %3029 = vmatmul.mubr.f32.gmra.mrb[0].mxu0 %v2823
      %v3030 = vpop.f32.mrb[0].mxu0
      %v3031 = vadd.f32 0.0, %v3030
      %v3032 = vpop.f32.mrb[0].mxu0
      %3033 = vmatprep.mubr.f32.mxu0 0.0
      %3034 = vmatmul.mubr.f32.gmra.mrb[0].mxu0 %v2826
      %v3035 = vpop.f32.mrb[0].mxu0
      %v3036 = vadd.f32 0.0, %v3035
      %v3037 = vpop.f32.mrb[0].mxu0
      %3038 = vmatprep.mubr.f32.mxu0 0.0
      %3039 = vmatmul.mubr.f32.gmra.mrb[0].mxu0 %v2829
      %v3040 = vpop.f32.mrb[0].mxu0
      %v3041 = vadd.f32 0.0, %v3040
      %v3042 = vpop.f32.mrb[0].mxu0
      %3043 = vmatprep.mubr.f32.mxu0 0.0
      %3044 = vmatmul.mubr.f32.gmra.mrb[0].mxu0 %v2832
      %v3045 = vpop.f32.mrb[0].mxu0
      %v3046 = vadd.f32 0.0, %v3045
      %v3047 = vpop.f32.mrb[0].mxu0
      %3048 = vmatprep.mubr.f32.mxu0 0.0
      %3049 = vmatmul.mubr.f32.gmra.mrb[0].mxu0 %v2835
      %v3050 = vpop.f32.mrb[0].mxu0
      %v3051 = vadd.f32 0.0, %v3050
      %v3052 = vpop.f32.mrb[0].mxu0
      %3053 = vmatprep.mubr.f32.mxu0 0.0
      %3054 = vmatmul.mubr.f32.gmra.mrb[0].mxu0 %v2838
      %v3055 = vpop.f32.mrb[0].mxu0
      %v3056 = vadd.f32 0.0, %v3055
      %v3057 = vpop.f32.mrb[0].mxu0
      %3058 = vmatprep.mubr.f32.mxu0 0.0
      %3059 = vmatmul.mubr.f32.gmra.mrb[0].mxu0 %v2841
      %v3060 = vpop.f32.mrb[0].mxu0
      %v3061 = vadd.f32 0.0, %v3060
      %v3062 = vpop.f32.mrb[0].mxu0
      %3063 = vmatprep.mubr.f32.mxu0 0.0
      %3064 = vmatmul.mubr.f32.gmra.mrb[0].mxu0 %v2844
      %v3065 = vpop.f32.mrb[0].mxu0
      %v3066 = vadd.f32 0.0, %v3065
      %v3067 = vpop.f32.mrb[0].mxu0
      %3068 = vmatprep.mubr.f32.mxu0 0.0
      %3069 = vmatmul.mubr.f32.gmra.mrb[0].mxu0 %v2847
      %v3070 = vpop.f32.mrb[0].mxu0
      %v3071 = vadd.f32 0.0, %v3070
      %v3072 = vpop.f32.mrb[0].mxu0
      %3073 = vdwg.mxu0
      %v3074 = vadd.f32 %v2683, %v2916
      %v3075 = vadd.f32 %v2684, %v2921
      %v3076 = vadd.f32 %v2685, %v2926
      %v3077 = vadd.f32 %v2686, %v2931
      %v3078 = vadd.f32 %v2687, %v2936
      %v3079 = vadd.f32 %v2688, %v2941
      %v3080 = vadd.f32 %v2689, %v2946
      %v3081 = vadd.f32 %v2690, %v2951
      %v3082 = vadd.f32 %v2691, %v2956
      %v3083 = vadd.f32 %v2692, %v2961
      %v3084 = vadd.f32 %v2693, %v2966
      %v3085 = vadd.f32 %v2694, %v2971
      %v3086 = vadd.f32 %v2695, %v2976
      %v3087 = vadd.f32 %v2696, %v2981
      %v3088 = vadd.f32 %v2697, %v2986
      %v3089 = vadd.f32 %v2698, %v2991
      %v3090 = vadd.f32 %v2699, %v2996
      %v3091 = vadd.f32 %v2700, %v3001
      %v3092 = vadd.f32 %v2701, %v3006
      %v3093 = vadd.f32 %v2702, %v3011
      %v3094 = vadd.f32 %v2703, %v3016
      %v3095 = vadd.f32 %v2704, %v3021
      %v3096 = vadd.f32 %v2705, %v3026
      %v3097 = vadd.f32 %v2706, %v3031
      %v3098 = vadd.f32 %v2707, %v3036
      %v3099 = vadd.f32 %v2708, %v3041
      %v3100 = vadd.f32 %v2709, %v3046
      %v3101 = vadd.f32 %v2710, %v3051
      %v3102 = vadd.f32 %v2711, %v3056
      %v3103 = vadd.f32 %v2712, %v3061
      %v3104 = vadd.f32 %v2713, %v3066
      %v3105 = vadd.f32 %v2714, %v3071
      %s3106 = scalar_lea.vmem %s4, 40
      %v3107 = vld [vmem:[%s3106] sm:$0xff]
      %v3109 = vsel %vm326, %v2747, 0
      %v3112 = vsel %vm326, %v2748, 0
      %3114 = vmatprep.subr.mxu0 0.0
      %3115 = vmatpush1.msra.mxu0 %v3107
      %3116 = vmatprep.subr.mxu0 0.0
      %3117 = vmatpush1.msra.mxu0 0.0
      %3118 = vmatprep.subr.mxu0 0.0
      %3119 = vmatpush1.msra.mxu0 0.0
      %3120 = vmatprep.subr.mxu0 0.0
      %3121 = vmatpush1.msra.mxu0 0.0
      %3122 = vmatprep.subr.mxu0 0.0
      %3123 = vmatpush1.msra.mxu0 0.0
      %3124 = vmatprep.subr.mxu0 0.0
      %3125 = vmatpush1.msra.mxu0 0.0
      %3126 = vmatprep.subr.mxu0 0.0
      %3127 = vmatpush1.msra.mxu0 0.0
      %3128 = vmatprep.subr.mxu0 0.0
      %3129 = vmatpush1.msra.mxu0 0.0
      %3130 = vmatprep.subr.mxu0 0.0
      %3131 = vmatpush1.msra.mxu0 0.0
      %3132 = vmatprep.subr.mxu0 0.0
      %3133 = vmatpush1.msra.mxu0 0.0
      %3134 = vmatprep.subr.mxu0 0.0
      %3135 = vmatpush1.msra.mxu0 0.0
      %3136 = vmatprep.subr.mxu0 0.0
      %3137 = vmatpush1.msra.mxu0 0.0
      %3138 = vmatprep.subr.mxu0 0.0
      %3139 = vmatpush1.msra.mxu0 0.0
      %3140 = vmatprep.subr.mxu0 0.0
      %3141 = vmatpush1.msra.mxu0 0.0
      %3142 = vmatprep.subr.mxu0 0.0
      %3143 = vmatpush1.msra.mxu0 0.0
      %3144 = vmatprep.subr.mxu0 0.0
      %3145 = vmatpush1.msra.mxu0 0.0
      %3146 = vmatprep.subr.mxu0 0.0
      %3147 = vmatpush1.msra.mxu0 0.0
      %3148 = vmatprep.subr.mxu0 0.0
      %3149 = vmatpush1.msra.mxu0 0.0
      %3150 = vmatprep.subr.mxu0 0.0
      %3151 = vmatpush1.msra.mxu0 0.0
      %3152 = vmatprep.subr.mxu0 0.0
      %3153 = vmatpush1.msra.mxu0 0.0
      %3154 = vmatprep.subr.mxu0 0.0
      %3155 = vmatpush1.msra.mxu0 0.0
      %3156 = vmatprep.subr.mxu0 0.0
      %3157 = vmatpush1.msra.mxu0 0.0
      %3158 = vmatprep.subr.mxu0 0.0
      %3159 = vmatpush1.msra.mxu0 0.0
      %3160 = vmatprep.subr.mxu0 0.0
      %3161 = vmatpush1.msra.mxu0 0.0
      %3162 = vmatprep.subr.mxu0 0.0
      %3163 = vmatpush1.msra.mxu0 0.0
      %3164 = vmatprep.subr.mxu0 0.0
      %3165 = vmatpush1.msra.mxu0 0.0
      %3166 = vmatprep.subr.mxu0 0.0
      %3167 = vmatpush1.msra.mxu0 0.0
      %3168 = vmatprep.subr.mxu0 0.0
      %3169 = vmatpush1.msra.mxu0 0.0
      %3170 = vmatprep.subr.mxu0 0.0
      %3171 = vmatpush1.msra.mxu0 0.0
      %3172 = vmatprep.subr.mxu0 0.0
      %3173 = vmatpush1.msra.mxu0 0.0
      %3174 = vmatprep.subr.mxu0 0.0
      %3175 = vmatpush1.msra.mxu0 0.0
      %3176 = vmatprep.subr.mxu0 0.0
      %3177 = vmatpush1.msra.mxu0 0.0
      %3178 = vmatprep.mubr.f32.mxu0 0.0
      %3179 = vmatmul.mubr.f32.gmra.mrb[0].mxu0 %v2760
      %v3180 = vpop.f32.mrb[0].mxu0
      %v3181 = vadd.f32 0.0, %v3180
      %v3182 = vpop.f32.mrb[0].mxu0
      %3183 = vmatprep.mubr.f32.mxu0 0.0
      %3184 = vmatmul.mubr.f32.gmra.mrb[0].mxu0 %v2763
      %v3185 = vpop.f32.mrb[0].mxu0
      %v3186 = vadd.f32 0.0, %v3185
      %v3187 = vpop.f32.mrb[0].mxu0
      %3188 = vmatprep.mubr.f32.mxu0 0.0
      %3189 = vmatmul.mubr.f32.gmra.mrb[0].mxu0 %v2766
      %v3190 = vpop.f32.mrb[0].mxu0
      %v3191 = vadd.f32 0.0, %v3190
      %v3192 = vpop.f32.mrb[0].mxu0
      %3193 = vmatprep.mubr.f32.mxu0 0.0
      %3194 = vmatmul.mubr.f32.gmra.mrb[0].mxu0 %v2769
      %v3195 = vpop.f32.mrb[0].mxu0
      %v3196 = vadd.f32 0.0, %v3195
      %v3197 = vpop.f32.mrb[0].mxu0
      %3198 = vmatprep.mubr.f32.mxu0 0.0
      %3199 = vmatmul.mubr.f32.gmra.mrb[0].mxu0 %v2772
      %v3200 = vpop.f32.mrb[0].mxu0
      %v3201 = vadd.f32 0.0, %v3200
      %v3202 = vpop.f32.mrb[0].mxu0
      %3203 = vmatprep.mubr.f32.mxu0 0.0
      %3204 = vmatmul.mubr.f32.gmra.mrb[0].mxu0 %v2775
      %v3205 = vpop.f32.mrb[0].mxu0
      %v3206 = vadd.f32 0.0, %v3205
      %v3207 = vpop.f32.mrb[0].mxu0
      %3208 = vmatprep.mubr.f32.mxu0 0.0
      %3209 = vmatmul.mubr.f32.gmra.mrb[0].mxu0 %v2778
      %v3210 = vpop.f32.mrb[0].mxu0
      %v3211 = vadd.f32 0.0, %v3210
      %v3212 = vpop.f32.mrb[0].mxu0
      %3213 = vmatprep.mubr.f32.mxu0 0.0
      %3214 = vmatmul.mubr.f32.gmra.mrb[0].mxu0 %v2781
      %v3215 = vpop.f32.mrb[0].mxu0
      %v3216 = vadd.f32 0.0, %v3215
      %v3217 = vpop.f32.mrb[0].mxu0
      %3218 = vmatprep.mubr.f32.mxu0 0.0
      %3219 = vmatmul.mubr.f32.gmra.mrb[0].mxu0 %v2784
      %v3220 = vpop.f32.mrb[0].mxu0
      %v3221 = vadd.f32 0.0, %v3220
      %v3222 = vpop.f32.mrb[0].mxu0
      %3223 = vmatprep.mubr.f32.mxu0 0.0
      %3224 = vmatmul.mubr.f32.gmra.mrb[0].mxu0 %v2787
      %v3225 = vpop.f32.mrb[0].mxu0
      %v3226 = vadd.f32 0.0, %v3225
      %v3227 = vpop.f32.mrb[0].mxu0
      %3228 = vmatprep.mubr.f32.mxu0 0.0
      %3229 = vmatmul.mubr.f32.gmra.mrb[0].mxu0 %v2790
      %v3230 = vpop.f32.mrb[0].mxu0
      %v3231 = vadd.f32 0.0, %v3230
      %v3232 = vpop.f32.mrb[0].mxu0
      %3233 = vmatprep.mubr.f32.mxu0 0.0
      %3234 = vmatmul.mubr.f32.gmra.mrb[0].mxu0 %v2793
      %v3235 = vpop.f32.mrb[0].mxu0
      %v3236 = vadd.f32 0.0, %v3235
      %v3237 = vpop.f32.mrb[0].mxu0
      %3238 = vmatprep.mubr.f32.mxu0 0.0
      %3239 = vmatmul.mubr.f32.gmra.mrb[0].mxu0 %v2796
      %v3240 = vpop.f32.mrb[0].mxu0
      %v3241 = vadd.f32 0.0, %v3240
      %v3242 = vpop.f32.mrb[0].mxu0
      %3243 = vmatprep.mubr.f32.mxu0 0.0
      %3244 = vmatmul.mubr.f32.gmra.mrb[0].mxu0 %v2799
      %v3245 = vpop.f32.mrb[0].mxu0
      %v3246 = vadd.f32 0.0, %v3245
      %v3247 = vpop.f32.mrb[0].mxu0
      %3248 = vmatprep.mubr.f32.mxu0 0.0
      %3249 = vmatmul.mubr.f32.gmra.mrb[0].mxu0 %v2802
      %v3250 = vpop.f32.mrb[0].mxu0
      %v3251 = vadd.f32 0.0, %v3250
      %v3252 = vpop.f32.mrb[0].mxu0
      %3253 = vmatprep.mubr.f32.mxu0 0.0
      %3254 = vmatmul.mubr.f32.gmra.mrb[0].mxu0 %v2805
      %v3255 = vpop.f32.mrb[0].mxu0
      %v3256 = vadd.f32 0.0, %v3255
      %v3257 = vpop.f32.mrb[0].mxu0
      %3258 = vmatprep.mubr.f32.mxu0 0.0
      %3259 = vmatmul.mubr.f32.gmra.mrb[0].mxu0 %v2808
      %v3260 = vpop.f32.mrb[0].mxu0
      %v3261 = vadd.f32 0.0, %v3260
      %v3262 = vpop.f32.mrb[0].mxu0
      %3263 = vmatprep.mubr.f32.mxu0 0.0
      %3264 = vmatmul.mubr.f32.gmra.mrb[0].mxu0 %v2811
      %v3265 = vpop.f32.mrb[0].mxu0
      %v3266 = vadd.f32 0.0, %v3265
      %v3267 = vpop.f32.mrb[0].mxu0
      %3268 = vmatprep.mubr.f32.mxu0 0.0
      %3269 = vmatmul.mubr.f32.gmra.mrb[0].mxu0 %v2814
      %v3270 = vpop.f32.mrb[0].mxu0
      %v3271 = vadd.f32 0.0, %v3270
      %v3272 = vpop.f32.mrb[0].mxu0
      %3273 = vmatprep.mubr.f32.mxu0 0.0
      %3274 = vmatmul.mubr.f32.gmra.mrb[0].mxu0 %v2817
      %v3275 = vpop.f32.mrb[0].mxu0
      %v3276 = vadd.f32 0.0, %v3275
      %v3277 = vpop.f32.mrb[0].mxu0
      %3278 = vmatprep.mubr.f32.mxu0 0.0
      %3279 = vmatmul.mubr.f32.gmra.mrb[0].mxu0 %v2820
      %v3280 = vpop.f32.mrb[0].mxu0
      %v3281 = vadd.f32 0.0, %v3280
      %v3282 = vpop.f32.mrb[0].mxu0
      %3283 = vmatprep.mubr.f32.mxu0 0.0
      %3284 = vmatmul.mubr.f32.gmra.mrb[0].mxu0 %v2823
      %v3285 = vpop.f32.mrb[0].mxu0
      %v3286 = vadd.f32 0.0, %v3285
      %v3287 = vpop.f32.mrb[0].mxu0
      %3288 = vmatprep.mubr.f32.mxu0 0.0
      %3289 = vmatmul.mubr.f32.gmra.mrb[0].mxu0 %v2826
      %v3290 = vpop.f32.mrb[0].mxu0
      %v3291 = vadd.f32 0.0, %v3290
      %v3292 = vpop.f32.mrb[0].mxu0
      %3293 = vmatprep.mubr.f32.mxu0 0.0
      %3294 = vmatmul.mubr.f32.gmra.mrb[0].mxu0 %v2829
      %v3295 = vpop.f32.mrb[0].mxu0
      %v3296 = vadd.f32 0.0, %v3295
      %v3297 = vpop.f32.mrb[0].mxu0
      %3298 = vmatprep.mubr.f32.mxu0 0.0
      %3299 = vmatmul.mubr.f32.gmra.mrb[0].mxu0 %v2832
      %v3300 = vpop.f32.mrb[0].mxu0
      %v3301 = vadd.f32 0.0, %v3300
      %v3302 = vpop.f32.mrb[0].mxu0
      %3303 = vmatprep.mubr.f32.mxu0 0.0
      %3304 = vmatmul.mubr.f32.gmra.mrb[0].mxu0 %v2835
      %v3305 = vpop.f32.mrb[0].mxu0
      %v3306 = vadd.f32 0.0, %v3305
      %v3307 = vpop.f32.mrb[0].mxu0
      %3308 = vmatprep.mubr.f32.mxu0 0.0
      %3309 = vmatmul.mubr.f32.gmra.mrb[0].mxu0 %v2838
      %v3310 = vpop.f32.mrb[0].mxu0
      %v3311 = vadd.f32 0.0, %v3310
      %v3312 = vpop.f32.mrb[0].mxu0
      %3313 = vmatprep.mubr.f32.mxu0 0.0
      %3314 = vmatmul.mubr.f32.gmra.mrb[0].mxu0 %v2841
      %v3315 = vpop.f32.mrb[0].mxu0
      %v3316 = vadd.f32 0.0, %v3315
      %v3317 = vpop.f32.mrb[0].mxu0
      %3318 = vmatprep.mubr.f32.mxu0 0.0
      %3319 = vmatmul.mubr.f32.gmra.mrb[0].mxu0 %v2844
      %v3320 = vpop.f32.mrb[0].mxu0
      %v3321 = vadd.f32 0.0, %v3320
      %v3322 = vpop.f32.mrb[0].mxu0
      %3323 = vmatprep.mubr.f32.mxu0 0.0
      %3324 = vmatmul.mubr.f32.gmra.mrb[0].mxu0 %v2847
      %v3325 = vpop.f32.mrb[0].mxu0
      %v3326 = vadd.f32 0.0, %v3325
      %v3327 = vpop.f32.mrb[0].mxu0
      %3328 = vmatprep.mubr.f32.mxu0 0.0
      %3329 = vmatmul.mubr.f32.gmra.mrb[0].mxu0 %v3109
      %v3330 = vpop.f32.mrb[0].mxu0
      %v3331 = vadd.f32 0.0, %v3330
      %v3332 = vpop.f32.mrb[0].mxu0
      %3333 = vmatprep.mubr.f32.mxu0 0.0
      %3334 = vmatmul.mubr.f32.gmra.mrb[0].mxu0 %v3112
      %v3335 = vpop.f32.mrb[0].mxu0
      %v3336 = vadd.f32 0.0, %v3335
      %v3337 = vpop.f32.mrb[0].mxu0
      %3338 = vdwg.mxu0
      %v3339 = vadd.f32 %v3074, %v3181
      %v3340 = vadd.f32 %v3075, %v3186
      %v3341 = vadd.f32 %v3076, %v3191
      %v3342 = vadd.f32 %v3077, %v3196
      %v3343 = vadd.f32 %v3078, %v3201
      %v3344 = vadd.f32 %v3079, %v3206
      %v3345 = vadd.f32 %v3080, %v3211
      %v3346 = vadd.f32 %v3081, %v3216
      %v3347 = vadd.f32 %v3082, %v3221
      %v3348 = vadd.f32 %v3083, %v3226
      %v3349 = vadd.f32 %v3084, %v3231
      %v3350 = vadd.f32 %v3085, %v3236
      %v3351 = vadd.f32 %v3086, %v3241
      %v3352 = vadd.f32 %v3087, %v3246
      %v3353 = vadd.f32 %v3088, %v3251
      %v3354 = vadd.f32 %v3089, %v3256
      %v3355 = vadd.f32 %v3090, %v3261
      %v3356 = vadd.f32 %v3091, %v3266
      %v3357 = vadd.f32 %v3092, %v3271
      %v3358 = vadd.f32 %v3093, %v3276
      %v3359 = vadd.f32 %v3094, %v3281
      %v3360 = vadd.f32 %v3095, %v3286
      %v3361 = vadd.f32 %v3096, %v3291
      %v3362 = vadd.f32 %v3097, %v3296
      %v3363 = vadd.f32 %v3098, %v3301
      %v3364 = vadd.f32 %v3099, %v3306
      %v3365 = vadd.f32 %v3100, %v3311
      %v3366 = vadd.f32 %v3101, %v3316
      %v3367 = vadd.f32 %v3102, %v3321
      %v3368 = vadd.f32 %v3103, %v3326
      %v3369 = vadd.f32 %v3104, %v3331
      %v3370 = vadd.f32 %v3105, %v3336
      %s3371 = scalar_lea.vmem %s4, 64
      %v3372 = vld [vmem:[%s3371] sm:$0xff]
      %v3374 = vsel %vm326, %v2749, 0
      %v3377 = vsel %vm326, %v2750, 0
      %3379 = vmatprep.subr.mxu0 0.0
      %3380 = vmatpush1.msra.mxu0 %v3372
      %3381 = vmatprep.subr.mxu0 0.0
      %3382 = vmatpush1.msra.mxu0 0.0
      %3383 = vmatprep.subr.mxu0 0.0
      %3384 = vmatpush1.msra.mxu0 0.0
      %3385 = vmatprep.subr.mxu0 0.0
      %3386 = vmatpush1.msra.mxu0 0.0
      %3387 = vmatprep.subr.mxu0 0.0
      %3388 = vmatpush1.msra.mxu0 0.0
      %3389 = vmatprep.subr.mxu0 0.0
      %3390 = vmatpush1.msra.mxu0 0.0
      %3391 = vmatprep.subr.mxu0 0.0
      %3392 = vmatpush1.msra.mxu0 0.0
      %3393 = vmatprep.subr.mxu0 0.0
      %3394 = vmatpush1.msra.mxu0 0.0
      %3395 = vmatprep.subr.mxu0 0.0
      %3396 = vmatpush1.msra.mxu0 0.0
      %3397 = vmatprep.subr.mxu0 0.0
      %3398 = vmatpush1.msra.mxu0 0.0
      %3399 = vmatprep.subr.mxu0 0.0
      %3400 = vmatpush1.msra.mxu0 0.0
      %3401 = vmatprep.subr.mxu0 0.0
      %3402 = vmatpush1.msra.mxu0 0.0
      %3403 = vmatprep.subr.mxu0 0.0
      %3404 = vmatpush1.msra.mxu0 0.0
      %3405 = vmatprep.subr.mxu0 0.0
      %3406 = vmatpush1.msra.mxu0 0.0
      %3407 = vmatprep.subr.mxu0 0.0
      %3408 = vmatpush1.msra.mxu0 0.0
      %3409 = vmatprep.subr.mxu0 0.0
      %3410 = vmatpush1.msra.mxu0 0.0
      %3411 = vmatprep.subr.mxu0 0.0
      %3412 = vmatpush1.msra.mxu0 0.0
      %3413 = vmatprep.subr.mxu0 0.0
      %3414 = vmatpush1.msra.mxu0 0.0
      %3415 = vmatprep.subr.mxu0 0.0
      %3416 = vmatpush1.msra.mxu0 0.0
      %3417 = vmatprep.subr.mxu0 0.0
      %3418 = vmatpush1.msra.mxu0 0.0
      %3419 = vmatprep.subr.mxu0 0.0
      %3420 = vmatpush1.msra.mxu0 0.0
      %3421 = vmatprep.subr.mxu0 0.0
      %3422 = vmatpush1.msra.mxu0 0.0
      %3423 = vmatprep.subr.mxu0 0.0
      %3424 = vmatpush1.msra.mxu0 0.0
      %3425 = vmatprep.subr.mxu0 0.0
      %3426 = vmatpush1.msra.mxu0 0.0
      %3427 = vmatprep.subr.mxu0 0.0
      %3428 = vmatpush1.msra.mxu0 0.0
      %3429 = vmatprep.subr.mxu0 0.0
      %3430 = vmatpush1.msra.mxu0 0.0
      %3431 = vmatprep.subr.mxu0 0.0
      %3432 = vmatpush1.msra.mxu0 0.0
      %3433 = vmatprep.subr.mxu0 0.0
      %3434 = vmatpush1.msra.mxu0 0.0
      %3435 = vmatprep.subr.mxu0 0.0
      %3436 = vmatpush1.msra.mxu0 0.0
      %3437 = vmatprep.subr.mxu0 0.0
      %3438 = vmatpush1.msra.mxu0 0.0
      %3439 = vmatprep.subr.mxu0 0.0
      %3440 = vmatpush1.msra.mxu0 0.0
      %3441 = vmatprep.subr.mxu0 0.0
      %3442 = vmatpush1.msra.mxu0 0.0
      %3443 = vmatprep.mubr.f32.mxu0 0.0
      %3444 = vmatmul.mubr.f32.gmra.mrb[0].mxu0 %v2766
      %v3445 = vpop.f32.mrb[0].mxu0
      %v3446 = vadd.f32 0.0, %v3445
      %v3447 = vpop.f32.mrb[0].mxu0
      %3448 = vmatprep.mubr.f32.mxu0 0.0
      %3449 = vmatmul.mubr.f32.gmra.mrb[0].mxu0 %v2769
      %v3450 = vpop.f32.mrb[0].mxu0
      %v3451 = vadd.f32 0.0, %v3450
      %v3452 = vpop.f32.mrb[0].mxu0
      %3453 = vmatprep.mubr.f32.mxu0 0.0
      %3454 = vmatmul.mubr.f32.gmra.mrb[0].mxu0 %v2772
      %v3455 = vpop.f32.mrb[0].mxu0
      %v3456 = vadd.f32 0.0, %v3455
      %v3457 = vpop.f32.mrb[0].mxu0
      %3458 = vmatprep.mubr.f32.mxu0 0.0
      %3459 = vmatmul.mubr.f32.gmra.mrb[0].mxu0 %v2775
      %v3460 = vpop.f32.mrb[0].mxu0
      %v3461 = vadd.f32 0.0, %v3460
      %v3462 = vpop.f32.mrb[0].mxu0
      %3463 = vmatprep.mubr.f32.mxu0 0.0
      %3464 = vmatmul.mubr.f32.gmra.mrb[0].mxu0 %v2778
      %v3465 = vpop.f32.mrb[0].mxu0
      %v3466 = vadd.f32 0.0, %v3465
      %v3467 = vpop.f32.mrb[0].mxu0
      %3468 = vmatprep.mubr.f32.mxu0 0.0
      %3469 = vmatmul.mubr.f32.gmra.mrb[0].mxu0 %v2781
      %v3470 = vpop.f32.mrb[0].mxu0
      %v3471 = vadd.f32 0.0, %v3470
      %v3472 = vpop.f32.mrb[0].mxu0
      %3473 = vmatprep.mubr.f32.mxu0 0.0
      %3474 = vmatmul.mubr.f32.gmra.mrb[0].mxu0 %v2784
      %v3475 = vpop.f32.mrb[0].mxu0
      %v3476 = vadd.f32 0.0, %v3475
      %v3477 = vpop.f32.mrb[0].mxu0
      %3478 = vmatprep.mubr.f32.mxu0 0.0
      %3479 = vmatmul.mubr.f32.gmra.mrb[0].mxu0 %v2787
      %v3480 = vpop.f32.mrb[0].mxu0
      %v3481 = vadd.f32 0.0, %v3480
      %v3482 = vpop.f32.mrb[0].mxu0
      %3483 = vmatprep.mubr.f32.mxu0 0.0
      %3484 = vmatmul.mubr.f32.gmra.mrb[0].mxu0 %v2790
      %v3485 = vpop.f32.mrb[0].mxu0
      %v3486 = vadd.f32 0.0, %v3485
      %v3487 = vpop.f32.mrb[0].mxu0
      %3488 = vmatprep.mubr.f32.mxu0 0.0
      %3489 = vmatmul.mubr.f32.gmra.mrb[0].mxu0 %v2793
      %v3490 = vpop.f32.mrb[0].mxu0
      %v3491 = vadd.f32 0.0, %v3490
      %v3492 = vpop.f32.mrb[0].mxu0
      %3493 = vmatprep.mubr.f32.mxu0 0.0
      %3494 = vmatmul.mubr.f32.gmra.mrb[0].mxu0 %v2796
      %v3495 = vpop.f32.mrb[0].mxu0
      %v3496 = vadd.f32 0.0, %v3495
      %v3497 = vpop.f32.mrb[0].mxu0
      %3498 = vmatprep.mubr.f32.mxu0 0.0
      %3499 = vmatmul.mubr.f32.gmra.mrb[0].mxu0 %v2799
      %v3500 = vpop.f32.mrb[0].mxu0
      %v3501 = vadd.f32 0.0, %v3500
      %v3502 = vpop.f32.mrb[0].mxu0
      %3503 = vmatprep.mubr.f32.mxu0 0.0
      %3504 = vmatmul.mubr.f32.gmra.mrb[0].mxu0 %v2802
      %v3505 = vpop.f32.mrb[0].mxu0
      %v3506 = vadd.f32 0.0, %v3505
      %v3507 = vpop.f32.mrb[0].mxu0
      %3508 = vmatprep.mubr.f32.mxu0 0.0
      %3509 = vmatmul.mubr.f32.gmra.mrb[0].mxu0 %v2805
      %v3510 = vpop.f32.mrb[0].mxu0
      %v3511 = vadd.f32 0.0, %v3510
      %v3512 = vpop.f32.mrb[0].mxu0
      %3513 = vmatprep.mubr.f32.mxu0 0.0
      %3514 = vmatmul.mubr.f32.gmra.mrb[0].mxu0 %v2808
      %v3515 = vpop.f32.mrb[0].mxu0
      %v3516 = vadd.f32 0.0, %v3515
      %v3517 = vpop.f32.mrb[0].mxu0
      %3518 = vmatprep.mubr.f32.mxu0 0.0
      %3519 = vmatmul.mubr.f32.gmra.mrb[0].mxu0 %v2811
      %v3520 = vpop.f32.mrb[0].mxu0
      %v3521 = vadd.f32 0.0, %v3520
      %v3522 = vpop.f32.mrb[0].mxu0
      %3523 = vmatprep.mubr.f32.mxu0 0.0
      %3524 = vmatmul.mubr.f32.gmra.mrb[0].mxu0 %v2814
      %v3525 = vpop.f32.mrb[0].mxu0
      %v3526 = vadd.f32 0.0, %v3525
      %v3527 = vpop.f32.mrb[0].mxu0
      %3528 = vmatprep.mubr.f32.mxu0 0.0
      %3529 = vmatmul.mubr.f32.gmra.mrb[0].mxu0 %v2817
      %v3530 = vpop.f32.mrb[0].mxu0
      %v3531 = vadd.f32 0.0, %v3530
      %v3532 = vpop.f32.mrb[0].mxu0
      %3533 = vmatprep.mubr.f32.mxu0 0.0
      %3534 = vmatmul.mubr.f32.gmra.mrb[0].mxu0 %v2820
      %v3535 = vpop.f32.mrb[0].mxu0
      %v3536 = vadd.f32 0.0, %v3535
      %v3537 = vpop.f32.mrb[0].mxu0
      %3538 = vmatprep.mubr.f32.mxu0 0.0
      %3539 = vmatmul.mubr.f32.gmra.mrb[0].mxu0 %v2823
      %v3540 = vpop.f32.mrb[0].mxu0
      %v3541 = vadd.f32 0.0, %v3540
      %v3542 = vpop.f32.mrb[0].mxu0
      %3543 = vmatprep.mubr.f32.mxu0 0.0
      %3544 = vmatmul.mubr.f32.gmra.mrb[0].mxu0 %v2826
      %v3545 = vpop.f32.mrb[0].mxu0
      %v3546 = vadd.f32 0.0, %v3545
      %v3547 = vpop.f32.mrb[0].mxu0
      %3548 = vmatprep.mubr.f32.mxu0 0.0
      %3549 = vmatmul.mubr.f32.gmra.mrb[0].mxu0 %v2829
      %v3550 = vpop.f32.mrb[0].mxu0
      %v3551 = vadd.f32 0.0, %v3550
      %v3552 = vpop.f32.mrb[0].mxu0
      %3553 = vmatprep.mubr.f32.mxu0 0.0
      %3554 = vmatmul.mubr.f32.gmra.mrb[0].mxu0 %v2832
      %v3555 = vpop.f32.mrb[0].mxu0
      %v3556 = vadd.f32 0.0, %v3555
      %v3557 = vpop.f32.mrb[0].mxu0
      %3558 = vmatprep.mubr.f32.mxu0 0.0
      %3559 = vmatmul.mubr.f32.gmra.mrb[0].mxu0 %v2835
      %v3560 = vpop.f32.mrb[0].mxu0
      %v3561 = vadd.f32 0.0, %v3560
      %v3562 = vpop.f32.mrb[0].mxu0
      %3563 = vmatprep.mubr.f32.mxu0 0.0
      %3564 = vmatmul.mubr.f32.gmra.mrb[0].mxu0 %v2838
      %v3565 = vpop.f32.mrb[0].mxu0
      %v3566 = vadd.f32 0.0, %v3565
      %v3567 = vpop.f32.mrb[0].mxu0
      %3568 = vmatprep.mubr.f32.mxu0 0.0
      %3569 = vmatmul.mubr.f32.gmra.mrb[0].mxu0 %v2841
      %v3570 = vpop.f32.mrb[0].mxu0
      %v3571 = vadd.f32 0.0, %v3570
      %v3572 = vpop.f32.mrb[0].mxu0
      %3573 = vmatprep.mubr.f32.mxu0 0.0
      %3574 = vmatmul.mubr.f32.gmra.mrb[0].mxu0 %v2844
      %v3575 = vpop.f32.mrb[0].mxu0
      %v3576 = vadd.f32 0.0, %v3575
      %v3577 = vpop.f32.mrb[0].mxu0
      %3578 = vmatprep.mubr.f32.mxu0 0.0
      %3579 = vmatmul.mubr.f32.gmra.mrb[0].mxu0 %v2847
      %v3580 = vpop.f32.mrb[0].mxu0
      %v3581 = vadd.f32 0.0, %v3580
      %v3582 = vpop.f32.mrb[0].mxu0
      %3583 = vmatprep.mubr.f32.mxu0 0.0
      %3584 = vmatmul.mubr.f32.gmra.mrb[0].mxu0 %v3109
      %v3585 = vpop.f32.mrb[0].mxu0
      %v3586 = vadd.f32 0.0, %v3585
      %v3587 = vpop.f32.mrb[0].mxu0
      %3588 = vmatprep.mubr.f32.mxu0 0.0
      %3589 = vmatmul.mubr.f32.gmra.mrb[0].mxu0 %v3112
      %v3590 = vpop.f32.mrb[0].mxu0
      %v3591 = vadd.f32 0.0, %v3590
      %v3592 = vpop.f32.mrb[0].mxu0
      %3593 = vmatprep.mubr.f32.mxu0 0.0
      %3594 = vmatmul.mubr.f32.gmra.mrb[0].mxu0 %v3374
      %v3595 = vpop.f32.mrb[0].mxu0
      %v3596 = vadd.f32 0.0, %v3595
      %v3597 = vpop.f32.mrb[0].mxu0
      %3598 = vmatprep.mubr.f32.mxu0 0.0
      %3599 = vmatmul.mubr.f32.gmra.mrb[0].mxu0 %v3377
      %v3600 = vpop.f32.mrb[0].mxu0
      %v3601 = vadd.f32 0.0, %v3600
      %v3602 = vpop.f32.mrb[0].mxu0
      %3603 = vdwg.mxu0
      %v3604 = vadd.f32 %v3339, %v3446
      %v3605 = vadd.f32 %v3340, %v3451
      %v3606 = vadd.f32 %v3341, %v3456
      %v3607 = vadd.f32 %v3342, %v3461
      %v3608 = vadd.f32 %v3343, %v3466
      %v3609 = vadd.f32 %v3344, %v3471
      %v3610 = vadd.f32 %v3345, %v3476
      %v3611 = vadd.f32 %v3346, %v3481
      %v3612 = vadd.f32 %v3347, %v3486
      %v3613 = vadd.f32 %v3348, %v3491
      %v3614 = vadd.f32 %v3349, %v3496
      %v3615 = vadd.f32 %v3350, %v3501
      %v3616 = vadd.f32 %v3351, %v3506
      %v3617 = vadd.f32 %v3352, %v3511
      %v3618 = vadd.f32 %v3353, %v3516
      %v3619 = vadd.f32 %v3354, %v3521
      %v3620 = vadd.f32 %v3355, %v3526
      %v3621 = vadd.f32 %v3356, %v3531
      %v3622 = vadd.f32 %v3357, %v3536
      %v3623 = vadd.f32 %v3358, %v3541
      %v3624 = vadd.f32 %v3359, %v3546
      %v3625 = vadd.f32 %v3360, %v3551
      %v3626 = vadd.f32 %v3361, %v3556
      %v3627 = vadd.f32 %v3362, %v3561
      %v3628 = vadd.f32 %v3363, %v3566
      %v3629 = vadd.f32 %v3364, %v3571
      %v3630 = vadd.f32 %v3365, %v3576
      %v3631 = vadd.f32 %v3366, %v3581
      %v3632 = vadd.f32 %v3367, %v3586
      %v3633 = vadd.f32 %v3368, %v3591
      %v3634 = vadd.f32 %v3369, %v3596
      %v3635 = vadd.f32 %v3370, %v3601
      %v3636 = vmax.f32 %v3604, 0.0
      %v3637 = vmax.f32 %v3605, 0.0
      %v3638 = vmax.f32 %v3606, 0.0
      %v3639 = vmax.f32 %v3607, 0.0
      %v3640 = vmax.f32 %v3608, 0.0
      %v3641 = vmax.f32 %v3609, 0.0
      %v3642 = vmax.f32 %v3610, 0.0
      %v3643 = vmax.f32 %v3611, 0.0
      %v3644 = vmax.f32 %v3612, 0.0
      %v3645 = vmax.f32 %v3613, 0.0
      %v3646 = vmax.f32 %v3614, 0.0
      %v3647 = vmax.f32 %v3615, 0.0
      %v3648 = vmax.f32 %v3616, 0.0
      %v3649 = vmax.f32 %v3617, 0.0
      %v3650 = vmax.f32 %v3618, 0.0
      %v3651 = vmax.f32 %v3619, 0.0
      %v3652 = vmax.f32 %v3620, 0.0
      %v3653 = vmax.f32 %v3621, 0.0
      %v3654 = vmax.f32 %v3622, 0.0
      %v3655 = vmax.f32 %v3623, 0.0
      %v3656 = vmax.f32 %v3624, 0.0
      %v3657 = vmax.f32 %v3625, 0.0
      %v3658 = vmax.f32 %v3626, 0.0
      %v3659 = vmax.f32 %v3627, 0.0
      %v3660 = vmax.f32 %v3628, 0.0
      %v3661 = vmax.f32 %v3629, 0.0
      %v3662 = vmax.f32 %v3630, 0.0
      %v3663 = vmax.f32 %v3631, 0.0
      %v3664 = vmax.f32 %v3632, 0.0
      %v3665 = vmax.f32 %v3633, 0.0
      %v3666 = vmax.f32 %v3634, 0.0
      %v3667 = vmax.f32 %v3635, 0.0
      %s3668 = scalar_lea.vmem [#allocation3], 24
      %3669 = vst.msk [vmem:[%s3668 + $0x1] sm:$0xff] %vm382, %v3636
      %3670 = vst.msk [vmem:[%s3668 + $0x9] sm:$0xff] %vm382, %v3637
      %3671 = vst.msk [vmem:[%s3668 + $0x19] sm:$0xff] %vm382, %v3638
      %3672 = vst.msk [vmem:[%s3668 + $0x21] sm:$0xff] %vm382, %v3639
      %3673 = vst.msk [vmem:[%s3668 + $0x31] sm:$0xff] %vm382, %v3640
      %3674 = vst.msk [vmem:[%s3668 + $0x39] sm:$0xff] %vm382, %v3641
      %3675 = vst.msk [vmem:[%s3668 + $0x49] sm:$0xff] %vm382, %v3642
      %3676 = vst.msk [vmem:[%s3668 + $0x51] sm:$0xff] %vm382, %v3643
      %3677 = vst.msk [vmem:[%s3668 + $0x61] sm:$0xff] %vm382, %v3644
      %3678 = vst.msk [vmem:[%s3668 + $0x69] sm:$0xff] %vm382, %v3645
      %3679 = vst.msk [vmem:[%s3668 + $0x79] sm:$0xff] %vm382, %v3646
      %3680 = vst.msk [vmem:[%s3668 + $0x81] sm:$0xff] %vm382, %v3647
      %3681 = vst.msk [vmem:[%s3668 + $0x91] sm:$0xff] %vm382, %v3648
      %3682 = vst.msk [vmem:[%s3668 + $0x99] sm:$0xff] %vm382, %v3649
      %3683 = vst.msk [vmem:[%s3668 + $0xa9] sm:$0xff] %vm382, %v3650
      %3684 = vst.msk [vmem:[%s3668 + $0xb1] sm:$0xff] %vm382, %v3651
      %3685 = vst.msk [vmem:[%s3668 + $0xc1] sm:$0xff] %vm382, %v3652
      %3686 = vst.msk [vmem:[%s3668 + $0xc9] sm:$0xff] %vm382, %v3653
      %3687 = vst.msk [vmem:[%s3668 + $0xd9] sm:$0xff] %vm382, %v3654
      %3688 = vst.msk [vmem:[%s3668 + $0xe1] sm:$0xff] %vm382, %v3655
      %3689 = vst.msk [vmem:[%s3668 + $0xf1] sm:$0xff] %vm382, %v3656
      %3690 = vst.msk [vmem:[%s3668 + $0xf9] sm:$0xff] %vm382, %v3657
      %3691 = vst.msk [vmem:[%s3668 + $0x109] sm:$0xff] %vm382, %v3658
      %3692 = vst.msk [vmem:[%s3668 + $0x111] sm:$0xff] %vm382, %v3659
      %3693 = vst.msk [vmem:[%s3668 + $0x121] sm:$0xff] %vm382, %v3660
      %3694 = vst.msk [vmem:[%s3668 + $0x129] sm:$0xff] %vm382, %v3661
      %3695 = vst.msk [vmem:[%s3668 + $0x139] sm:$0xff] %vm382, %v3662
      %3696 = vst.msk [vmem:[%s3668 + $0x141] sm:$0xff] %vm382, %v3663
      %3697 = vst.msk [vmem:[%s3668 + $0x151] sm:$0xff] %vm382, %v3664
      %3698 = vst.msk [vmem:[%s3668 + $0x159] sm:$0xff] %vm382, %v3665
      %3699 = vst.msk [vmem:[%s3668 + $0x169] sm:$0xff] %vm382, %v3666
      %3700 = vst.msk [vmem:[%s3668 + $0x171] sm:$0xff] %vm382, %v3667
      %v3701 = vld [vmem:[#allocation3] sm:$0xff]
      %v3702 = vld [vmem:[#allocation3 + $0x8] sm:$0xff]
      %v3703 = vld [vmem:[#allocation3 + $0x18] sm:$0xff]
      %v3704 = vld [vmem:[#allocation3 + $0x20] sm:$0xff]
      %v3705 = vld [vmem:[#allocation3 + $0x30] sm:$0xff]
      %v3706 = vld [vmem:[#allocation3 + $0x38] sm:$0xff]
      %v3707 = vld [vmem:[#allocation3 + $0x48] sm:$0xff]
      %v3708 = vld [vmem:[#allocation3 + $0x50] sm:$0xff]
      %v3709 = vld [vmem:[#allocation3 + $0x60] sm:$0xff]
      %v3710 = vld [vmem:[#allocation3 + $0x68] sm:$0xff]
      %v3711 = vld [vmem:[#allocation3 + $0x78] sm:$0xff]
      %v3712 = vld [vmem:[#allocation3 + $0x80] sm:$0xff]
      %v3713 = vld [vmem:[#allocation3 + $0x90] sm:$0xff]
      %v3714 = vld [vmem:[#allocation3 + $0x98] sm:$0xff]
      %v3715 = vld [vmem:[#allocation3 + $0xa8] sm:$0xff]
      %v3716 = vld [vmem:[#allocation3 + $0xb0] sm:$0xff]
      %v3717 = vld [vmem:[#allocation3 + $0xc0] sm:$0xff]
      %v3718 = vld [vmem:[#allocation3 + $0xc8] sm:$0xff]
      %v3719 = vld [vmem:[#allocation3 + $0xd8] sm:$0xff]
      %v3720 = vld [vmem:[#allocation3 + $0xe0] sm:$0xff]
      %v3721 = vld [vmem:[#allocation3 + $0xf0] sm:$0xff]
      %v3722 = vld [vmem:[#allocation3 + $0xf8] sm:$0xff]
      %v3723 = vld [vmem:[#allocation3 + $0x108] sm:$0xff]
      %v3724 = vld [vmem:[#allocation3 + $0x110] sm:$0xff]
      %v3725 = vld [vmem:[#allocation3 + $0x120] sm:$0xff]
      %v3726 = vld [vmem:[#allocation3 + $0x128] sm:$0xff]
      %v3727 = vld [vmem:[#allocation3 + $0x138] sm:$0xff]
      %v3728 = vld [vmem:[#allocation3 + $0x140] sm:$0xff]
      %v3729 = vld [vmem:[#allocation3 + $0x150] sm:$0xff]
      %v3730 = vld [vmem:[#allocation3 + $0x158] sm:$0xff]
      %v3731 = vld [vmem:[#allocation3 + $0x168] sm:$0xff]
      %v3732 = vld [vmem:[#allocation3 + $0x170] sm:$0xff]
      %v3733 = vld [vmem:[#allocation3 + $0x180] sm:$0xff]
      %v3734 = vld [vmem:[#allocation3 + $0x188] sm:$0xff]
      %v3735 = vld [vmem:[#allocation3 + $0x198] sm:$0xff]
      %v3736 = vld [vmem:[#allocation3 + $0x1a0] sm:$0xff]
      %v3737 = vld [vmem:[%s6] sm:$0xf]
      %v3738 = vld [vmem:[%s7] sm:$0x1]
      %v3740 = vlaneseq
      %v3741 = vshrl.u32 %v3740, 7
      %v3742 = vsub.s32 0, %v3741
      %v3743 = vrot.slane %v3738, %v3742
      %v3746 = vsel %vm382, %v3701, 0
      %v3749 = vsel %vm382, %v3702, 0
      %v3752 = vsel %vm382, %v3703, 0
      %v3755 = vsel %vm382, %v3704, 0
      %v3758 = vsel %vm382, %v3705, 0
      %v3761 = vsel %vm382, %v3706, 0
      %v3764 = vsel %vm382, %v3707, 0
      %v3767 = vsel %vm382, %v3708, 0
      %v3770 = vsel %vm382, %v3709, 0
      %v3773 = vsel %vm382, %v3710, 0
      %v3776 = vsel %vm382, %v3711, 0
      %v3779 = vsel %vm382, %v3712, 0
      %v3782 = vsel %vm382, %v3713, 0
      %v3785 = vsel %vm382, %v3714, 0
      %v3788 = vsel %vm382, %v3715, 0
      %v3791 = vsel %vm382, %v3716, 0
      %v3794 = vsel %vm382, %v3717, 0
      %v3797 = vsel %vm382, %v3718, 0
      %v3800 = vsel %vm382, %v3719, 0
      %v3803 = vsel %vm382, %v3720, 0
      %v3806 = vsel %vm382, %v3721, 0
      %v3809 = vsel %vm382, %v3722, 0
      %v3812 = vsel %vm382, %v3723, 0
      %v3815 = vsel %vm382, %v3724, 0
      %v3818 = vsel %vm382, %v3725, 0
      %v3821 = vsel %vm382, %v3726, 0
      %v3824 = vsel %vm382, %v3727, 0
      %v3827 = vsel %vm382, %v3728, 0
      %v3830 = vsel %vm382, %v3729, 0
      %v3833 = vsel %vm382, %v3730, 0
      %v3836 = vsel %vm382, %v3731, 0
      %v3839 = vsel %vm382, %v3732, 0
      %vm3841 = vcmask 1043456
      %v3843 = vsel %vm3841, %v3737, 0
      %3845 = vmatprep.subr.mxu0 0.0
      %3846 = vmatpush1.msra.mxu0 %v3843
      %3847 = vmatprep.subr.mxu0 0.0
      %3848 = vmatpush1.msra.mxu0 0.0
      %3849 = vmatprep.subr.mxu0 0.0
      %3850 = vmatpush1.msra.mxu0 0.0
      %3851 = vmatprep.subr.mxu0 0.0
      %3852 = vmatpush1.msra.mxu0 0.0
      %3853 = vmatprep.subr.mxu0 0.0
      %3854 = vmatpush1.msra.mxu0 0.0
      %3855 = vmatprep.subr.mxu0 0.0
      %3856 = vmatpush1.msra.mxu0 0.0
      %3857 = vmatprep.subr.mxu0 0.0
      %3858 = vmatpush1.msra.mxu0 0.0
      %3859 = vmatprep.subr.mxu0 0.0
      %3860 = vmatpush1.msra.mxu0 0.0
      %3861 = vmatprep.subr.mxu0 0.0
      %3862 = vmatpush1.msra.mxu0 0.0
      %3863 = vmatprep.subr.mxu0 0.0
      %3864 = vmatpush1.msra.mxu0 0.0
      %3865 = vmatprep.subr.mxu0 0.0
      %3866 = vmatpush1.msra.mxu0 0.0
      %3867 = vmatprep.subr.mxu0 0.0
      %3868 = vmatpush1.msra.mxu0 0.0
      %3869 = vmatprep.subr.mxu0 0.0
      %3870 = vmatpush1.msra.mxu0 0.0
      %3871 = vmatprep.subr.mxu0 0.0
      %3872 = vmatpush1.msra.mxu0 0.0
      %3873 = vmatprep.subr.mxu0 0.0
      %3874 = vmatpush1.msra.mxu0 0.0
      %3875 = vmatprep.subr.mxu0 0.0
      %3876 = vmatpush1.msra.mxu0 0.0
      %3877 = vmatprep.subr.mxu0 0.0
      %3878 = vmatpush1.msra.mxu0 0.0
      %3879 = vmatprep.subr.mxu0 0.0
      %3880 = vmatpush1.msra.mxu0 0.0
      %3881 = vmatprep.subr.mxu0 0.0
      %3882 = vmatpush1.msra.mxu0 0.0
      %3883 = vmatprep.subr.mxu0 0.0
      %3884 = vmatpush1.msra.mxu0 0.0
      %3885 = vmatprep.subr.mxu0 0.0
      %3886 = vmatpush1.msra.mxu0 0.0
      %3887 = vmatprep.subr.mxu0 0.0
      %3888 = vmatpush1.msra.mxu0 0.0
      %3889 = vmatprep.subr.mxu0 0.0
      %3890 = vmatpush1.msra.mxu0 0.0
      %3891 = vmatprep.subr.mxu0 0.0
      %3892 = vmatpush1.msra.mxu0 0.0
      %3893 = vmatprep.subr.mxu0 0.0
      %3894 = vmatpush1.msra.mxu0 0.0
      %3895 = vmatprep.subr.mxu0 0.0
      %3896 = vmatpush1.msra.mxu0 0.0
      %3897 = vmatprep.subr.mxu0 0.0
      %3898 = vmatpush1.msra.mxu0 0.0
      %3899 = vmatprep.subr.mxu0 0.0
      %3900 = vmatpush1.msra.mxu0 0.0
      %3901 = vmatprep.subr.mxu0 0.0
      %3902 = vmatpush1.msra.mxu0 0.0
      %3903 = vmatprep.subr.mxu0 0.0
      %3904 = vmatpush1.msra.mxu0 0.0
      %3905 = vmatprep.subr.mxu0 0.0
      %3906 = vmatpush1.msra.mxu0 0.0
      %3907 = vmatprep.subr.mxu0 0.0
      %3908 = vmatpush1.msra.mxu0 0.0
      %3909 = vmatprep.mubr.f32.mxu0 0.0
      %3910 = vmatmul.mubr.f32.gmra.mrb[0].mxu0 %v3746
      %v3911 = vpop.f32.mrb[0].mxu0
      %v3912 = vadd.f32 %v3743, %v3911
      %v3913 = vpop.f32.mrb[0].mxu0
      %3914 = vmatprep.mubr.f32.mxu0 0.0
      %3915 = vmatmul.mubr.f32.gmra.mrb[0].mxu0 %v3749
      %v3916 = vpop.f32.mrb[0].mxu0
      %v3917 = vadd.f32 %v3743, %v3916
      %v3918 = vpop.f32.mrb[0].mxu0
      %3919 = vmatprep.mubr.f32.mxu0 0.0
      %3920 = vmatmul.mubr.f32.gmra.mrb[0].mxu0 %v3752
      %v3921 = vpop.f32.mrb[0].mxu0
      %v3922 = vadd.f32 %v3743, %v3921
      %v3923 = vpop.f32.mrb[0].mxu0
      %3924 = vmatprep.mubr.f32.mxu0 0.0
      %3925 = vmatmul.mubr.f32.gmra.mrb[0].mxu0 %v3755
      %v3926 = vpop.f32.mrb[0].mxu0
      %v3927 = vadd.f32 %v3743, %v3926
      %v3928 = vpop.f32.mrb[0].mxu0
      %3929 = vmatprep.mubr.f32.mxu0 0.0
      %3930 = vmatmul.mubr.f32.gmra.mrb[0].mxu0 %v3758
      %v3931 = vpop.f32.mrb[0].mxu0
      %v3932 = vadd.f32 %v3743, %v3931
      %v3933 = vpop.f32.mrb[0].mxu0
      %3934 = vmatprep.mubr.f32.mxu0 0.0
      %3935 = vmatmul.mubr.f32.gmra.mrb[0].mxu0 %v3761
      %v3936 = vpop.f32.mrb[0].mxu0
      %v3937 = vadd.f32 %v3743, %v3936
      %v3938 = vpop.f32.mrb[0].mxu0
      %3939 = vmatprep.mubr.f32.mxu0 0.0
      %3940 = vmatmul.mubr.f32.gmra.mrb[0].mxu0 %v3764
      %v3941 = vpop.f32.mrb[0].mxu0
      %v3942 = vadd.f32 %v3743, %v3941
      %v3943 = vpop.f32.mrb[0].mxu0
      %3944 = vmatprep.mubr.f32.mxu0 0.0
      %3945 = vmatmul.mubr.f32.gmra.mrb[0].mxu0 %v3767
      %v3946 = vpop.f32.mrb[0].mxu0
      %v3947 = vadd.f32 %v3743, %v3946
      %v3948 = vpop.f32.mrb[0].mxu0
      %3949 = vmatprep.mubr.f32.mxu0 0.0
      %3950 = vmatmul.mubr.f32.gmra.mrb[0].mxu0 %v3770
      %v3951 = vpop.f32.mrb[0].mxu0
      %v3952 = vadd.f32 %v3743, %v3951
      %v3953 = vpop.f32.mrb[0].mxu0
      %3954 = vmatprep.mubr.f32.mxu0 0.0
      %3955 = vmatmul.mubr.f32.gmra.mrb[0].mxu0 %v3773
      %v3956 = vpop.f32.mrb[0].mxu0
      %v3957 = vadd.f32 %v3743, %v3956
      %v3958 = vpop.f32.mrb[0].mxu0
      %3959 = vmatprep.mubr.f32.mxu0 0.0
      %3960 = vmatmul.mubr.f32.gmra.mrb[0].mxu0 %v3776
      %v3961 = vpop.f32.mrb[0].mxu0
      %v3962 = vadd.f32 %v3743, %v3961
      %v3963 = vpop.f32.mrb[0].mxu0
      %3964 = vmatprep.mubr.f32.mxu0 0.0
      %3965 = vmatmul.mubr.f32.gmra.mrb[0].mxu0 %v3779
      %v3966 = vpop.f32.mrb[0].mxu0
      %v3967 = vadd.f32 %v3743, %v3966
      %v3968 = vpop.f32.mrb[0].mxu0
      %3969 = vmatprep.mubr.f32.mxu0 0.0
      %3970 = vmatmul.mubr.f32.gmra.mrb[0].mxu0 %v3782
      %v3971 = vpop.f32.mrb[0].mxu0
      %v3972 = vadd.f32 %v3743, %v3971
      %v3973 = vpop.f32.mrb[0].mxu0
      %3974 = vmatprep.mubr.f32.mxu0 0.0
      %3975 = vmatmul.mubr.f32.gmra.mrb[0].mxu0 %v3785
      %v3976 = vpop.f32.mrb[0].mxu0
      %v3977 = vadd.f32 %v3743, %v3976
      %v3978 = vpop.f32.mrb[0].mxu0
      %3979 = vmatprep.mubr.f32.mxu0 0.0
      %3980 = vmatmul.mubr.f32.gmra.mrb[0].mxu0 %v3788
      %v3981 = vpop.f32.mrb[0].mxu0
      %v3982 = vadd.f32 %v3743, %v3981
      %v3983 = vpop.f32.mrb[0].mxu0
      %3984 = vmatprep.mubr.f32.mxu0 0.0
      %3985 = vmatmul.mubr.f32.gmra.mrb[0].mxu0 %v3791
      %v3986 = vpop.f32.mrb[0].mxu0
      %v3987 = vadd.f32 %v3743, %v3986
      %v3988 = vpop.f32.mrb[0].mxu0
      %3989 = vmatprep.mubr.f32.mxu0 0.0
      %3990 = vmatmul.mubr.f32.gmra.mrb[0].mxu0 %v3794
      %v3991 = vpop.f32.mrb[0].mxu0
      %v3992 = vadd.f32 %v3743, %v3991
      %v3993 = vpop.f32.mrb[0].mxu0
      %3994 = vmatprep.mubr.f32.mxu0 0.0
      %3995 = vmatmul.mubr.f32.gmra.mrb[0].mxu0 %v3797
      %v3996 = vpop.f32.mrb[0].mxu0
      %v3997 = vadd.f32 %v3743, %v3996
      %v3998 = vpop.f32.mrb[0].mxu0
      %3999 = vmatprep.mubr.f32.mxu0 0.0
      %4000 = vmatmul.mubr.f32.gmra.mrb[0].mxu0 %v3800
      %v4001 = vpop.f32.mrb[0].mxu0
      %v4002 = vadd.f32 %v3743, %v4001
      %v4003 = vpop.f32.mrb[0].mxu0
      %4004 = vmatprep.mubr.f32.mxu0 0.0
      %4005 = vmatmul.mubr.f32.gmra.mrb[0].mxu0 %v3803
      %v4006 = vpop.f32.mrb[0].mxu0
      %v4007 = vadd.f32 %v3743, %v4006
      %v4008 = vpop.f32.mrb[0].mxu0
      %4009 = vmatprep.mubr.f32.mxu0 0.0
      %4010 = vmatmul.mubr.f32.gmra.mrb[0].mxu0 %v3806
      %v4011 = vpop.f32.mrb[0].mxu0
      %v4012 = vadd.f32 %v3743, %v4011
      %v4013 = vpop.f32.mrb[0].mxu0
      %4014 = vmatprep.mubr.f32.mxu0 0.0
      %4015 = vmatmul.mubr.f32.gmra.mrb[0].mxu0 %v3809
      %v4016 = vpop.f32.mrb[0].mxu0
      %v4017 = vadd.f32 %v3743, %v4016
      %v4018 = vpop.f32.mrb[0].mxu0
      %4019 = vmatprep.mubr.f32.mxu0 0.0
      %4020 = vmatmul.mubr.f32.gmra.mrb[0].mxu0 %v3812
      %v4021 = vpop.f32.mrb[0].mxu0
      %v4022 = vadd.f32 %v3743, %v4021
      %v4023 = vpop.f32.mrb[0].mxu0
      %4024 = vmatprep.mubr.f32.mxu0 0.0
      %4025 = vmatmul.mubr.f32.gmra.mrb[0].mxu0 %v3815
      %v4026 = vpop.f32.mrb[0].mxu0
      %v4027 = vadd.f32 %v3743, %v4026
      %v4028 = vpop.f32.mrb[0].mxu0
      %4029 = vmatprep.mubr.f32.mxu0 0.0
      %4030 = vmatmul.mubr.f32.gmra.mrb[0].mxu0 %v3818
      %v4031 = vpop.f32.mrb[0].mxu0
      %v4032 = vadd.f32 %v3743, %v4031
      %v4033 = vpop.f32.mrb[0].mxu0
      %4034 = vmatprep.mubr.f32.mxu0 0.0
      %4035 = vmatmul.mubr.f32.gmra.mrb[0].mxu0 %v3821
      %v4036 = vpop.f32.mrb[0].mxu0
      %v4037 = vadd.f32 %v3743, %v4036
      %v4038 = vpop.f32.mrb[0].mxu0
      %4039 = vmatprep.mubr.f32.mxu0 0.0
      %4040 = vmatmul.mubr.f32.gmra.mrb[0].mxu0 %v3824
      %v4041 = vpop.f32.mrb[0].mxu0
      %v4042 = vadd.f32 %v3743, %v4041
      %v4043 = vpop.f32.mrb[0].mxu0
      %4044 = vmatprep.mubr.f32.mxu0 0.0
      %4045 = vmatmul.mubr.f32.gmra.mrb[0].mxu0 %v3827
      %v4046 = vpop.f32.mrb[0].mxu0
      %v4047 = vadd.f32 %v3743, %v4046
      %v4048 = vpop.f32.mrb[0].mxu0
      %4049 = vmatprep.mubr.f32.mxu0 0.0
      %4050 = vmatmul.mubr.f32.gmra.mrb[0].mxu0 %v3830
      %v4051 = vpop.f32.mrb[0].mxu0
      %v4052 = vadd.f32 %v3743, %v4051
      %v4053 = vpop.f32.mrb[0].mxu0
      %4054 = vmatprep.mubr.f32.mxu0 0.0
      %4055 = vmatmul.mubr.f32.gmra.mrb[0].mxu0 %v3833
      %v4056 = vpop.f32.mrb[0].mxu0
      %v4057 = vadd.f32 %v3743, %v4056
      %v4058 = vpop.f32.mrb[0].mxu0
      %4059 = vmatprep.mubr.f32.mxu0 0.0
      %4060 = vmatmul.mubr.f32.gmra.mrb[0].mxu0 %v3836
      %v4061 = vpop.f32.mrb[0].mxu0
      %v4062 = vadd.f32 %v3743, %v4061
      %v4063 = vpop.f32.mrb[0].mxu0
      %4064 = vmatprep.mubr.f32.mxu0 0.0
      %4065 = vmatmul.mubr.f32.gmra.mrb[0].mxu0 %v3839
      %v4066 = vpop.f32.mrb[0].mxu0
      %v4067 = vadd.f32 %v3743, %v4066
      %v4068 = vpop.f32.mrb[0].mxu0
      %4069 = vdwg.mxu0
      %s4070 = scalar_lea.vmem %s6, 12
      %v4071 = vld [vmem:[%s4070] sm:$0xf]
      %v4073 = vsel %vm382, %v3733, 0
      %v4076 = vsel %vm382, %v3734, 0
      %v4079 = vsel %vm3841, %v4071, 0
      %4081 = vmatprep.subr.mxu0 0.0
      %4082 = vmatpush1.msra.mxu0 %v4079
      %4083 = vmatprep.subr.mxu0 0.0
      %4084 = vmatpush1.msra.mxu0 0.0
      %4085 = vmatprep.subr.mxu0 0.0
      %4086 = vmatpush1.msra.mxu0 0.0
      %4087 = vmatprep.subr.mxu0 0.0
      %4088 = vmatpush1.msra.mxu0 0.0
      %4089 = vmatprep.subr.mxu0 0.0
      %4090 = vmatpush1.msra.mxu0 0.0
      %4091 = vmatprep.subr.mxu0 0.0
      %4092 = vmatpush1.msra.mxu0 0.0
      %4093 = vmatprep.subr.mxu0 0.0
      %4094 = vmatpush1.msra.mxu0 0.0
      %4095 = vmatprep.subr.mxu0 0.0
      %4096 = vmatpush1.msra.mxu0 0.0
      %4097 = vmatprep.subr.mxu0 0.0
      %4098 = vmatpush1.msra.mxu0 0.0
      %4099 = vmatprep.subr.mxu0 0.0
      %4100 = vmatpush1.msra.mxu0 0.0
      %4101 = vmatprep.subr.mxu0 0.0
      %4102 = vmatpush1.msra.mxu0 0.0
      %4103 = vmatprep.subr.mxu0 0.0
      %4104 = vmatpush1.msra.mxu0 0.0
      %4105 = vmatprep.subr.mxu0 0.0
      %4106 = vmatpush1.msra.mxu0 0.0
      %4107 = vmatprep.subr.mxu0 0.0
      %4108 = vmatpush1.msra.mxu0 0.0
      %4109 = vmatprep.subr.mxu0 0.0
      %4110 = vmatpush1.msra.mxu0 0.0
      %4111 = vmatprep.subr.mxu0 0.0
      %4112 = vmatpush1.msra.mxu0 0.0
      %4113 = vmatprep.subr.mxu0 0.0
      %4114 = vmatpush1.msra.mxu0 0.0
      %4115 = vmatprep.subr.mxu0 0.0
      %4116 = vmatpush1.msra.mxu0 0.0
      %4117 = vmatprep.subr.mxu0 0.0
      %4118 = vmatpush1.msra.mxu0 0.0
      %4119 = vmatprep.subr.mxu0 0.0
      %4120 = vmatpush1.msra.mxu0 0.0
      %4121 = vmatprep.subr.mxu0 0.0
      %4122 = vmatpush1.msra.mxu0 0.0
      %4123 = vmatprep.subr.mxu0 0.0
      %4124 = vmatpush1.msra.mxu0 0.0
      %4125 = vmatprep.subr.mxu0 0.0
      %4126 = vmatpush1.msra.mxu0 0.0
      %4127 = vmatprep.subr.mxu0 0.0
      %4128 = vmatpush1.msra.mxu0 0.0
      %4129 = vmatprep.subr.mxu0 0.0
      %4130 = vmatpush1.msra.mxu0 0.0
      %4131 = vmatprep.subr.mxu0 0.0
      %4132 = vmatpush1.msra.mxu0 0.0
      %4133 = vmatprep.subr.mxu0 0.0
      %4134 = vmatpush1.msra.mxu0 0.0
      %4135 = vmatprep.subr.mxu0 0.0
      %4136 = vmatpush1.msra.mxu0 0.0
      %4137 = vmatprep.subr.mxu0 0.0
      %4138 = vmatpush1.msra.mxu0 0.0
      %4139 = vmatprep.subr.mxu0 0.0
      %4140 = vmatpush1.msra.mxu0 0.0
      %4141 = vmatprep.subr.mxu0 0.0
      %4142 = vmatpush1.msra.mxu0 0.0
      %4143 = vmatprep.subr.mxu0 0.0
      %4144 = vmatpush1.msra.mxu0 0.0
      %4145 = vmatprep.mubr.f32.mxu0 0.0
      %4146 = vmatmul.mubr.f32.gmra.mrb[0].mxu0 %v3752
      %v4147 = vpop.f32.mrb[0].mxu0
      %v4148 = vadd.f32 0.0, %v4147
      %v4149 = vpop.f32.mrb[0].mxu0
      %4150 = vmatprep.mubr.f32.mxu0 0.0
      %4151 = vmatmul.mubr.f32.gmra.mrb[0].mxu0 %v3755
      %v4152 = vpop.f32.mrb[0].mxu0
      %v4153 = vadd.f32 0.0, %v4152
      %v4154 = vpop.f32.mrb[0].mxu0
      %4155 = vmatprep.mubr.f32.mxu0 0.0
      %4156 = vmatmul.mubr.f32.gmra.mrb[0].mxu0 %v3758
      %v4157 = vpop.f32.mrb[0].mxu0
      %v4158 = vadd.f32 0.0, %v4157
      %v4159 = vpop.f32.mrb[0].mxu0
      %4160 = vmatprep.mubr.f32.mxu0 0.0
      %4161 = vmatmul.mubr.f32.gmra.mrb[0].mxu0 %v3761
      %v4162 = vpop.f32.mrb[0].mxu0
      %v4163 = vadd.f32 0.0, %v4162
      %v4164 = vpop.f32.mrb[0].mxu0
      %4165 = vmatprep.mubr.f32.mxu0 0.0
      %4166 = vmatmul.mubr.f32.gmra.mrb[0].mxu0 %v3764
      %v4167 = vpop.f32.mrb[0].mxu0
      %v4168 = vadd.f32 0.0, %v4167
      %v4169 = vpop.f32.mrb[0].mxu0
      %4170 = vmatprep.mubr.f32.mxu0 0.0
      %4171 = vmatmul.mubr.f32.gmra.mrb[0].mxu0 %v3767
      %v4172 = vpop.f32.mrb[0].mxu0
      %v4173 = vadd.f32 0.0, %v4172
      %v4174 = vpop.f32.mrb[0].mxu0
      %4175 = vmatprep.mubr.f32.mxu0 0.0
      %4176 = vmatmul.mubr.f32.gmra.mrb[0].mxu0 %v3770
      %v4177 = vpop.f32.mrb[0].mxu0
      %v4178 = vadd.f32 0.0, %v4177
      %v4179 = vpop.f32.mrb[0].mxu0
      %4180 = vmatprep.mubr.f32.mxu0 0.0
      %4181 = vmatmul.mubr.f32.gmra.mrb[0].mxu0 %v3773
      %v4182 = vpop.f32.mrb[0].mxu0
      %v4183 = vadd.f32 0.0, %v4182
      %v4184 = vpop.f32.mrb[0].mxu0
      %4185 = vmatprep.mubr.f32.mxu0 0.0
      %4186 = vmatmul.mubr.f32.gmra.mrb[0].mxu0 %v3776
      %v4187 = vpop.f32.mrb[0].mxu0
      %v4188 = vadd.f32 0.0, %v4187
      %v4189 = vpop.f32.mrb[0].mxu0
      %4190 = vmatprep.mubr.f32.mxu0 0.0
      %4191 = vmatmul.mubr.f32.gmra.mrb[0].mxu0 %v3779
      %v4192 = vpop.f32.mrb[0].mxu0
      %v4193 = vadd.f32 0.0, %v4192
      %v4194 = vpop.f32.mrb[0].mxu0
      %4195 = vmatprep.mubr.f32.mxu0 0.0
      %4196 = vmatmul.mubr.f32.gmra.mrb[0].mxu0 %v3782
      %v4197 = vpop.f32.mrb[0].mxu0
      %v4198 = vadd.f32 0.0, %v4197
      %v4199 = vpop.f32.mrb[0].mxu0
      %4200 = vmatprep.mubr.f32.mxu0 0.0
      %4201 = vmatmul.mubr.f32.gmra.mrb[0].mxu0 %v3785
      %v4202 = vpop.f32.mrb[0].mxu0
      %v4203 = vadd.f32 0.0, %v4202
      %v4204 = vpop.f32.mrb[0].mxu0
      %4205 = vmatprep.mubr.f32.mxu0 0.0
      %4206 = vmatmul.mubr.f32.gmra.mrb[0].mxu0 %v3788
      %v4207 = vpop.f32.mrb[0].mxu0
      %v4208 = vadd.f32 0.0, %v4207
      %v4209 = vpop.f32.mrb[0].mxu0
      %4210 = vmatprep.mubr.f32.mxu0 0.0
      %4211 = vmatmul.mubr.f32.gmra.mrb[0].mxu0 %v3791
      %v4212 = vpop.f32.mrb[0].mxu0
      %v4213 = vadd.f32 0.0, %v4212
      %v4214 = vpop.f32.mrb[0].mxu0
      %4215 = vmatprep.mubr.f32.mxu0 0.0
      %4216 = vmatmul.mubr.f32.gmra.mrb[0].mxu0 %v3794
      %v4217 = vpop.f32.mrb[0].mxu0
      %v4218 = vadd.f32 0.0, %v4217
      %v4219 = vpop.f32.mrb[0].mxu0
      %4220 = vmatprep.mubr.f32.mxu0 0.0
      %4221 = vmatmul.mubr.f32.gmra.mrb[0].mxu0 %v3797
      %v4222 = vpop.f32.mrb[0].mxu0
      %v4223 = vadd.f32 0.0, %v4222
      %v4224 = vpop.f32.mrb[0].mxu0
      %4225 = vmatprep.mubr.f32.mxu0 0.0
      %4226 = vmatmul.mubr.f32.gmra.mrb[0].mxu0 %v3800
      %v4227 = vpop.f32.mrb[0].mxu0
      %v4228 = vadd.f32 0.0, %v4227
      %v4229 = vpop.f32.mrb[0].mxu0
      %4230 = vmatprep.mubr.f32.mxu0 0.0
      %4231 = vmatmul.mubr.f32.gmra.mrb[0].mxu0 %v3803
      %v4232 = vpop.f32.mrb[0].mxu0
      %v4233 = vadd.f32 0.0, %v4232
      %v4234 = vpop.f32.mrb[0].mxu0
      %4235 = vmatprep.mubr.f32.mxu0 0.0
      %4236 = vmatmul.mubr.f32.gmra.mrb[0].mxu0 %v3806
      %v4237 = vpop.f32.mrb[0].mxu0
      %v4238 = vadd.f32 0.0, %v4237
      %v4239 = vpop.f32.mrb[0].mxu0
      %4240 = vmatprep.mubr.f32.mxu0 0.0
      %4241 = vmatmul.mubr.f32.gmra.mrb[0].mxu0 %v3809
      %v4242 = vpop.f32.mrb[0].mxu0
      %v4243 = vadd.f32 0.0, %v4242
      %v4244 = vpop.f32.mrb[0].mxu0
      %4245 = vmatprep.mubr.f32.mxu0 0.0
      %4246 = vmatmul.mubr.f32.gmra.mrb[0].mxu0 %v3812
      %v4247 = vpop.f32.mrb[0].mxu0
      %v4248 = vadd.f32 0.0, %v4247
      %v4249 = vpop.f32.mrb[0].mxu0
      %4250 = vmatprep.mubr.f32.mxu0 0.0
      %4251 = vmatmul.mubr.f32.gmra.mrb[0].mxu0 %v3815
      %v4252 = vpop.f32.mrb[0].mxu0
      %v4253 = vadd.f32 0.0, %v4252
      %v4254 = vpop.f32.mrb[0].mxu0
      %4255 = vmatprep.mubr.f32.mxu0 0.0
      %4256 = vmatmul.mubr.f32.gmra.mrb[0].mxu0 %v3818
      %v4257 = vpop.f32.mrb[0].mxu0
      %v4258 = vadd.f32 0.0, %v4257
      %v4259 = vpop.f32.mrb[0].mxu0
      %4260 = vmatprep.mubr.f32.mxu0 0.0
      %4261 = vmatmul.mubr.f32.gmra.mrb[0].mxu0 %v3821
      %v4262 = vpop.f32.mrb[0].mxu0
      %v4263 = vadd.f32 0.0, %v4262
      %v4264 = vpop.f32.mrb[0].mxu0
      %4265 = vmatprep.mubr.f32.mxu0 0.0
      %4266 = vmatmul.mubr.f32.gmra.mrb[0].mxu0 %v3824
      %v4267 = vpop.f32.mrb[0].mxu0
      %v4268 = vadd.f32 0.0, %v4267
      %v4269 = vpop.f32.mrb[0].mxu0
      %4270 = vmatprep.mubr.f32.mxu0 0.0
      %4271 = vmatmul.mubr.f32.gmra.mrb[0].mxu0 %v3827
      %v4272 = vpop.f32.mrb[0].mxu0
      %v4273 = vadd.f32 0.0, %v4272
      %v4274 = vpop.f32.mrb[0].mxu0
      %4275 = vmatprep.mubr.f32.mxu0 0.0
      %4276 = vmatmul.mubr.f32.gmra.mrb[0].mxu0 %v3830
      %v4277 = vpop.f32.mrb[0].mxu0
      %v4278 = vadd.f32 0.0, %v4277
      %v4279 = vpop.f32.mrb[0].mxu0
      %4280 = vmatprep.mubr.f32.mxu0 0.0
      %4281 = vmatmul.mubr.f32.gmra.mrb[0].mxu0 %v3833
      %v4282 = vpop.f32.mrb[0].mxu0
      %v4283 = vadd.f32 0.0, %v4282
      %v4284 = vpop.f32.mrb[0].mxu0
      %4285 = vmatprep.mubr.f32.mxu0 0.0
      %4286 = vmatmul.mubr.f32.gmra.mrb[0].mxu0 %v3836
      %v4287 = vpop.f32.mrb[0].mxu0
      %v4288 = vadd.f32 0.0, %v4287
      %v4289 = vpop.f32.mrb[0].mxu0
      %4290 = vmatprep.mubr.f32.mxu0 0.0
      %4291 = vmatmul.mubr.f32.gmra.mrb[0].mxu0 %v3839
      %v4292 = vpop.f32.mrb[0].mxu0
      %v4293 = vadd.f32 0.0, %v4292
      %v4294 = vpop.f32.mrb[0].mxu0
      %4295 = vmatprep.mubr.f32.mxu0 0.0
      %4296 = vmatmul.mubr.f32.gmra.mrb[0].mxu0 %v4073
      %v4297 = vpop.f32.mrb[0].mxu0
      %v4298 = vadd.f32 0.0, %v4297
      %v4299 = vpop.f32.mrb[0].mxu0
      %4300 = vmatprep.mubr.f32.mxu0 0.0
      %4301 = vmatmul.mubr.f32.gmra.mrb[0].mxu0 %v4076
      %v4302 = vpop.f32.mrb[0].mxu0
      %v4303 = vadd.f32 0.0, %v4302
      %v4304 = vpop.f32.mrb[0].mxu0
      %4305 = vdwg.mxu0
      %v4306 = vadd.f32 %v3912, %v4148
      %v4307 = vadd.f32 %v3917, %v4153
      %v4308 = vadd.f32 %v3922, %v4158
      %v4309 = vadd.f32 %v3927, %v4163
      %v4310 = vadd.f32 %v3932, %v4168
      %v4311 = vadd.f32 %v3937, %v4173
      %v4312 = vadd.f32 %v3942, %v4178
      %v4313 = vadd.f32 %v3947, %v4183
      %v4314 = vadd.f32 %v3952, %v4188
      %v4315 = vadd.f32 %v3957, %v4193
      %v4316 = vadd.f32 %v3962, %v4198
      %v4317 = vadd.f32 %v3967, %v4203
      %v4318 = vadd.f32 %v3972, %v4208
      %v4319 = vadd.f32 %v3977, %v4213
      %v4320 = vadd.f32 %v3982, %v4218
      %v4321 = vadd.f32 %v3987, %v4223
      %v4322 = vadd.f32 %v3992, %v4228
      %v4323 = vadd.f32 %v3997, %v4233
      %v4324 = vadd.f32 %v4002, %v4238
      %v4325 = vadd.f32 %v4007, %v4243
      %v4326 = vadd.f32 %v4012, %v4248
      %v4327 = vadd.f32 %v4017, %v4253
      %v4328 = vadd.f32 %v4022, %v4258
      %v4329 = vadd.f32 %v4027, %v4263
      %v4330 = vadd.f32 %v4032, %v4268
      %v4331 = vadd.f32 %v4037, %v4273
      %v4332 = vadd.f32 %v4042, %v4278
      %v4333 = vadd.f32 %v4047, %v4283
      %v4334 = vadd.f32 %v4052, %v4288
      %v4335 = vadd.f32 %v4057, %v4293
      %v4336 = vadd.f32 %v4062, %v4298
      %v4337 = vadd.f32 %v4067, %v4303
      %s4338 = scalar_lea.vmem %s6, 24
      %v4339 = vld [vmem:[%s4338] sm:$0xf]
      %v4341 = vsel %vm382, %v3735, 0
      %v4344 = vsel %vm382, %v3736, 0
      %v4347 = vsel %vm3841, %v4339, 0
      %4349 = vmatprep.subr.mxu0 0.0
      %4350 = vmatpush1.msra.mxu0 %v4347
      %4351 = vmatprep.subr.mxu0 0.0
      %4352 = vmatpush1.msra.mxu0 0.0
      %4353 = vmatprep.subr.mxu0 0.0
      %4354 = vmatpush1.msra.mxu0 0.0
      %4355 = vmatprep.subr.mxu0 0.0
      %4356 = vmatpush1.msra.mxu0 0.0
      %4357 = vmatprep.subr.mxu0 0.0
      %4358 = vmatpush1.msra.mxu0 0.0
      %4359 = vmatprep.subr.mxu0 0.0
      %4360 = vmatpush1.msra.mxu0 0.0
      %4361 = vmatprep.subr.mxu0 0.0
      %4362 = vmatpush1.msra.mxu0 0.0
      %4363 = vmatprep.subr.mxu0 0.0
      %4364 = vmatpush1.msra.mxu0 0.0
      %4365 = vmatprep.subr.mxu0 0.0
      %4366 = vmatpush1.msra.mxu0 0.0
      %4367 = vmatprep.subr.mxu0 0.0
      %4368 = vmatpush1.msra.mxu0 0.0
      %4369 = vmatprep.subr.mxu0 0.0
      %4370 = vmatpush1.msra.mxu0 0.0
      %4371 = vmatprep.subr.mxu0 0.0
      %4372 = vmatpush1.msra.mxu0 0.0
      %4373 = vmatprep.subr.mxu0 0.0
      %4374 = vmatpush1.msra.mxu0 0.0
      %4375 = vmatprep.subr.mxu0 0.0
      %4376 = vmatpush1.msra.mxu0 0.0
      %4377 = vmatprep.subr.mxu0 0.0
      %4378 = vmatpush1.msra.mxu0 0.0
      %4379 = vmatprep.subr.mxu0 0.0
      %4380 = vmatpush1.msra.mxu0 0.0
      %4381 = vmatprep.subr.mxu0 0.0
      %4382 = vmatpush1.msra.mxu0 0.0
      %4383 = vmatprep.subr.mxu0 0.0
      %4384 = vmatpush1.msra.mxu0 0.0
      %4385 = vmatprep.subr.mxu0 0.0
      %4386 = vmatpush1.msra.mxu0 0.0
      %4387 = vmatprep.subr.mxu0 0.0
      %4388 = vmatpush1.msra.mxu0 0.0
      %4389 = vmatprep.subr.mxu0 0.0
      %4390 = vmatpush1.msra.mxu0 0.0
      %4391 = vmatprep.subr.mxu0 0.0
      %4392 = vmatpush1.msra.mxu0 0.0
      %4393 = vmatprep.subr.mxu0 0.0
      %4394 = vmatpush1.msra.mxu0 0.0
      %4395 = vmatprep.subr.mxu0 0.0
      %4396 = vmatpush1.msra.mxu0 0.0
      %4397 = vmatprep.subr.mxu0 0.0
      %4398 = vmatpush1.msra.mxu0 0.0
      %4399 = vmatprep.subr.mxu0 0.0
      %4400 = vmatpush1.msra.mxu0 0.0
      %4401 = vmatprep.subr.mxu0 0.0
      %4402 = vmatpush1.msra.mxu0 0.0
      %4403 = vmatprep.subr.mxu0 0.0
      %4404 = vmatpush1.msra.mxu0 0.0
      %4405 = vmatprep.subr.mxu0 0.0
      %4406 = vmatpush1.msra.mxu0 0.0
      %4407 = vmatprep.subr.mxu0 0.0
      %4408 = vmatpush1.msra.mxu0 0.0
      %4409 = vmatprep.subr.mxu0 0.0
      %4410 = vmatpush1.msra.mxu0 0.0
      %4411 = vmatprep.subr.mxu0 0.0
      %4412 = vmatpush1.msra.mxu0 0.0
      %4413 = vmatprep.mubr.f32.mxu0 0.0
      %4414 = vmatmul.mubr.f32.gmra.mrb[0].mxu0 %v3758
      %v4415 = vpop.f32.mrb[0].mxu0
      %v4416 = vadd.f32 0.0, %v4415
      %v4417 = vpop.f32.mrb[0].mxu0
      %4418 = vmatprep.mubr.f32.mxu0 0.0
      %4419 = vmatmul.mubr.f32.gmra.mrb[0].mxu0 %v3761
      %v4420 = vpop.f32.mrb[0].mxu0
      %v4421 = vadd.f32 0.0, %v4420
      %v4422 = vpop.f32.mrb[0].mxu0
      %4423 = vmatprep.mubr.f32.mxu0 0.0
      %4424 = vmatmul.mubr.f32.gmra.mrb[0].mxu0 %v3764
      %v4425 = vpop.f32.mrb[0].mxu0
      %v4426 = vadd.f32 0.0, %v4425
      %v4427 = vpop.f32.mrb[0].mxu0
      %4428 = vmatprep.mubr.f32.mxu0 0.0
      %4429 = vmatmul.mubr.f32.gmra.mrb[0].mxu0 %v3767
      %v4430 = vpop.f32.mrb[0].mxu0
      %v4431 = vadd.f32 0.0, %v4430
      %v4432 = vpop.f32.mrb[0].mxu0
      %4433 = vmatprep.mubr.f32.mxu0 0.0
      %4434 = vmatmul.mubr.f32.gmra.mrb[0].mxu0 %v3770
      %v4435 = vpop.f32.mrb[0].mxu0
      %v4436 = vadd.f32 0.0, %v4435
      %v4437 = vpop.f32.mrb[0].mxu0
      %4438 = vmatprep.mubr.f32.mxu0 0.0
      %4439 = vmatmul.mubr.f32.gmra.mrb[0].mxu0 %v3773
      %v4440 = vpop.f32.mrb[0].mxu0
      %v4441 = vadd.f32 0.0, %v4440
      %v4442 = vpop.f32.mrb[0].mxu0
      %4443 = vmatprep.mubr.f32.mxu0 0.0
      %4444 = vmatmul.mubr.f32.gmra.mrb[0].mxu0 %v3776
      %v4445 = vpop.f32.mrb[0].mxu0
      %v4446 = vadd.f32 0.0, %v4445
      %v4447 = vpop.f32.mrb[0].mxu0
      %4448 = vmatprep.mubr.f32.mxu0 0.0
      %4449 = vmatmul.mubr.f32.gmra.mrb[0].mxu0 %v3779
      %v4450 = vpop.f32.mrb[0].mxu0
      %v4451 = vadd.f32 0.0, %v4450
      %v4452 = vpop.f32.mrb[0].mxu0
      %4453 = vmatprep.mubr.f32.mxu0 0.0
      %4454 = vmatmul.mubr.f32.gmra.mrb[0].mxu0 %v3782
      %v4455 = vpop.f32.mrb[0].mxu0
      %v4456 = vadd.f32 0.0, %v4455
      %v4457 = vpop.f32.mrb[0].mxu0
      %4458 = vmatprep.mubr.f32.mxu0 0.0
      %4459 = vmatmul.mubr.f32.gmra.mrb[0].mxu0 %v3785
      %v4460 = vpop.f32.mrb[0].mxu0
      %v4461 = vadd.f32 0.0, %v4460
      %v4462 = vpop.f32.mrb[0].mxu0
      %4463 = vmatprep.mubr.f32.mxu0 0.0
      %4464 = vmatmul.mubr.f32.gmra.mrb[0].mxu0 %v3788
      %v4465 = vpop.f32.mrb[0].mxu0
      %v4466 = vadd.f32 0.0, %v4465
      %v4467 = vpop.f32.mrb[0].mxu0
      %4468 = vmatprep.mubr.f32.mxu0 0.0
      %4469 = vmatmul.mubr.f32.gmra.mrb[0].mxu0 %v3791
      %v4470 = vpop.f32.mrb[0].mxu0
      %v4471 = vadd.f32 0.0, %v4470
      %v4472 = vpop.f32.mrb[0].mxu0
      %4473 = vmatprep.mubr.f32.mxu0 0.0
      %4474 = vmatmul.mubr.f32.gmra.mrb[0].mxu0 %v3794
      %v4475 = vpop.f32.mrb[0].mxu0
      %v4476 = vadd.f32 0.0, %v4475
      %v4477 = vpop.f32.mrb[0].mxu0
      %4478 = vmatprep.mubr.f32.mxu0 0.0
      %4479 = vmatmul.mubr.f32.gmra.mrb[0].mxu0 %v3797
      %v4480 = vpop.f32.mrb[0].mxu0
      %v4481 = vadd.f32 0.0, %v4480
      %v4482 = vpop.f32.mrb[0].mxu0
      %4483 = vmatprep.mubr.f32.mxu0 0.0
      %4484 = vmatmul.mubr.f32.gmra.mrb[0].mxu0 %v3800
      %v4485 = vpop.f32.mrb[0].mxu0
      %v4486 = vadd.f32 0.0, %v4485
      %v4487 = vpop.f32.mrb[0].mxu0
      %4488 = vmatprep.mubr.f32.mxu0 0.0
      %4489 = vmatmul.mubr.f32.gmra.mrb[0].mxu0 %v3803
      %v4490 = vpop.f32.mrb[0].mxu0
      %v4491 = vadd.f32 0.0, %v4490
      %v4492 = vpop.f32.mrb[0].mxu0
      %4493 = vmatprep.mubr.f32.mxu0 0.0
      %4494 = vmatmul.mubr.f32.gmra.mrb[0].mxu0 %v3806
      %v4495 = vpop.f32.mrb[0].mxu0
      %v4496 = vadd.f32 0.0, %v4495
      %v4497 = vpop.f32.mrb[0].mxu0
      %4498 = vmatprep.mubr.f32.mxu0 0.0
      %4499 = vmatmul.mubr.f32.gmra.mrb[0].mxu0 %v3809
      %v4500 = vpop.f32.mrb[0].mxu0
      %v4501 = vadd.f32 0.0, %v4500
      %v4502 = vpop.f32.mrb[0].mxu0
      %4503 = vmatprep.mubr.f32.mxu0 0.0
      %4504 = vmatmul.mubr.f32.gmra.mrb[0].mxu0 %v3812
      %v4505 = vpop.f32.mrb[0].mxu0
      %v4506 = vadd.f32 0.0, %v4505
      %v4507 = vpop.f32.mrb[0].mxu0
      %4508 = vmatprep.mubr.f32.mxu0 0.0
      %4509 = vmatmul.mubr.f32.gmra.mrb[0].mxu0 %v3815
      %v4510 = vpop.f32.mrb[0].mxu0
      %v4511 = vadd.f32 0.0, %v4510
      %v4512 = vpop.f32.mrb[0].mxu0
      %4513 = vmatprep.mubr.f32.mxu0 0.0
      %4514 = vmatmul.mubr.f32.gmra.mrb[0].mxu0 %v3818
      %v4515 = vpop.f32.mrb[0].mxu0
      %v4516 = vadd.f32 0.0, %v4515
      %v4517 = vpop.f32.mrb[0].mxu0
      %4518 = vmatprep.mubr.f32.mxu0 0.0
      %4519 = vmatmul.mubr.f32.gmra.mrb[0].mxu0 %v3821
      %v4520 = vpop.f32.mrb[0].mxu0
      %v4521 = vadd.f32 0.0, %v4520
      %v4522 = vpop.f32.mrb[0].mxu0
      %4523 = vmatprep.mubr.f32.mxu0 0.0
      %4524 = vmatmul.mubr.f32.gmra.mrb[0].mxu0 %v3824
      %v4525 = vpop.f32.mrb[0].mxu0
      %v4526 = vadd.f32 0.0, %v4525
      %v4527 = vpop.f32.mrb[0].mxu0
      %4528 = vmatprep.mubr.f32.mxu0 0.0
      %4529 = vmatmul.mubr.f32.gmra.mrb[0].mxu0 %v3827
      %v4530 = vpop.f32.mrb[0].mxu0
      %v4531 = vadd.f32 0.0, %v4530
      %v4532 = vpop.f32.mrb[0].mxu0
      %4533 = vmatprep.mubr.f32.mxu0 0.0
      %4534 = vmatmul.mubr.f32.gmra.mrb[0].mxu0 %v3830
      %v4535 = vpop.f32.mrb[0].mxu0
      %v4536 = vadd.f32 0.0, %v4535
      %v4537 = vpop.f32.mrb[0].mxu0
      %4538 = vmatprep.mubr.f32.mxu0 0.0
      %4539 = vmatmul.mubr.f32.gmra.mrb[0].mxu0 %v3833
      %v4540 = vpop.f32.mrb[0].mxu0
      %v4541 = vadd.f32 0.0, %v4540
      %v4542 = vpop.f32.mrb[0].mxu0
      %4543 = vmatprep.mubr.f32.mxu0 0.0
      %4544 = vmatmul.mubr.f32.gmra.mrb[0].mxu0 %v3836
      %v4545 = vpop.f32.mrb[0].mxu0
      %v4546 = vadd.f32 0.0, %v4545
      %v4547 = vpop.f32.mrb[0].mxu0
      %4548 = vmatprep.mubr.f32.mxu0 0.0
      %4549 = vmatmul.mubr.f32.gmra.mrb[0].mxu0 %v3839
      %v4550 = vpop.f32.mrb[0].mxu0
      %v4551 = vadd.f32 0.0, %v4550
      %v4552 = vpop.f32.mrb[0].mxu0
      %4553 = vmatprep.mubr.f32.mxu0 0.0
      %4554 = vmatmul.mubr.f32.gmra.mrb[0].mxu0 %v4073
      %v4555 = vpop.f32.mrb[0].mxu0
      %v4556 = vadd.f32 0.0, %v4555
      %v4557 = vpop.f32.mrb[0].mxu0
      %4558 = vmatprep.mubr.f32.mxu0 0.0
      %4559 = vmatmul.mubr.f32.gmra.mrb[0].mxu0 %v4076
      %v4560 = vpop.f32.mrb[0].mxu0
      %v4561 = vadd.f32 0.0, %v4560
      %v4562 = vpop.f32.mrb[0].mxu0
      %4563 = vmatprep.mubr.f32.mxu0 0.0
      %4564 = vmatmul.mubr.f32.gmra.mrb[0].mxu0 %v4341
      %v4565 = vpop.f32.mrb[0].mxu0
      %v4566 = vadd.f32 0.0, %v4565
      %v4567 = vpop.f32.mrb[0].mxu0
      %4568 = vmatprep.mubr.f32.mxu0 0.0
      %4569 = vmatmul.mubr.f32.gmra.mrb[0].mxu0 %v4344
      %v4570 = vpop.f32.mrb[0].mxu0
      %v4571 = vadd.f32 0.0, %v4570
      %v4572 = vpop.f32.mrb[0].mxu0
      %4573 = vdwg.mxu0
      %v4574 = vadd.f32 %v4306, %v4416
      %v4575 = vadd.f32 %v4307, %v4421
      %v4576 = vadd.f32 %v4308, %v4426
      %v4577 = vadd.f32 %v4309, %v4431
      %v4578 = vadd.f32 %v4310, %v4436
      %v4579 = vadd.f32 %v4311, %v4441
      %v4580 = vadd.f32 %v4312, %v4446
      %v4581 = vadd.f32 %v4313, %v4451
      %v4582 = vadd.f32 %v4314, %v4456
      %v4583 = vadd.f32 %v4315, %v4461
      %v4584 = vadd.f32 %v4316, %v4466
      %v4585 = vadd.f32 %v4317, %v4471
      %v4586 = vadd.f32 %v4318, %v4476
      %v4587 = vadd.f32 %v4319, %v4481
      %v4588 = vadd.f32 %v4320, %v4486
      %v4589 = vadd.f32 %v4321, %v4491
      %v4590 = vadd.f32 %v4322, %v4496
      %v4591 = vadd.f32 %v4323, %v4501
      %v4592 = vadd.f32 %v4324, %v4506
      %v4593 = vadd.f32 %v4325, %v4511
      %v4594 = vadd.f32 %v4326, %v4516
      %v4595 = vadd.f32 %v4327, %v4521
      %v4596 = vadd.f32 %v4328, %v4526
      %v4597 = vadd.f32 %v4329, %v4531
      %v4598 = vadd.f32 %v4330, %v4536
      %v4599 = vadd.f32 %v4331, %v4541
      %v4600 = vadd.f32 %v4332, %v4546
      %v4601 = vadd.f32 %v4333, %v4551
      %v4602 = vadd.f32 %v4334, %v4556
      %v4603 = vadd.f32 %v4335, %v4561
      %v4604 = vadd.f32 %v4336, %v4566
      %v4605 = vadd.f32 %v4337, %v4571
      %v4606 = vld [vmem:[#allocation3 + $0x1] sm:$0xff]
      %v4607 = vld [vmem:[#allocation3 + $0x9] sm:$0xff]
      %v4608 = vld [vmem:[#allocation3 + $0x19] sm:$0xff]
      %v4609 = vld [vmem:[#allocation3 + $0x21] sm:$0xff]
      %v4610 = vld [vmem:[#allocation3 + $0x31] sm:$0xff]
      %v4611 = vld [vmem:[#allocation3 + $0x39] sm:$0xff]
      %v4612 = vld [vmem:[#allocation3 + $0x49] sm:$0xff]
      %v4613 = vld [vmem:[#allocation3 + $0x51] sm:$0xff]
      %v4614 = vld [vmem:[#allocation3 + $0x61] sm:$0xff]
      %v4615 = vld [vmem:[#allocation3 + $0x69] sm:$0xff]
      %v4616 = vld [vmem:[#allocation3 + $0x79] sm:$0xff]
      %v4617 = vld [vmem:[#allocation3 + $0x81] sm:$0xff]
      %v4618 = vld [vmem:[#allocation3 + $0x91] sm:$0xff]
      %v4619 = vld [vmem:[#allocation3 + $0x99] sm:$0xff]
      %v4620 = vld [vmem:[#allocation3 + $0xa9] sm:$0xff]
      %v4621 = vld [vmem:[#allocation3 + $0xb1] sm:$0xff]
      %v4622 = vld [vmem:[#allocation3 + $0xc1] sm:$0xff]
      %v4623 = vld [vmem:[#allocation3 + $0xc9] sm:$0xff]
      %v4624 = vld [vmem:[#allocation3 + $0xd9] sm:$0xff]
      %v4625 = vld [vmem:[#allocation3 + $0xe1] sm:$0xff]
      %v4626 = vld [vmem:[#allocation3 + $0xf1] sm:$0xff]
      %v4627 = vld [vmem:[#allocation3 + $0xf9] sm:$0xff]
      %v4628 = vld [vmem:[#allocation3 + $0x109] sm:$0xff]
      %v4629 = vld [vmem:[#allocation3 + $0x111] sm:$0xff]
      %v4630 = vld [vmem:[#allocation3 + $0x121] sm:$0xff]
      %v4631 = vld [vmem:[#allocation3 + $0x129] sm:$0xff]
      %v4632 = vld [vmem:[#allocation3 + $0x139] sm:$0xff]
      %v4633 = vld [vmem:[#allocation3 + $0x141] sm:$0xff]
      %v4634 = vld [vmem:[#allocation3 + $0x151] sm:$0xff]
      %v4635 = vld [vmem:[#allocation3 + $0x159] sm:$0xff]
      %v4636 = vld [vmem:[#allocation3 + $0x169] sm:$0xff]
      %v4637 = vld [vmem:[#allocation3 + $0x171] sm:$0xff]
      %v4638 = vld [vmem:[#allocation3 + $0x181] sm:$0xff]
      %v4639 = vld [vmem:[#allocation3 + $0x189] sm:$0xff]
      %v4640 = vld [vmem:[#allocation3 + $0x199] sm:$0xff]
      %v4641 = vld [vmem:[#allocation3 + $0x1a1] sm:$0xff]
      %s4642 = scalar_lea.vmem %s6, 4
      %v4643 = vld [vmem:[%s4642] sm:$0xf]
      %v4645 = vsel %vm382, %v4606, 0
      %v4648 = vsel %vm382, %v4607, 0
      %v4651 = vsel %vm382, %v4608, 0
      %v4654 = vsel %vm382, %v4609, 0
      %v4657 = vsel %vm382, %v4610, 0
      %v4660 = vsel %vm382, %v4611, 0
      %v4663 = vsel %vm382, %v4612, 0
      %v4666 = vsel %vm382, %v4613, 0
      %v4669 = vsel %vm382, %v4614, 0
      %v4672 = vsel %vm382, %v4615, 0
      %v4675 = vsel %vm382, %v4616, 0
      %v4678 = vsel %vm382, %v4617, 0
      %v4681 = vsel %vm382, %v4618, 0
      %v4684 = vsel %vm382, %v4619, 0
      %v4687 = vsel %vm382, %v4620, 0
      %v4690 = vsel %vm382, %v4621, 0
      %v4693 = vsel %vm382, %v4622, 0
      %v4696 = vsel %vm382, %v4623, 0
      %v4699 = vsel %vm382, %v4624, 0
      %v4702 = vsel %vm382, %v4625, 0
      %v4705 = vsel %vm382, %v4626, 0
      %v4708 = vsel %vm382, %v4627, 0
      %v4711 = vsel %vm382, %v4628, 0
      %v4714 = vsel %vm382, %v4629, 0
      %v4717 = vsel %vm382, %v4630, 0
      %v4720 = vsel %vm382, %v4631, 0
      %v4723 = vsel %vm382, %v4632, 0
      %v4726 = vsel %vm382, %v4633, 0
      %v4729 = vsel %vm382, %v4634, 0
      %v4732 = vsel %vm382, %v4635, 0
      %v4735 = vsel %vm382, %v4636, 0
      %v4738 = vsel %vm382, %v4637, 0
      %v4741 = vsel %vm3841, %v4643, 0
      %4743 = vmatprep.subr.mxu0 0.0
      %4744 = vmatpush1.msra.mxu0 %v4741
      %4745 = vmatprep.subr.mxu0 0.0
      %4746 = vmatpush1.msra.mxu0 0.0
      %4747 = vmatprep.subr.mxu0 0.0
      %4748 = vmatpush1.msra.mxu0 0.0
      %4749 = vmatprep.subr.mxu0 0.0
      %4750 = vmatpush1.msra.mxu0 0.0
      %4751 = vmatprep.subr.mxu0 0.0
      %4752 = vmatpush1.msra.mxu0 0.0
      %4753 = vmatprep.subr.mxu0 0.0
      %4754 = vmatpush1.msra.mxu0 0.0
      %4755 = vmatprep.subr.mxu0 0.0
      %4756 = vmatpush1.msra.mxu0 0.0
      %4757 = vmatprep.subr.mxu0 0.0
      %4758 = vmatpush1.msra.mxu0 0.0
      %4759 = vmatprep.subr.mxu0 0.0
      %4760 = vmatpush1.msra.mxu0 0.0
      %4761 = vmatprep.subr.mxu0 0.0
      %4762 = vmatpush1.msra.mxu0 0.0
      %4763 = vmatprep.subr.mxu0 0.0
      %4764 = vmatpush1.msra.mxu0 0.0
      %4765 = vmatprep.subr.mxu0 0.0
      %4766 = vmatpush1.msra.mxu0 0.0
      %4767 = vmatprep.subr.mxu0 0.0
      %4768 = vmatpush1.msra.mxu0 0.0
      %4769 = vmatprep.subr.mxu0 0.0
      %4770 = vmatpush1.msra.mxu0 0.0
      %4771 = vmatprep.subr.mxu0 0.0
      %4772 = vmatpush1.msra.mxu0 0.0
      %4773 = vmatprep.subr.mxu0 0.0
      %4774 = vmatpush1.msra.mxu0 0.0
      %4775 = vmatprep.subr.mxu0 0.0
      %4776 = vmatpush1.msra.mxu0 0.0
      %4777 = vmatprep.subr.mxu0 0.0
      %4778 = vmatpush1.msra.mxu0 0.0
      %4779 = vmatprep.subr.mxu0 0.0
      %4780 = vmatpush1.msra.mxu0 0.0
      %4781 = vmatprep.subr.mxu0 0.0
      %4782 = vmatpush1.msra.mxu0 0.0
      %4783 = vmatprep.subr.mxu0 0.0
      %4784 = vmatpush1.msra.mxu0 0.0
      %4785 = vmatprep.subr.mxu0 0.0
      %4786 = vmatpush1.msra.mxu0 0.0
      %4787 = vmatprep.subr.mxu0 0.0
      %4788 = vmatpush1.msra.mxu0 0.0
      %4789 = vmatprep.subr.mxu0 0.0
      %4790 = vmatpush1.msra.mxu0 0.0
      %4791 = vmatprep.subr.mxu0 0.0
      %4792 = vmatpush1.msra.mxu0 0.0
      %4793 = vmatprep.subr.mxu0 0.0
      %4794 = vmatpush1.msra.mxu0 0.0
      %4795 = vmatprep.subr.mxu0 0.0
      %4796 = vmatpush1.msra.mxu0 0.0
      %4797 = vmatprep.subr.mxu0 0.0
      %4798 = vmatpush1.msra.mxu0 0.0
      %4799 = vmatprep.subr.mxu0 0.0
      %4800 = vmatpush1.msra.mxu0 0.0
      %4801 = vmatprep.subr.mxu0 0.0
      %4802 = vmatpush1.msra.mxu0 0.0
      %4803 = vmatprep.subr.mxu0 0.0
      %4804 = vmatpush1.msra.mxu0 0.0
      %4805 = vmatprep.subr.mxu0 0.0
      %4806 = vmatpush1.msra.mxu0 0.0
      %4807 = vmatprep.mubr.f32.mxu0 0.0
      %4808 = vmatmul.mubr.f32.gmra.mrb[0].mxu0 %v4645
      %v4809 = vpop.f32.mrb[0].mxu0
      %v4810 = vadd.f32 0.0, %v4809
      %v4811 = vpop.f32.mrb[0].mxu0
      %4812 = vmatprep.mubr.f32.mxu0 0.0
      %4813 = vmatmul.mubr.f32.gmra.mrb[0].mxu0 %v4648
      %v4814 = vpop.f32.mrb[0].mxu0
      %v4815 = vadd.f32 0.0, %v4814
      %v4816 = vpop.f32.mrb[0].mxu0
      %4817 = vmatprep.mubr.f32.mxu0 0.0
      %4818 = vmatmul.mubr.f32.gmra.mrb[0].mxu0 %v4651
      %v4819 = vpop.f32.mrb[0].mxu0
      %v4820 = vadd.f32 0.0, %v4819
      %v4821 = vpop.f32.mrb[0].mxu0
      %4822 = vmatprep.mubr.f32.mxu0 0.0
      %4823 = vmatmul.mubr.f32.gmra.mrb[0].mxu0 %v4654
      %v4824 = vpop.f32.mrb[0].mxu0
      %v4825 = vadd.f32 0.0, %v4824
      %v4826 = vpop.f32.mrb[0].mxu0
      %4827 = vmatprep.mubr.f32.mxu0 0.0
      %4828 = vmatmul.mubr.f32.gmra.mrb[0].mxu0 %v4657
      %v4829 = vpop.f32.mrb[0].mxu0
      %v4830 = vadd.f32 0.0, %v4829
      %v4831 = vpop.f32.mrb[0].mxu0
      %4832 = vmatprep.mubr.f32.mxu0 0.0
      %4833 = vmatmul.mubr.f32.gmra.mrb[0].mxu0 %v4660
      %v4834 = vpop.f32.mrb[0].mxu0
      %v4835 = vadd.f32 0.0, %v4834
      %v4836 = vpop.f32.mrb[0].mxu0
      %4837 = vmatprep.mubr.f32.mxu0 0.0
      %4838 = vmatmul.mubr.f32.gmra.mrb[0].mxu0 %v4663
      %v4839 = vpop.f32.mrb[0].mxu0
      %v4840 = vadd.f32 0.0, %v4839
      %v4841 = vpop.f32.mrb[0].mxu0
      %4842 = vmatprep.mubr.f32.mxu0 0.0
      %4843 = vmatmul.mubr.f32.gmra.mrb[0].mxu0 %v4666
      %v4844 = vpop.f32.mrb[0].mxu0
      %v4845 = vadd.f32 0.0, %v4844
      %v4846 = vpop.f32.mrb[0].mxu0
      %4847 = vmatprep.mubr.f32.mxu0 0.0
      %4848 = vmatmul.mubr.f32.gmra.mrb[0].mxu0 %v4669
      %v4849 = vpop.f32.mrb[0].mxu0
      %v4850 = vadd.f32 0.0, %v4849
      %v4851 = vpop.f32.mrb[0].mxu0
      %4852 = vmatprep.mubr.f32.mxu0 0.0
      %4853 = vmatmul.mubr.f32.gmra.mrb[0].mxu0 %v4672
      %v4854 = vpop.f32.mrb[0].mxu0
      %v4855 = vadd.f32 0.0, %v4854
      %v4856 = vpop.f32.mrb[0].mxu0
      %4857 = vmatprep.mubr.f32.mxu0 0.0
      %4858 = vmatmul.mubr.f32.gmra.mrb[0].mxu0 %v4675
      %v4859 = vpop.f32.mrb[0].mxu0
      %v4860 = vadd.f32 0.0, %v4859
      %v4861 = vpop.f32.mrb[0].mxu0
      %4862 = vmatprep.mubr.f32.mxu0 0.0
      %4863 = vmatmul.mubr.f32.gmra.mrb[0].mxu0 %v4678
      %v4864 = vpop.f32.mrb[0].mxu0
      %v4865 = vadd.f32 0.0, %v4864
      %v4866 = vpop.f32.mrb[0].mxu0
      %4867 = vmatprep.mubr.f32.mxu0 0.0
      %4868 = vmatmul.mubr.f32.gmra.mrb[0].mxu0 %v4681
      %v4869 = vpop.f32.mrb[0].mxu0
      %v4870 = vadd.f32 0.0, %v4869
      %v4871 = vpop.f32.mrb[0].mxu0
      %4872 = vmatprep.mubr.f32.mxu0 0.0
      %4873 = vmatmul.mubr.f32.gmra.mrb[0].mxu0 %v4684
      %v4874 = vpop.f32.mrb[0].mxu0
      %v4875 = vadd.f32 0.0, %v4874
      %v4876 = vpop.f32.mrb[0].mxu0
      %4877 = vmatprep.mubr.f32.mxu0 0.0
      %4878 = vmatmul.mubr.f32.gmra.mrb[0].mxu0 %v4687
      %v4879 = vpop.f32.mrb[0].mxu0
      %v4880 = vadd.f32 0.0, %v4879
      %v4881 = vpop.f32.mrb[0].mxu0
      %4882 = vmatprep.mubr.f32.mxu0 0.0
      %4883 = vmatmul.mubr.f32.gmra.mrb[0].mxu0 %v4690
      %v4884 = vpop.f32.mrb[0].mxu0
      %v4885 = vadd.f32 0.0, %v4884
      %v4886 = vpop.f32.mrb[0].mxu0
      %4887 = vmatprep.mubr.f32.mxu0 0.0
      %4888 = vmatmul.mubr.f32.gmra.mrb[0].mxu0 %v4693
      %v4889 = vpop.f32.mrb[0].mxu0
      %v4890 = vadd.f32 0.0, %v4889
      %v4891 = vpop.f32.mrb[0].mxu0
      %4892 = vmatprep.mubr.f32.mxu0 0.0
      %4893 = vmatmul.mubr.f32.gmra.mrb[0].mxu0 %v4696
      %v4894 = vpop.f32.mrb[0].mxu0
      %v4895 = vadd.f32 0.0, %v4894
      %v4896 = vpop.f32.mrb[0].mxu0
      %4897 = vmatprep.mubr.f32.mxu0 0.0
      %4898 = vmatmul.mubr.f32.gmra.mrb[0].mxu0 %v4699
      %v4899 = vpop.f32.mrb[0].mxu0
      %v4900 = vadd.f32 0.0, %v4899
      %v4901 = vpop.f32.mrb[0].mxu0
      %4902 = vmatprep.mubr.f32.mxu0 0.0
      %4903 = vmatmul.mubr.f32.gmra.mrb[0].mxu0 %v4702
      %v4904 = vpop.f32.mrb[0].mxu0
      %v4905 = vadd.f32 0.0, %v4904
      %v4906 = vpop.f32.mrb[0].mxu0
      %4907 = vmatprep.mubr.f32.mxu0 0.0
      %4908 = vmatmul.mubr.f32.gmra.mrb[0].mxu0 %v4705
      %v4909 = vpop.f32.mrb[0].mxu0
      %v4910 = vadd.f32 0.0, %v4909
      %v4911 = vpop.f32.mrb[0].mxu0
      %4912 = vmatprep.mubr.f32.mxu0 0.0
      %4913 = vmatmul.mubr.f32.gmra.mrb[0].mxu0 %v4708
      %v4914 = vpop.f32.mrb[0].mxu0
      %v4915 = vadd.f32 0.0, %v4914
      %v4916 = vpop.f32.mrb[0].mxu0
      %4917 = vmatprep.mubr.f32.mxu0 0.0
      %4918 = vmatmul.mubr.f32.gmra.mrb[0].mxu0 %v4711
      %v4919 = vpop.f32.mrb[0].mxu0
      %v4920 = vadd.f32 0.0, %v4919
      %v4921 = vpop.f32.mrb[0].mxu0
      %4922 = vmatprep.mubr.f32.mxu0 0.0
      %4923 = vmatmul.mubr.f32.gmra.mrb[0].mxu0 %v4714
      %v4924 = vpop.f32.mrb[0].mxu0
      %v4925 = vadd.f32 0.0, %v4924
      %v4926 = vpop.f32.mrb[0].mxu0
      %4927 = vmatprep.mubr.f32.mxu0 0.0
      %4928 = vmatmul.mubr.f32.gmra.mrb[0].mxu0 %v4717
      %v4929 = vpop.f32.mrb[0].mxu0
      %v4930 = vadd.f32 0.0, %v4929
      %v4931 = vpop.f32.mrb[0].mxu0
      %4932 = vmatprep.mubr.f32.mxu0 0.0
      %4933 = vmatmul.mubr.f32.gmra.mrb[0].mxu0 %v4720
      %v4934 = vpop.f32.mrb[0].mxu0
      %v4935 = vadd.f32 0.0, %v4934
      %v4936 = vpop.f32.mrb[0].mxu0
      %4937 = vmatprep.mubr.f32.mxu0 0.0
      %4938 = vmatmul.mubr.f32.gmra.mrb[0].mxu0 %v4723
      %v4939 = vpop.f32.mrb[0].mxu0
      %v4940 = vadd.f32 0.0, %v4939
      %v4941 = vpop.f32.mrb[0].mxu0
      %4942 = vmatprep.mubr.f32.mxu0 0.0
      %4943 = vmatmul.mubr.f32.gmra.mrb[0].mxu0 %v4726
      %v4944 = vpop.f32.mrb[0].mxu0
      %v4945 = vadd.f32 0.0, %v4944
      %v4946 = vpop.f32.mrb[0].mxu0
      %4947 = vmatprep.mubr.f32.mxu0 0.0
      %4948 = vmatmul.mubr.f32.gmra.mrb[0].mxu0 %v4729
      %v4949 = vpop.f32.mrb[0].mxu0
      %v4950 = vadd.f32 0.0, %v4949
      %v4951 = vpop.f32.mrb[0].mxu0
      %4952 = vmatprep.mubr.f32.mxu0 0.0
      %4953 = vmatmul.mubr.f32.gmra.mrb[0].mxu0 %v4732
      %v4954 = vpop.f32.mrb[0].mxu0
      %v4955 = vadd.f32 0.0, %v4954
      %v4956 = vpop.f32.mrb[0].mxu0
      %4957 = vmatprep.mubr.f32.mxu0 0.0
      %4958 = vmatmul.mubr.f32.gmra.mrb[0].mxu0 %v4735
      %v4959 = vpop.f32.mrb[0].mxu0
      %v4960 = vadd.f32 0.0, %v4959
      %v4961 = vpop.f32.mrb[0].mxu0
      %4962 = vmatprep.mubr.f32.mxu0 0.0
      %4963 = vmatmul.mubr.f32.gmra.mrb[0].mxu0 %v4738
      %v4964 = vpop.f32.mrb[0].mxu0
      %v4965 = vadd.f32 0.0, %v4964
      %v4966 = vpop.f32.mrb[0].mxu0
      %4967 = vdwg.mxu0
      %v4968 = vadd.f32 %v4574, %v4810
      %v4969 = vadd.f32 %v4575, %v4815
      %v4970 = vadd.f32 %v4576, %v4820
      %v4971 = vadd.f32 %v4577, %v4825
      %v4972 = vadd.f32 %v4578, %v4830
      %v4973 = vadd.f32 %v4579, %v4835
      %v4974 = vadd.f32 %v4580, %v4840
      %v4975 = vadd.f32 %v4581, %v4845
      %v4976 = vadd.f32 %v4582, %v4850
      %v4977 = vadd.f32 %v4583, %v4855
      %v4978 = vadd.f32 %v4584, %v4860
      %v4979 = vadd.f32 %v4585, %v4865
      %v4980 = vadd.f32 %v4586, %v4870
      %v4981 = vadd.f32 %v4587, %v4875
      %v4982 = vadd.f32 %v4588, %v4880
      %v4983 = vadd.f32 %v4589, %v4885
      %v4984 = vadd.f32 %v4590, %v4890
      %v4985 = vadd.f32 %v4591, %v4895
      %v4986 = vadd.f32 %v4592, %v4900
      %v4987 = vadd.f32 %v4593, %v4905
      %v4988 = vadd.f32 %v4594, %v4910
      %v4989 = vadd.f32 %v4595, %v4915
      %v4990 = vadd.f32 %v4596, %v4920
      %v4991 = vadd.f32 %v4597, %v4925
      %v4992 = vadd.f32 %v4598, %v4930
      %v4993 = vadd.f32 %v4599, %v4935
      %v4994 = vadd.f32 %v4600, %v4940
      %v4995 = vadd.f32 %v4601, %v4945
      %v4996 = vadd.f32 %v4602, %v4950
      %v4997 = vadd.f32 %v4603, %v4955
      %v4998 = vadd.f32 %v4604, %v4960
      %v4999 = vadd.f32 %v4605, %v4965
      %s5000 = scalar_lea.vmem %s6, 16
      %v5001 = vld [vmem:[%s5000] sm:$0xf]
      %v5003 = vsel %vm382, %v4638, 0
      %v5006 = vsel %vm382, %v4639, 0
      %v5009 = vsel %vm3841, %v5001, 0
      %5011 = vmatprep.subr.mxu0 0.0
      %5012 = vmatpush1.msra.mxu0 %v5009
      %5013 = vmatprep.subr.mxu0 0.0
      %5014 = vmatpush1.msra.mxu0 0.0
      %5015 = vmatprep.subr.mxu0 0.0
      %5016 = vmatpush1.msra.mxu0 0.0
      %5017 = vmatprep.subr.mxu0 0.0
      %5018 = vmatpush1.msra.mxu0 0.0
      %5019 = vmatprep.subr.mxu0 0.0
      %5020 = vmatpush1.msra.mxu0 0.0
      %5021 = vmatprep.subr.mxu0 0.0
      %5022 = vmatpush1.msra.mxu0 0.0
      %5023 = vmatprep.subr.mxu0 0.0
      %5024 = vmatpush1.msra.mxu0 0.0
      %5025 = vmatprep.subr.mxu0 0.0
      %5026 = vmatpush1.msra.mxu0 0.0
      %5027 = vmatprep.subr.mxu0 0.0
      %5028 = vmatpush1.msra.mxu0 0.0
      %5029 = vmatprep.subr.mxu0 0.0
      %5030 = vmatpush1.msra.mxu0 0.0
      %5031 = vmatprep.subr.mxu0 0.0
      %5032 = vmatpush1.msra.mxu0 0.0
      %5033 = vmatprep.subr.mxu0 0.0
      %5034 = vmatpush1.msra.mxu0 0.0
      %5035 = vmatprep.subr.mxu0 0.0
      %5036 = vmatpush1.msra.mxu0 0.0
      %5037 = vmatprep.subr.mxu0 0.0
      %5038 = vmatpush1.msra.mxu0 0.0
      %5039 = vmatprep.subr.mxu0 0.0
      %5040 = vmatpush1.msra.mxu0 0.0
      %5041 = vmatprep.subr.mxu0 0.0
      %5042 = vmatpush1.msra.mxu0 0.0
      %5043 = vmatprep.subr.mxu0 0.0
      %5044 = vmatpush1.msra.mxu0 0.0
      %5045 = vmatprep.subr.mxu0 0.0
      %5046 = vmatpush1.msra.mxu0 0.0
      %5047 = vmatprep.subr.mxu0 0.0
      %5048 = vmatpush1.msra.mxu0 0.0
      %5049 = vmatprep.subr.mxu0 0.0
      %5050 = vmatpush1.msra.mxu0 0.0
      %5051 = vmatprep.subr.mxu0 0.0
      %5052 = vmatpush1.msra.mxu0 0.0
      %5053 = vmatprep.subr.mxu0 0.0
      %5054 = vmatpush1.msra.mxu0 0.0
      %5055 = vmatprep.subr.mxu0 0.0
      %5056 = vmatpush1.msra.mxu0 0.0
      %5057 = vmatprep.subr.mxu0 0.0
      %5058 = vmatpush1.msra.mxu0 0.0
      %5059 = vmatprep.subr.mxu0 0.0
      %5060 = vmatpush1.msra.mxu0 0.0
      %5061 = vmatprep.subr.mxu0 0.0
      %5062 = vmatpush1.msra.mxu0 0.0
      %5063 = vmatprep.subr.mxu0 0.0
      %5064 = vmatpush1.msra.mxu0 0.0
      %5065 = vmatprep.subr.mxu0 0.0
      %5066 = vmatpush1.msra.mxu0 0.0
      %5067 = vmatprep.subr.mxu0 0.0
      %5068 = vmatpush1.msra.mxu0 0.0
      %5069 = vmatprep.subr.mxu0 0.0
      %5070 = vmatpush1.msra.mxu0 0.0
      %5071 = vmatprep.subr.mxu0 0.0
      %5072 = vmatpush1.msra.mxu0 0.0
      %5073 = vmatprep.subr.mxu0 0.0
      %5074 = vmatpush1.msra.mxu0 0.0
      %5075 = vmatprep.mubr.f32.mxu0 0.0
      %5076 = vmatmul.mubr.f32.gmra.mrb[0].mxu0 %v4651
      %v5077 = vpop.f32.mrb[0].mxu0
      %v5078 = vadd.f32 0.0, %v5077
      %v5079 = vpop.f32.mrb[0].mxu0
      %5080 = vmatprep.mubr.f32.mxu0 0.0
      %5081 = vmatmul.mubr.f32.gmra.mrb[0].mxu0 %v4654
      %v5082 = vpop.f32.mrb[0].mxu0
      %v5083 = vadd.f32 0.0, %v5082
      %v5084 = vpop.f32.mrb[0].mxu0
      %5085 = vmatprep.mubr.f32.mxu0 0.0
      %5086 = vmatmul.mubr.f32.gmra.mrb[0].mxu0 %v4657
      %v5087 = vpop.f32.mrb[0].mxu0
      %v5088 = vadd.f32 0.0, %v5087
      %v5089 = vpop.f32.mrb[0].mxu0
      %5090 = vmatprep.mubr.f32.mxu0 0.0
      %5091 = vmatmul.mubr.f32.gmra.mrb[0].mxu0 %v4660
      %v5092 = vpop.f32.mrb[0].mxu0
      %v5093 = vadd.f32 0.0, %v5092
      %v5094 = vpop.f32.mrb[0].mxu0
      %5095 = vmatprep.mubr.f32.mxu0 0.0
      %5096 = vmatmul.mubr.f32.gmra.mrb[0].mxu0 %v4663
      %v5097 = vpop.f32.mrb[0].mxu0
      %v5098 = vadd.f32 0.0, %v5097
      %v5099 = vpop.f32.mrb[0].mxu0
      %5100 = vmatprep.mubr.f32.mxu0 0.0
      %5101 = vmatmul.mubr.f32.gmra.mrb[0].mxu0 %v4666
      %v5102 = vpop.f32.mrb[0].mxu0
      %v5103 = vadd.f32 0.0, %v5102
      %v5104 = vpop.f32.mrb[0].mxu0
      %5105 = vmatprep.mubr.f32.mxu0 0.0
      %5106 = vmatmul.mubr.f32.gmra.mrb[0].mxu0 %v4669
      %v5107 = vpop.f32.mrb[0].mxu0
      %v5108 = vadd.f32 0.0, %v5107
      %v5109 = vpop.f32.mrb[0].mxu0
      %5110 = vmatprep.mubr.f32.mxu0 0.0
      %5111 = vmatmul.mubr.f32.gmra.mrb[0].mxu0 %v4672
      %v5112 = vpop.f32.mrb[0].mxu0
      %v5113 = vadd.f32 0.0, %v5112
      %v5114 = vpop.f32.mrb[0].mxu0
      %5115 = vmatprep.mubr.f32.mxu0 0.0
      %5116 = vmatmul.mubr.f32.gmra.mrb[0].mxu0 %v4675
      %v5117 = vpop.f32.mrb[0].mxu0
      %v5118 = vadd.f32 0.0, %v5117
      %v5119 = vpop.f32.mrb[0].mxu0
      %5120 = vmatprep.mubr.f32.mxu0 0.0
      %5121 = vmatmul.mubr.f32.gmra.mrb[0].mxu0 %v4678
      %v5122 = vpop.f32.mrb[0].mxu0
      %v5123 = vadd.f32 0.0, %v5122
      %v5124 = vpop.f32.mrb[0].mxu0
      %5125 = vmatprep.mubr.f32.mxu0 0.0
      %5126 = vmatmul.mubr.f32.gmra.mrb[0].mxu0 %v4681
      %v5127 = vpop.f32.mrb[0].mxu0
      %v5128 = vadd.f32 0.0, %v5127
      %v5129 = vpop.f32.mrb[0].mxu0
      %5130 = vmatprep.mubr.f32.mxu0 0.0
      %5131 = vmatmul.mubr.f32.gmra.mrb[0].mxu0 %v4684
      %v5132 = vpop.f32.mrb[0].mxu0
      %v5133 = vadd.f32 0.0, %v5132
      %v5134 = vpop.f32.mrb[0].mxu0
      %5135 = vmatprep.mubr.f32.mxu0 0.0
      %5136 = vmatmul.mubr.f32.gmra.mrb[0].mxu0 %v4687
      %v5137 = vpop.f32.mrb[0].mxu0
      %v5138 = vadd.f32 0.0, %v5137
      %v5139 = vpop.f32.mrb[0].mxu0
      %5140 = vmatprep.mubr.f32.mxu0 0.0
      %5141 = vmatmul.mubr.f32.gmra.mrb[0].mxu0 %v4690
      %v5142 = vpop.f32.mrb[0].mxu0
      %v5143 = vadd.f32 0.0, %v5142
      %v5144 = vpop.f32.mrb[0].mxu0
      %5145 = vmatprep.mubr.f32.mxu0 0.0
      %5146 = vmatmul.mubr.f32.gmra.mrb[0].mxu0 %v4693
      %v5147 = vpop.f32.mrb[0].mxu0
      %v5148 = vadd.f32 0.0, %v5147
      %v5149 = vpop.f32.mrb[0].mxu0
      %5150 = vmatprep.mubr.f32.mxu0 0.0
      %5151 = vmatmul.mubr.f32.gmra.mrb[0].mxu0 %v4696
      %v5152 = vpop.f32.mrb[0].mxu0
      %v5153 = vadd.f32 0.0, %v5152
      %v5154 = vpop.f32.mrb[0].mxu0
      %5155 = vmatprep.mubr.f32.mxu0 0.0
      %5156 = vmatmul.mubr.f32.gmra.mrb[0].mxu0 %v4699
      %v5157 = vpop.f32.mrb[0].mxu0
      %v5158 = vadd.f32 0.0, %v5157
      %v5159 = vpop.f32.mrb[0].mxu0
      %5160 = vmatprep.mubr.f32.mxu0 0.0
      %5161 = vmatmul.mubr.f32.gmra.mrb[0].mxu0 %v4702
      %v5162 = vpop.f32.mrb[0].mxu0
      %v5163 = vadd.f32 0.0, %v5162
      %v5164 = vpop.f32.mrb[0].mxu0
      %5165 = vmatprep.mubr.f32.mxu0 0.0
      %5166 = vmatmul.mubr.f32.gmra.mrb[0].mxu0 %v4705
      %v5167 = vpop.f32.mrb[0].mxu0
      %v5168 = vadd.f32 0.0, %v5167
      %v5169 = vpop.f32.mrb[0].mxu0
      %5170 = vmatprep.mubr.f32.mxu0 0.0
      %5171 = vmatmul.mubr.f32.gmra.mrb[0].mxu0 %v4708
      %v5172 = vpop.f32.mrb[0].mxu0
      %v5173 = vadd.f32 0.0, %v5172
      %v5174 = vpop.f32.mrb[0].mxu0
      %5175 = vmatprep.mubr.f32.mxu0 0.0
      %5176 = vmatmul.mubr.f32.gmra.mrb[0].mxu0 %v4711
      %v5177 = vpop.f32.mrb[0].mxu0
      %v5178 = vadd.f32 0.0, %v5177
      %v5179 = vpop.f32.mrb[0].mxu0
      %5180 = vmatprep.mubr.f32.mxu0 0.0
      %5181 = vmatmul.mubr.f32.gmra.mrb[0].mxu0 %v4714
      %v5182 = vpop.f32.mrb[0].mxu0
      %v5183 = vadd.f32 0.0, %v5182
      %v5184 = vpop.f32.mrb[0].mxu0
      %5185 = vmatprep.mubr.f32.mxu0 0.0
      %5186 = vmatmul.mubr.f32.gmra.mrb[0].mxu0 %v4717
      %v5187 = vpop.f32.mrb[0].mxu0
      %v5188 = vadd.f32 0.0, %v5187
      %v5189 = vpop.f32.mrb[0].mxu0
      %5190 = vmatprep.mubr.f32.mxu0 0.0
      %5191 = vmatmul.mubr.f32.gmra.mrb[0].mxu0 %v4720
      %v5192 = vpop.f32.mrb[0].mxu0
      %v5193 = vadd.f32 0.0, %v5192
      %v5194 = vpop.f32.mrb[0].mxu0
      %5195 = vmatprep.mubr.f32.mxu0 0.0
      %5196 = vmatmul.mubr.f32.gmra.mrb[0].mxu0 %v4723
      %v5197 = vpop.f32.mrb[0].mxu0
      %v5198 = vadd.f32 0.0, %v5197
      %v5199 = vpop.f32.mrb[0].mxu0
      %5200 = vmatprep.mubr.f32.mxu0 0.0
      %5201 = vmatmul.mubr.f32.gmra.mrb[0].mxu0 %v4726
      %v5202 = vpop.f32.mrb[0].mxu0
      %v5203 = vadd.f32 0.0, %v5202
      %v5204 = vpop.f32.mrb[0].mxu0
      %5205 = vmatprep.mubr.f32.mxu0 0.0
      %5206 = vmatmul.mubr.f32.gmra.mrb[0].mxu0 %v4729
      %v5207 = vpop.f32.mrb[0].mxu0
      %v5208 = vadd.f32 0.0, %v5207
      %v5209 = vpop.f32.mrb[0].mxu0
      %5210 = vmatprep.mubr.f32.mxu0 0.0
      %5211 = vmatmul.mubr.f32.gmra.mrb[0].mxu0 %v4732
      %v5212 = vpop.f32.mrb[0].mxu0
      %v5213 = vadd.f32 0.0, %v5212
      %v5214 = vpop.f32.mrb[0].mxu0
      %5215 = vmatprep.mubr.f32.mxu0 0.0
      %5216 = vmatmul.mubr.f32.gmra.mrb[0].mxu0 %v4735
      %v5217 = vpop.f32.mrb[0].mxu0
      %v5218 = vadd.f32 0.0, %v5217
      %v5219 = vpop.f32.mrb[0].mxu0
      %5220 = vmatprep.mubr.f32.mxu0 0.0
      %5221 = vmatmul.mubr.f32.gmra.mrb[0].mxu0 %v4738
      %v5222 = vpop.f32.mrb[0].mxu0
      %v5223 = vadd.f32 0.0, %v5222
      %v5224 = vpop.f32.mrb[0].mxu0
      %5225 = vmatprep.mubr.f32.mxu0 0.0
      %5226 = vmatmul.mubr.f32.gmra.mrb[0].mxu0 %v5003
      %v5227 = vpop.f32.mrb[0].mxu0
      %v5228 = vadd.f32 0.0, %v5227
      %v5229 = vpop.f32.mrb[0].mxu0
      %5230 = vmatprep.mubr.f32.mxu0 0.0
      %5231 = vmatmul.mubr.f32.gmra.mrb[0].mxu0 %v5006
      %v5232 = vpop.f32.mrb[0].mxu0
      %v5233 = vadd.f32 0.0, %v5232
      %v5234 = vpop.f32.mrb[0].mxu0
      %5235 = vdwg.mxu0
      %v5236 = vadd.f32 %v4968, %v5078
      %v5237 = vadd.f32 %v4969, %v5083
      %v5238 = vadd.f32 %v4970, %v5088
      %v5239 = vadd.f32 %v4971, %v5093
      %v5240 = vadd.f32 %v4972, %v5098
      %v5241 = vadd.f32 %v4973, %v5103
      %v5242 = vadd.f32 %v4974, %v5108
      %v5243 = vadd.f32 %v4975, %v5113
      %v5244 = vadd.f32 %v4976, %v5118
      %v5245 = vadd.f32 %v4977, %v5123
      %v5246 = vadd.f32 %v4978, %v5128
      %v5247 = vadd.f32 %v4979, %v5133
      %v5248 = vadd.f32 %v4980, %v5138
      %v5249 = vadd.f32 %v4981, %v5143
      %v5250 = vadd.f32 %v4982, %v5148
      %v5251 = vadd.f32 %v4983, %v5153
      %v5252 = vadd.f32 %v4984, %v5158
      %v5253 = vadd.f32 %v4985, %v5163
      %v5254 = vadd.f32 %v4986, %v5168
      %v5255 = vadd.f32 %v4987, %v5173
      %v5256 = vadd.f32 %v4988, %v5178
      %v5257 = vadd.f32 %v4989, %v5183
      %v5258 = vadd.f32 %v4990, %v5188
      %v5259 = vadd.f32 %v4991, %v5193
      %v5260 = vadd.f32 %v4992, %v5198
      %v5261 = vadd.f32 %v4993, %v5203
      %v5262 = vadd.f32 %v4994, %v5208
      %v5263 = vadd.f32 %v4995, %v5213
      %v5264 = vadd.f32 %v4996, %v5218
      %v5265 = vadd.f32 %v4997, %v5223
      %v5266 = vadd.f32 %v4998, %v5228
      %v5267 = vadd.f32 %v4999, %v5233
      %s5268 = scalar_lea.vmem %s6, 28
      %v5269 = vld [vmem:[%s5268] sm:$0xf]
      %v5271 = vsel %vm382, %v4640, 0
      %v5274 = vsel %vm382, %v4641, 0
      %v5277 = vsel %vm3841, %v5269, 0
      %5279 = vmatprep.subr.mxu0 0.0
      %5280 = vmatpush1.msra.mxu0 %v5277
      %5281 = vmatprep.subr.mxu0 0.0
      %5282 = vmatpush1.msra.mxu0 0.0
      %5283 = vmatprep.subr.mxu0 0.0
      %5284 = vmatpush1.msra.mxu0 0.0
      %5285 = vmatprep.subr.mxu0 0.0
      %5286 = vmatpush1.msra.mxu0 0.0
      %5287 = vmatprep.subr.mxu0 0.0
      %5288 = vmatpush1.msra.mxu0 0.0
      %5289 = vmatprep.subr.mxu0 0.0
      %5290 = vmatpush1.msra.mxu0 0.0
      %5291 = vmatprep.subr.mxu0 0.0
      %5292 = vmatpush1.msra.mxu0 0.0
      %5293 = vmatprep.subr.mxu0 0.0
      %5294 = vmatpush1.msra.mxu0 0.0
      %5295 = vmatprep.subr.mxu0 0.0
      %5296 = vmatpush1.msra.mxu0 0.0
      %5297 = vmatprep.subr.mxu0 0.0
      %5298 = vmatpush1.msra.mxu0 0.0
      %5299 = vmatprep.subr.mxu0 0.0
      %5300 = vmatpush1.msra.mxu0 0.0
      %5301 = vmatprep.subr.mxu0 0.0
      %5302 = vmatpush1.msra.mxu0 0.0
      %5303 = vmatprep.subr.mxu0 0.0
      %5304 = vmatpush1.msra.mxu0 0.0
      %5305 = vmatprep.subr.mxu0 0.0
      %5306 = vmatpush1.msra.mxu0 0.0
      %5307 = vmatprep.subr.mxu0 0.0
      %5308 = vmatpush1.msra.mxu0 0.0
      %5309 = vmatprep.subr.mxu0 0.0
      %5310 = vmatpush1.msra.mxu0 0.0
      %5311 = vmatprep.subr.mxu0 0.0
      %5312 = vmatpush1.msra.mxu0 0.0
      %5313 = vmatprep.subr.mxu0 0.0
      %5314 = vmatpush1.msra.mxu0 0.0
      %5315 = vmatprep.subr.mxu0 0.0
      %5316 = vmatpush1.msra.mxu0 0.0
      %5317 = vmatprep.subr.mxu0 0.0
      %5318 = vmatpush1.msra.mxu0 0.0
      %5319 = vmatprep.subr.mxu0 0.0
      %5320 = vmatpush1.msra.mxu0 0.0
      %5321 = vmatprep.subr.mxu0 0.0
      %5322 = vmatpush1.msra.mxu0 0.0
      %5323 = vmatprep.subr.mxu0 0.0
      %5324 = vmatpush1.msra.mxu0 0.0
      %5325 = vmatprep.subr.mxu0 0.0
      %5326 = vmatpush1.msra.mxu0 0.0
      %5327 = vmatprep.subr.mxu0 0.0
      %5328 = vmatpush1.msra.mxu0 0.0
      %5329 = vmatprep.subr.mxu0 0.0
      %5330 = vmatpush1.msra.mxu0 0.0
      %5331 = vmatprep.subr.mxu0 0.0
      %5332 = vmatpush1.msra.mxu0 0.0
      %5333 = vmatprep.subr.mxu0 0.0
      %5334 = vmatpush1.msra.mxu0 0.0
      %5335 = vmatprep.subr.mxu0 0.0
      %5336 = vmatpush1.msra.mxu0 0.0
      %5337 = vmatprep.subr.mxu0 0.0
      %5338 = vmatpush1.msra.mxu0 0.0
      %5339 = vmatprep.subr.mxu0 0.0
      %5340 = vmatpush1.msra.mxu0 0.0
      %5341 = vmatprep.subr.mxu0 0.0
      %5342 = vmatpush1.msra.mxu0 0.0
      %5343 = vmatprep.mubr.f32.mxu0 0.0
      %5344 = vmatmul.mubr.f32.gmra.mrb[0].mxu0 %v4657
      %v5345 = vpop.f32.mrb[0].mxu0
      %v5346 = vadd.f32 0.0, %v5345
      %v5347 = vpop.f32.mrb[0].mxu0
      %5348 = vmatprep.mubr.f32.mxu0 0.0
      %5349 = vmatmul.mubr.f32.gmra.mrb[0].mxu0 %v4660
      %v5350 = vpop.f32.mrb[0].mxu0
      %v5351 = vadd.f32 0.0, %v5350
      %v5352 = vpop.f32.mrb[0].mxu0
      %5353 = vmatprep.mubr.f32.mxu0 0.0
      %5354 = vmatmul.mubr.f32.gmra.mrb[0].mxu0 %v4663
      %v5355 = vpop.f32.mrb[0].mxu0
      %v5356 = vadd.f32 0.0, %v5355
      %v5357 = vpop.f32.mrb[0].mxu0
      %5358 = vmatprep.mubr.f32.mxu0 0.0
      %5359 = vmatmul.mubr.f32.gmra.mrb[0].mxu0 %v4666
      %v5360 = vpop.f32.mrb[0].mxu0
      %v5361 = vadd.f32 0.0, %v5360
      %v5362 = vpop.f32.mrb[0].mxu0
      %5363 = vmatprep.mubr.f32.mxu0 0.0
      %5364 = vmatmul.mubr.f32.gmra.mrb[0].mxu0 %v4669
      %v5365 = vpop.f32.mrb[0].mxu0
      %v5366 = vadd.f32 0.0, %v5365
      %v5367 = vpop.f32.mrb[0].mxu0
      %5368 = vmatprep.mubr.f32.mxu0 0.0
      %5369 = vmatmul.mubr.f32.gmra.mrb[0].mxu0 %v4672
      %v5370 = vpop.f32.mrb[0].mxu0
      %v5371 = vadd.f32 0.0, %v5370
      %v5372 = vpop.f32.mrb[0].mxu0
      %5373 = vmatprep.mubr.f32.mxu0 0.0
      %5374 = vmatmul.mubr.f32.gmra.mrb[0].mxu0 %v4675
      %v5375 = vpop.f32.mrb[0].mxu0
      %v5376 = vadd.f32 0.0, %v5375
      %v5377 = vpop.f32.mrb[0].mxu0
      %5378 = vmatprep.mubr.f32.mxu0 0.0
      %5379 = vmatmul.mubr.f32.gmra.mrb[0].mxu0 %v4678
      %v5380 = vpop.f32.mrb[0].mxu0
      %v5381 = vadd.f32 0.0, %v5380
      %v5382 = vpop.f32.mrb[0].mxu0
      %5383 = vmatprep.mubr.f32.mxu0 0.0
      %5384 = vmatmul.mubr.f32.gmra.mrb[0].mxu0 %v4681
      %v5385 = vpop.f32.mrb[0].mxu0
      %v5386 = vadd.f32 0.0, %v5385
      %v5387 = vpop.f32.mrb[0].mxu0
      %5388 = vmatprep.mubr.f32.mxu0 0.0
      %5389 = vmatmul.mubr.f32.gmra.mrb[0].mxu0 %v4684
      %v5390 = vpop.f32.mrb[0].mxu0
      %v5391 = vadd.f32 0.0, %v5390
      %v5392 = vpop.f32.mrb[0].mxu0
      %5393 = vmatprep.mubr.f32.mxu0 0.0
      %5394 = vmatmul.mubr.f32.gmra.mrb[0].mxu0 %v4687
      %v5395 = vpop.f32.mrb[0].mxu0
      %v5396 = vadd.f32 0.0, %v5395
      %v5397 = vpop.f32.mrb[0].mxu0
      %5398 = vmatprep.mubr.f32.mxu0 0.0
      %5399 = vmatmul.mubr.f32.gmra.mrb[0].mxu0 %v4690
      %v5400 = vpop.f32.mrb[0].mxu0
      %v5401 = vadd.f32 0.0, %v5400
      %v5402 = vpop.f32.mrb[0].mxu0
      %5403 = vmatprep.mubr.f32.mxu0 0.0
      %5404 = vmatmul.mubr.f32.gmra.mrb[0].mxu0 %v4693
      %v5405 = vpop.f32.mrb[0].mxu0
      %v5406 = vadd.f32 0.0, %v5405
      %v5407 = vpop.f32.mrb[0].mxu0
      %5408 = vmatprep.mubr.f32.mxu0 0.0
      %5409 = vmatmul.mubr.f32.gmra.mrb[0].mxu0 %v4696
      %v5410 = vpop.f32.mrb[0].mxu0
      %v5411 = vadd.f32 0.0, %v5410
      %v5412 = vpop.f32.mrb[0].mxu0
      %5413 = vmatprep.mubr.f32.mxu0 0.0
      %5414 = vmatmul.mubr.f32.gmra.mrb[0].mxu0 %v4699
      %v5415 = vpop.f32.mrb[0].mxu0
      %v5416 = vadd.f32 0.0, %v5415
      %v5417 = vpop.f32.mrb[0].mxu0
      %5418 = vmatprep.mubr.f32.mxu0 0.0
      %5419 = vmatmul.mubr.f32.gmra.mrb[0].mxu0 %v4702
      %v5420 = vpop.f32.mrb[0].mxu0
      %v5421 = vadd.f32 0.0, %v5420
      %v5422 = vpop.f32.mrb[0].mxu0
      %5423 = vmatprep.mubr.f32.mxu0 0.0
      %5424 = vmatmul.mubr.f32.gmra.mrb[0].mxu0 %v4705
      %v5425 = vpop.f32.mrb[0].mxu0
      %v5426 = vadd.f32 0.0, %v5425
      %v5427 = vpop.f32.mrb[0].mxu0
      %5428 = vmatprep.mubr.f32.mxu0 0.0
      %5429 = vmatmul.mubr.f32.gmra.mrb[0].mxu0 %v4708
      %v5430 = vpop.f32.mrb[0].mxu0
      %v5431 = vadd.f32 0.0, %v5430
      %v5432 = vpop.f32.mrb[0].mxu0
      %5433 = vmatprep.mubr.f32.mxu0 0.0
      %5434 = vmatmul.mubr.f32.gmra.mrb[0].mxu0 %v4711
      %v5435 = vpop.f32.mrb[0].mxu0
      %v5436 = vadd.f32 0.0, %v5435
      %v5437 = vpop.f32.mrb[0].mxu0
      %5438 = vmatprep.mubr.f32.mxu0 0.0
      %5439 = vmatmul.mubr.f32.gmra.mrb[0].mxu0 %v4714
      %v5440 = vpop.f32.mrb[0].mxu0
      %v5441 = vadd.f32 0.0, %v5440
      %v5442 = vpop.f32.mrb[0].mxu0
      %5443 = vmatprep.mubr.f32.mxu0 0.0
      %5444 = vmatmul.mubr.f32.gmra.mrb[0].mxu0 %v4717
      %v5445 = vpop.f32.mrb[0].mxu0
      %v5446 = vadd.f32 0.0, %v5445
      %v5447 = vpop.f32.mrb[0].mxu0
      %5448 = vmatprep.mubr.f32.mxu0 0.0
      %5449 = vmatmul.mubr.f32.gmra.mrb[0].mxu0 %v4720
      %v5450 = vpop.f32.mrb[0].mxu0
      %v5451 = vadd.f32 0.0, %v5450
      %v5452 = vpop.f32.mrb[0].mxu0
      %5453 = vmatprep.mubr.f32.mxu0 0.0
      %5454 = vmatmul.mubr.f32.gmra.mrb[0].mxu0 %v4723
      %v5455 = vpop.f32.mrb[0].mxu0
      %v5456 = vadd.f32 0.0, %v5455
      %v5457 = vpop.f32.mrb[0].mxu0
      %5458 = vmatprep.mubr.f32.mxu0 0.0
      %5459 = vmatmul.mubr.f32.gmra.mrb[0].mxu0 %v4726
      %v5460 = vpop.f32.mrb[0].mxu0
      %v5461 = vadd.f32 0.0, %v5460
      %v5462 = vpop.f32.mrb[0].mxu0
      %5463 = vmatprep.mubr.f32.mxu0 0.0
      %5464 = vmatmul.mubr.f32.gmra.mrb[0].mxu0 %v4729
      %v5465 = vpop.f32.mrb[0].mxu0
      %v5466 = vadd.f32 0.0, %v5465
      %v5467 = vpop.f32.mrb[0].mxu0
      %5468 = vmatprep.mubr.f32.mxu0 0.0
      %5469 = vmatmul.mubr.f32.gmra.mrb[0].mxu0 %v4732
      %v5470 = vpop.f32.mrb[0].mxu0
      %v5471 = vadd.f32 0.0, %v5470
      %v5472 = vpop.f32.mrb[0].mxu0
      %5473 = vmatprep.mubr.f32.mxu0 0.0
      %5474 = vmatmul.mubr.f32.gmra.mrb[0].mxu0 %v4735
      %v5475 = vpop.f32.mrb[0].mxu0
      %v5476 = vadd.f32 0.0, %v5475
      %v5477 = vpop.f32.mrb[0].mxu0
      %5478 = vmatprep.mubr.f32.mxu0 0.0
      %5479 = vmatmul.mubr.f32.gmra.mrb[0].mxu0 %v4738
      %v5480 = vpop.f32.mrb[0].mxu0
      %v5481 = vadd.f32 0.0, %v5480
      %v5482 = vpop.f32.mrb[0].mxu0
      %5483 = vmatprep.mubr.f32.mxu0 0.0
      %5484 = vmatmul.mubr.f32.gmra.mrb[0].mxu0 %v5003
      %v5485 = vpop.f32.mrb[0].mxu0
      %v5486 = vadd.f32 0.0, %v5485
      %v5487 = vpop.f32.mrb[0].mxu0
      %5488 = vmatprep.mubr.f32.mxu0 0.0
      %5489 = vmatmul.mubr.f32.gmra.mrb[0].mxu0 %v5006
      %v5490 = vpop.f32.mrb[0].mxu0
      %v5491 = vadd.f32 0.0, %v5490
      %v5492 = vpop.f32.mrb[0].mxu0
      %5493 = vmatprep.mubr.f32.mxu0 0.0
      %5494 = vmatmul.mubr.f32.gmra.mrb[0].mxu0 %v5271
      %v5495 = vpop.f32.mrb[0].mxu0
      %v5496 = vadd.f32 0.0, %v5495
      %v5497 = vpop.f32.mrb[0].mxu0
      %5498 = vmatprep.mubr.f32.mxu0 0.0
      %5499 = vmatmul.mubr.f32.gmra.mrb[0].mxu0 %v5274
      %v5500 = vpop.f32.mrb[0].mxu0
      %v5501 = vadd.f32 0.0, %v5500
      %v5502 = vpop.f32.mrb[0].mxu0
      %5503 = vdwg.mxu0
      %v5504 = vadd.f32 %v5236, %v5346
      %v5505 = vadd.f32 %v5237, %v5351
      %v5506 = vadd.f32 %v5238, %v5356
      %v5507 = vadd.f32 %v5239, %v5361
      %v5508 = vadd.f32 %v5240, %v5366
      %v5509 = vadd.f32 %v5241, %v5371
      %v5510 = vadd.f32 %v5242, %v5376
      %v5511 = vadd.f32 %v5243, %v5381
      %v5512 = vadd.f32 %v5244, %v5386
      %v5513 = vadd.f32 %v5245, %v5391
      %v5514 = vadd.f32 %v5246, %v5396
      %v5515 = vadd.f32 %v5247, %v5401
      %v5516 = vadd.f32 %v5248, %v5406
      %v5517 = vadd.f32 %v5249, %v5411
      %v5518 = vadd.f32 %v5250, %v5416
      %v5519 = vadd.f32 %v5251, %v5421
      %v5520 = vadd.f32 %v5252, %v5426
      %v5521 = vadd.f32 %v5253, %v5431
      %v5522 = vadd.f32 %v5254, %v5436
      %v5523 = vadd.f32 %v5255, %v5441
      %v5524 = vadd.f32 %v5256, %v5446
      %v5525 = vadd.f32 %v5257, %v5451
      %v5526 = vadd.f32 %v5258, %v5456
      %v5527 = vadd.f32 %v5259, %v5461
      %v5528 = vadd.f32 %v5260, %v5466
      %v5529 = vadd.f32 %v5261, %v5471
      %v5530 = vadd.f32 %v5262, %v5476
      %v5531 = vadd.f32 %v5263, %v5481
      %v5532 = vadd.f32 %v5264, %v5486
      %v5533 = vadd.f32 %v5265, %v5491
      %v5534 = vadd.f32 %v5266, %v5496
      %v5535 = vadd.f32 %v5267, %v5501
      %v5536 = vld [vmem:[#allocation3 + $0x2] sm:$0xff]
      %v5537 = vld [vmem:[#allocation3 + $0xa] sm:$0xff]
      %v5538 = vld [vmem:[#allocation3 + $0x1a] sm:$0xff]
      %v5539 = vld [vmem:[#allocation3 + $0x22] sm:$0xff]
      %v5540 = vld [vmem:[#allocation3 + $0x32] sm:$0xff]
      %v5541 = vld [vmem:[#allocation3 + $0x3a] sm:$0xff]
      %v5542 = vld [vmem:[#allocation3 + $0x4a] sm:$0xff]
      %v5543 = vld [vmem:[#allocation3 + $0x52] sm:$0xff]
      %v5544 = vld [vmem:[#allocation3 + $0x62] sm:$0xff]
      %v5545 = vld [vmem:[#allocation3 + $0x6a] sm:$0xff]
      %v5546 = vld [vmem:[#allocation3 + $0x7a] sm:$0xff]
      %v5547 = vld [vmem:[#allocation3 + $0x82] sm:$0xff]
      %v5548 = vld [vmem:[#allocation3 + $0x92] sm:$0xff]
      %v5549 = vld [vmem:[#allocation3 + $0x9a] sm:$0xff]
      %v5550 = vld [vmem:[#allocation3 + $0xaa] sm:$0xff]
      %v5551 = vld [vmem:[#allocation3 + $0xb2] sm:$0xff]
      %v5552 = vld [vmem:[#allocation3 + $0xc2] sm:$0xff]
      %v5553 = vld [vmem:[#allocation3 + $0xca] sm:$0xff]
      %v5554 = vld [vmem:[#allocation3 + $0xda] sm:$0xff]
      %v5555 = vld [vmem:[#allocation3 + $0xe2] sm:$0xff]
      %v5556 = vld [vmem:[#allocation3 + $0xf2] sm:$0xff]
      %v5557 = vld [vmem:[#allocation3 + $0xfa] sm:$0xff]
      %v5558 = vld [vmem:[#allocation3 + $0x10a] sm:$0xff]
      %v5559 = vld [vmem:[#allocation3 + $0x112] sm:$0xff]
      %v5560 = vld [vmem:[#allocation3 + $0x122] sm:$0xff]
      %v5561 = vld [vmem:[#allocation3 + $0x12a] sm:$0xff]
      %v5562 = vld [vmem:[#allocation3 + $0x13a] sm:$0xff]
      %v5563 = vld [vmem:[#allocation3 + $0x142] sm:$0xff]
      %v5564 = vld [vmem:[#allocation3 + $0x152] sm:$0xff]
      %v5565 = vld [vmem:[#allocation3 + $0x15a] sm:$0xff]
      %v5566 = vld [vmem:[#allocation3 + $0x16a] sm:$0xff]
      %v5567 = vld [vmem:[#allocation3 + $0x172] sm:$0xff]
      %v5568 = vld [vmem:[#allocation3 + $0x182] sm:$0xff]
      %v5569 = vld [vmem:[#allocation3 + $0x18a] sm:$0xff]
      %v5570 = vld [vmem:[#allocation3 + $0x19a] sm:$0xff]
      %v5571 = vld [vmem:[#allocation3 + $0x1a2] sm:$0xff]
      %s5572 = scalar_lea.vmem %s6, 8
      %v5573 = vld [vmem:[%s5572] sm:$0xf]
      %v5575 = vsel %vm382, %v5536, 0
      %v5578 = vsel %vm382, %v5537, 0
      %v5581 = vsel %vm382, %v5538, 0
      %v5584 = vsel %vm382, %v5539, 0
      %v5587 = vsel %vm382, %v5540, 0
      %v5590 = vsel %vm382, %v5541, 0
      %v5593 = vsel %vm382, %v5542, 0
      %v5596 = vsel %vm382, %v5543, 0
      %v5599 = vsel %vm382, %v5544, 0
      %v5602 = vsel %vm382, %v5545, 0
      %v5605 = vsel %vm382, %v5546, 0
      %v5608 = vsel %vm382, %v5547, 0
      %v5611 = vsel %vm382, %v5548, 0
      %v5614 = vsel %vm382, %v5549, 0
      %v5617 = vsel %vm382, %v5550, 0
      %v5620 = vsel %vm382, %v5551, 0
      %v5623 = vsel %vm382, %v5552, 0
      %v5626 = vsel %vm382, %v5553, 0
      %v5629 = vsel %vm382, %v5554, 0
      %v5632 = vsel %vm382, %v5555, 0
      %v5635 = vsel %vm382, %v5556, 0
      %v5638 = vsel %vm382, %v5557, 0
      %v5641 = vsel %vm382, %v5558, 0
      %v5644 = vsel %vm382, %v5559, 0
      %v5647 = vsel %vm382, %v5560, 0
      %v5650 = vsel %vm382, %v5561, 0
      %v5653 = vsel %vm382, %v5562, 0
      %v5656 = vsel %vm382, %v5563, 0
      %v5659 = vsel %vm382, %v5564, 0
      %v5662 = vsel %vm382, %v5565, 0
      %v5665 = vsel %vm382, %v5566, 0
      %v5668 = vsel %vm382, %v5567, 0
      %v5671 = vsel %vm3841, %v5573, 0
      %5673 = vmatprep.subr.mxu0 0.0
      %5674 = vmatpush1.msra.mxu0 %v5671
      %5675 = vmatprep.subr.mxu0 0.0
      %5676 = vmatpush1.msra.mxu0 0.0
      %5677 = vmatprep.subr.mxu0 0.0
      %5678 = vmatpush1.msra.mxu0 0.0
      %5679 = vmatprep.subr.mxu0 0.0
      %5680 = vmatpush1.msra.mxu0 0.0
      %5681 = vmatprep.subr.mxu0 0.0
      %5682 = vmatpush1.msra.mxu0 0.0
      %5683 = vmatprep.subr.mxu0 0.0
      %5684 = vmatpush1.msra.mxu0 0.0
      %5685 = vmatprep.subr.mxu0 0.0
      %5686 = vmatpush1.msra.mxu0 0.0
      %5687 = vmatprep.subr.mxu0 0.0
      %5688 = vmatpush1.msra.mxu0 0.0
      %5689 = vmatprep.subr.mxu0 0.0
      %5690 = vmatpush1.msra.mxu0 0.0
      %5691 = vmatprep.subr.mxu0 0.0
      %5692 = vmatpush1.msra.mxu0 0.0
      %5693 = vmatprep.subr.mxu0 0.0
      %5694 = vmatpush1.msra.mxu0 0.0
      %5695 = vmatprep.subr.mxu0 0.0
      %5696 = vmatpush1.msra.mxu0 0.0
      %5697 = vmatprep.subr.mxu0 0.0
      %5698 = vmatpush1.msra.mxu0 0.0
      %5699 = vmatprep.subr.mxu0 0.0
      %5700 = vmatpush1.msra.mxu0 0.0
      %5701 = vmatprep.subr.mxu0 0.0
      %5702 = vmatpush1.msra.mxu0 0.0
      %5703 = vmatprep.subr.mxu0 0.0
      %5704 = vmatpush1.msra.mxu0 0.0
      %5705 = vmatprep.subr.mxu0 0.0
      %5706 = vmatpush1.msra.mxu0 0.0
      %5707 = vmatprep.subr.mxu0 0.0
      %5708 = vmatpush1.msra.mxu0 0.0
      %5709 = vmatprep.subr.mxu0 0.0
      %5710 = vmatpush1.msra.mxu0 0.0
      %5711 = vmatprep.subr.mxu0 0.0
      %5712 = vmatpush1.msra.mxu0 0.0
      %5713 = vmatprep.subr.mxu0 0.0
      %5714 = vmatpush1.msra.mxu0 0.0
      %5715 = vmatprep.subr.mxu0 0.0
      %5716 = vmatpush1.msra.mxu0 0.0
      %5717 = vmatprep.subr.mxu0 0.0
      %5718 = vmatpush1.msra.mxu0 0.0
      %5719 = vmatprep.subr.mxu0 0.0
      %5720 = vmatpush1.msra.mxu0 0.0
      %5721 = vmatprep.subr.mxu0 0.0
      %5722 = vmatpush1.msra.mxu0 0.0
      %5723 = vmatprep.subr.mxu0 0.0
      %5724 = vmatpush1.msra.mxu0 0.0
      %5725 = vmatprep.subr.mxu0 0.0
      %5726 = vmatpush1.msra.mxu0 0.0
      %5727 = vmatprep.subr.mxu0 0.0
      %5728 = vmatpush1.msra.mxu0 0.0
      %5729 = vmatprep.subr.mxu0 0.0
      %5730 = vmatpush1.msra.mxu0 0.0
      %5731 = vmatprep.subr.mxu0 0.0
      %5732 = vmatpush1.msra.mxu0 0.0
      %5733 = vmatprep.subr.mxu0 0.0
      %5734 = vmatpush1.msra.mxu0 0.0
      %5735 = vmatprep.subr.mxu0 0.0
      %5736 = vmatpush1.msra.mxu0 0.0
      %5737 = vmatprep.mubr.f32.mxu0 0.0
      %5738 = vmatmul.mubr.f32.gmra.mrb[0].mxu0 %v5575
      %v5739 = vpop.f32.mrb[0].mxu0
      %v5740 = vadd.f32 0.0, %v5739
      %v5741 = vpop.f32.mrb[0].mxu0
      %5742 = vmatprep.mubr.f32.mxu0 0.0
      %5743 = vmatmul.mubr.f32.gmra.mrb[0].mxu0 %v5578
      %v5744 = vpop.f32.mrb[0].mxu0
      %v5745 = vadd.f32 0.0, %v5744
      %v5746 = vpop.f32.mrb[0].mxu0
      %5747 = vmatprep.mubr.f32.mxu0 0.0
      %5748 = vmatmul.mubr.f32.gmra.mrb[0].mxu0 %v5581
      %v5749 = vpop.f32.mrb[0].mxu0
      %v5750 = vadd.f32 0.0, %v5749
      %v5751 = vpop.f32.mrb[0].mxu0
      %5752 = vmatprep.mubr.f32.mxu0 0.0
      %5753 = vmatmul.mubr.f32.gmra.mrb[0].mxu0 %v5584
      %v5754 = vpop.f32.mrb[0].mxu0
      %v5755 = vadd.f32 0.0, %v5754
      %v5756 = vpop.f32.mrb[0].mxu0
      %5757 = vmatprep.mubr.f32.mxu0 0.0
      %5758 = vmatmul.mubr.f32.gmra.mrb[0].mxu0 %v5587
      %v5759 = vpop.f32.mrb[0].mxu0
      %v5760 = vadd.f32 0.0, %v5759
      %v5761 = vpop.f32.mrb[0].mxu0
      %5762 = vmatprep.mubr.f32.mxu0 0.0
      %5763 = vmatmul.mubr.f32.gmra.mrb[0].mxu0 %v5590
      %v5764 = vpop.f32.mrb[0].mxu0
      %v5765 = vadd.f32 0.0, %v5764
      %v5766 = vpop.f32.mrb[0].mxu0
      %5767 = vmatprep.mubr.f32.mxu0 0.0
      %5768 = vmatmul.mubr.f32.gmra.mrb[0].mxu0 %v5593
      %v5769 = vpop.f32.mrb[0].mxu0
      %v5770 = vadd.f32 0.0, %v5769
      %v5771 = vpop.f32.mrb[0].mxu0
      %5772 = vmatprep.mubr.f32.mxu0 0.0
      %5773 = vmatmul.mubr.f32.gmra.mrb[0].mxu0 %v5596
      %v5774 = vpop.f32.mrb[0].mxu0
      %v5775 = vadd.f32 0.0, %v5774
      %v5776 = vpop.f32.mrb[0].mxu0
      %5777 = vmatprep.mubr.f32.mxu0 0.0
      %5778 = vmatmul.mubr.f32.gmra.mrb[0].mxu0 %v5599
      %v5779 = vpop.f32.mrb[0].mxu0
      %v5780 = vadd.f32 0.0, %v5779
      %v5781 = vpop.f32.mrb[0].mxu0
      %5782 = vmatprep.mubr.f32.mxu0 0.0
      %5783 = vmatmul.mubr.f32.gmra.mrb[0].mxu0 %v5602
      %v5784 = vpop.f32.mrb[0].mxu0
      %v5785 = vadd.f32 0.0, %v5784
      %v5786 = vpop.f32.mrb[0].mxu0
      %5787 = vmatprep.mubr.f32.mxu0 0.0
      %5788 = vmatmul.mubr.f32.gmra.mrb[0].mxu0 %v5605
      %v5789 = vpop.f32.mrb[0].mxu0
      %v5790 = vadd.f32 0.0, %v5789
      %v5791 = vpop.f32.mrb[0].mxu0
      %5792 = vmatprep.mubr.f32.mxu0 0.0
      %5793 = vmatmul.mubr.f32.gmra.mrb[0].mxu0 %v5608
      %v5794 = vpop.f32.mrb[0].mxu0
      %v5795 = vadd.f32 0.0, %v5794
      %v5796 = vpop.f32.mrb[0].mxu0
      %5797 = vmatprep.mubr.f32.mxu0 0.0
      %5798 = vmatmul.mubr.f32.gmra.mrb[0].mxu0 %v5611
      %v5799 = vpop.f32.mrb[0].mxu0
      %v5800 = vadd.f32 0.0, %v5799
      %v5801 = vpop.f32.mrb[0].mxu0
      %5802 = vmatprep.mubr.f32.mxu0 0.0
      %5803 = vmatmul.mubr.f32.gmra.mrb[0].mxu0 %v5614
      %v5804 = vpop.f32.mrb[0].mxu0
      %v5805 = vadd.f32 0.0, %v5804
      %v5806 = vpop.f32.mrb[0].mxu0
      %5807 = vmatprep.mubr.f32.mxu0 0.0
      %5808 = vmatmul.mubr.f32.gmra.mrb[0].mxu0 %v5617
      %v5809 = vpop.f32.mrb[0].mxu0
      %v5810 = vadd.f32 0.0, %v5809
      %v5811 = vpop.f32.mrb[0].mxu0
      %5812 = vmatprep.mubr.f32.mxu0 0.0
      %5813 = vmatmul.mubr.f32.gmra.mrb[0].mxu0 %v5620
      %v5814 = vpop.f32.mrb[0].mxu0
      %v5815 = vadd.f32 0.0, %v5814
      %v5816 = vpop.f32.mrb[0].mxu0
      %5817 = vmatprep.mubr.f32.mxu0 0.0
      %5818 = vmatmul.mubr.f32.gmra.mrb[0].mxu0 %v5623
      %v5819 = vpop.f32.mrb[0].mxu0
      %v5820 = vadd.f32 0.0, %v5819
      %v5821 = vpop.f32.mrb[0].mxu0
      %5822 = vmatprep.mubr.f32.mxu0 0.0
      %5823 = vmatmul.mubr.f32.gmra.mrb[0].mxu0 %v5626
      %v5824 = vpop.f32.mrb[0].mxu0
      %v5825 = vadd.f32 0.0, %v5824
      %v5826 = vpop.f32.mrb[0].mxu0
      %5827 = vmatprep.mubr.f32.mxu0 0.0
      %5828 = vmatmul.mubr.f32.gmra.mrb[0].mxu0 %v5629
      %v5829 = vpop.f32.mrb[0].mxu0
      %v5830 = vadd.f32 0.0, %v5829
      %v5831 = vpop.f32.mrb[0].mxu0
      %5832 = vmatprep.mubr.f32.mxu0 0.0
      %5833 = vmatmul.mubr.f32.gmra.mrb[0].mxu0 %v5632
      %v5834 = vpop.f32.mrb[0].mxu0
      %v5835 = vadd.f32 0.0, %v5834
      %v5836 = vpop.f32.mrb[0].mxu0
      %5837 = vmatprep.mubr.f32.mxu0 0.0
      %5838 = vmatmul.mubr.f32.gmra.mrb[0].mxu0 %v5635
      %v5839 = vpop.f32.mrb[0].mxu0
      %v5840 = vadd.f32 0.0, %v5839
      %v5841 = vpop.f32.mrb[0].mxu0
      %5842 = vmatprep.mubr.f32.mxu0 0.0
      %5843 = vmatmul.mubr.f32.gmra.mrb[0].mxu0 %v5638
      %v5844 = vpop.f32.mrb[0].mxu0
      %v5845 = vadd.f32 0.0, %v5844
      %v5846 = vpop.f32.mrb[0].mxu0
      %5847 = vmatprep.mubr.f32.mxu0 0.0
      %5848 = vmatmul.mubr.f32.gmra.mrb[0].mxu0 %v5641
      %v5849 = vpop.f32.mrb[0].mxu0
      %v5850 = vadd.f32 0.0, %v5849
      %v5851 = vpop.f32.mrb[0].mxu0
      %5852 = vmatprep.mubr.f32.mxu0 0.0
      %5853 = vmatmul.mubr.f32.gmra.mrb[0].mxu0 %v5644
      %v5854 = vpop.f32.mrb[0].mxu0
      %v5855 = vadd.f32 0.0, %v5854
      %v5856 = vpop.f32.mrb[0].mxu0
      %5857 = vmatprep.mubr.f32.mxu0 0.0
      %5858 = vmatmul.mubr.f32.gmra.mrb[0].mxu0 %v5647
      %v5859 = vpop.f32.mrb[0].mxu0
      %v5860 = vadd.f32 0.0, %v5859
      %v5861 = vpop.f32.mrb[0].mxu0
      %5862 = vmatprep.mubr.f32.mxu0 0.0
      %5863 = vmatmul.mubr.f32.gmra.mrb[0].mxu0 %v5650
      %v5864 = vpop.f32.mrb[0].mxu0
      %v5865 = vadd.f32 0.0, %v5864
      %v5866 = vpop.f32.mrb[0].mxu0
      %5867 = vmatprep.mubr.f32.mxu0 0.0
      %5868 = vmatmul.mubr.f32.gmra.mrb[0].mxu0 %v5653
      %v5869 = vpop.f32.mrb[0].mxu0
      %v5870 = vadd.f32 0.0, %v5869
      %v5871 = vpop.f32.mrb[0].mxu0
      %5872 = vmatprep.mubr.f32.mxu0 0.0
      %5873 = vmatmul.mubr.f32.gmra.mrb[0].mxu0 %v5656
      %v5874 = vpop.f32.mrb[0].mxu0
      %v5875 = vadd.f32 0.0, %v5874
      %v5876 = vpop.f32.mrb[0].mxu0
      %5877 = vmatprep.mubr.f32.mxu0 0.0
      %5878 = vmatmul.mubr.f32.gmra.mrb[0].mxu0 %v5659
      %v5879 = vpop.f32.mrb[0].mxu0
      %v5880 = vadd.f32 0.0, %v5879
      %v5881 = vpop.f32.mrb[0].mxu0
      %5882 = vmatprep.mubr.f32.mxu0 0.0
      %5883 = vmatmul.mubr.f32.gmra.mrb[0].mxu0 %v5662
      %v5884 = vpop.f32.mrb[0].mxu0
      %v5885 = vadd.f32 0.0, %v5884
      %v5886 = vpop.f32.mrb[0].mxu0
      %5887 = vmatprep.mubr.f32.mxu0 0.0
      %5888 = vmatmul.mubr.f32.gmra.mrb[0].mxu0 %v5665
      %v5889 = vpop.f32.mrb[0].mxu0
      %v5890 = vadd.f32 0.0, %v5889
      %v5891 = vpop.f32.mrb[0].mxu0
      %5892 = vmatprep.mubr.f32.mxu0 0.0
      %5893 = vmatmul.mubr.f32.gmra.mrb[0].mxu0 %v5668
      %v5894 = vpop.f32.mrb[0].mxu0
      %v5895 = vadd.f32 0.0, %v5894
      %v5896 = vpop.f32.mrb[0].mxu0
      %5897 = vdwg.mxu0
      %v5898 = vadd.f32 %v5504, %v5740
      %v5899 = vadd.f32 %v5505, %v5745
      %v5900 = vadd.f32 %v5506, %v5750
      %v5901 = vadd.f32 %v5507, %v5755
      %v5902 = vadd.f32 %v5508, %v5760
      %v5903 = vadd.f32 %v5509, %v5765
      %v5904 = vadd.f32 %v5510, %v5770
      %v5905 = vadd.f32 %v5511, %v5775
      %v5906 = vadd.f32 %v5512, %v5780
      %v5907 = vadd.f32 %v5513, %v5785
      %v5908 = vadd.f32 %v5514, %v5790
      %v5909 = vadd.f32 %v5515, %v5795
      %v5910 = vadd.f32 %v5516, %v5800
      %v5911 = vadd.f32 %v5517, %v5805
      %v5912 = vadd.f32 %v5518, %v5810
      %v5913 = vadd.f32 %v5519, %v5815
      %v5914 = vadd.f32 %v5520, %v5820
      %v5915 = vadd.f32 %v5521, %v5825
      %v5916 = vadd.f32 %v5522, %v5830
      %v5917 = vadd.f32 %v5523, %v5835
      %v5918 = vadd.f32 %v5524, %v5840
      %v5919 = vadd.f32 %v5525, %v5845
      %v5920 = vadd.f32 %v5526, %v5850
      %v5921 = vadd.f32 %v5527, %v5855
      %v5922 = vadd.f32 %v5528, %v5860
      %v5923 = vadd.f32 %v5529, %v5865
      %v5924 = vadd.f32 %v5530, %v5870
      %v5925 = vadd.f32 %v5531, %v5875
      %v5926 = vadd.f32 %v5532, %v5880
      %v5927 = vadd.f32 %v5533, %v5885
      %v5928 = vadd.f32 %v5534, %v5890
      %v5929 = vadd.f32 %v5535, %v5895
      %s5930 = scalar_lea.vmem %s6, 20
      %v5931 = vld [vmem:[%s5930] sm:$0xf]
      %v5933 = vsel %vm382, %v5568, 0
      %v5936 = vsel %vm382, %v5569, 0
      %v5939 = vsel %vm3841, %v5931, 0
      %5941 = vmatprep.subr.mxu0 0.0
      %5942 = vmatpush1.msra.mxu0 %v5939
      %5943 = vmatprep.subr.mxu0 0.0
      %5944 = vmatpush1.msra.mxu0 0.0
      %5945 = vmatprep.subr.mxu0 0.0
      %5946 = vmatpush1.msra.mxu0 0.0
      %5947 = vmatprep.subr.mxu0 0.0
      %5948 = vmatpush1.msra.mxu0 0.0
      %5949 = vmatprep.subr.mxu0 0.0
      %5950 = vmatpush1.msra.mxu0 0.0
      %5951 = vmatprep.subr.mxu0 0.0
      %5952 = vmatpush1.msra.mxu0 0.0
      %5953 = vmatprep.subr.mxu0 0.0
      %5954 = vmatpush1.msra.mxu0 0.0
      %5955 = vmatprep.subr.mxu0 0.0
      %5956 = vmatpush1.msra.mxu0 0.0
      %5957 = vmatprep.subr.mxu0 0.0
      %5958 = vmatpush1.msra.mxu0 0.0
      %5959 = vmatprep.subr.mxu0 0.0
      %5960 = vmatpush1.msra.mxu0 0.0
      %5961 = vmatprep.subr.mxu0 0.0
      %5962 = vmatpush1.msra.mxu0 0.0
      %5963 = vmatprep.subr.mxu0 0.0
      %5964 = vmatpush1.msra.mxu0 0.0
      %5965 = vmatprep.subr.mxu0 0.0
      %5966 = vmatpush1.msra.mxu0 0.0
      %5967 = vmatprep.subr.mxu0 0.0
      %5968 = vmatpush1.msra.mxu0 0.0
      %5969 = vmatprep.subr.mxu0 0.0
      %5970 = vmatpush1.msra.mxu0 0.0
      %5971 = vmatprep.subr.mxu0 0.0
      %5972 = vmatpush1.msra.mxu0 0.0
      %5973 = vmatprep.subr.mxu0 0.0
      %5974 = vmatpush1.msra.mxu0 0.0
      %5975 = vmatprep.subr.mxu0 0.0
      %5976 = vmatpush1.msra.mxu0 0.0
      %5977 = vmatprep.subr.mxu0 0.0
      %5978 = vmatpush1.msra.mxu0 0.0
      %5979 = vmatprep.subr.mxu0 0.0
      %5980 = vmatpush1.msra.mxu0 0.0
      %5981 = vmatprep.subr.mxu0 0.0
      %5982 = vmatpush1.msra.mxu0 0.0
      %5983 = vmatprep.subr.mxu0 0.0
      %5984 = vmatpush1.msra.mxu0 0.0
      %5985 = vmatprep.subr.mxu0 0.0
      %5986 = vmatpush1.msra.mxu0 0.0
      %5987 = vmatprep.subr.mxu0 0.0
      %5988 = vmatpush1.msra.mxu0 0.0
      %5989 = vmatprep.subr.mxu0 0.0
      %5990 = vmatpush1.msra.mxu0 0.0
      %5991 = vmatprep.subr.mxu0 0.0
      %5992 = vmatpush1.msra.mxu0 0.0
      %5993 = vmatprep.subr.mxu0 0.0
      %5994 = vmatpush1.msra.mxu0 0.0
      %5995 = vmatprep.subr.mxu0 0.0
      %5996 = vmatpush1.msra.mxu0 0.0
      %5997 = vmatprep.subr.mxu0 0.0
      %5998 = vmatpush1.msra.mxu0 0.0
      %5999 = vmatprep.subr.mxu0 0.0
      %6000 = vmatpush1.msra.mxu0 0.0
      %6001 = vmatprep.subr.mxu0 0.0
      %6002 = vmatpush1.msra.mxu0 0.0
      %6003 = vmatprep.subr.mxu0 0.0
      %6004 = vmatpush1.msra.mxu0 0.0
      %6005 = vmatprep.mubr.f32.mxu0 0.0
      %6006 = vmatmul.mubr.f32.gmra.mrb[0].mxu0 %v5581
      %v6007 = vpop.f32.mrb[0].mxu0
      %v6008 = vadd.f32 0.0, %v6007
      %v6009 = vpop.f32.mrb[0].mxu0
      %6010 = vmatprep.mubr.f32.mxu0 0.0
      %6011 = vmatmul.mubr.f32.gmra.mrb[0].mxu0 %v5584
      %v6012 = vpop.f32.mrb[0].mxu0
      %v6013 = vadd.f32 0.0, %v6012
      %v6014 = vpop.f32.mrb[0].mxu0
      %6015 = vmatprep.mubr.f32.mxu0 0.0
      %6016 = vmatmul.mubr.f32.gmra.mrb[0].mxu0 %v5587
      %v6017 = vpop.f32.mrb[0].mxu0
      %v6018 = vadd.f32 0.0, %v6017
      %v6019 = vpop.f32.mrb[0].mxu0
      %6020 = vmatprep.mubr.f32.mxu0 0.0
      %6021 = vmatmul.mubr.f32.gmra.mrb[0].mxu0 %v5590
      %v6022 = vpop.f32.mrb[0].mxu0
      %v6023 = vadd.f32 0.0, %v6022
      %v6024 = vpop.f32.mrb[0].mxu0
      %6025 = vmatprep.mubr.f32.mxu0 0.0
      %6026 = vmatmul.mubr.f32.gmra.mrb[0].mxu0 %v5593
      %v6027 = vpop.f32.mrb[0].mxu0
      %v6028 = vadd.f32 0.0, %v6027
      %v6029 = vpop.f32.mrb[0].mxu0
      %6030 = vmatprep.mubr.f32.mxu0 0.0
      %6031 = vmatmul.mubr.f32.gmra.mrb[0].mxu0 %v5596
      %v6032 = vpop.f32.mrb[0].mxu0
      %v6033 = vadd.f32 0.0, %v6032
      %v6034 = vpop.f32.mrb[0].mxu0
      %6035 = vmatprep.mubr.f32.mxu0 0.0
      %6036 = vmatmul.mubr.f32.gmra.mrb[0].mxu0 %v5599
      %v6037 = vpop.f32.mrb[0].mxu0
      %v6038 = vadd.f32 0.0, %v6037
      %v6039 = vpop.f32.mrb[0].mxu0
      %6040 = vmatprep.mubr.f32.mxu0 0.0
      %6041 = vmatmul.mubr.f32.gmra.mrb[0].mxu0 %v5602
      %v6042 = vpop.f32.mrb[0].mxu0
      %v6043 = vadd.f32 0.0, %v6042
      %v6044 = vpop.f32.mrb[0].mxu0
      %6045 = vmatprep.mubr.f32.mxu0 0.0
      %6046 = vmatmul.mubr.f32.gmra.mrb[0].mxu0 %v5605
      %v6047 = vpop.f32.mrb[0].mxu0
      %v6048 = vadd.f32 0.0, %v6047
      %v6049 = vpop.f32.mrb[0].mxu0
      %6050 = vmatprep.mubr.f32.mxu0 0.0
      %6051 = vmatmul.mubr.f32.gmra.mrb[0].mxu0 %v5608
      %v6052 = vpop.f32.mrb[0].mxu0
      %v6053 = vadd.f32 0.0, %v6052
      %v6054 = vpop.f32.mrb[0].mxu0
      %6055 = vmatprep.mubr.f32.mxu0 0.0
      %6056 = vmatmul.mubr.f32.gmra.mrb[0].mxu0 %v5611
      %v6057 = vpop.f32.mrb[0].mxu0
      %v6058 = vadd.f32 0.0, %v6057
      %v6059 = vpop.f32.mrb[0].mxu0
      %6060 = vmatprep.mubr.f32.mxu0 0.0
      %6061 = vmatmul.mubr.f32.gmra.mrb[0].mxu0 %v5614
      %v6062 = vpop.f32.mrb[0].mxu0
      %v6063 = vadd.f32 0.0, %v6062
      %v6064 = vpop.f32.mrb[0].mxu0
      %6065 = vmatprep.mubr.f32.mxu0 0.0
      %6066 = vmatmul.mubr.f32.gmra.mrb[0].mxu0 %v5617
      %v6067 = vpop.f32.mrb[0].mxu0
      %v6068 = vadd.f32 0.0, %v6067
      %v6069 = vpop.f32.mrb[0].mxu0
      %6070 = vmatprep.mubr.f32.mxu0 0.0
      %6071 = vmatmul.mubr.f32.gmra.mrb[0].mxu0 %v5620
      %v6072 = vpop.f32.mrb[0].mxu0
      %v6073 = vadd.f32 0.0, %v6072
      %v6074 = vpop.f32.mrb[0].mxu0
      %6075 = vmatprep.mubr.f32.mxu0 0.0
      %6076 = vmatmul.mubr.f32.gmra.mrb[0].mxu0 %v5623
      %v6077 = vpop.f32.mrb[0].mxu0
      %v6078 = vadd.f32 0.0, %v6077
      %v6079 = vpop.f32.mrb[0].mxu0
      %6080 = vmatprep.mubr.f32.mxu0 0.0
      %6081 = vmatmul.mubr.f32.gmra.mrb[0].mxu0 %v5626
      %v6082 = vpop.f32.mrb[0].mxu0
      %v6083 = vadd.f32 0.0, %v6082
      %v6084 = vpop.f32.mrb[0].mxu0
      %6085 = vmatprep.mubr.f32.mxu0 0.0
      %6086 = vmatmul.mubr.f32.gmra.mrb[0].mxu0 %v5629
      %v6087 = vpop.f32.mrb[0].mxu0
      %v6088 = vadd.f32 0.0, %v6087
      %v6089 = vpop.f32.mrb[0].mxu0
      %6090 = vmatprep.mubr.f32.mxu0 0.0
      %6091 = vmatmul.mubr.f32.gmra.mrb[0].mxu0 %v5632
      %v6092 = vpop.f32.mrb[0].mxu0
      %v6093 = vadd.f32 0.0, %v6092
      %v6094 = vpop.f32.mrb[0].mxu0
      %6095 = vmatprep.mubr.f32.mxu0 0.0
      %6096 = vmatmul.mubr.f32.gmra.mrb[0].mxu0 %v5635
      %v6097 = vpop.f32.mrb[0].mxu0
      %v6098 = vadd.f32 0.0, %v6097
      %v6099 = vpop.f32.mrb[0].mxu0
      %6100 = vmatprep.mubr.f32.mxu0 0.0
      %6101 = vmatmul.mubr.f32.gmra.mrb[0].mxu0 %v5638
      %v6102 = vpop.f32.mrb[0].mxu0
      %v6103 = vadd.f32 0.0, %v6102
      %v6104 = vpop.f32.mrb[0].mxu0
      %6105 = vmatprep.mubr.f32.mxu0 0.0
      %6106 = vmatmul.mubr.f32.gmra.mrb[0].mxu0 %v5641
      %v6107 = vpop.f32.mrb[0].mxu0
      %v6108 = vadd.f32 0.0, %v6107
      %v6109 = vpop.f32.mrb[0].mxu0
      %6110 = vmatprep.mubr.f32.mxu0 0.0
      %6111 = vmatmul.mubr.f32.gmra.mrb[0].mxu0 %v5644
      %v6112 = vpop.f32.mrb[0].mxu0
      %v6113 = vadd.f32 0.0, %v6112
      %v6114 = vpop.f32.mrb[0].mxu0
      %6115 = vmatprep.mubr.f32.mxu0 0.0
      %6116 = vmatmul.mubr.f32.gmra.mrb[0].mxu0 %v5647
      %v6117 = vpop.f32.mrb[0].mxu0
      %v6118 = vadd.f32 0.0, %v6117
      %v6119 = vpop.f32.mrb[0].mxu0
      %6120 = vmatprep.mubr.f32.mxu0 0.0
      %6121 = vmatmul.mubr.f32.gmra.mrb[0].mxu0 %v5650
      %v6122 = vpop.f32.mrb[0].mxu0
      %v6123 = vadd.f32 0.0, %v6122
      %v6124 = vpop.f32.mrb[0].mxu0
      %6125 = vmatprep.mubr.f32.mxu0 0.0
      %6126 = vmatmul.mubr.f32.gmra.mrb[0].mxu0 %v5653
      %v6127 = vpop.f32.mrb[0].mxu0
      %v6128 = vadd.f32 0.0, %v6127
      %v6129 = vpop.f32.mrb[0].mxu0
      %6130 = vmatprep.mubr.f32.mxu0 0.0
      %6131 = vmatmul.mubr.f32.gmra.mrb[0].mxu0 %v5656
      %v6132 = vpop.f32.mrb[0].mxu0
      %v6133 = vadd.f32 0.0, %v6132
      %v6134 = vpop.f32.mrb[0].mxu0
      %6135 = vmatprep.mubr.f32.mxu0 0.0
      %6136 = vmatmul.mubr.f32.gmra.mrb[0].mxu0 %v5659
      %v6137 = vpop.f32.mrb[0].mxu0
      %v6138 = vadd.f32 0.0, %v6137
      %v6139 = vpop.f32.mrb[0].mxu0
      %6140 = vmatprep.mubr.f32.mxu0 0.0
      %6141 = vmatmul.mubr.f32.gmra.mrb[0].mxu0 %v5662
      %v6142 = vpop.f32.mrb[0].mxu0
      %v6143 = vadd.f32 0.0, %v6142
      %v6144 = vpop.f32.mrb[0].mxu0
      %6145 = vmatprep.mubr.f32.mxu0 0.0
      %6146 = vmatmul.mubr.f32.gmra.mrb[0].mxu0 %v5665
      %v6147 = vpop.f32.mrb[0].mxu0
      %v6148 = vadd.f32 0.0, %v6147
      %v6149 = vpop.f32.mrb[0].mxu0
      %6150 = vmatprep.mubr.f32.mxu0 0.0
      %6151 = vmatmul.mubr.f32.gmra.mrb[0].mxu0 %v5668
      %v6152 = vpop.f32.mrb[0].mxu0
      %v6153 = vadd.f32 0.0, %v6152
      %v6154 = vpop.f32.mrb[0].mxu0
      %6155 = vmatprep.mubr.f32.mxu0 0.0
      %6156 = vmatmul.mubr.f32.gmra.mrb[0].mxu0 %v5933
      %v6157 = vpop.f32.mrb[0].mxu0
      %v6158 = vadd.f32 0.0, %v6157
      %v6159 = vpop.f32.mrb[0].mxu0
      %6160 = vmatprep.mubr.f32.mxu0 0.0
      %6161 = vmatmul.mubr.f32.gmra.mrb[0].mxu0 %v5936
      %v6162 = vpop.f32.mrb[0].mxu0
      %v6163 = vadd.f32 0.0, %v6162
      %v6164 = vpop.f32.mrb[0].mxu0
      %6165 = vdwg.mxu0
      %v6166 = vadd.f32 %v5898, %v6008
      %v6167 = vadd.f32 %v5899, %v6013
      %v6168 = vadd.f32 %v5900, %v6018
      %v6169 = vadd.f32 %v5901, %v6023
      %v6170 = vadd.f32 %v5902, %v6028
      %v6171 = vadd.f32 %v5903, %v6033
      %v6172 = vadd.f32 %v5904, %v6038
      %v6173 = vadd.f32 %v5905, %v6043
      %v6174 = vadd.f32 %v5906, %v6048
      %v6175 = vadd.f32 %v5907, %v6053
      %v6176 = vadd.f32 %v5908, %v6058
      %v6177 = vadd.f32 %v5909, %v6063
      %v6178 = vadd.f32 %v5910, %v6068
      %v6179 = vadd.f32 %v5911, %v6073
      %v6180 = vadd.f32 %v5912, %v6078
      %v6181 = vadd.f32 %v5913, %v6083
      %v6182 = vadd.f32 %v5914, %v6088
      %v6183 = vadd.f32 %v5915, %v6093
      %v6184 = vadd.f32 %v5916, %v6098
      %v6185 = vadd.f32 %v5917, %v6103
      %v6186 = vadd.f32 %v5918, %v6108
      %v6187 = vadd.f32 %v5919, %v6113
      %v6188 = vadd.f32 %v5920, %v6118
      %v6189 = vadd.f32 %v5921, %v6123
      %v6190 = vadd.f32 %v5922, %v6128
      %v6191 = vadd.f32 %v5923, %v6133
      %v6192 = vadd.f32 %v5924, %v6138
      %v6193 = vadd.f32 %v5925, %v6143
      %v6194 = vadd.f32 %v5926, %v6148
      %v6195 = vadd.f32 %v5927, %v6153
      %v6196 = vadd.f32 %v5928, %v6158
      %v6197 = vadd.f32 %v5929, %v6163
      %s6198 = scalar_lea.vmem %s6, 32
      %v6199 = vld [vmem:[%s6198] sm:$0xf]
      %v6201 = vsel %vm382, %v5570, 0
      %v6204 = vsel %vm382, %v5571, 0
      %v6207 = vsel %vm3841, %v6199, 0
      %6209 = vmatprep.subr.mxu0 0.0
      %6210 = vmatpush1.msra.mxu0 %v6207
      %6211 = vmatprep.subr.mxu0 0.0
      %6212 = vmatpush1.msra.mxu0 0.0
      %6213 = vmatprep.subr.mxu0 0.0
      %6214 = vmatpush1.msra.mxu0 0.0
      %6215 = vmatprep.subr.mxu0 0.0
      %6216 = vmatpush1.msra.mxu0 0.0
      %6217 = vmatprep.subr.mxu0 0.0
      %6218 = vmatpush1.msra.mxu0 0.0
      %6219 = vmatprep.subr.mxu0 0.0
      %6220 = vmatpush1.msra.mxu0 0.0
      %6221 = vmatprep.subr.mxu0 0.0
      %6222 = vmatpush1.msra.mxu0 0.0
      %6223 = vmatprep.subr.mxu0 0.0
      %6224 = vmatpush1.msra.mxu0 0.0
      %6225 = vmatprep.subr.mxu0 0.0
      %6226 = vmatpush1.msra.mxu0 0.0
      %6227 = vmatprep.subr.mxu0 0.0
      %6228 = vmatpush1.msra.mxu0 0.0
      %6229 = vmatprep.subr.mxu0 0.0
      %6230 = vmatpush1.msra.mxu0 0.0
      %6231 = vmatprep.subr.mxu0 0.0
      %6232 = vmatpush1.msra.mxu0 0.0
      %6233 = vmatprep.subr.mxu0 0.0
      %6234 = vmatpush1.msra.mxu0 0.0
      %6235 = vmatprep.subr.mxu0 0.0
      %6236 = vmatpush1.msra.mxu0 0.0
      %6237 = vmatprep.subr.mxu0 0.0
      %6238 = vmatpush1.msra.mxu0 0.0
      %6239 = vmatprep.subr.mxu0 0.0
      %6240 = vmatpush1.msra.mxu0 0.0
      %6241 = vmatprep.subr.mxu0 0.0
      %6242 = vmatpush1.msra.mxu0 0.0
      %6243 = vmatprep.subr.mxu0 0.0
      %6244 = vmatpush1.msra.mxu0 0.0
      %6245 = vmatprep.subr.mxu0 0.0
      %6246 = vmatpush1.msra.mxu0 0.0
      %6247 = vmatprep.subr.mxu0 0.0
      %6248 = vmatpush1.msra.mxu0 0.0
      %6249 = vmatprep.subr.mxu0 0.0
      %6250 = vmatpush1.msra.mxu0 0.0
      %6251 = vmatprep.subr.mxu0 0.0
      %6252 = vmatpush1.msra.mxu0 0.0
      %6253 = vmatprep.subr.mxu0 0.0
      %6254 = vmatpush1.msra.mxu0 0.0
      %6255 = vmatprep.subr.mxu0 0.0
      %6256 = vmatpush1.msra.mxu0 0.0
      %6257 = vmatprep.subr.mxu0 0.0
      %6258 = vmatpush1.msra.mxu0 0.0
      %6259 = vmatprep.subr.mxu0 0.0
      %6260 = vmatpush1.msra.mxu0 0.0
      %6261 = vmatprep.subr.mxu0 0.0
      %6262 = vmatpush1.msra.mxu0 0.0
      %6263 = vmatprep.subr.mxu0 0.0
      %6264 = vmatpush1.msra.mxu0 0.0
      %6265 = vmatprep.subr.mxu0 0.0
      %6266 = vmatpush1.msra.mxu0 0.0
      %6267 = vmatprep.subr.mxu0 0.0
      %6268 = vmatpush1.msra.mxu0 0.0
      %6269 = vmatprep.subr.mxu0 0.0
      %6270 = vmatpush1.msra.mxu0 0.0
      %6271 = vmatprep.subr.mxu0 0.0
      %6272 = vmatpush1.msra.mxu0 0.0
      %6273 = vmatprep.mubr.f32.mxu0 0.0
      %6274 = vmatmul.mubr.f32.gmra.mrb[0].mxu0 %v5587
      %v6275 = vpop.f32.mrb[0].mxu0
      %v6276 = vadd.f32 0.0, %v6275
      %v6277 = vpop.f32.mrb[0].mxu0
      %6278 = vmatprep.mubr.f32.mxu0 0.0
      %6279 = vmatmul.mubr.f32.gmra.mrb[0].mxu0 %v5590
      %v6280 = vpop.f32.mrb[0].mxu0
      %v6281 = vadd.f32 0.0, %v6280
      %v6282 = vpop.f32.mrb[0].mxu0
      %6283 = vmatprep.mubr.f32.mxu0 0.0
      %6284 = vmatmul.mubr.f32.gmra.mrb[0].mxu0 %v5593
      %v6285 = vpop.f32.mrb[0].mxu0
      %v6286 = vadd.f32 0.0, %v6285
      %v6287 = vpop.f32.mrb[0].mxu0
      %6288 = vmatprep.mubr.f32.mxu0 0.0
      %6289 = vmatmul.mubr.f32.gmra.mrb[0].mxu0 %v5596
      %v6290 = vpop.f32.mrb[0].mxu0
      %v6291 = vadd.f32 0.0, %v6290
      %v6292 = vpop.f32.mrb[0].mxu0
      %6293 = vmatprep.mubr.f32.mxu0 0.0
      %6294 = vmatmul.mubr.f32.gmra.mrb[0].mxu0 %v5599
      %v6295 = vpop.f32.mrb[0].mxu0
      %v6296 = vadd.f32 0.0, %v6295
      %v6297 = vpop.f32.mrb[0].mxu0
      %6298 = vmatprep.mubr.f32.mxu0 0.0
      %6299 = vmatmul.mubr.f32.gmra.mrb[0].mxu0 %v5602
      %v6300 = vpop.f32.mrb[0].mxu0
      %v6301 = vadd.f32 0.0, %v6300
      %v6302 = vpop.f32.mrb[0].mxu0
      %6303 = vmatprep.mubr.f32.mxu0 0.0
      %6304 = vmatmul.mubr.f32.gmra.mrb[0].mxu0 %v5605
      %v6305 = vpop.f32.mrb[0].mxu0
      %v6306 = vadd.f32 0.0, %v6305
      %v6307 = vpop.f32.mrb[0].mxu0
      %6308 = vmatprep.mubr.f32.mxu0 0.0
      %6309 = vmatmul.mubr.f32.gmra.mrb[0].mxu0 %v5608
      %v6310 = vpop.f32.mrb[0].mxu0
      %v6311 = vadd.f32 0.0, %v6310
      %v6312 = vpop.f32.mrb[0].mxu0
      %6313 = vmatprep.mubr.f32.mxu0 0.0
      %6314 = vmatmul.mubr.f32.gmra.mrb[0].mxu0 %v5611
      %v6315 = vpop.f32.mrb[0].mxu0
      %v6316 = vadd.f32 0.0, %v6315
      %v6317 = vpop.f32.mrb[0].mxu0
      %6318 = vmatprep.mubr.f32.mxu0 0.0
      %6319 = vmatmul.mubr.f32.gmra.mrb[0].mxu0 %v5614
      %v6320 = vpop.f32.mrb[0].mxu0
      %v6321 = vadd.f32 0.0, %v6320
      %v6322 = vpop.f32.mrb[0].mxu0
      %6323 = vmatprep.mubr.f32.mxu0 0.0
      %6324 = vmatmul.mubr.f32.gmra.mrb[0].mxu0 %v5617
      %v6325 = vpop.f32.mrb[0].mxu0
      %v6326 = vadd.f32 0.0, %v6325
      %v6327 = vpop.f32.mrb[0].mxu0
      %6328 = vmatprep.mubr.f32.mxu0 0.0
      %6329 = vmatmul.mubr.f32.gmra.mrb[0].mxu0 %v5620
      %v6330 = vpop.f32.mrb[0].mxu0
      %v6331 = vadd.f32 0.0, %v6330
      %v6332 = vpop.f32.mrb[0].mxu0
      %6333 = vmatprep.mubr.f32.mxu0 0.0
      %6334 = vmatmul.mubr.f32.gmra.mrb[0].mxu0 %v5623
      %v6335 = vpop.f32.mrb[0].mxu0
      %v6336 = vadd.f32 0.0, %v6335
      %v6337 = vpop.f32.mrb[0].mxu0
      %6338 = vmatprep.mubr.f32.mxu0 0.0
      %6339 = vmatmul.mubr.f32.gmra.mrb[0].mxu0 %v5626
      %v6340 = vpop.f32.mrb[0].mxu0
      %v6341 = vadd.f32 0.0, %v6340
      %v6342 = vpop.f32.mrb[0].mxu0
      %6343 = vmatprep.mubr.f32.mxu0 0.0
      %6344 = vmatmul.mubr.f32.gmra.mrb[0].mxu0 %v5629
      %v6345 = vpop.f32.mrb[0].mxu0
      %v6346 = vadd.f32 0.0, %v6345
      %v6347 = vpop.f32.mrb[0].mxu0
      %6348 = vmatprep.mubr.f32.mxu0 0.0
      %6349 = vmatmul.mubr.f32.gmra.mrb[0].mxu0 %v5632
      %v6350 = vpop.f32.mrb[0].mxu0
      %v6351 = vadd.f32 0.0, %v6350
      %v6352 = vpop.f32.mrb[0].mxu0
      %6353 = vmatprep.mubr.f32.mxu0 0.0
      %6354 = vmatmul.mubr.f32.gmra.mrb[0].mxu0 %v5635
      %v6355 = vpop.f32.mrb[0].mxu0
      %v6356 = vadd.f32 0.0, %v6355
      %v6357 = vpop.f32.mrb[0].mxu0
      %6358 = vmatprep.mubr.f32.mxu0 0.0
      %6359 = vmatmul.mubr.f32.gmra.mrb[0].mxu0 %v5638
      %v6360 = vpop.f32.mrb[0].mxu0
      %v6361 = vadd.f32 0.0, %v6360
      %v6362 = vpop.f32.mrb[0].mxu0
      %6363 = vmatprep.mubr.f32.mxu0 0.0
      %6364 = vmatmul.mubr.f32.gmra.mrb[0].mxu0 %v5641
      %v6365 = vpop.f32.mrb[0].mxu0
      %v6366 = vadd.f32 0.0, %v6365
      %v6367 = vpop.f32.mrb[0].mxu0
      %6368 = vmatprep.mubr.f32.mxu0 0.0
      %6369 = vmatmul.mubr.f32.gmra.mrb[0].mxu0 %v5644
      %v6370 = vpop.f32.mrb[0].mxu0
      %v6371 = vadd.f32 0.0, %v6370
      %v6372 = vpop.f32.mrb[0].mxu0
      %6373 = vmatprep.mubr.f32.mxu0 0.0
      %6374 = vmatmul.mubr.f32.gmra.mrb[0].mxu0 %v5647
      %v6375 = vpop.f32.mrb[0].mxu0
      %v6376 = vadd.f32 0.0, %v6375
      %v6377 = vpop.f32.mrb[0].mxu0
      %6378 = vmatprep.mubr.f32.mxu0 0.0
      %6379 = vmatmul.mubr.f32.gmra.mrb[0].mxu0 %v5650
      %v6380 = vpop.f32.mrb[0].mxu0
      %v6381 = vadd.f32 0.0, %v6380
      %v6382 = vpop.f32.mrb[0].mxu0
      %6383 = vmatprep.mubr.f32.mxu0 0.0
      %6384 = vmatmul.mubr.f32.gmra.mrb[0].mxu0 %v5653
      %v6385 = vpop.f32.mrb[0].mxu0
      %v6386 = vadd.f32 0.0, %v6385
      %v6387 = vpop.f32.mrb[0].mxu0
      %6388 = vmatprep.mubr.f32.mxu0 0.0
      %6389 = vmatmul.mubr.f32.gmra.mrb[0].mxu0 %v5656
      %v6390 = vpop.f32.mrb[0].mxu0
      %v6391 = vadd.f32 0.0, %v6390
      %v6392 = vpop.f32.mrb[0].mxu0
      %6393 = vmatprep.mubr.f32.mxu0 0.0
      %6394 = vmatmul.mubr.f32.gmra.mrb[0].mxu0 %v5659
      %v6395 = vpop.f32.mrb[0].mxu0
      %v6396 = vadd.f32 0.0, %v6395
      %v6397 = vpop.f32.mrb[0].mxu0
      %6398 = vmatprep.mubr.f32.mxu0 0.0
      %6399 = vmatmul.mubr.f32.gmra.mrb[0].mxu0 %v5662
      %v6400 = vpop.f32.mrb[0].mxu0
      %v6401 = vadd.f32 0.0, %v6400
      %v6402 = vpop.f32.mrb[0].mxu0
      %6403 = vmatprep.mubr.f32.mxu0 0.0
      %6404 = vmatmul.mubr.f32.gmra.mrb[0].mxu0 %v5665
      %v6405 = vpop.f32.mrb[0].mxu0
      %v6406 = vadd.f32 0.0, %v6405
      %v6407 = vpop.f32.mrb[0].mxu0
      %6408 = vmatprep.mubr.f32.mxu0 0.0
      %6409 = vmatmul.mubr.f32.gmra.mrb[0].mxu0 %v5668
      %v6410 = vpop.f32.mrb[0].mxu0
      %v6411 = vadd.f32 0.0, %v6410
      %v6412 = vpop.f32.mrb[0].mxu0
      %6413 = vmatprep.mubr.f32.mxu0 0.0
      %6414 = vmatmul.mubr.f32.gmra.mrb[0].mxu0 %v5933
      %v6415 = vpop.f32.mrb[0].mxu0
      %v6416 = vadd.f32 0.0, %v6415
      %v6417 = vpop.f32.mrb[0].mxu0
      %6418 = vmatprep.mubr.f32.mxu0 0.0
      %6419 = vmatmul.mubr.f32.gmra.mrb[0].mxu0 %v5936
      %v6420 = vpop.f32.mrb[0].mxu0
      %v6421 = vadd.f32 0.0, %v6420
      %v6422 = vpop.f32.mrb[0].mxu0
      %6423 = vmatprep.mubr.f32.mxu0 0.0
      %6424 = vmatmul.mubr.f32.gmra.mrb[0].mxu0 %v6201
      %v6425 = vpop.f32.mrb[0].mxu0
      %v6426 = vadd.f32 0.0, %v6425
      %v6427 = vpop.f32.mrb[0].mxu0
      %6428 = vmatprep.mubr.f32.mxu0 0.0
      %6429 = vmatmul.mubr.f32.gmra.mrb[0].mxu0 %v6204
      %v6430 = vpop.f32.mrb[0].mxu0
      %v6431 = vadd.f32 0.0, %v6430
      %v6432 = vpop.f32.mrb[0].mxu0
      %6433 = vdwg.mxu0
      %v6434 = vadd.f32 %v6166, %v6276
      %v6435 = vadd.f32 %v6167, %v6281
      %v6436 = vadd.f32 %v6168, %v6286
      %v6437 = vadd.f32 %v6169, %v6291
      %v6438 = vadd.f32 %v6170, %v6296
      %v6439 = vadd.f32 %v6171, %v6301
      %v6440 = vadd.f32 %v6172, %v6306
      %v6441 = vadd.f32 %v6173, %v6311
      %v6442 = vadd.f32 %v6174, %v6316
      %v6443 = vadd.f32 %v6175, %v6321
      %v6444 = vadd.f32 %v6176, %v6326
      %v6445 = vadd.f32 %v6177, %v6331
      %v6446 = vadd.f32 %v6178, %v6336
      %v6447 = vadd.f32 %v6179, %v6341
      %v6448 = vadd.f32 %v6180, %v6346
      %v6449 = vadd.f32 %v6181, %v6351
      %v6450 = vadd.f32 %v6182, %v6356
      %v6451 = vadd.f32 %v6183, %v6361
      %v6452 = vadd.f32 %v6184, %v6366
      %v6453 = vadd.f32 %v6185, %v6371
      %v6454 = vadd.f32 %v6186, %v6376
      %v6455 = vadd.f32 %v6187, %v6381
      %v6456 = vadd.f32 %v6188, %v6386
      %v6457 = vadd.f32 %v6189, %v6391
      %v6458 = vadd.f32 %v6190, %v6396
      %v6459 = vadd.f32 %v6191, %v6401
      %v6460 = vadd.f32 %v6192, %v6406
      %v6461 = vadd.f32 %v6193, %v6411
      %v6462 = vadd.f32 %v6194, %v6416
      %v6463 = vadd.f32 %v6195, %v6421
      %v6464 = vadd.f32 %v6196, %v6426
      %v6465 = vadd.f32 %v6197, %v6431
      %v6466 = vmax.f32 %v6434, 0.0
      %v6467 = vmax.f32 %v6435, 0.0
      %v6468 = vmax.f32 %v6436, 0.0
      %v6469 = vmax.f32 %v6437, 0.0
      %v6470 = vmax.f32 %v6438, 0.0
      %v6471 = vmax.f32 %v6439, 0.0
      %v6472 = vmax.f32 %v6440, 0.0
      %v6473 = vmax.f32 %v6441, 0.0
      %v6474 = vmax.f32 %v6442, 0.0
      %v6475 = vmax.f32 %v6443, 0.0
      %v6476 = vmax.f32 %v6444, 0.0
      %v6477 = vmax.f32 %v6445, 0.0
      %v6478 = vmax.f32 %v6446, 0.0
      %v6479 = vmax.f32 %v6447, 0.0
      %v6480 = vmax.f32 %v6448, 0.0
      %v6481 = vmax.f32 %v6449, 0.0
      %v6482 = vmax.f32 %v6450, 0.0
      %v6483 = vmax.f32 %v6451, 0.0
      %v6484 = vmax.f32 %v6452, 0.0
      %v6485 = vmax.f32 %v6453, 0.0
      %v6486 = vmax.f32 %v6454, 0.0
      %v6487 = vmax.f32 %v6455, 0.0
      %v6488 = vmax.f32 %v6456, 0.0
      %v6489 = vmax.f32 %v6457, 0.0
      %v6490 = vmax.f32 %v6458, 0.0
      %v6491 = vmax.f32 %v6459, 0.0
      %v6492 = vmax.f32 %v6460, 0.0
      %v6493 = vmax.f32 %v6461, 0.0
      %v6494 = vmax.f32 %v6462, 0.0
      %v6495 = vmax.f32 %v6463, 0.0
      %v6496 = vmax.f32 %v6464, 0.0
      %v6497 = vmax.f32 %v6465, 0.0
      %6498 = vxpose.xlu0.b32.start [1/16] %v6466, 128
      %6499 = vxpose.xlu0.b32.cont [2/16] %v6467, 128
      %6500 = vxpose.xlu0.b32.cont [3/16] %v6468, 128
      %6501 = vxpose.xlu0.b32.cont [4/16] %v6469, 128
      %6502 = vxpose.xlu0.b32.cont [5/16] %v6470, 128
      %6503 = vxpose.xlu0.b32.cont [6/16] %v6471, 128
      %6504 = vxpose.xlu0.b32.cont [7/16] %v6472, 128
      %6505 = vxpose.xlu0.b32.cont [8/16] %v6473, 128
      %6506 = vxpose.xlu0.b32.cont [9/16] %v6474, 128
      %6507 = vxpose.xlu0.b32.cont [10/16] %v6475, 128
      %6508 = vxpose.xlu0.b32.cont [11/16] %v6476, 128
      %6509 = vxpose.xlu0.b32.cont [12/16] %v6477, 128
      %6510 = vxpose.xlu0.b32.cont [13/16] %v6478, 128
      %6511 = vxpose.xlu0.b32.cont [14/16] %v6479, 128
      %6512 = vxpose.xlu0.b32.cont [15/16] %v6480, 128
      %6513 = vxpose.xlu0.b32.end [16/16] %v6481, 128
      %v6514 = vpop.trf.xlu0
      %v6515 = vpop.trf.xlu0
      %v6516 = vpop.trf.xlu0
      %v6517 = vpop.trf.xlu0
      %v6518 = vpop.trf.xlu0
      %v6519 = vpop.trf.xlu0
      %v6520 = vpop.trf.xlu0
      %v6521 = vpop.trf.xlu0
      %v6522 = vpop.trf.xlu0
      %v6523 = vpop.trf.xlu0
      %v6524 = vpop.trf.xlu0
      %v6525 = vpop.trf.xlu0
      %v6526 = vpop.trf.xlu0
      %v6527 = vpop.trf.xlu0
      %v6528 = vpop.trf.xlu0
      %v6529 = vpop.trf.xlu0
      %6530 = vxpose.xlu0.b32.start [1/16] %v6482, 128
      %6531 = vxpose.xlu0.b32.cont [2/16] %v6483, 128
      %6532 = vxpose.xlu0.b32.cont [3/16] %v6484, 128
      %6533 = vxpose.xlu0.b32.cont [4/16] %v6485, 128
      %6534 = vxpose.xlu0.b32.cont [5/16] %v6486, 128
      %6535 = vxpose.xlu0.b32.cont [6/16] %v6487, 128
      %6536 = vxpose.xlu0.b32.cont [7/16] %v6488, 128
      %6537 = vxpose.xlu0.b32.cont [8/16] %v6489, 128
      %6538 = vxpose.xlu0.b32.cont [9/16] %v6490, 128
      %6539 = vxpose.xlu0.b32.cont [10/16] %v6491, 128
      %6540 = vxpose.xlu0.b32.cont [11/16] %v6492, 128
      %6541 = vxpose.xlu0.b32.cont [12/16] %v6493, 128
      %6542 = vxpose.xlu0.b32.cont [13/16] %v6494, 128
      %6543 = vxpose.xlu0.b32.cont [14/16] %v6495, 128
      %6544 = vxpose.xlu0.b32.cont [15/16] %v6496, 128
      %6545 = vxpose.xlu0.b32.end [16/16] %v6497, 128
      %v6546 = vpop.trf.xlu0
      %v6547 = vpop.trf.xlu0
      %v6548 = vpop.trf.xlu0
      %v6549 = vpop.trf.xlu0
      %v6550 = vpop.trf.xlu0
      %v6551 = vpop.trf.xlu0
      %v6552 = vpop.trf.xlu0
      %v6553 = vpop.trf.xlu0
      %v6554 = vpop.trf.xlu0
      %v6555 = vpop.trf.xlu0
      %v6556 = vpop.trf.xlu0
      %v6557 = vpop.trf.xlu0
      %v6558 = vpop.trf.xlu0
      %v6559 = vpop.trf.xlu0
      %v6560 = vpop.trf.xlu0
      %v6561 = vpop.trf.xlu0
      %v6564 = vcombine.low %v6514, %v6546
      %6566 = vst [vmem:[%s325] sm:$0xff] %v6564
      %p6567 = scmp.lt.s32.totalorder %s19, 1
      %s6568 = scalar_select %p6567, %s19, 1
      %s6569 = smul.addr %s6568, 2
      %s6570 = smul.addr %s6569, 4
      %s6571 = scalar_lea.vmem %s8, %s6570
      // Predicated region
      $region53: #{_lambda_.1} parent=51 // pred_check
        %p6572 = pneg %p215
      $region54: #{_lambda_.1} parent=51 // pred_check_branch
        %6574 = sbr.rel (%p6572) target = $region56
      $region55: #{_lambda_.1} parent=51 // pred_region
        _
      $region56: #{_lambda_.1} parent=51 // pred_fallthru
        _
    $region52: #{_lambda_.1} parent=5 // pred_fallthru
      _
    %p6575 = scmp.le.s32.totalorder 2, %s14
    // Predicated region
    $region57: #{_lambda_.1} parent=5 // pred_check
      %p6576 = pneg %p6575
    $region58: #{_lambda_.1} parent=5 // pred_check_branch
      %6578 = sbr.rel (%p6576) target = $region60
    $region59: #{_lambda_.1} parent=5 // pred_region
      %s6579 = ssub.s32 %s14, 2
      // Predicated region
      $region61: #{_lambda_.1} parent=59 // pred_check
        %p6580 = pneg %p221
      $region62: #{_lambda_.1} parent=59 // pred_check_branch
        %6582 = sbr.rel (%p6580) target = $region64
      $region63: #{_lambda_.1} parent=59 // pred_region
        %p6583 = scmp.lt.s32.totalorder %s20, 1
        %s6584 = scalar_select %p6583, %s20, 1
        %s6585 = smul.addr %s6584, 2
        %s6586 = smul.addr %s6585, 4
        %s6587 = scalar_lea.vmem %s8, %s6586
      $region64: #{_lambda_.1} parent=59 // pred_fallthru
        _
    $region60: #{_lambda_.1} parent=5 // pred_fallthru
      _
  $region6: #{_lambda_.1} parent=0 // loop_footer
    %s18 = sadd.s32 1, %s14
  $region7: #{_lambda_.1} parent=0 // loop_footer_branch
    %13 = sbr.rel target = $region3
  $region8: #{_lambda_.1} parent=0 // loop_exit
    _

</llo_original>
